<compile_context>
chip_gen: v6e
topology: v6e:2x2x1
jax: 0.10.0
libtpu: 0.0.40
codegen_flags: <defaults>
</compile_context>

<pallas_src>
import jax
import jax.numpy as jnp
from jax.experimental import pallas as pl
from jax.experimental.pallas import tpu as pltpu

C_OUT = 32
H = W = 28
PH = PW = 14                    # pooled spatial dims
S = PH * PW                     # 196 pooled positions
Q = S // 4                      # 49 groups of 4 pooled positions (4*32 = 128 lanes)
FLAT = C_OUT * S                # 6272
HID = 128
N_CLASSES = 10
TAPS = 36                       # 4 pooled positions x 9 conv taps
LANES = 4 * C_OUT               # 128
OUT_PAD = 128                   # lane-dense padded class dim


def fused_cnn_kernel(p_ref, wk_ref, bc_ref, w1_ref, b1_ref, w2_ref, b2_ref, o_ref):
    """conv3x3+bias+ReLU+maxpool2x2 -> fc1+ReLU -> fc2 for one batch tile.

    p_ref : (4*Q*nb, 36)  bf16   im2col patches; row = (o*Q + q)*nb + b
    wk_ref: (36, 128)     bf16   block-diagonal conv weight
    bc_ref: (1, 128)      f32    conv bias tiled 4x
    w1_ref: (Q, 128, HID) bf16   fc1 weight, HWC order, chunked by 128 features
    b1_ref: (1, HID)      f32
    w2_ref: (HID, 128)    bf16   fc2 weight zero-padded to 128 classes
    b2_ref: (1, 128)      f32    fc2 bias zero-padded
    o_ref : (nb, 128)     f32    padded logits (first 10 lanes are real)
    """
    nb = o_ref.shape[0]
    m1 = Q * nb
    wk = wk_ref[...]

    # conv (K=36 block-diag matmul) per pool offset, max-pooled incrementally.
    pooled = jnp.dot(p_ref[0:m1, :], wk, preferred_element_type=jnp.float32)
    for o in range(1, 4):
        c = jnp.dot(p_ref[o * m1:(o + 1) * m1, :], wk,
                    preferred_element_type=jnp.float32)
        pooled = jnp.maximum(pooled, c)                           # (Q*nb, 128)

    # shared bias + ReLU once, after the max (exact reorder), then bf16 for fc1.
    pooled = jnp.maximum(pooled + bc_ref[...], 0.0).astype(jnp.bfloat16)

    # fc1: accumulate the Q feature chunks on the MXU; one f32 (nb, HID)
    # accumulator, no (Q, nb, HID) intermediate.
    h = jnp.zeros((nb, HID), jnp.float32)
    for q in range(Q):
        h = h + jnp.dot(pooled[q * nb:(q + 1) * nb, :], w1_ref[q],
                        preferred_element_type=jnp.float32)
    h = jnp.maximum(h + b1_ref[...], 0.0).astype(jnp.bfloat16)    # (nb, HID)

    out = jnp.dot(h, w2_ref[...], preferred_element_type=jnp.float32)  # (nb, 128)
    o_ref[...] = out + b2_ref[...]


def _im2col(x):
    """(B,1,28,28) -> (4, Q, B, 36) f32 im2col patches.

    patches[o, q, b, r*9 + k] = xpad[b, 2*hp+dh+kh, 2*wp+dw+kw]  with
    o = dh*2+dw (pool offset), s = 4*q+r = hp*14+wp, k = kh*3+kw.
    """
    B = x.shape[0]
    xpad = jnp.pad(x[:, 0], ((0, 0), (1, 1), (1, 1)))             # (B, 30, 30)
    offsets = []
    for dh in range(2):
        for dw in range(2):
            taps = []
            for kh in range(3):
                for kw in range(3):
                    t = xpad[:, dh + kh:dh + kh + 27:2, dw + kw:dw + kw + 27:2]
                    taps.append(t.reshape(B, S))                  # (B, 196)
            p = jnp.stack(taps, axis=-1)                          # (B, 196, 9)
            p = p.reshape(B, Q, TAPS)                             # s*9+k -> (q, r*9+k)
            offsets.append(jnp.transpose(p, (1, 0, 2)))           # (Q, B, 36)
    return jnp.stack(offsets, axis=0)                             # (4, Q, B, 36)


def prepare_params(params):
    """One-time weight layout transforms (hoisted out of the per-call forward)."""
    conv_w, conv_b, fc1_w, fc1_b, fc2_w, fc2_b = params
    wk = jnp.transpose(conv_w[:, 0].reshape(C_OUT, 9))            # (9, 32)  [tap, cout]
    # block-diagonal (36, 128): 4 pooled positions share the same filter bank
    wk4 = jnp.einsum("rs,kc->rksc", jnp.eye(4, dtype=wk.dtype), wk)
    wk4 = wk4.reshape(TAPS, LANES).astype(jnp.bfloat16)           # (36, 128)
    bc = jnp.tile(conv_b, 4).reshape(1, LANES)                    # (1, 128) f32
    # fc1 weight permuted so the kernel's HWC feature order matches PyTorch's
    # CHW flatten, then chunked into Q groups of 128 features; cast once to bf16.
    w1_hwc = jnp.transpose(
        fc1_w.reshape(HID, C_OUT, PH, PW).transpose(0, 2, 3, 1).reshape(HID, FLAT))
    w1q = w1_hwc.reshape(Q, LANES, HID).astype(jnp.bfloat16)      # (49, 128, 128)
    b1 = fc1_b.reshape(1, HID)
    # fc2 zero-padded to 128 classes -> lane-dense output stores.
    w2 = jnp.zeros((HID, OUT_PAD), jnp.float32).at[:, :N_CLASSES].set(jnp.transpose(fc2_w))
    w2 = w2.astype(jnp.bfloat16)                                  # (128, 128)
    b2 = jnp.zeros((1, OUT_PAD), jnp.float32).at[0, :N_CLASSES].set(fc2_b)
    return wk4, bc, w1q, b1, w2, b2


def fashion_cnn_forward(x, prep, *, batch_tile=128):
    # batch_tile=128 keeps the bf16 patch double-buffer within v7x's 64 MiB VMEM;
    # v5e/v6e (128 MiB) can use 256.
    wk4, bc, w1q, b1, w2, b2 = prep
    B = x.shape[0]
    nb = min(batch_tile, -(-B // 16) * 16)        # multiple of 16 (bf16 sublane tile)
    n_tiles = -(-B // nb)
    Bp = n_tiles * nb
    if Bp != B:
        x = jnp.pad(x, ((0, Bp - B), (0, 0), (0, 0), (0, 0)))

    patches = _im2col(x).astype(jnp.bfloat16)                     # (4, Q, Bp, 36)
    # batch-tile-outermost, contiguous per grid step: row = ((i*4+o)*Q+q)*nb + b
    patches = patches.reshape(4, Q, n_tiles, nb, TAPS)
    patches = jnp.transpose(patches, (2, 0, 1, 3, 4)).reshape(n_tiles * 4 * Q * nb, TAPS)

    out = pl.pallas_call(
        fused_cnn_kernel,
        out_shape=jax.ShapeDtypeStruct((Bp, OUT_PAD), jnp.float32),
        grid=(n_tiles,),
        in_specs=[
            pl.BlockSpec((4 * Q * nb, TAPS), lambda i: (i, 0)),   # batch tile of patches
            pl.BlockSpec((TAPS, LANES), lambda i: (0, 0)),        # conv weight (resident)
            pl.BlockSpec((1, LANES), lambda i: (0, 0)),           # conv bias
            pl.BlockSpec((Q, LANES, HID), lambda i: (0, 0, 0)),   # fc1 weight (resident)
            pl.BlockSpec((1, HID), lambda i: (0, 0)),             # fc1 bias
            pl.BlockSpec((HID, OUT_PAD), lambda i: (0, 0)),       # fc2 weight (padded)
            pl.BlockSpec((1, OUT_PAD), lambda i: (0, 0)),         # fc2 bias (padded)
        ],
        out_specs=pl.BlockSpec((nb, OUT_PAD), lambda i: (i, 0)),  # lane-dense output slab
        compiler_params=pltpu.CompilerParams(
            dimension_semantics=("parallel",),
            vmem_limit_bytes=48 * 1024 * 1024),
    )(patches, wk4, bc, w1q, b1, w2, b2)
    return out[:B, :N_CLASSES]


def init_params(key):
    ks = jax.random.split(key, 6)
    conv_w = jax.random.normal(ks[0], (C_OUT, 1, 3, 3), jnp.float32) * (1.0 / 3.0)
    conv_b = jax.random.normal(ks[1], (C_OUT,), jnp.float32) * 0.1
    fc1_w = jax.random.normal(ks[2], (HID, FLAT), jnp.float32) * (1.0 / jnp.sqrt(FLAT))
    fc1_b = jax.random.normal(ks[3], (HID,), jnp.float32) * 0.05
    fc2_w = jax.random.normal(ks[4], (N_CLASSES, HID), jnp.float32) * (1.0 / jnp.sqrt(HID))
    fc2_b = jax.random.normal(ks[5], (N_CLASSES,), jnp.float32) * 0.05
    return conv_w, conv_b, fc1_w, fc1_b, fc2_w, fc2_b


def reference_forward(x, params):
    """Plain-JAX (all-f32) replica of the PyTorch forward (NCHW conv, CHW flatten)."""
    conv_w, conv_b, fc1_w, fc1_b, fc2_w, fc2_b = params
    B = x.shape[0]
    y = jax.lax.conv_general_dilated(
        x, conv_w, window_strides=(1, 1), padding=((1, 1), (1, 1)),
        dimension_numbers=("NCHW", "OIHW", "NCHW"))
    y = jnp.maximum(y + conv_b[None, :, None, None], 0.0)
    y = y.reshape(B, C_OUT, PH, 2, PW, 2).max(axis=(3, 5))
    y = y.reshape(B, FLAT)
    h = jnp.maximum(y @ fc1_w.T + fc1_b, 0.0)
    return h @ fc2_w.T + fc2_b


if __name__ == "__main__":
    key = jax.random.PRNGKey(0)
    k_x, k_p = jax.random.split(key)
    # spatial 28x28 / 1 channel is dictated by fc1 = Linear(32*14*14, 128);
    # B=32 with batch_tile=16 exercises two grid steps at small shape.
    B = 32
    x = jax.random.normal(k_x, (B, 1, H, W), jnp.float32)
    params = init_params(k_p)

    prep = prepare_params(params)            # weight layout transforms, paid once
    fwd = jax.jit(fashion_cnn_forward, static_argnames=("batch_tile",))

    out = jax.block_until_ready(fwd(x, prep, batch_tile=16))
    assert out.shape == (B, N_CLASSES)

    ref = reference_forward(x, params)
    # conv/fc1/fc2 matmuls run in bf16 with f32 accumulation.
    assert jnp.allclose(out, ref, atol=5e-2, rtol=5e-2), (
        f"max abs diff {jnp.max(jnp.abs(out - ref))}")
    print("KERNEL_OK")
</pallas_src>

<mosaic_0001>
module attributes {stable_mosaic.version = 11 : i64} {
  func.func @fused_cnn_kernel(%arg0: i32, %arg1: memref<3136x36xbf16, #tpu.memory_space<vmem>>, %arg2: memref<36x128xbf16, #tpu.memory_space<vmem>>, %arg3: memref<1x128xf32, #tpu.memory_space<vmem>>, %arg4: memref<49x128x128xbf16, #tpu.memory_space<vmem>>, %arg5: memref<1x128xf32, #tpu.memory_space<vmem>>, %arg6: memref<128x128xbf16, #tpu.memory_space<vmem>>, %arg7: memref<1x128xf32, #tpu.memory_space<vmem>>, %arg8: memref<16x128xf32, #tpu.memory_space<vmem>>) attributes {dimension_semantics = [#tpu.dimension_semantics<parallel>], iteration_bounds = array<i64: 2>, scalar_prefetch = 0 : i64, scratch_operands = 0 : i64, tpu.core_type = #tpu.core_type<tc>, window_params = [{transform_indices = @transform_0, window_bounds = array<i64: 3136, 36>}, {pipeline_mode = #tpu.pipeline_mode<synchronous>, transform_indices = @transform_1, window_bounds = array<i64: 36, 128>}, {pipeline_mode = #tpu.pipeline_mode<synchronous>, transform_indices = @transform_2, window_bounds = array<i64: 1, 128>}, {pipeline_mode = #tpu.pipeline_mode<synchronous>, transform_indices = @transform_3, window_bounds = array<i64: 49, 128, 128>}, {pipeline_mode = #tpu.pipeline_mode<synchronous>, transform_indices = @transform_4, window_bounds = array<i64: 1, 128>}, {pipeline_mode = #tpu.pipeline_mode<synchronous>, transform_indices = @transform_5, window_bounds = array<i64: 128, 128>}, {pipeline_mode = #tpu.pipeline_mode<synchronous>, transform_indices = @transform_6, window_bounds = array<i64: 1, 128>}, {transform_indices = @transform_7, window_bounds = array<i64: 16, 128>}]} {
    %c0 = arith.constant 0 : index
    %c0_0 = arith.constant 0 : index
    %0 = vector.load %arg2[%c0, %c0_0] : memref<36x128xbf16, #tpu.memory_space<vmem>>, vector<36x128xbf16>
    %c0_1 = arith.constant 0 : index
    %c0_2 = arith.constant 0 : index
    %1 = vector.load %arg1[%c0_1, %c0_2] : memref<3136x36xbf16, #tpu.memory_space<vmem>>, vector<784x36xbf16>
    %cst = arith.constant dense<0.000000e+00> : vector<784x128xf32>
    %2 = tpu.matmul %1, %0, %cst {dimension_numbers = #tpu.dot_dimension_numbers<[1], [0], [0], [1], [0, 0, 1, 1], [], []>} : vector<784x36xbf16>, vector<36x128xbf16>, vector<784x128xf32> -> vector<784x128xf32>
    %c784 = arith.constant 784 : index
    %c0_3 = arith.constant 0 : index
    %3 = vector.load %arg1[%c784, %c0_3] : memref<3136x36xbf16, #tpu.memory_space<vmem>>, vector<784x36xbf16>
    %cst_4 = arith.constant dense<0.000000e+00> : vector<784x128xf32>
    %4 = tpu.matmul %3, %0, %cst_4 {dimension_numbers = #tpu.dot_dimension_numbers<[1], [0], [0], [1], [0, 0, 1, 1], [], []>} : vector<784x36xbf16>, vector<36x128xbf16>, vector<784x128xf32> -> vector<784x128xf32>
    %5 = arith.maximumf %2, %4 : vector<784x128xf32>
    %c1568 = arith.constant 1568 : index
    %c0_5 = arith.constant 0 : index
    %6 = vector.load %arg1[%c1568, %c0_5] : memref<3136x36xbf16, #tpu.memory_space<vmem>>, vector<784x36xbf16>
    %cst_6 = arith.constant dense<0.000000e+00> : vector<784x128xf32>
    %7 = tpu.matmul %6, %0, %cst_6 {dimension_numbers = #tpu.dot_dimension_numbers<[1], [0], [0], [1], [0, 0, 1, 1], [], []>} : vector<784x36xbf16>, vector<36x128xbf16>, vector<784x128xf32> -> vector<784x128xf32>
    %8 = arith.maximumf %5, %7 : vector<784x128xf32>
    %c2352 = arith.constant 2352 : index
    %c0_7 = arith.constant 0 : index
    %9 = vector.load %arg1[%c2352, %c0_7] : memref<3136x36xbf16, #tpu.memory_space<vmem>>, vector<784x36xbf16>
    %cst_8 = arith.constant dense<0.000000e+00> : vector<784x128xf32>
    %10 = tpu.matmul %9, %0, %cst_8 {dimension_numbers = #tpu.dot_dimension_numbers<[1], [0], [0], [1], [0, 0, 1, 1], [], []>} : vector<784x36xbf16>, vector<36x128xbf16>, vector<784x128xf32> -> vector<784x128xf32>
    %11 = arith.maximumf %8, %10 : vector<784x128xf32>
    %c0_9 = arith.constant 0 : index
    %c0_10 = arith.constant 0 : index
    %12 = vector.load %arg3[%c0_9, %c0_10] : memref<1x128xf32, #tpu.memory_space<vmem>>, vector<1x128xf32>
    %13 = vector.broadcast %12 : vector<1x128xf32> to vector<784x128xf32>
    %14 = arith.addf %11, %13 : vector<784x128xf32>
    %cst_11 = arith.constant 0.000000e+00 : f32
    %15 = vector.broadcast %cst_11 : f32 to vector<784x128xf32>
    %16 = arith.maximumf %14, %15 : vector<784x128xf32>
    %17 = arith.truncf %16 : vector<784x128xf32> to vector<784x128xbf16>
    %cst_12 = arith.constant 0.000000e+00 : f32
    %18 = vector.broadcast %cst_12 : f32 to vector<16x128xf32>
    %19 = vector.extract_strided_slice %17 {offsets = [0, 0], sizes = [16, 128], strides = [1, 1]} : vector<784x128xbf16> to vector<16x128xbf16>
    %c0_13 = arith.constant 0 : index
    %c0_14 = arith.constant 0 : index
    %c0_15 = arith.constant 0 : index
    %20 = vector.load %arg4[%c0_13, %c0_14, %c0_15] : memref<49x128x128xbf16, #tpu.memory_space<vmem>>, vector<1x128x128xbf16>
    %21 = vector.shape_cast %20 : vector<1x128x128xbf16> to vector<128x128xbf16>
    %cst_16 = arith.constant dense<0.000000e+00> : vector<16x128xf32>
    %22 = tpu.matmul %19, %21, %cst_16 {dimension_numbers = #tpu.dot_dimension_numbers<[1], [0], [0], [1], [0, 0, 1, 1], [], []>} : vector<16x128xbf16>, vector<128x128xbf16>, vector<16x128xf32> -> vector<16x128xf32>
    %23 = arith.addf %18, %22 : vector<16x128xf32>
    %24 = vector.extract_strided_slice %17 {offsets = [16, 0], sizes = [16, 128], strides = [1, 1]} : vector<784x128xbf16> to vector<16x128xbf16>
    %c1 = arith.constant 1 : index
    %c0_17 = arith.constant 0 : index
    %c0_18 = arith.constant 0 : index
    %25 = vector.load %arg4[%c1, %c0_17, %c0_18] : memref<49x128x128xbf16, #tpu.memory_space<vmem>>, vector<1x128x128xbf16>
    %26 = vector.shape_cast %25 : vector<1x128x128xbf16> to vector<128x128xbf16>
    %cst_19 = arith.constant dense<0.000000e+00> : vector<16x128xf32>
    %27 = tpu.matmul %24, %26, %cst_19 {dimension_numbers = #tpu.dot_dimension_numbers<[1], [0], [0], [1], [0, 0, 1, 1], [], []>} : vector<16x128xbf16>, vector<128x128xbf16>, vector<16x128xf32> -> vector<16x128xf32>
    %28 = arith.addf %23, %27 : vector<16x128xf32>
    %29 = vector.extract_strided_slice %17 {offsets = [32, 0], sizes = [16, 128], strides = [1, 1]} : vector<784x128xbf16> to vector<16x128xbf16>
    %c2 = arith.constant 2 : index
    %c0_20 = arith.constant 0 : index
    %c0_21 = arith.constant 0 : index
    %30 = vector.load %arg4[%c2, %c0_20, %c0_21] : memref<49x128x128xbf16, #tpu.memory_space<vmem>>, vector<1x128x128xbf16>
    %31 = vector.shape_cast %30 : vector<1x128x128xbf16> to vector<128x128xbf16>
    %cst_22 = arith.constant dense<0.000000e+00> : vector<16x128xf32>
    %32 = tpu.matmul %29, %31, %cst_22 {dimension_numbers = #tpu.dot_dimension_numbers<[1], [0], [0], [1], [0, 0, 1, 1], [], []>} : vector<16x128xbf16>, vector<128x128xbf16>, vector<16x128xf32> -> vector<16x128xf32>
    %33 = arith.addf %28, %32 : vector<16x128xf32>
    %34 = vector.extract_strided_slice %17 {offsets = [48, 0], sizes = [16, 128], strides = [1, 1]} : vector<784x128xbf16> to vector<16x128xbf16>
    %c3 = arith.constant 3 : index
    %c0_23 = arith.constant 0 : index
    %c0_24 = arith.constant 0 : index
    %35 = vector.load %arg4[%c3, %c0_23, %c0_24] : memref<49x128x128xbf16, #tpu.memory_space<vmem>>, vector<1x128x128xbf16>
    %36 = vector.shape_cast %35 : vector<1x128x128xbf16> to vector<128x128xbf16>
    %cst_25 = arith.constant dense<0.000000e+00> : vector<16x128xf32>
    %37 = tpu.matmul %34, %36, %cst_25 {dimension_numbers = #tpu.dot_dimension_numbers<[1], [0], [0], [1], [0, 0, 1, 1], [], []>} : vector<16x128xbf16>, vector<128x128xbf16>, vector<16x128xf32> -> vector<16x128xf32>
    %38 = arith.addf %33, %37 : vector<16x128xf32>
    %39 = vector.extract_strided_slice %17 {offsets = [64, 0], sizes = [16, 128], strides = [1, 1]} : vector<784x128xbf16> to vector<16x128xbf16>
    %c4 = arith.constant 4 : index
    %c0_26 = arith.constant 0 : index
    %c0_27 = arith.constant 0 : index
    %40 = vector.load %arg4[%c4, %c0_26, %c0_27] : memref<49x128x128xbf16, #tpu.memory_space<vmem>>, vector<1x128x128xbf16>
    %41 = vector.shape_cast %40 : vector<1x128x128xbf16> to vector<128x128xbf16>
    %cst_28 = arith.constant dense<0.000000e+00> : vector<16x128xf32>
    %42 = tpu.matmul %39, %41, %cst_28 {dimension_numbers = #tpu.dot_dimension_numbers<[1], [0], [0], [1], [0, 0, 1, 1], [], []>} : vector<16x128xbf16>, vector<128x128xbf16>, vector<16x128xf32> -> vector<16x128xf32>
    %43 = arith.addf %38, %42 : vector<16x128xf32>
    %44 = vector.extract_strided_slice %17 {offsets = [80, 0], sizes = [16, 128], strides = [1, 1]} : vector<784x128xbf16> to vector<16x128xbf16>
    %c5 = arith.constant 5 : index
    %c0_29 = arith.constant 0 : index
    %c0_30 = arith.constant 0 : index
    %45 = vector.load %arg4[%c5, %c0_29, %c0_30] : memref<49x128x128xbf16, #tpu.memory_space<vmem>>, vector<1x128x128xbf16>
    %46 = vector.shape_cast %45 : vector<1x128x128xbf16> to vector<128x128xbf16>
    %cst_31 = arith.constant dense<0.000000e+00> : vector<16x128xf32>
    %47 = tpu.matmul %44, %46, %cst_31 {dimension_numbers = #tpu.dot_dimension_numbers<[1], [0], [0], [1], [0, 0, 1, 1], [], []>} : vector<16x128xbf16>, vector<128x128xbf16>, vector<16x128xf32> -> vector<16x128xf32>
    %48 = arith.addf %43, %47 : vector<16x128xf32>
    %49 = vector.extract_strided_slice %17 {offsets = [96, 0], sizes = [16, 128], strides = [1, 1]} : vector<784x128xbf16> to vector<16x128xbf16>
    %c6 = arith.constant 6 : index
    %c0_32 = arith.constant 0 : index
    %c0_33 = arith.constant 0 : index
    %50 = vector.load %arg4[%c6, %c0_32, %c0_33] : memref<49x128x128xbf16, #tpu.memory_space<vmem>>, vector<1x128x128xbf16>
    %51 = vector.shape_cast %50 : vector<1x128x128xbf16> to vector<128x128xbf16>
    %cst_34 = arith.constant dense<0.000000e+00> : vector<16x128xf32>
    %52 = tpu.matmul %49, %51, %cst_34 {dimension_numbers = #tpu.dot_dimension_numbers<[1], [0], [0], [1], [0, 0, 1, 1], [], []>} : vector<16x128xbf16>, vector<128x128xbf16>, vector<16x128xf32> -> vector<16x128xf32>
    %53 = arith.addf %48, %52 : vector<16x128xf32>
    %54 = vector.extract_strided_slice %17 {offsets = [112, 0], sizes = [16, 128], strides = [1, 1]} : vector<784x128xbf16> to vector<16x128xbf16>
    %c7 = arith.constant 7 : index
    %c0_35 = arith.constant 0 : index
    %c0_36 = arith.constant 0 : index
    %55 = vector.load %arg4[%c7, %c0_35, %c0_36] : memref<49x128x128xbf16, #tpu.memory_space<vmem>>, vector<1x128x128xbf16>
    %56 = vector.shape_cast %55 : vector<1x128x128xbf16> to vector<128x128xbf16>
    %cst_37 = arith.constant dense<0.000000e+00> : vector<16x128xf32>
    %57 = tpu.matmul %54, %56, %cst_37 {dimension_numbers = #tpu.dot_dimension_numbers<[1], [0], [0], [1], [0, 0, 1, 1], [], []>} : vector<16x128xbf16>, vector<128x128xbf16>, vector<16x128xf32> -> vector<16x128xf32>
    %58 = arith.addf %53, %57 : vector<16x128xf32>
    %59 = vector.extract_strided_slice %17 {offsets = [128, 0], sizes = [16, 128], strides = [1, 1]} : vector<784x128xbf16> to vector<16x128xbf16>
    %c8 = arith.constant 8 : index
    %c0_38 = arith.constant 0 : index
    %c0_39 = arith.constant 0 : index
    %60 = vector.load %arg4[%c8, %c0_38, %c0_39] : memref<49x128x128xbf16, #tpu.memory_space<vmem>>, vector<1x128x128xbf16>
    %61 = vector.shape_cast %60 : vector<1x128x128xbf16> to vector<128x128xbf16>
    %cst_40 = arith.constant dense<0.000000e+00> : vector<16x128xf32>
    %62 = tpu.matmul %59, %61, %cst_40 {dimension_numbers = #tpu.dot_dimension_numbers<[1], [0], [0], [1], [0, 0, 1, 1], [], []>} : vector<16x128xbf16>, vector<128x128xbf16>, vector<16x128xf32> -> vector<16x128xf32>
    %63 = arith.addf %58, %62 : vector<16x128xf32>
    %64 = vector.extract_strided_slice %17 {offsets = [144, 0], sizes = [16, 128], strides = [1, 1]} : vector<784x128xbf16> to vector<16x128xbf16>
    %c9 = arith.constant 9 : index
    %c0_41 = arith.constant 0 : index
    %c0_42 = arith.constant 0 : index
    %65 = vector.load %arg4[%c9, %c0_41, %c0_42] : memref<49x128x128xbf16, #tpu.memory_space<vmem>>, vector<1x128x128xbf16>
    %66 = vector.shape_cast %65 : vector<1x128x128xbf16> to vector<128x128xbf16>
    %cst_43 = arith.constant dense<0.000000e+00> : vector<16x128xf32>
    %67 = tpu.matmul %64, %66, %cst_43 {dimension_numbers = #tpu.dot_dimension_numbers<[1], [0], [0], [1], [0, 0, 1, 1], [], []>} : vector<16x128xbf16>, vector<128x128xbf16>, vector<16x128xf32> -> vector<16x128xf32>
    %68 = arith.addf %63, %67 : vector<16x128xf32>
    %69 = vector.extract_strided_slice %17 {offsets = [160, 0], sizes = [16, 128], strides = [1, 1]} : vector<784x128xbf16> to vector<16x128xbf16>
    %c10 = arith.constant 10 : index
    %c0_44 = arith.constant 0 : index
    %c0_45 = arith.constant 0 : index
    %70 = vector.load %arg4[%c10, %c0_44, %c0_45] : memref<49x128x128xbf16, #tpu.memory_space<vmem>>, vector<1x128x128xbf16>
    %71 = vector.shape_cast %70 : vector<1x128x128xbf16> to vector<128x128xbf16>
    %cst_46 = arith.constant dense<0.000000e+00> : vector<16x128xf32>
    %72 = tpu.matmul %69, %71, %cst_46 {dimension_numbers = #tpu.dot_dimension_numbers<[1], [0], [0], [1], [0, 0, 1, 1], [], []>} : vector<16x128xbf16>, vector<128x128xbf16>, vector<16x128xf32> -> vector<16x128xf32>
    %73 = arith.addf %68, %72 : vector<16x128xf32>
    %74 = vector.extract_strided_slice %17 {offsets = [176, 0], sizes = [16, 128], strides = [1, 1]} : vector<784x128xbf16> to vector<16x128xbf16>
    %c11 = arith.constant 11 : index
    %c0_47 = arith.constant 0 : index
    %c0_48 = arith.constant 0 : index
    %75 = vector.load %arg4[%c11, %c0_47, %c0_48] : memref<49x128x128xbf16, #tpu.memory_space<vmem>>, vector<1x128x128xbf16>
    %76 = vector.shape_cast %75 : vector<1x128x128xbf16> to vector<128x128xbf16>
    %cst_49 = arith.constant dense<0.000000e+00> : vector<16x128xf32>
    %77 = tpu.matmul %74, %76, %cst_49 {dimension_numbers = #tpu.dot_dimension_numbers<[1], [0], [0], [1], [0, 0, 1, 1], [], []>} : vector<16x128xbf16>, vector<128x128xbf16>, vector<16x128xf32> -> vector<16x128xf32>
    %78 = arith.addf %73, %77 : vector<16x128xf32>
    %79 = vector.extract_strided_slice %17 {offsets = [192, 0], sizes = [16, 128], strides = [1, 1]} : vector<784x128xbf16> to vector<16x128xbf16>
    %c12 = arith.constant 12 : index
    %c0_50 = arith.constant 0 : index
    %c0_51 = arith.constant 0 : index
    %80 = vector.load %arg4[%c12, %c0_50, %c0_51] : memref<49x128x128xbf16, #tpu.memory_space<vmem>>, vector<1x128x128xbf16>
    %81 = vector.shape_cast %80 : vector<1x128x128xbf16> to vector<128x128xbf16>
    %cst_52 = arith.constant dense<0.000000e+00> : vector<16x128xf32>
    %82 = tpu.matmul %79, %81, %cst_52 {dimension_numbers = #tpu.dot_dimension_numbers<[1], [0], [0], [1], [0, 0, 1, 1], [], []>} : vector<16x128xbf16>, vector<128x128xbf16>, vector<16x128xf32> -> vector<16x128xf32>
    %83 = arith.addf %78, %82 : vector<16x128xf32>
    %84 = vector.extract_strided_slice %17 {offsets = [208, 0], sizes = [16, 128], strides = [1, 1]} : vector<784x128xbf16> to vector<16x128xbf16>
    %c13 = arith.constant 13 : index
    %c0_53 = arith.constant 0 : index
    %c0_54 = arith.constant 0 : index
    %85 = vector.load %arg4[%c13, %c0_53, %c0_54] : memref<49x128x128xbf16, #tpu.memory_space<vmem>>, vector<1x128x128xbf16>
    %86 = vector.shape_cast %85 : vector<1x128x128xbf16> to vector<128x128xbf16>
    %cst_55 = arith.constant dense<0.000000e+00> : vector<16x128xf32>
    %87 = tpu.matmul %84, %86, %cst_55 {dimension_numbers = #tpu.dot_dimension_numbers<[1], [0], [0], [1], [0, 0, 1, 1], [], []>} : vector<16x128xbf16>, vector<128x128xbf16>, vector<16x128xf32> -> vector<16x128xf32>
    %88 = arith.addf %83, %87 : vector<16x128xf32>
    %89 = vector.extract_strided_slice %17 {offsets = [224, 0], sizes = [16, 128], strides = [1, 1]} : vector<784x128xbf16> to vector<16x128xbf16>
    %c14 = arith.constant 14 : index
    %c0_56 = arith.constant 0 : index
    %c0_57 = arith.constant 0 : index
    %90 = vector.load %arg4[%c14, %c0_56, %c0_57] : memref<49x128x128xbf16, #tpu.memory_space<vmem>>, vector<1x128x128xbf16>
    %91 = vector.shape_cast %90 : vector<1x128x128xbf16> to vector<128x128xbf16>
    %cst_58 = arith.constant dense<0.000000e+00> : vector<16x128xf32>
    %92 = tpu.matmul %89, %91, %cst_58 {dimension_numbers = #tpu.dot_dimension_numbers<[1], [0], [0], [1], [0, 0, 1, 1], [], []>} : vector<16x128xbf16>, vector<128x128xbf16>, vector<16x128xf32> -> vector<16x128xf32>
    %93 = arith.addf %88, %92 : vector<16x128xf32>
    %94 = vector.extract_strided_slice %17 {offsets = [240, 0], sizes = [16, 128], strides = [1, 1]} : vector<784x128xbf16> to vector<16x128xbf16>
    %c15 = arith.constant 15 : index
    %c0_59 = arith.constant 0 : index
    %c0_60 = arith.constant 0 : index
    %95 = vector.load %arg4[%c15, %c0_59, %c0_60] : memref<49x128x128xbf16, #tpu.memory_space<vmem>>, vector<1x128x128xbf16>
    %96 = vector.shape_cast %95 : vector<1x128x128xbf16> to vector<128x128xbf16>
    %cst_61 = arith.constant dense<0.000000e+00> : vector<16x128xf32>
    %97 = tpu.matmul %94, %96, %cst_61 {dimension_numbers = #tpu.dot_dimension_numbers<[1], [0], [0], [1], [0, 0, 1, 1], [], []>} : vector<16x128xbf16>, vector<128x128xbf16>, vector<16x128xf32> -> vector<16x128xf32>
    %98 = arith.addf %93, %97 : vector<16x128xf32>
    %99 = vector.extract_strided_slice %17 {offsets = [256, 0], sizes = [16, 128], strides = [1, 1]} : vector<784x128xbf16> to vector<16x128xbf16>
    %c16 = arith.constant 16 : index
    %c0_62 = arith.constant 0 : index
    %c0_63 = arith.constant 0 : index
    %100 = vector.load %arg4[%c16, %c0_62, %c0_63] : memref<49x128x128xbf16, #tpu.memory_space<vmem>>, vector<1x128x128xbf16>
    %101 = vector.shape_cast %100 : vector<1x128x128xbf16> to vector<128x128xbf16>
    %cst_64 = arith.constant dense<0.000000e+00> : vector<16x128xf32>
    %102 = tpu.matmul %99, %101, %cst_64 {dimension_numbers = #tpu.dot_dimension_numbers<[1], [0], [0], [1], [0, 0, 1, 1], [], []>} : vector<16x128xbf16>, vector<128x128xbf16>, vector<16x128xf32> -> vector<16x128xf32>
    %103 = arith.addf %98, %102 : vector<16x128xf32>
    %104 = vector.extract_strided_slice %17 {offsets = [272, 0], sizes = [16, 128], strides = [1, 1]} : vector<784x128xbf16> to vector<16x128xbf16>
    %c17 = arith.constant 17 : index
    %c0_65 = arith.constant 0 : index
    %c0_66 = arith.constant 0 : index
    %105 = vector.load %arg4[%c17, %c0_65, %c0_66] : memref<49x128x128xbf16, #tpu.memory_space<vmem>>, vector<1x128x128xbf16>
    %106 = vector.shape_cast %105 : vector<1x128x128xbf16> to vector<128x128xbf16>
    %cst_67 = arith.constant dense<0.000000e+00> : vector<16x128xf32>
    %107 = tpu.matmul %104, %106, %cst_67 {dimension_numbers = #tpu.dot_dimension_numbers<[1], [0], [0], [1], [0, 0, 1, 1], [], []>} : vector<16x128xbf16>, vector<128x128xbf16>, vector<16x128xf32> -> vector<16x128xf32>
    %108 = arith.addf %103, %107 : vector<16x128xf32>
    %109 = vector.extract_strided_slice %17 {offsets = [288, 0], sizes = [16, 128], strides = [1, 1]} : vector<784x128xbf16> to vector<16x128xbf16>
    %c18 = arith.constant 18 : index
    %c0_68 = arith.constant 0 : index
    %c0_69 = arith.constant 0 : index
    %110 = vector.load %arg4[%c18, %c0_68, %c0_69] : memref<49x128x128xbf16, #tpu.memory_space<vmem>>, vector<1x128x128xbf16>
    %111 = vector.shape_cast %110 : vector<1x128x128xbf16> to vector<128x128xbf16>
    %cst_70 = arith.constant dense<0.000000e+00> : vector<16x128xf32>
    %112 = tpu.matmul %109, %111, %cst_70 {dimension_numbers = #tpu.dot_dimension_numbers<[1], [0], [0], [1], [0, 0, 1, 1], [], []>} : vector<16x128xbf16>, vector<128x128xbf16>, vector<16x128xf32> -> vector<16x128xf32>
    %113 = arith.addf %108, %112 : vector<16x128xf32>
    %114 = vector.extract_strided_slice %17 {offsets = [304, 0], sizes = [16, 128], strides = [1, 1]} : vector<784x128xbf16> to vector<16x128xbf16>
    %c19 = arith.constant 19 : index
    %c0_71 = arith.constant 0 : index
    %c0_72 = arith.constant 0 : index
    %115 = vector.load %arg4[%c19, %c0_71, %c0_72] : memref<49x128x128xbf16, #tpu.memory_space<vmem>>, vector<1x128x128xbf16>
    %116 = vector.shape_cast %115 : vector<1x128x128xbf16> to vector<128x128xbf16>
    %cst_73 = arith.constant dense<0.000000e+00> : vector<16x128xf32>
    %117 = tpu.matmul %114, %116, %cst_73 {dimension_numbers = #tpu.dot_dimension_numbers<[1], [0], [0], [1], [0, 0, 1, 1], [], []>} : vector<16x128xbf16>, vector<128x128xbf16>, vector<16x128xf32> -> vector<16x128xf32>
    %118 = arith.addf %113, %117 : vector<16x128xf32>
    %119 = vector.extract_strided_slice %17 {offsets = [320, 0], sizes = [16, 128], strides = [1, 1]} : vector<784x128xbf16> to vector<16x128xbf16>
    %c20 = arith.constant 20 : index
    %c0_74 = arith.constant 0 : index
    %c0_75 = arith.constant 0 : index
    %120 = vector.load %arg4[%c20, %c0_74, %c0_75] : memref<49x128x128xbf16, #tpu.memory_space<vmem>>, vector<1x128x128xbf16>
    %121 = vector.shape_cast %120 : vector<1x128x128xbf16> to vector<128x128xbf16>
    %cst_76 = arith.constant dense<0.000000e+00> : vector<16x128xf32>
    %122 = tpu.matmul %119, %121, %cst_76 {dimension_numbers = #tpu.dot_dimension_numbers<[1], [0], [0], [1], [0, 0, 1, 1], [], []>} : vector<16x128xbf16>, vector<128x128xbf16>, vector<16x128xf32> -> vector<16x128xf32>
    %123 = arith.addf %118, %122 : vector<16x128xf32>
    %124 = vector.extract_strided_slice %17 {offsets = [336, 0], sizes = [16, 128], strides = [1, 1]} : vector<784x128xbf16> to vector<16x128xbf16>
    %c21 = arith.constant 21 : index
    %c0_77 = arith.constant 0 : index
    %c0_78 = arith.constant 0 : index
    %125 = vector.load %arg4[%c21, %c0_77, %c0_78] : memref<49x128x128xbf16, #tpu.memory_space<vmem>>, vector<1x128x128xbf16>
    %126 = vector.shape_cast %125 : vector<1x128x128xbf16> to vector<128x128xbf16>
    %cst_79 = arith.constant dense<0.000000e+00> : vector<16x128xf32>
    %127 = tpu.matmul %124, %126, %cst_79 {dimension_numbers = #tpu.dot_dimension_numbers<[1], [0], [0], [1], [0, 0, 1, 1], [], []>} : vector<16x128xbf16>, vector<128x128xbf16>, vector<16x128xf32> -> vector<16x128xf32>
    %128 = arith.addf %123, %127 : vector<16x128xf32>
    %129 = vector.extract_strided_slice %17 {offsets = [352, 0], sizes = [16, 128], strides = [1, 1]} : vector<784x128xbf16> to vector<16x128xbf16>
    %c22 = arith.constant 22 : index
    %c0_80 = arith.constant 0 : index
    %c0_81 = arith.constant 0 : index
    %130 = vector.load %arg4[%c22, %c0_80, %c0_81] : memref<49x128x128xbf16, #tpu.memory_space<vmem>>, vector<1x128x128xbf16>
    %131 = vector.shape_cast %130 : vector<1x128x128xbf16> to vector<128x128xbf16>
    %cst_82 = arith.constant dense<0.000000e+00> : vector<16x128xf32>
    %132 = tpu.matmul %129, %131, %cst_82 {dimension_numbers = #tpu.dot_dimension_numbers<[1], [0], [0], [1], [0, 0, 1, 1], [], []>} : vector<16x128xbf16>, vector<128x128xbf16>, vector<16x128xf32> -> vector<16x128xf32>
    %133 = arith.addf %128, %132 : vector<16x128xf32>
    %134 = vector.extract_strided_slice %17 {offsets = [368, 0], sizes = [16, 128], strides = [1, 1]} : vector<784x128xbf16> to vector<16x128xbf16>
    %c23 = arith.constant 23 : index
    %c0_83 = arith.constant 0 : index
    %c0_84 = arith.constant 0 : index
    %135 = vector.load %arg4[%c23, %c0_83, %c0_84] : memref<49x128x128xbf16, #tpu.memory_space<vmem>>, vector<1x128x128xbf16>
    %136 = vector.shape_cast %135 : vector<1x128x128xbf16> to vector<128x128xbf16>
    %cst_85 = arith.constant dense<0.000000e+00> : vector<16x128xf32>
    %137 = tpu.matmul %134, %136, %cst_85 {dimension_numbers = #tpu.dot_dimension_numbers<[1], [0], [0], [1], [0, 0, 1, 1], [], []>} : vector<16x128xbf16>, vector<128x128xbf16>, vector<16x128xf32> -> vector<16x128xf32>
    %138 = arith.addf %133, %137 : vector<16x128xf32>
    %139 = vector.extract_strided_slice %17 {offsets = [384, 0], sizes = [16, 128], strides = [1, 1]} : vector<784x128xbf16> to vector<16x128xbf16>
    %c24 = arith.constant 24 : index
    %c0_86 = arith.constant 0 : index
    %c0_87 = arith.constant 0 : index
    %140 = vector.load %arg4[%c24, %c0_86, %c0_87] : memref<49x128x128xbf16, #tpu.memory_space<vmem>>, vector<1x128x128xbf16>
    %141 = vector.shape_cast %140 : vector<1x128x128xbf16> to vector<128x128xbf16>
    %cst_88 = arith.constant dense<0.000000e+00> : vector<16x128xf32>
    %142 = tpu.matmul %139, %141, %cst_88 {dimension_numbers = #tpu.dot_dimension_numbers<[1], [0], [0], [1], [0, 0, 1, 1], [], []>} : vector<16x128xbf16>, vector<128x128xbf16>, vector<16x128xf32> -> vector<16x128xf32>
    %143 = arith.addf %138, %142 : vector<16x128xf32>
    %144 = vector.extract_strided_slice %17 {offsets = [400, 0], sizes = [16, 128], strides = [1, 1]} : vector<784x128xbf16> to vector<16x128xbf16>
    %c25 = arith.constant 25 : index
    %c0_89 = arith.constant 0 : index
    %c0_90 = arith.constant 0 : index
    %145 = vector.load %arg4[%c25, %c0_89, %c0_90] : memref<49x128x128xbf16, #tpu.memory_space<vmem>>, vector<1x128x128xbf16>
    %146 = vector.shape_cast %145 : vector<1x128x128xbf16> to vector<128x128xbf16>
    %cst_91 = arith.constant dense<0.000000e+00> : vector<16x128xf32>
    %147 = tpu.matmul %144, %146, %cst_91 {dimension_numbers = #tpu.dot_dimension_numbers<[1], [0], [0], [1], [0, 0, 1, 1], [], []>} : vector<16x128xbf16>, vector<128x128xbf16>, vector<16x128xf32> -> vector<16x128xf32>
    %148 = arith.addf %143, %147 : vector<16x128xf32>
    %149 = vector.extract_strided_slice %17 {offsets = [416, 0], sizes = [16, 128], strides = [1, 1]} : vector<784x128xbf16> to vector<16x128xbf16>
    %c26 = arith.constant 26 : index
    %c0_92 = arith.constant 0 : index
    %c0_93 = arith.constant 0 : index
    %150 = vector.load %arg4[%c26, %c0_92, %c0_93] : memref<49x128x128xbf16, #tpu.memory_space<vmem>>, vector<1x128x128xbf16>
    %151 = vector.shape_cast %150 : vector<1x128x128xbf16> to vector<128x128xbf16>
    %cst_94 = arith.constant dense<0.000000e+00> : vector<16x128xf32>
    %152 = tpu.matmul %149, %151, %cst_94 {dimension_numbers = #tpu.dot_dimension_numbers<[1], [0], [0], [1], [0, 0, 1, 1], [], []>} : vector<16x128xbf16>, vector<128x128xbf16>, vector<16x128xf32> -> vector<16x128xf32>
    %153 = arith.addf %148, %152 : vector<16x128xf32>
    %154 = vector.extract_strided_slice %17 {offsets = [432, 0], sizes = [16, 128], strides = [1, 1]} : vector<784x128xbf16> to vector<16x128xbf16>
    %c27 = arith.constant 27 : index
    %c0_95 = arith.constant 0 : index
    %c0_96 = arith.constant 0 : index
    %155 = vector.load %arg4[%c27, %c0_95, %c0_96] : memref<49x128x128xbf16, #tpu.memory_space<vmem>>, vector<1x128x128xbf16>
    %156 = vector.shape_cast %155 : vector<1x128x128xbf16> to vector<128x128xbf16>
    %cst_97 = arith.constant dense<0.000000e+00> : vector<16x128xf32>
    %157 = tpu.matmul %154, %156, %cst_97 {dimension_numbers = #tpu.dot_dimension_numbers<[1], [0], [0], [1], [0, 0, 1, 1], [], []>} : vector<16x128xbf16>, vector<128x128xbf16>, vector<16x128xf32> -> vector<16x128xf32>
    %158 = arith.addf %153, %157 : vector<16x128xf32>
    %159 = vector.extract_strided_slice %17 {offsets = [448, 0], sizes = [16, 128], strides = [1, 1]} : vector<784x128xbf16> to vector<16x128xbf16>
    %c28 = arith.constant 28 : index
    %c0_98 = arith.constant 0 : index
    %c0_99 = arith.constant 0 : index
    %160 = vector.load %arg4[%c28, %c0_98, %c0_99] : memref<49x128x128xbf16, #tpu.memory_space<vmem>>, vector<1x128x128xbf16>
    %161 = vector.shape_cast %160 : vector<1x128x128xbf16> to vector<128x128xbf16>
    %cst_100 = arith.constant dense<0.000000e+00> : vector<16x128xf32>
    %162 = tpu.matmul %159, %161, %cst_100 {dimension_numbers = #tpu.dot_dimension_numbers<[1], [0], [0], [1], [0, 0, 1, 1], [], []>} : vector<16x128xbf16>, vector<128x128xbf16>, vector<16x128xf32> -> vector<16x128xf32>
    %163 = arith.addf %158, %162 : vector<16x128xf32>
    %164 = vector.extract_strided_slice %17 {offsets = [464, 0], sizes = [16, 128], strides = [1, 1]} : vector<784x128xbf16> to vector<16x128xbf16>
    %c29 = arith.constant 29 : index
    %c0_101 = arith.constant 0 : index
    %c0_102 = arith.constant 0 : index
    %165 = vector.load %arg4[%c29, %c0_101, %c0_102] : memref<49x128x128xbf16, #tpu.memory_space<vmem>>, vector<1x128x128xbf16>
    %166 = vector.shape_cast %165 : vector<1x128x128xbf16> to vector<128x128xbf16>
    %cst_103 = arith.constant dense<0.000000e+00> : vector<16x128xf32>
    %167 = tpu.matmul %164, %166, %cst_103 {dimension_numbers = #tpu.dot_dimension_numbers<[1], [0], [0], [1], [0, 0, 1, 1], [], []>} : vector<16x128xbf16>, vector<128x128xbf16>, vector<16x128xf32> -> vector<16x128xf32>
    %168 = arith.addf %163, %167 : vector<16x128xf32>
    %169 = vector.extract_strided_slice %17 {offsets = [480, 0], sizes = [16, 128], strides = [1, 1]} : vector<784x128xbf16> to vector<16x128xbf16>
    %c30 = arith.constant 30 : index
    %c0_104 = arith.constant 0 : index
    %c0_105 = arith.constant 0 : index
    %170 = vector.load %arg4[%c30, %c0_104, %c0_105] : memref<49x128x128xbf16, #tpu.memory_space<vmem>>, vector<1x128x128xbf16>
    %171 = vector.shape_cast %170 : vector<1x128x128xbf16> to vector<128x128xbf16>
    %cst_106 = arith.constant dense<0.000000e+00> : vector<16x128xf32>
    %172 = tpu.matmul %169, %171, %cst_106 {dimension_numbers = #tpu.dot_dimension_numbers<[1], [0], [0], [1], [0, 0, 1, 1], [], []>} : vector<16x128xbf16>, vector<128x128xbf16>, vector<16x128xf32> -> vector<16x128xf32>
    %173 = arith.addf %168, %172 : vector<16x128xf32>
    %174 = vector.extract_strided_slice %17 {offsets = [496, 0], sizes = [16, 128], strides = [1, 1]} : vector<784x128xbf16> to vector<16x128xbf16>
    %c31 = arith.constant 31 : index
    %c0_107 = arith.constant 0 : index
    %c0_108 = arith.constant 0 : index
    %175 = vector.load %arg4[%c31, %c0_107, %c0_108] : memref<49x128x128xbf16, #tpu.memory_space<vmem>>, vector<1x128x128xbf16>
    %176 = vector.shape_cast %175 : vector<1x128x128xbf16> to vector<128x128xbf16>
    %cst_109 = arith.constant dense<0.000000e+00> : vector<16x128xf32>
    %177 = tpu.matmul %174, %176, %cst_109 {dimension_numbers = #tpu.dot_dimension_numbers<[1], [0], [0], [1], [0, 0, 1, 1], [], []>} : vector<16x128xbf16>, vector<128x128xbf16>, vector<16x128xf32> -> vector<16x128xf32>
    %178 = arith.addf %173, %177 : vector<16x128xf32>
    %179 = vector.extract_strided_slice %17 {offsets = [512, 0], sizes = [16, 128], strides = [1, 1]} : vector<784x128xbf16> to vector<16x128xbf16>
    %c32 = arith.constant 32 : index
    %c0_110 = arith.constant 0 : index
    %c0_111 = arith.constant 0 : index
    %180 = vector.load %arg4[%c32, %c0_110, %c0_111] : memref<49x128x128xbf16, #tpu.memory_space<vmem>>, vector<1x128x128xbf16>
    %181 = vector.shape_cast %180 : vector<1x128x128xbf16> to vector<128x128xbf16>
    %cst_112 = arith.constant dense<0.000000e+00> : vector<16x128xf32>
    %182 = tpu.matmul %179, %181, %cst_112 {dimension_numbers = #tpu.dot_dimension_numbers<[1], [0], [0], [1], [0, 0, 1, 1], [], []>} : vector<16x128xbf16>, vector<128x128xbf16>, vector<16x128xf32> -> vector<16x128xf32>
    %183 = arith.addf %178, %182 : vector<16x128xf32>
    %184 = vector.extract_strided_slice %17 {offsets = [528, 0], sizes = [16, 128], strides = [1, 1]} : vector<784x128xbf16> to vector<16x128xbf16>
    %c33 = arith.constant 33 : index
    %c0_113 = arith.constant 0 : index
    %c0_114 = arith.constant 0 : index
    %185 = vector.load %arg4[%c33, %c0_113, %c0_114] : memref<49x128x128xbf16, #tpu.memory_space<vmem>>, vector<1x128x128xbf16>
    %186 = vector.shape_cast %185 : vector<1x128x128xbf16> to vector<128x128xbf16>
    %cst_115 = arith.constant dense<0.000000e+00> : vector<16x128xf32>
    %187 = tpu.matmul %184, %186, %cst_115 {dimension_numbers = #tpu.dot_dimension_numbers<[1], [0], [0], [1], [0, 0, 1, 1], [], []>} : vector<16x128xbf16>, vector<128x128xbf16>, vector<16x128xf32> -> vector<16x128xf32>
    %188 = arith.addf %183, %187 : vector<16x128xf32>
    %189 = vector.extract_strided_slice %17 {offsets = [544, 0], sizes = [16, 128], strides = [1, 1]} : vector<784x128xbf16> to vector<16x128xbf16>
    %c34 = arith.constant 34 : index
    %c0_116 = arith.constant 0 : index
    %c0_117 = arith.constant 0 : index
    %190 = vector.load %arg4[%c34, %c0_116, %c0_117] : memref<49x128x128xbf16, #tpu.memory_space<vmem>>, vector<1x128x128xbf16>
    %191 = vector.shape_cast %190 : vector<1x128x128xbf16> to vector<128x128xbf16>
    %cst_118 = arith.constant dense<0.000000e+00> : vector<16x128xf32>
    %192 = tpu.matmul %189, %191, %cst_118 {dimension_numbers = #tpu.dot_dimension_numbers<[1], [0], [0], [1], [0, 0, 1, 1], [], []>} : vector<16x128xbf16>, vector<128x128xbf16>, vector<16x128xf32> -> vector<16x128xf32>
    %193 = arith.addf %188, %192 : vector<16x128xf32>
    %194 = vector.extract_strided_slice %17 {offsets = [560, 0], sizes = [16, 128], strides = [1, 1]} : vector<784x128xbf16> to vector<16x128xbf16>
    %c35 = arith.constant 35 : index
    %c0_119 = arith.constant 0 : index
    %c0_120 = arith.constant 0 : index
    %195 = vector.load %arg4[%c35, %c0_119, %c0_120] : memref<49x128x128xbf16, #tpu.memory_space<vmem>>, vector<1x128x128xbf16>
    %196 = vector.shape_cast %195 : vector<1x128x128xbf16> to vector<128x128xbf16>
    %cst_121 = arith.constant dense<0.000000e+00> : vector<16x128xf32>
    %197 = tpu.matmul %194, %196, %cst_121 {dimension_numbers = #tpu.dot_dimension_numbers<[1], [0], [0], [1], [0, 0, 1, 1], [], []>} : vector<16x128xbf16>, vector<128x128xbf16>, vector<16x128xf32> -> vector<16x128xf32>
    %198 = arith.addf %193, %197 : vector<16x128xf32>
    %199 = vector.extract_strided_slice %17 {offsets = [576, 0], sizes = [16, 128], strides = [1, 1]} : vector<784x128xbf16> to vector<16x128xbf16>
    %c36 = arith.constant 36 : index
    %c0_122 = arith.constant 0 : index
    %c0_123 = arith.constant 0 : index
    %200 = vector.load %arg4[%c36, %c0_122, %c0_123] : memref<49x128x128xbf16, #tpu.memory_space<vmem>>, vector<1x128x128xbf16>
    %201 = vector.shape_cast %200 : vector<1x128x128xbf16> to vector<128x128xbf16>
    %cst_124 = arith.constant dense<0.000000e+00> : vector<16x128xf32>
    %202 = tpu.matmul %199, %201, %cst_124 {dimension_numbers = #tpu.dot_dimension_numbers<[1], [0], [0], [1], [0, 0, 1, 1], [], []>} : vector<16x128xbf16>, vector<128x128xbf16>, vector<16x128xf32> -> vector<16x128xf32>
    %203 = arith.addf %198, %202 : vector<16x128xf32>
    %204 = vector.extract_strided_slice %17 {offsets = [592, 0], sizes = [16, 128], strides = [1, 1]} : vector<784x128xbf16> to vector<16x128xbf16>
    %c37 = arith.constant 37 : index
    %c0_125 = arith.constant 0 : index
    %c0_126 = arith.constant 0 : index
    %205 = vector.load %arg4[%c37, %c0_125, %c0_126] : memref<49x128x128xbf16, #tpu.memory_space<vmem>>, vector<1x128x128xbf16>
    %206 = vector.shape_cast %205 : vector<1x128x128xbf16> to vector<128x128xbf16>
    %cst_127 = arith.constant dense<0.000000e+00> : vector<16x128xf32>
    %207 = tpu.matmul %204, %206, %cst_127 {dimension_numbers = #tpu.dot_dimension_numbers<[1], [0], [0], [1], [0, 0, 1, 1], [], []>} : vector<16x128xbf16>, vector<128x128xbf16>, vector<16x128xf32> -> vector<16x128xf32>
    %208 = arith.addf %203, %207 : vector<16x128xf32>
    %209 = vector.extract_strided_slice %17 {offsets = [608, 0], sizes = [16, 128], strides = [1, 1]} : vector<784x128xbf16> to vector<16x128xbf16>
    %c38 = arith.constant 38 : index
    %c0_128 = arith.constant 0 : index
    %c0_129 = arith.constant 0 : index
    %210 = vector.load %arg4[%c38, %c0_128, %c0_129] : memref<49x128x128xbf16, #tpu.memory_space<vmem>>, vector<1x128x128xbf16>
    %211 = vector.shape_cast %210 : vector<1x128x128xbf16> to vector<128x128xbf16>
    %cst_130 = arith.constant dense<0.000000e+00> : vector<16x128xf32>
    %212 = tpu.matmul %209, %211, %cst_130 {dimension_numbers = #tpu.dot_dimension_numbers<[1], [0], [0], [1], [0, 0, 1, 1], [], []>} : vector<16x128xbf16>, vector<128x128xbf16>, vector<16x128xf32> -> vector<16x128xf32>
    %213 = arith.addf %208, %212 : vector<16x128xf32>
    %214 = vector.extract_strided_slice %17 {offsets = [624, 0], sizes = [16, 128], strides = [1, 1]} : vector<784x128xbf16> to vector<16x128xbf16>
    %c39 = arith.constant 39 : index
    %c0_131 = arith.constant 0 : index
    %c0_132 = arith.constant 0 : index
    %215 = vector.load %arg4[%c39, %c0_131, %c0_132] : memref<49x128x128xbf16, #tpu.memory_space<vmem>>, vector<1x128x128xbf16>
    %216 = vector.shape_cast %215 : vector<1x128x128xbf16> to vector<128x128xbf16>
    %cst_133 = arith.constant dense<0.000000e+00> : vector<16x128xf32>
    %217 = tpu.matmul %214, %216, %cst_133 {dimension_numbers = #tpu.dot_dimension_numbers<[1], [0], [0], [1], [0, 0, 1, 1], [], []>} : vector<16x128xbf16>, vector<128x128xbf16>, vector<16x128xf32> -> vector<16x128xf32>
    %218 = arith.addf %213, %217 : vector<16x128xf32>
    %219 = vector.extract_strided_slice %17 {offsets = [640, 0], sizes = [16, 128], strides = [1, 1]} : vector<784x128xbf16> to vector<16x128xbf16>
    %c40 = arith.constant 40 : index
    %c0_134 = arith.constant 0 : index
    %c0_135 = arith.constant 0 : index
    %220 = vector.load %arg4[%c40, %c0_134, %c0_135] : memref<49x128x128xbf16, #tpu.memory_space<vmem>>, vector<1x128x128xbf16>
    %221 = vector.shape_cast %220 : vector<1x128x128xbf16> to vector<128x128xbf16>
    %cst_136 = arith.constant dense<0.000000e+00> : vector<16x128xf32>
    %222 = tpu.matmul %219, %221, %cst_136 {dimension_numbers = #tpu.dot_dimension_numbers<[1], [0], [0], [1], [0, 0, 1, 1], [], []>} : vector<16x128xbf16>, vector<128x128xbf16>, vector<16x128xf32> -> vector<16x128xf32>
    %223 = arith.addf %218, %222 : vector<16x128xf32>
    %224 = vector.extract_strided_slice %17 {offsets = [656, 0], sizes = [16, 128], strides = [1, 1]} : vector<784x128xbf16> to vector<16x128xbf16>
    %c41 = arith.constant 41 : index
    %c0_137 = arith.constant 0 : index
    %c0_138 = arith.constant 0 : index
    %225 = vector.load %arg4[%c41, %c0_137, %c0_138] : memref<49x128x128xbf16, #tpu.memory_space<vmem>>, vector<1x128x128xbf16>
    %226 = vector.shape_cast %225 : vector<1x128x128xbf16> to vector<128x128xbf16>
    %cst_139 = arith.constant dense<0.000000e+00> : vector<16x128xf32>
    %227 = tpu.matmul %224, %226, %cst_139 {dimension_numbers = #tpu.dot_dimension_numbers<[1], [0], [0], [1], [0, 0, 1, 1], [], []>} : vector<16x128xbf16>, vector<128x128xbf16>, vector<16x128xf32> -> vector<16x128xf32>
    %228 = arith.addf %223, %227 : vector<16x128xf32>
    %229 = vector.extract_strided_slice %17 {offsets = [672, 0], sizes = [16, 128], strides = [1, 1]} : vector<784x128xbf16> to vector<16x128xbf16>
    %c42 = arith.constant 42 : index
    %c0_140 = arith.constant 0 : index
    %c0_141 = arith.constant 0 : index
    %230 = vector.load %arg4[%c42, %c0_140, %c0_141] : memref<49x128x128xbf16, #tpu.memory_space<vmem>>, vector<1x128x128xbf16>
    %231 = vector.shape_cast %230 : vector<1x128x128xbf16> to vector<128x128xbf16>
    %cst_142 = arith.constant dense<0.000000e+00> : vector<16x128xf32>
    %232 = tpu.matmul %229, %231, %cst_142 {dimension_numbers = #tpu.dot_dimension_numbers<[1], [0], [0], [1], [0, 0, 1, 1], [], []>} : vector<16x128xbf16>, vector<128x128xbf16>, vector<16x128xf32> -> vector<16x128xf32>
    %233 = arith.addf %228, %232 : vector<16x128xf32>
    %234 = vector.extract_strided_slice %17 {offsets = [688, 0], sizes = [16, 128], strides = [1, 1]} : vector<784x128xbf16> to vector<16x128xbf16>
    %c43 = arith.constant 43 : index
    %c0_143 = arith.constant 0 : index
    %c0_144 = arith.constant 0 : index
    %235 = vector.load %arg4[%c43, %c0_143, %c0_144] : memref<49x128x128xbf16, #tpu.memory_space<vmem>>, vector<1x128x128xbf16>
    %236 = vector.shape_cast %235 : vector<1x128x128xbf16> to vector<128x128xbf16>
    %cst_145 = arith.constant dense<0.000000e+00> : vector<16x128xf32>
    %237 = tpu.matmul %234, %236, %cst_145 {dimension_numbers = #tpu.dot_dimension_numbers<[1], [0], [0], [1], [0, 0, 1, 1], [], []>} : vector<16x128xbf16>, vector<128x128xbf16>, vector<16x128xf32> -> vector<16x128xf32>
    %238 = arith.addf %233, %237 : vector<16x128xf32>
    %239 = vector.extract_strided_slice %17 {offsets = [704, 0], sizes = [16, 128], strides = [1, 1]} : vector<784x128xbf16> to vector<16x128xbf16>
    %c44 = arith.constant 44 : index
    %c0_146 = arith.constant 0 : index
    %c0_147 = arith.constant 0 : index
    %240 = vector.load %arg4[%c44, %c0_146, %c0_147] : memref<49x128x128xbf16, #tpu.memory_space<vmem>>, vector<1x128x128xbf16>
    %241 = vector.shape_cast %240 : vector<1x128x128xbf16> to vector<128x128xbf16>
    %cst_148 = arith.constant dense<0.000000e+00> : vector<16x128xf32>
    %242 = tpu.matmul %239, %241, %cst_148 {dimension_numbers = #tpu.dot_dimension_numbers<[1], [0], [0], [1], [0, 0, 1, 1], [], []>} : vector<16x128xbf16>, vector<128x128xbf16>, vector<16x128xf32> -> vector<16x128xf32>
    %243 = arith.addf %238, %242 : vector<16x128xf32>
    %244 = vector.extract_strided_slice %17 {offsets = [720, 0], sizes = [16, 128], strides = [1, 1]} : vector<784x128xbf16> to vector<16x128xbf16>
    %c45 = arith.constant 45 : index
    %c0_149 = arith.constant 0 : index
    %c0_150 = arith.constant 0 : index
    %245 = vector.load %arg4[%c45, %c0_149, %c0_150] : memref<49x128x128xbf16, #tpu.memory_space<vmem>>, vector<1x128x128xbf16>
    %246 = vector.shape_cast %245 : vector<1x128x128xbf16> to vector<128x128xbf16>
    %cst_151 = arith.constant dense<0.000000e+00> : vector<16x128xf32>
    %247 = tpu.matmul %244, %246, %cst_151 {dimension_numbers = #tpu.dot_dimension_numbers<[1], [0], [0], [1], [0, 0, 1, 1], [], []>} : vector<16x128xbf16>, vector<128x128xbf16>, vector<16x128xf32> -> vector<16x128xf32>
    %248 = arith.addf %243, %247 : vector<16x128xf32>
    %249 = vector.extract_strided_slice %17 {offsets = [736, 0], sizes = [16, 128], strides = [1, 1]} : vector<784x128xbf16> to vector<16x128xbf16>
    %c46 = arith.constant 46 : index
    %c0_152 = arith.constant 0 : index
    %c0_153 = arith.constant 0 : index
    %250 = vector.load %arg4[%c46, %c0_152, %c0_153] : memref<49x128x128xbf16, #tpu.memory_space<vmem>>, vector<1x128x128xbf16>
    %251 = vector.shape_cast %250 : vector<1x128x128xbf16> to vector<128x128xbf16>
    %cst_154 = arith.constant dense<0.000000e+00> : vector<16x128xf32>
    %252 = tpu.matmul %249, %251, %cst_154 {dimension_numbers = #tpu.dot_dimension_numbers<[1], [0], [0], [1], [0, 0, 1, 1], [], []>} : vector<16x128xbf16>, vector<128x128xbf16>, vector<16x128xf32> -> vector<16x128xf32>
    %253 = arith.addf %248, %252 : vector<16x128xf32>
    %254 = vector.extract_strided_slice %17 {offsets = [752, 0], sizes = [16, 128], strides = [1, 1]} : vector<784x128xbf16> to vector<16x128xbf16>
    %c47 = arith.constant 47 : index
    %c0_155 = arith.constant 0 : index
    %c0_156 = arith.constant 0 : index
    %255 = vector.load %arg4[%c47, %c0_155, %c0_156] : memref<49x128x128xbf16, #tpu.memory_space<vmem>>, vector<1x128x128xbf16>
    %256 = vector.shape_cast %255 : vector<1x128x128xbf16> to vector<128x128xbf16>
    %cst_157 = arith.constant dense<0.000000e+00> : vector<16x128xf32>
    %257 = tpu.matmul %254, %256, %cst_157 {dimension_numbers = #tpu.dot_dimension_numbers<[1], [0], [0], [1], [0, 0, 1, 1], [], []>} : vector<16x128xbf16>, vector<128x128xbf16>, vector<16x128xf32> -> vector<16x128xf32>
    %258 = arith.addf %253, %257 : vector<16x128xf32>
    %259 = vector.extract_strided_slice %17 {offsets = [768, 0], sizes = [16, 128], strides = [1, 1]} : vector<784x128xbf16> to vector<16x128xbf16>
    %c48 = arith.constant 48 : index
    %c0_158 = arith.constant 0 : index
    %c0_159 = arith.constant 0 : index
    %260 = vector.load %arg4[%c48, %c0_158, %c0_159] : memref<49x128x128xbf16, #tpu.memory_space<vmem>>, vector<1x128x128xbf16>
    %261 = vector.shape_cast %260 : vector<1x128x128xbf16> to vector<128x128xbf16>
    %cst_160 = arith.constant dense<0.000000e+00> : vector<16x128xf32>
    %262 = tpu.matmul %259, %261, %cst_160 {dimension_numbers = #tpu.dot_dimension_numbers<[1], [0], [0], [1], [0, 0, 1, 1], [], []>} : vector<16x128xbf16>, vector<128x128xbf16>, vector<16x128xf32> -> vector<16x128xf32>
    %263 = arith.addf %258, %262 : vector<16x128xf32>
    %c0_161 = arith.constant 0 : index
    %c0_162 = arith.constant 0 : index
    %264 = vector.load %arg5[%c0_161, %c0_162] : memref<1x128xf32, #tpu.memory_space<vmem>>, vector<1x128xf32>
    %265 = vector.broadcast %264 : vector<1x128xf32> to vector<16x128xf32>
    %266 = arith.addf %263, %265 : vector<16x128xf32>
    %cst_163 = arith.constant 0.000000e+00 : f32
    %267 = vector.broadcast %cst_163 : f32 to vector<16x128xf32>
    %268 = arith.maximumf %266, %267 : vector<16x128xf32>
    %269 = arith.truncf %268 : vector<16x128xf32> to vector<16x128xbf16>
    %c0_164 = arith.constant 0 : index
    %c0_165 = arith.constant 0 : index
    %270 = vector.load %arg6[%c0_164, %c0_165] : memref<128x128xbf16, #tpu.memory_space<vmem>>, vector<128x128xbf16>
    %cst_166 = arith.constant dense<0.000000e+00> : vector<16x128xf32>
    %271 = tpu.matmul %269, %270, %cst_166 {dimension_numbers = #tpu.dot_dimension_numbers<[1], [0], [0], [1], [0, 0, 1, 1], [], []>} : vector<16x128xbf16>, vector<128x128xbf16>, vector<16x128xf32> -> vector<16x128xf32>
    %c0_167 = arith.constant 0 : index
    %c0_168 = arith.constant 0 : index
    %272 = vector.load %arg7[%c0_167, %c0_168] : memref<1x128xf32, #tpu.memory_space<vmem>>, vector<1x128xf32>
    %273 = vector.broadcast %272 : vector<1x128xf32> to vector<16x128xf32>
    %274 = arith.addf %271, %273 : vector<16x128xf32>
    %c0_169 = arith.constant 0 : index
    %c0_170 = arith.constant 0 : index
    %275 = vector.load %arg8[%c0_169, %c0_170] : memref<16x128xf32, #tpu.memory_space<vmem>>, vector<16x128xf32>
    tpu.vector_store %arg8[%c0_169, %c0_170], %274 {strides = array<i32>} : memref<16x128xf32, #tpu.memory_space<vmem>>, vector<16x128xf32>,
    return
  }
  func.func @transform_0(%arg0: i32) -> (i32, i32) {
    %c0_i32 = arith.constant 0 : i32
    %c0_i32_0 = arith.constant 0 : i32
    return %arg0, %c0_i32 : i32, i32
  }
  func.func @transform_1(%arg0: i32) -> (i32, i32) {
    %c0_i32 = arith.constant 0 : i32
    %c0_i32_0 = arith.constant 0 : i32
    %c0_i32_1 = arith.constant 0 : i32
    return %c0_i32, %c0_i32_0 : i32, i32
  }
  func.func @transform_2(%arg0: i32) -> (i32, i32) {
    %c0_i32 = arith.constant 0 : i32
    %c0_i32_0 = arith.constant 0 : i32
    %c0_i32_1 = arith.constant 0 : i32
    return %c0_i32, %c0_i32_0 : i32, i32
  }
  func.func @transform_3(%arg0: i32) -> (i32, i32, i32) {
    %c0_i32 = arith.constant 0 : i32
    %c0_i32_0 = arith.constant 0 : i32
    %c0_i32_1 = arith.constant 0 : i32
    %c0_i32_2 = arith.constant 0 : i32
    return %c0_i32, %c0_i32_0, %c0_i32_1 : i32, i32, i32
  }
  func.func @transform_4(%arg0: i32) -> (i32, i32) {
    %c0_i32 = arith.constant 0 : i32
    %c0_i32_0 = arith.constant 0 : i32
    %c0_i32_1 = arith.constant 0 : i32
    return %c0_i32, %c0_i32_0 : i32, i32
  }
  func.func @transform_5(%arg0: i32) -> (i32, i32) {
    %c0_i32 = arith.constant 0 : i32
    %c0_i32_0 = arith.constant 0 : i32
    %c0_i32_1 = arith.constant 0 : i32
    return %c0_i32, %c0_i32_0 : i32, i32
  }
  func.func @transform_6(%arg0: i32) -> (i32, i32) {
    %c0_i32 = arith.constant 0 : i32
    %c0_i32_0 = arith.constant 0 : i32
    %c0_i32_1 = arith.constant 0 : i32
    return %c0_i32, %c0_i32_0 : i32, i32
  }
  func.func @transform_7(%arg0: i32) -> (i32, i32) {
    %c0_i32 = arith.constant 0 : i32
    %c0_i32_0 = arith.constant 0 : i32
    return %arg0, %c0_i32 : i32, i32
  }
}

</mosaic_0001>

<llo_original>
// kernel: fashion_cnn_forward.1
$region0: #{fashion_cnn_forward.1}
  #allocation0 [shape = 'u32[]', space=smem, size = 0x4, offset = 0x4, fixed_abs, tag = 'smem constant byte address 0x4 - core index']
  #allocation1 [shape = 'u32[144,128]{1,0:T(1,128)}', space=vmem, size = 0x12000, scoped, tag = 'internal scratch']
  %s0 = inlined_call_operand.vmem [shape: bf16[6272,36], index: 0, kind: input, shape index: {}]
  %s1 = inlined_call_operand.vmem [shape: bf16[36,128], index: 1, kind: input, shape index: {}]
  %s2 = inlined_call_operand.vmem [shape: f32[1,128], index: 2, kind: input, shape index: {}]
  %s3 = inlined_call_operand.vmem [shape: bf16[49,128,128], index: 3, kind: input, shape index: {}]
  %s4 = inlined_call_operand.vmem [shape: f32[1,128], index: 4, kind: input, shape index: {}]
  %s5 = inlined_call_operand.vmem [shape: bf16[128,128], index: 5, kind: input, shape index: {}]
  %s6 = inlined_call_operand.vmem [shape: f32[1,128], index: 6, kind: input, shape index: {}]
  %s7 = inlined_call_operand.vmem [shape: f32[32,128], index: 7, kind: output, shape index: {}]
  %s8 = sld [smem:[#allocation0]]
  $region61: #{fashion_cnn_forward.1} parent=0
    _
  %s10 = ssub.s32 1, %s8
  %s11 = scalar_select 0, %s10, %s8
  loop: start=0, step=1, limit=4
  $region2: #{fashion_cnn_forward.1} parent=0 // loop_pre_header
    _
  $region3: #{fashion_cnn_forward.1} parent=0 // loop_header
    %s13 = sphi 0, %s17
    %p14 = scmp.ge.s32.totalorder %s13, 4
    %s23 = sphi 0, %s25
    %s26 = sphi 0, %s23
    %s27 = sphi 0, %s26
    %s43 = sphi 0, %s27
    %s47 = sphi 0, %s47
    %s49 = sphi 0, %s47
    %s50 = sphi 0, %s49
    %s64 = sphi 0, %s50
    %s68 = sphi 0, %s68
    %s70 = sphi 0, %s68
    %s71 = sphi 0, %s70
    %s85 = sphi 0, %s71
    %s89 = sphi 0, %s89
    %s91 = sphi 0, %s89
    %s92 = sphi 0, %s91
    %s106 = sphi 0, %s92
    %s110 = sphi 0, %s110
    %s112 = sphi 0, %s110
    %s113 = sphi 0, %s112
    %s127 = sphi 0, %s113
    %s131 = sphi 0, %s131
    %s133 = sphi 0, %s131
    %s134 = sphi 0, %s133
    %s148 = sphi 0, %s134
    %s152 = sphi 0, %s152
    %s154 = sphi 0, %s152
    %s155 = sphi 0, %s154
    %s169 = sphi 0, %s155
    %s175 = sphi 0, %s177
    %s178 = sphi 0, %s175
    %s179 = sphi 0, %s178
    %s195 = sphi 0, %s179
  $region4: #{fashion_cnn_forward.1} parent=0 // loop_header_branch
    %16 = sbr.rel (%p14) target = $region8
  $region5: #{fashion_cnn_forward.1} parent=0 // loop_body
    %s18 = ssub.s32 %s13, 1
    %s19 = ssub.s32 %s13, 2
    %s20 = sadd.s32 %s13, 1
    %s21 = ssub.s32 %s13, %s20
    %p22 = scmp.eq.s32.totalorder %s21, 0
    %s24 = sadd.s32 %s23, 1
    %s25 = scalar_select %p22, %s23, %s24
    %p28 = pneg %p22
    %p29 = scmp.eq.s32.totalorder %s13, 1
    %p30 = por %p28, %p29
    %p31 = scmp.ne.s32.totalorder %s23, %s26
    %p32 = scmp.eq.s32.totalorder %s13, 0
    %p33 = por %p31, %p32
    %p34 = scmp.ne.s32.totalorder %s23, %s26
    %p35 = scmp.eq.s32.totalorder %s18, 1
    %p36 = por %p34, %p35
    %p37 = scmp.ne.s32.totalorder %s26, %s27
    %p38 = scmp.eq.s32.totalorder %s18, 0
    %p39 = por %p37, %p38
    %p40 = scmp.ne.s32.totalorder %s26, %s27
    %p41 = scmp.eq.s32.totalorder %s19, 1
    %p42 = por %p40, %p41
    %p44 = scmp.ne.s32.totalorder %s27, %s43
    %p45 = scmp.eq.s32.totalorder %s19, 0
    %p46 = por %p44, %p45
    %s48 = sadd.s32 %s47, 1
    %p51 = scmp.eq.s32.totalorder %s13, 1
    %p52 = scmp.ne.s32.totalorder %s47, %s49
    %p53 = scmp.eq.s32.totalorder %s13, 0
    %p54 = por %p52, %p53
    %p55 = scmp.ne.s32.totalorder %s47, %s49
    %p56 = scmp.eq.s32.totalorder %s18, 1
    %p57 = por %p55, %p56
    %p58 = scmp.ne.s32.totalorder %s49, %s50
    %p59 = scmp.eq.s32.totalorder %s18, 0
    %p60 = por %p58, %p59
    %p61 = scmp.ne.s32.totalorder %s49, %s50
    %p62 = scmp.eq.s32.totalorder %s19, 1
    %p63 = por %p61, %p62
    %p65 = scmp.ne.s32.totalorder %s50, %s64
    %p66 = scmp.eq.s32.totalorder %s19, 0
    %p67 = por %p65, %p66
    %s69 = sadd.s32 %s68, 1
    %p72 = scmp.eq.s32.totalorder %s13, 1
    %p73 = scmp.ne.s32.totalorder %s68, %s70
    %p74 = scmp.eq.s32.totalorder %s13, 0
    %p75 = por %p73, %p74
    %p76 = scmp.ne.s32.totalorder %s68, %s70
    %p77 = scmp.eq.s32.totalorder %s18, 1
    %p78 = por %p76, %p77
    %p79 = scmp.ne.s32.totalorder %s70, %s71
    %p80 = scmp.eq.s32.totalorder %s18, 0
    %p81 = por %p79, %p80
    %p82 = scmp.ne.s32.totalorder %s70, %s71
    %p83 = scmp.eq.s32.totalorder %s19, 1
    %p84 = por %p82, %p83
    %p86 = scmp.ne.s32.totalorder %s71, %s85
    %p87 = scmp.eq.s32.totalorder %s19, 0
    %p88 = por %p86, %p87
    %s90 = sadd.s32 %s89, 1
    %p93 = scmp.eq.s32.totalorder %s13, 1
    %p94 = scmp.ne.s32.totalorder %s89, %s91
    %p95 = scmp.eq.s32.totalorder %s13, 0
    %p96 = por %p94, %p95
    %p97 = scmp.ne.s32.totalorder %s89, %s91
    %p98 = scmp.eq.s32.totalorder %s18, 1
    %p99 = por %p97, %p98
    %p100 = scmp.ne.s32.totalorder %s91, %s92
    %p101 = scmp.eq.s32.totalorder %s18, 0
    %p102 = por %p100, %p101
    %p103 = scmp.ne.s32.totalorder %s91, %s92
    %p104 = scmp.eq.s32.totalorder %s19, 1
    %p105 = por %p103, %p104
    %p107 = scmp.ne.s32.totalorder %s92, %s106
    %p108 = scmp.eq.s32.totalorder %s19, 0
    %p109 = por %p107, %p108
    %s111 = sadd.s32 %s110, 1
    %p114 = scmp.eq.s32.totalorder %s13, 1
    %p115 = scmp.ne.s32.totalorder %s110, %s112
    %p116 = scmp.eq.s32.totalorder %s13, 0
    %p117 = por %p115, %p116
    %p118 = scmp.ne.s32.totalorder %s110, %s112
    %p119 = scmp.eq.s32.totalorder %s18, 1
    %p120 = por %p118, %p119
    %p121 = scmp.ne.s32.totalorder %s112, %s113
    %p122 = scmp.eq.s32.totalorder %s18, 0
    %p123 = por %p121, %p122
    %p124 = scmp.ne.s32.totalorder %s112, %s113
    %p125 = scmp.eq.s32.totalorder %s19, 1
    %p126 = por %p124, %p125
    %p128 = scmp.ne.s32.totalorder %s113, %s127
    %p129 = scmp.eq.s32.totalorder %s19, 0
    %p130 = por %p128, %p129
    %s132 = sadd.s32 %s131, 1
    %p135 = scmp.eq.s32.totalorder %s13, 1
    %p136 = scmp.ne.s32.totalorder %s131, %s133
    %p137 = scmp.eq.s32.totalorder %s13, 0
    %p138 = por %p136, %p137
    %p139 = scmp.ne.s32.totalorder %s131, %s133
    %p140 = scmp.eq.s32.totalorder %s18, 1
    %p141 = por %p139, %p140
    %p142 = scmp.ne.s32.totalorder %s133, %s134
    %p143 = scmp.eq.s32.totalorder %s18, 0
    %p144 = por %p142, %p143
    %p145 = scmp.ne.s32.totalorder %s133, %s134
    %p146 = scmp.eq.s32.totalorder %s19, 1
    %p147 = por %p145, %p146
    %p149 = scmp.ne.s32.totalorder %s134, %s148
    %p150 = scmp.eq.s32.totalorder %s19, 0
    %p151 = por %p149, %p150
    %s153 = sadd.s32 %s152, 1
    %p156 = scmp.eq.s32.totalorder %s13, 1
    %p157 = scmp.ne.s32.totalorder %s152, %s154
    %p158 = scmp.eq.s32.totalorder %s13, 0
    %p159 = por %p157, %p158
    %p160 = scmp.ne.s32.totalorder %s152, %s154
    %p161 = scmp.eq.s32.totalorder %s18, 1
    %p162 = por %p160, %p161
    %p163 = scmp.ne.s32.totalorder %s154, %s155
    %p164 = scmp.eq.s32.totalorder %s18, 0
    %p165 = por %p163, %p164
    %p166 = scmp.ne.s32.totalorder %s154, %s155
    %p167 = scmp.eq.s32.totalorder %s19, 1
    %p168 = por %p166, %p167
    %p170 = scmp.ne.s32.totalorder %s155, %s169
    %p171 = scmp.eq.s32.totalorder %s19, 0
    %p172 = por %p170, %p171
    %s173 = ssub.s32 %s13, %s20
    %p174 = scmp.eq.s32.totalorder %s173, 0
    %s176 = sadd.s32 %s175, 1
    %s177 = scalar_select %p174, %s175, %s176
    %p180 = pneg %p174
    %p181 = scmp.eq.s32.totalorder %s13, 1
    %p182 = por %p180, %p181
    %p183 = scmp.ne.s32.totalorder %s175, %s178
    %p184 = scmp.eq.s32.totalorder %s13, 0
    %p185 = por %p183, %p184
    %p186 = scmp.ne.s32.totalorder %s175, %s178
    %p187 = scmp.eq.s32.totalorder %s18, 1
    %p188 = por %p186, %p187
    %p189 = scmp.ne.s32.totalorder %s178, %s179
    %p190 = scmp.eq.s32.totalorder %s18, 0
    %p191 = por %p189, %p190
    %p192 = scmp.ne.s32.totalorder %s178, %s179
    %p193 = scmp.eq.s32.totalorder %s19, 1
    %p194 = por %p192, %p193
    %p196 = scmp.ne.s32.totalorder %s179, %s195
    %p197 = scmp.eq.s32.totalorder %s19, 0
    %p198 = por %p196, %p197
    %p199 = scmp.le.s32.totalorder 1, %s13
    %p200 = scmp.lt.s32.totalorder %s13, 3
    %p201 = pnand %p199, %p200
    %p202 = pneg %p201
    // Predicated region
    $region9: #{fashion_cnn_forward.1} parent=5 // pred_check
      _
    $region10: #{fashion_cnn_forward.1} parent=5 // pred_check_branch
      %204 = sbr.rel (%p201) target = $region12
    $region11: #{fashion_cnn_forward.1} parent=5 // pred_region
      %s205 = ssub.s32 %s13, 1
      // Predicated region
      $region13: #{fashion_cnn_forward.1} parent=11 // pred_check
        %p206 = pneg %p60
      $region14: #{fashion_cnn_forward.1} parent=11 // pred_check_branch
        %208 = sbr.rel (%p206) target = $region16
      $region15: #{fashion_cnn_forward.1} parent=11 // pred_region
        _
      $region16: #{fashion_cnn_forward.1} parent=11 // pred_fallthru
        _
      // Predicated region
      $region17: #{fashion_cnn_forward.1} parent=11 // pred_check
        %p209 = pneg %p81
      $region18: #{fashion_cnn_forward.1} parent=11 // pred_check_branch
        %211 = sbr.rel (%p209) target = $region20
      $region19: #{fashion_cnn_forward.1} parent=11 // pred_region
        _
      $region20: #{fashion_cnn_forward.1} parent=11 // pred_fallthru
        _
      // Predicated region
      $region21: #{fashion_cnn_forward.1} parent=11 // pred_check
        %p212 = pneg %p102
      $region22: #{fashion_cnn_forward.1} parent=11 // pred_check_branch
        %214 = sbr.rel (%p212) target = $region24
      $region23: #{fashion_cnn_forward.1} parent=11 // pred_region
        _
      $region24: #{fashion_cnn_forward.1} parent=11 // pred_fallthru
        _
      // Predicated region
      $region25: #{fashion_cnn_forward.1} parent=11 // pred_check
        %p215 = pneg %p123
      $region26: #{fashion_cnn_forward.1} parent=11 // pred_check_branch
        %217 = sbr.rel (%p215) target = $region28
      $region27: #{fashion_cnn_forward.1} parent=11 // pred_region
        _
      $region28: #{fashion_cnn_forward.1} parent=11 // pred_fallthru
        _
      // Predicated region
      $region29: #{fashion_cnn_forward.1} parent=11 // pred_check
        %p218 = pneg %p144
      $region30: #{fashion_cnn_forward.1} parent=11 // pred_check_branch
        %220 = sbr.rel (%p218) target = $region32
      $region31: #{fashion_cnn_forward.1} parent=11 // pred_region
        _
      $region32: #{fashion_cnn_forward.1} parent=11 // pred_fallthru
        _
      // Predicated region
      $region33: #{fashion_cnn_forward.1} parent=11 // pred_check
        %p221 = pneg %p165
      $region34: #{fashion_cnn_forward.1} parent=11 // pred_check_branch
        %223 = sbr.rel (%p221) target = $region36
      $region35: #{fashion_cnn_forward.1} parent=11 // pred_region
        _
      $region36: #{fashion_cnn_forward.1} parent=11 // pred_fallthru
        _
    $region12: #{fashion_cnn_forward.1} parent=5 // pred_fallthru
      _
    %p224 = scmp.lt.s32.totalorder %s13, 2
    // Predicated region
    $region37: #{fashion_cnn_forward.1} parent=5 // pred_check
      %p225 = pneg %p224
    $region38: #{fashion_cnn_forward.1} parent=5 // pred_check_branch
      %227 = sbr.rel (%p225) target = $region40
    $region39: #{fashion_cnn_forward.1} parent=5 // pred_region
      // Predicated region
      $region41: #{fashion_cnn_forward.1} parent=39 // pred_check
        %p228 = pneg %p33
      $region42: #{fashion_cnn_forward.1} parent=39 // pred_check_branch
        %230 = sbr.rel (%p228) target = $region44
      $region43: #{fashion_cnn_forward.1} parent=39 // pred_region
        %s231 = smul.u32 392, %s13
        %p232 = scmp.lt.s32.totalorder %s231, 783
        %s233 = scalar_select %p232, %s231, 783
        %s234 = smul.addr %s233, 4
        %s235 = scalar_lea.vmem %s0, %s234
        %s236 = smul.u32 392, %s13
      $region44: #{fashion_cnn_forward.1} parent=39 // pred_fallthru
        _
    $region40: #{fashion_cnn_forward.1} parent=5 // pred_fallthru
      _
    %p237 = scmp.le.s32.totalorder 1, %s13
    %p238 = scmp.lt.s32.totalorder %s13, 3
    %p239 = pnand %p237, %p238
    %p240 = pneg %p239
    // Predicated region
    $region45: #{fashion_cnn_forward.1} parent=5 // pred_check
      _
    $region46: #{fashion_cnn_forward.1} parent=5 // pred_check_branch
      %242 = sbr.rel (%p239) target = $region48
    $region47: #{fashion_cnn_forward.1} parent=5 // pred_region
      %s243 = ssub.s32 %s13, 1
      %s244 = smul.u32 392, %s18
      %p245 = scmp.lt.s32.totalorder %s244, 783
      %s246 = scalar_select %p245, %s244, 783
      %s247 = smul.addr %s246, 4
      %s248 = scalar_lea.vmem %s0, %s247
      %p249 = pneg %p39
      %p250 = pneg %p36
      %p251 = pneg %p60
      %p252 = pneg %p57
      %p253 = pneg %p81
      %p254 = pneg %p78
      %p255 = pneg %p102
      %p256 = pneg %p99
      %p257 = pneg %p123
      %p258 = pneg %p120
      %p259 = pneg %p144
      %p260 = pneg %p141
      %p261 = pneg %p165
      %p262 = pneg %p162
      %p263 = pneg %p191
      %p264 = pneg %p188
      %s265 = smul.u32 2, %s18
      %p266 = scmp.lt.s32.totalorder %s265, 3
      %s267 = scalar_select %p266, %s265, 3
      %s268 = smul.addr %s267, 8
      %s269 = scalar_lea.vmem %s7, %s268
      %s270 = smul.u32 392, %s18
      %p271 = scmp.lt.s32.totalorder %s270, 783
      %s272 = scalar_select %p271, %s270, 783
      %s273 = smul.addr %s272, 4
      %s274 = scalar_lea.vmem %s0, %s273
      %s275 = smul.u32 392, %s18
      %s276 = smul.u32 2, %s18
      %p277 = scmp.lt.s32.totalorder %s276, 3
      %s278 = scalar_select %p277, %s276, 3
      %s279 = smul.addr %s278, 8
      %s280 = scalar_lea.vmem %s7, %s279
      %s281 = smul.u32 2, %s18
      %v283 = vld [vmem:[%s1] sm:$0xf]
      %v284 = vld [vmem:[%s1 + $0x4] sm:$0xf]
      %v285 = vld [vmem:[%s1 + $0x8] sm:$0xf]
      %v286 = vld [vmem:[%s1 + $0xc] sm:$0xf]
      %v287 = vld [vmem:[%s1 + $0x10] sm:$0x3]
      %v288 = vld [vmem:[%s274] sm:$0xf]
      %v289 = vld [vmem:[%s274 + $0x4] sm:$0xf]
      %v290 = vld [vmem:[%s274 + $0x8] sm:$0xf]
      %v291 = vld [vmem:[%s274 + $0xc] sm:$0xf]
      %v292 = vld [vmem:[%s274 + $0x10] sm:$0xf]
      %v293 = vld [vmem:[%s274 + $0x14] sm:$0xf]
      %v294 = vld [vmem:[%s274 + $0x18] sm:$0xf]
      %v295 = vld [vmem:[%s274 + $0x1c] sm:$0xf]
      %v296 = vld [vmem:[%s274 + $0x20] sm:$0xf]
      %v297 = vld [vmem:[%s274 + $0x24] sm:$0xf]
      %v298 = vld [vmem:[%s274 + $0x28] sm:$0xf]
      %v299 = vld [vmem:[%s274 + $0x2c] sm:$0xf]
      %v300 = vld [vmem:[%s274 + $0x30] sm:$0xf]
      %v301 = vld [vmem:[%s274 + $0x34] sm:$0xf]
      %v302 = vld [vmem:[%s274 + $0x38] sm:$0xf]
      %v303 = vld [vmem:[%s274 + $0x3c] sm:$0xf]
      %v304 = vld [vmem:[%s274 + $0x40] sm:$0xf]
      %v305 = vld [vmem:[%s274 + $0x44] sm:$0xf]
      %v306 = vld [vmem:[%s274 + $0x48] sm:$0xf]
      %v307 = vld [vmem:[%s274 + $0x4c] sm:$0xf]
      %v308 = vld [vmem:[%s274 + $0x50] sm:$0xf]
      %v309 = vld [vmem:[%s274 + $0x54] sm:$0xf]
      %v310 = vld [vmem:[%s274 + $0x58] sm:$0xf]
      %v311 = vld [vmem:[%s274 + $0x5c] sm:$0xf]
      %v312 = vld [vmem:[%s274 + $0x60] sm:$0xf]
      %v313 = vld [vmem:[%s274 + $0x64] sm:$0xf]
      %v314 = vld [vmem:[%s274 + $0x68] sm:$0xf]
      %v315 = vld [vmem:[%s274 + $0x6c] sm:$0xf]
      %v316 = vld [vmem:[%s274 + $0x70] sm:$0xf]
      %v317 = vld [vmem:[%s274 + $0x74] sm:$0xf]
      %v318 = vld [vmem:[%s274 + $0x78] sm:$0xf]
      %v319 = vld [vmem:[%s274 + $0x7c] sm:$0xf]
      %v320 = vld [vmem:[%s274 + $0x80] sm:$0xf]
      %v321 = vld [vmem:[%s274 + $0x84] sm:$0xf]
      %v322 = vld [vmem:[%s274 + $0x88] sm:$0xf]
      %v323 = vld [vmem:[%s274 + $0x8c] sm:$0xf]
      %v324 = vld [vmem:[%s274 + $0x90] sm:$0xf]
      %v325 = vld [vmem:[%s274 + $0x94] sm:$0xf]
      %v326 = vld [vmem:[%s274 + $0x98] sm:$0xf]
      %v327 = vld [vmem:[%s274 + $0x9c] sm:$0xf]
      %v328 = vld [vmem:[%s274 + $0xa0] sm:$0xf]
      %v329 = vld [vmem:[%s274 + $0xa4] sm:$0xf]
      %v330 = vld [vmem:[%s274 + $0xa8] sm:$0xf]
      %v331 = vld [vmem:[%s274 + $0xac] sm:$0xf]
      %v332 = vld [vmem:[%s274 + $0xb0] sm:$0xf]
      %v333 = vld [vmem:[%s274 + $0xb4] sm:$0xf]
      %v334 = vld [vmem:[%s274 + $0xb8] sm:$0xf]
      %v335 = vld [vmem:[%s274 + $0xbc] sm:$0xf]
      %v336 = vld [vmem:[%s274 + $0xc0] sm:$0xf]
      %v337 = vld [vmem:[%s274 + $0xc4] sm:$0xf]
      %v338 = vld [vmem:[%s274 + $0xc8] sm:$0xf]
      %v339 = vld [vmem:[%s274 + $0xcc] sm:$0xf]
      %v340 = vld [vmem:[%s274 + $0xd0] sm:$0xf]
      %v341 = vld [vmem:[%s274 + $0xd4] sm:$0xf]
      %v342 = vld [vmem:[%s274 + $0xd8] sm:$0xf]
      %v343 = vld [vmem:[%s274 + $0xdc] sm:$0xf]
      %v344 = vld [vmem:[%s274 + $0xe0] sm:$0xf]
      %v345 = vld [vmem:[%s274 + $0xe4] sm:$0xf]
      %v346 = vld [vmem:[%s274 + $0xe8] sm:$0xf]
      %v347 = vld [vmem:[%s274 + $0xec] sm:$0xf]
      %v348 = vld [vmem:[%s274 + $0xf0] sm:$0xf]
      %v349 = vld [vmem:[%s274 + $0xf4] sm:$0xf]
      %v350 = vld [vmem:[%s274 + $0xf8] sm:$0xf]
      %v351 = vld [vmem:[%s274 + $0xfc] sm:$0xf]
      %v352 = vld [vmem:[%s274 + $0x100] sm:$0xf]
      %v353 = vld [vmem:[%s274 + $0x104] sm:$0xf]
      %v354 = vld [vmem:[%s274 + $0x108] sm:$0xf]
      %v355 = vld [vmem:[%s274 + $0x10c] sm:$0xf]
      %v356 = vld [vmem:[%s274 + $0x110] sm:$0xf]
      %v357 = vld [vmem:[%s274 + $0x114] sm:$0xf]
      %v358 = vld [vmem:[%s274 + $0x118] sm:$0xf]
      %v359 = vld [vmem:[%s274 + $0x11c] sm:$0xf]
      %v360 = vld [vmem:[%s274 + $0x120] sm:$0xf]
      %v361 = vld [vmem:[%s274 + $0x124] sm:$0xf]
      %v362 = vld [vmem:[%s274 + $0x128] sm:$0xf]
      %v363 = vld [vmem:[%s274 + $0x12c] sm:$0xf]
      %v364 = vld [vmem:[%s274 + $0x130] sm:$0xf]
      %v365 = vld [vmem:[%s274 + $0x134] sm:$0xf]
      %v366 = vld [vmem:[%s274 + $0x138] sm:$0xf]
      %v367 = vld [vmem:[%s274 + $0x13c] sm:$0xf]
      %v368 = vld [vmem:[%s274 + $0x140] sm:$0xf]
      %v369 = vld [vmem:[%s274 + $0x144] sm:$0xf]
      %v370 = vld [vmem:[%s274 + $0x148] sm:$0xf]
      %v371 = vld [vmem:[%s274 + $0x14c] sm:$0xf]
      %v372 = vld [vmem:[%s274 + $0x150] sm:$0xf]
      %v373 = vld [vmem:[%s274 + $0x154] sm:$0xf]
      %v374 = vld [vmem:[%s274 + $0x158] sm:$0xf]
      %v375 = vld [vmem:[%s274 + $0x15c] sm:$0xf]
      %v376 = vld [vmem:[%s274 + $0x160] sm:$0xf]
      %v377 = vld [vmem:[%s274 + $0x164] sm:$0xf]
      %v378 = vld [vmem:[%s274 + $0x168] sm:$0xf]
      %v379 = vld [vmem:[%s274 + $0x16c] sm:$0xf]
      %v380 = vld [vmem:[%s274 + $0x170] sm:$0xf]
      %v381 = vld [vmem:[%s274 + $0x174] sm:$0xf]
      %v382 = vld [vmem:[%s274 + $0x178] sm:$0xf]
      %v383 = vld [vmem:[%s274 + $0x17c] sm:$0xf]
      %v384 = vld [vmem:[%s274 + $0x180] sm:$0xf]
      %v385 = vld [vmem:[%s274 + $0x184] sm:$0xf]
      %v484 = vunpack.c.l.b16 %v288
      %v485 = vunpack.c.l.b16 %v289
      %v486 = vunpack.c.l.b16 %v290
      %v487 = vunpack.c.l.b16 %v291
      %v488 = vunpack.c.l.b16 %v292
      %v489 = vunpack.c.l.b16 %v293
      %v490 = vunpack.c.l.b16 %v294
      %v491 = vunpack.c.l.b16 %v295
      %v492 = vunpack.c.l.b16 %v296
      %v493 = vunpack.c.l.b16 %v297
      %v494 = vunpack.c.l.b16 %v298
      %v495 = vunpack.c.l.b16 %v299
      %v496 = vunpack.c.l.b16 %v300
      %v497 = vunpack.c.l.b16 %v301
      %v498 = vunpack.c.l.b16 %v302
      %v499 = vunpack.c.l.b16 %v303
      %v500 = vunpack.c.l.b16 %v304
      %v501 = vunpack.c.l.b16 %v305
      %v502 = vunpack.c.l.b16 %v306
      %v503 = vunpack.c.l.b16 %v307
      %v504 = vunpack.c.l.b16 %v308
      %v505 = vunpack.c.l.b16 %v309
      %v506 = vunpack.c.l.b16 %v310
      %v507 = vunpack.c.l.b16 %v311
      %v508 = vunpack.c.l.b16 %v312
      %v509 = vunpack.c.l.b16 %v313
      %v510 = vunpack.c.l.b16 %v314
      %v511 = vunpack.c.l.b16 %v315
      %v512 = vunpack.c.l.b16 %v316
      %v513 = vunpack.c.l.b16 %v317
      %v514 = vunpack.c.l.b16 %v318
      %v515 = vunpack.c.l.b16 %v319
      %v516 = vunpack.c.l.b16 %v320
      %v517 = vunpack.c.l.b16 %v321
      %v518 = vunpack.c.l.b16 %v322
      %v519 = vunpack.c.l.b16 %v323
      %v520 = vunpack.c.l.b16 %v324
      %v521 = vunpack.c.l.b16 %v325
      %v522 = vunpack.c.l.b16 %v326
      %v523 = vunpack.c.l.b16 %v327
      %v524 = vunpack.c.l.b16 %v328
      %v525 = vunpack.c.l.b16 %v329
      %v526 = vunpack.c.l.b16 %v330
      %v527 = vunpack.c.l.b16 %v331
      %v528 = vunpack.c.l.b16 %v332
      %v529 = vunpack.c.l.b16 %v333
      %v530 = vunpack.c.l.b16 %v334
      %v531 = vunpack.c.l.b16 %v335
      %v532 = vunpack.c.l.b16 %v336
      %v533 = vunpack.c.l.b16 %v337
      %v534 = vunpack.c.l.b16 %v338
      %v535 = vunpack.c.l.b16 %v339
      %v536 = vunpack.c.l.b16 %v340
      %v537 = vunpack.c.l.b16 %v341
      %v538 = vunpack.c.l.b16 %v342
      %v539 = vunpack.c.l.b16 %v343
      %v540 = vunpack.c.l.b16 %v344
      %v541 = vunpack.c.l.b16 %v345
      %v542 = vunpack.c.l.b16 %v346
      %v543 = vunpack.c.l.b16 %v347
      %v544 = vunpack.c.l.b16 %v348
      %v545 = vunpack.c.l.b16 %v349
      %v546 = vunpack.c.l.b16 %v350
      %v547 = vunpack.c.l.b16 %v351
      %v548 = vunpack.c.l.b16 %v352
      %v549 = vunpack.c.l.b16 %v353
      %v550 = vunpack.c.l.b16 %v354
      %v551 = vunpack.c.l.b16 %v355
      %v552 = vunpack.c.l.b16 %v356
      %v553 = vunpack.c.l.b16 %v357
      %v554 = vunpack.c.l.b16 %v358
      %v555 = vunpack.c.l.b16 %v359
      %v556 = vunpack.c.l.b16 %v360
      %v557 = vunpack.c.l.b16 %v361
      %v558 = vunpack.c.l.b16 %v362
      %v559 = vunpack.c.l.b16 %v363
      %v560 = vunpack.c.l.b16 %v364
      %v561 = vunpack.c.l.b16 %v365
      %v562 = vunpack.c.l.b16 %v366
      %v563 = vunpack.c.l.b16 %v367
      %v564 = vunpack.c.l.b16 %v368
      %v565 = vunpack.c.l.b16 %v369
      %v566 = vunpack.c.l.b16 %v370
      %v567 = vunpack.c.l.b16 %v371
      %v568 = vunpack.c.l.b16 %v372
      %v569 = vunpack.c.l.b16 %v373
      %v570 = vunpack.c.l.b16 %v374
      %v571 = vunpack.c.l.b16 %v375
      %v572 = vunpack.c.l.b16 %v376
      %v573 = vunpack.c.l.b16 %v377
      %v574 = vunpack.c.l.b16 %v378
      %v575 = vunpack.c.l.b16 %v379
      %v576 = vunpack.c.l.b16 %v380
      %v577 = vunpack.c.l.b16 %v381
      %v578 = vunpack.c.l.b16 %v382
      %v579 = vunpack.c.l.b16 %v383
      %v580 = vunpack.c.l.b16 %v384
      %v581 = vunpack.c.l.b16 %v385
      %v582 = vpack.c.b16 %v485, %v484
      %v583 = vpack.c.b16 %v487, %v486
      %v584 = vpack.c.b16 %v489, %v488
      %v585 = vpack.c.b16 %v491, %v490
      %v586 = vpack.c.b16 %v493, %v492
      %v587 = vpack.c.b16 %v495, %v494
      %v588 = vpack.c.b16 %v497, %v496
      %v589 = vpack.c.b16 %v499, %v498
      %v590 = vpack.c.b16 %v501, %v500
      %v591 = vpack.c.b16 %v503, %v502
      %v592 = vpack.c.b16 %v505, %v504
      %v593 = vpack.c.b16 %v507, %v506
      %v594 = vpack.c.b16 %v509, %v508
      %v595 = vpack.c.b16 %v511, %v510
      %v596 = vpack.c.b16 %v513, %v512
      %v597 = vpack.c.b16 %v515, %v514
      %v598 = vpack.c.b16 %v517, %v516
      %v599 = vpack.c.b16 %v519, %v518
      %v600 = vpack.c.b16 %v521, %v520
      %v601 = vpack.c.b16 %v523, %v522
      %v602 = vpack.c.b16 %v525, %v524
      %v603 = vpack.c.b16 %v527, %v526
      %v604 = vpack.c.b16 %v529, %v528
      %v605 = vpack.c.b16 %v531, %v530
      %v606 = vpack.c.b16 %v533, %v532
      %v607 = vpack.c.b16 %v535, %v534
      %v608 = vpack.c.b16 %v537, %v536
      %v609 = vpack.c.b16 %v539, %v538
      %v610 = vpack.c.b16 %v541, %v540
      %v611 = vpack.c.b16 %v543, %v542
      %v612 = vpack.c.b16 %v545, %v544
      %v613 = vpack.c.b16 %v547, %v546
      %v614 = vpack.c.b16 %v549, %v548
      %v615 = vpack.c.b16 %v551, %v550
      %v616 = vpack.c.b16 %v553, %v552
      %v617 = vpack.c.b16 %v555, %v554
      %v618 = vpack.c.b16 %v557, %v556
      %v619 = vpack.c.b16 %v559, %v558
      %v620 = vpack.c.b16 %v561, %v560
      %v621 = vpack.c.b16 %v563, %v562
      %v622 = vpack.c.b16 %v565, %v564
      %v623 = vpack.c.b16 %v567, %v566
      %v624 = vpack.c.b16 %v569, %v568
      %v625 = vpack.c.b16 %v571, %v570
      %v626 = vpack.c.b16 %v573, %v572
      %v627 = vpack.c.b16 %v575, %v574
      %v628 = vpack.c.b16 %v577, %v576
      %v629 = vpack.c.b16 %v579, %v578
      %v630 = vpack.c.b16 %v581, %v580
      %v636 = vunpack.c.l.b16 %v283
      %v637 = vunpack.c.l.b16 %v284
      %v638 = vunpack.c.l.b16 %v285
      %v639 = vunpack.c.l.b16 %v286
      %v640 = vunpack.c.l.b16 %v287
      %v641 = vpack.c.b16 %v637, %v636
      %v642 = vpack.c.b16 %v639, %v638
      %v643 = vpack.c.b16 %v640, %v640
      %vm646 = vcmask 293888
      %v648 = vsel %vm646, %v582, 0
      %v651 = vsel %vm646, %v583, 0
      %v654 = vsel %vm646, %v584, 0
      %v657 = vsel %vm646, %v585, 0
      %v660 = vsel %vm646, %v586, 0
      %v663 = vsel %vm646, %v587, 0
      %v666 = vsel %vm646, %v588, 0
      %v669 = vsel %vm646, %v589, 0
      %v672 = vsel %vm646, %v590, 0
      %v675 = vsel %vm646, %v591, 0
      %v678 = vsel %vm646, %v592, 0
      %v681 = vsel %vm646, %v593, 0
      %v684 = vsel %vm646, %v594, 0
      %v687 = vsel %vm646, %v595, 0
      %v690 = vsel %vm646, %v596, 0
      %v693 = vsel %vm646, %v597, 0
      %v696 = vsel %vm646, %v598, 0
      %v699 = vsel %vm646, %v599, 0
      %v702 = vsel %vm646, %v600, 0
      %v705 = vsel %vm646, %v601, 0
      %v708 = vsel %vm646, %v602, 0
      %v711 = vsel %vm646, %v603, 0
      %v714 = vsel %vm646, %v604, 0
      %v717 = vsel %vm646, %v605, 0
      %v720 = vsel %vm646, %v606, 0
      %v723 = vsel %vm646, %v607, 0
      %v726 = vsel %vm646, %v608, 0
      %v729 = vsel %vm646, %v609, 0
      %v732 = vsel %vm646, %v610, 0
      %v735 = vsel %vm646, %v611, 0
      %v738 = vsel %vm646, %v612, 0
      %v741 = vsel %vm646, %v613, 0
      %v744 = vsel %vm646, %v614, 0
      %v747 = vsel %vm646, %v615, 0
      %v750 = vsel %vm646, %v616, 0
      %v753 = vsel %vm646, %v617, 0
      %v756 = vsel %vm646, %v618, 0
      %v759 = vsel %vm646, %v619, 0
      %v762 = vsel %vm646, %v620, 0
      %v765 = vsel %vm646, %v621, 0
      %v768 = vsel %vm646, %v622, 0
      %v771 = vsel %vm646, %v623, 0
      %v774 = vsel %vm646, %v624, 0
      %v777 = vsel %vm646, %v625, 0
      %v780 = vsel %vm646, %v626, 0
      %v783 = vsel %vm646, %v627, 0
      %v786 = vsel %vm646, %v628, 0
      %v789 = vsel %vm646, %v629, 0
      %v792 = vsel %vm646, %v630, 0
      %vm794 = vcmask 1041408
      %v796 = vsel %vm794, %v643, 0
      %798 = vmatprep.subr.bf16.mxu0 0
      %799 = vmatpush1.bf16.msra.mxu0 0
      %800 = vmatprep.subr.bf16.mxu0 0
      %801 = vmatpush1.bf16.msra.mxu0 0
      %802 = vmatprep.subr.bf16.mxu0 0
      %803 = vmatpush1.bf16.msra.mxu0 0
      %804 = vmatprep.subr.bf16.mxu0 0
      %805 = vmatpush1.bf16.msra.mxu0 0
      %806 = vmatprep.subr.bf16.mxu0 0
      %807 = vmatpush1.bf16.msra.mxu0 0
      %808 = vmatprep.subr.bf16.mxu0 0
      %809 = vmatpush1.bf16.msra.mxu0 %v796
      %810 = vmatprep.subr.bf16.mxu0 0
      %811 = vmatpush1.bf16.msra.mxu0 %v642
      %812 = vmatprep.subr.bf16.mxu0 0
      %813 = vmatpush1.bf16.msra.mxu0 %v641
      %814 = vmatprep.subr.bf16.mxu0 0
      %815 = vmatpush2.bf16.msra.mxu0 0
      %816 = vmatprep.subr.bf16.mxu0 0
      %817 = vmatpush2.bf16.msra.mxu0 0
      %818 = vmatprep.subr.bf16.mxu0 0
      %819 = vmatpush2.bf16.msra.mxu0 0
      %820 = vmatprep.subr.bf16.mxu0 0
      %821 = vmatpush2.bf16.msra.mxu0 0
      %822 = vmatprep.subr.bf16.mxu0 0
      %823 = vmatpush2.bf16.msra.mxu0 0
      %824 = vmatprep.subr.bf16.mxu0 0
      %825 = vmatpush2.bf16.msra.mxu0 0
      %826 = vmatprep.subr.bf16.mxu0 0
      %827 = vmatpush2.bf16.msra.mxu0 0
      %828 = vmatprep.subr.bf16.mxu0 0
      %829 = vmatpush2.bf16.msra.mxu0 0
      %830 = vmatprep.mubr.bf16.mxu0 0
      %831 = vmatmul.mubr.bf16.gmra.mxu0 %v648
      %v832 = vpop.f32.mrf.mxu0
      %v833 = vadd.f32 0.0, %v832
      %v834 = vpop.f32.mrf.mxu0
      %v835 = vpop.f32.mrf.mxu0
      %v836 = vadd.f32 0.0, %v835
      %v837 = vpop.f32.mrf.mxu0
      %838 = vmatprep.mubr.bf16.mxu0 0
      %839 = vmatmul.mubr.bf16.gmra.mxu0 %v651
      %v840 = vpop.f32.mrf.mxu0
      %v841 = vadd.f32 0.0, %v840
      %v842 = vpop.f32.mrf.mxu0
      %v843 = vpop.f32.mrf.mxu0
      %v844 = vadd.f32 0.0, %v843
      %v845 = vpop.f32.mrf.mxu0
      %846 = vmatprep.mubr.bf16.mxu0 0
      %847 = vmatmul.mubr.bf16.gmra.mxu0 %v654
      %v848 = vpop.f32.mrf.mxu0
      %v849 = vadd.f32 0.0, %v848
      %v850 = vpop.f32.mrf.mxu0
      %v851 = vpop.f32.mrf.mxu0
      %v852 = vadd.f32 0.0, %v851
      %v853 = vpop.f32.mrf.mxu0
      %854 = vmatprep.mubr.bf16.mxu0 0
      %855 = vmatmul.mubr.bf16.gmra.mxu0 %v657
      %v856 = vpop.f32.mrf.mxu0
      %v857 = vadd.f32 0.0, %v856
      %v858 = vpop.f32.mrf.mxu0
      %v859 = vpop.f32.mrf.mxu0
      %v860 = vadd.f32 0.0, %v859
      %v861 = vpop.f32.mrf.mxu0
      %862 = vmatprep.mubr.bf16.mxu0 0
      %863 = vmatmul.mubr.bf16.gmra.mxu0 %v660
      %v864 = vpop.f32.mrf.mxu0
      %v865 = vadd.f32 0.0, %v864
      %v866 = vpop.f32.mrf.mxu0
      %v867 = vpop.f32.mrf.mxu0
      %v868 = vadd.f32 0.0, %v867
      %v869 = vpop.f32.mrf.mxu0
      %870 = vmatprep.mubr.bf16.mxu0 0
      %871 = vmatmul.mubr.bf16.gmra.mxu0 %v663
      %v872 = vpop.f32.mrf.mxu0
      %v873 = vadd.f32 0.0, %v872
      %v874 = vpop.f32.mrf.mxu0
      %v875 = vpop.f32.mrf.mxu0
      %v876 = vadd.f32 0.0, %v875
      %v877 = vpop.f32.mrf.mxu0
      %878 = vmatprep.mubr.bf16.mxu0 0
      %879 = vmatmul.mubr.bf16.gmra.mxu0 %v666
      %v880 = vpop.f32.mrf.mxu0
      %v881 = vadd.f32 0.0, %v880
      %v882 = vpop.f32.mrf.mxu0
      %v883 = vpop.f32.mrf.mxu0
      %v884 = vadd.f32 0.0, %v883
      %v885 = vpop.f32.mrf.mxu0
      %886 = vmatprep.mubr.bf16.mxu0 0
      %887 = vmatmul.mubr.bf16.gmra.mxu0 %v669
      %v888 = vpop.f32.mrf.mxu0
      %v889 = vadd.f32 0.0, %v888
      %v890 = vpop.f32.mrf.mxu0
      %v891 = vpop.f32.mrf.mxu0
      %v892 = vadd.f32 0.0, %v891
      %v893 = vpop.f32.mrf.mxu0
      %894 = vmatprep.mubr.bf16.mxu0 0
      %895 = vmatmul.mubr.bf16.gmra.mxu0 %v672
      %v896 = vpop.f32.mrf.mxu0
      %v897 = vadd.f32 0.0, %v896
      %v898 = vpop.f32.mrf.mxu0
      %v899 = vpop.f32.mrf.mxu0
      %v900 = vadd.f32 0.0, %v899
      %v901 = vpop.f32.mrf.mxu0
      %902 = vmatprep.mubr.bf16.mxu0 0
      %903 = vmatmul.mubr.bf16.gmra.mxu0 %v675
      %v904 = vpop.f32.mrf.mxu0
      %v905 = vadd.f32 0.0, %v904
      %v906 = vpop.f32.mrf.mxu0
      %v907 = vpop.f32.mrf.mxu0
      %v908 = vadd.f32 0.0, %v907
      %v909 = vpop.f32.mrf.mxu0
      %910 = vmatprep.mubr.bf16.mxu0 0
      %911 = vmatmul.mubr.bf16.gmra.mxu0 %v678
      %v912 = vpop.f32.mrf.mxu0
      %v913 = vadd.f32 0.0, %v912
      %v914 = vpop.f32.mrf.mxu0
      %v915 = vpop.f32.mrf.mxu0
      %v916 = vadd.f32 0.0, %v915
      %v917 = vpop.f32.mrf.mxu0
      %918 = vmatprep.mubr.bf16.mxu0 0
      %919 = vmatmul.mubr.bf16.gmra.mxu0 %v681
      %v920 = vpop.f32.mrf.mxu0
      %v921 = vadd.f32 0.0, %v920
      %v922 = vpop.f32.mrf.mxu0
      %v923 = vpop.f32.mrf.mxu0
      %v924 = vadd.f32 0.0, %v923
      %v925 = vpop.f32.mrf.mxu0
      %926 = vmatprep.mubr.bf16.mxu0 0
      %927 = vmatmul.mubr.bf16.gmra.mxu0 %v684
      %v928 = vpop.f32.mrf.mxu0
      %v929 = vadd.f32 0.0, %v928
      %v930 = vpop.f32.mrf.mxu0
      %v931 = vpop.f32.mrf.mxu0
      %v932 = vadd.f32 0.0, %v931
      %v933 = vpop.f32.mrf.mxu0
      %934 = vmatprep.mubr.bf16.mxu0 0
      %935 = vmatmul.mubr.bf16.gmra.mxu0 %v687
      %v936 = vpop.f32.mrf.mxu0
      %v937 = vadd.f32 0.0, %v936
      %v938 = vpop.f32.mrf.mxu0
      %v939 = vpop.f32.mrf.mxu0
      %v940 = vadd.f32 0.0, %v939
      %v941 = vpop.f32.mrf.mxu0
      %942 = vmatprep.mubr.bf16.mxu0 0
      %943 = vmatmul.mubr.bf16.gmra.mxu0 %v690
      %v944 = vpop.f32.mrf.mxu0
      %v945 = vadd.f32 0.0, %v944
      %v946 = vpop.f32.mrf.mxu0
      %v947 = vpop.f32.mrf.mxu0
      %v948 = vadd.f32 0.0, %v947
      %v949 = vpop.f32.mrf.mxu0
      %950 = vmatprep.mubr.bf16.mxu0 0
      %951 = vmatmul.mubr.bf16.gmra.mxu0 %v693
      %v952 = vpop.f32.mrf.mxu0
      %v953 = vadd.f32 0.0, %v952
      %v954 = vpop.f32.mrf.mxu0
      %v955 = vpop.f32.mrf.mxu0
      %v956 = vadd.f32 0.0, %v955
      %v957 = vpop.f32.mrf.mxu0
      %958 = vmatprep.mubr.bf16.mxu0 0
      %959 = vmatmul.mubr.bf16.gmra.mxu0 %v696
      %v960 = vpop.f32.mrf.mxu0
      %v961 = vadd.f32 0.0, %v960
      %v962 = vpop.f32.mrf.mxu0
      %v963 = vpop.f32.mrf.mxu0
      %v964 = vadd.f32 0.0, %v963
      %v965 = vpop.f32.mrf.mxu0
      %966 = vmatprep.mubr.bf16.mxu0 0
      %967 = vmatmul.mubr.bf16.gmra.mxu0 %v699
      %v968 = vpop.f32.mrf.mxu0
      %v969 = vadd.f32 0.0, %v968
      %v970 = vpop.f32.mrf.mxu0
      %v971 = vpop.f32.mrf.mxu0
      %v972 = vadd.f32 0.0, %v971
      %v973 = vpop.f32.mrf.mxu0
      %974 = vmatprep.mubr.bf16.mxu0 0
      %975 = vmatmul.mubr.bf16.gmra.mxu0 %v702
      %v976 = vpop.f32.mrf.mxu0
      %v977 = vadd.f32 0.0, %v976
      %v978 = vpop.f32.mrf.mxu0
      %v979 = vpop.f32.mrf.mxu0
      %v980 = vadd.f32 0.0, %v979
      %v981 = vpop.f32.mrf.mxu0
      %982 = vmatprep.mubr.bf16.mxu0 0
      %983 = vmatmul.mubr.bf16.gmra.mxu0 %v705
      %v984 = vpop.f32.mrf.mxu0
      %v985 = vadd.f32 0.0, %v984
      %v986 = vpop.f32.mrf.mxu0
      %v987 = vpop.f32.mrf.mxu0
      %v988 = vadd.f32 0.0, %v987
      %v989 = vpop.f32.mrf.mxu0
      %990 = vmatprep.mubr.bf16.mxu0 0
      %991 = vmatmul.mubr.bf16.gmra.mxu0 %v708
      %v992 = vpop.f32.mrf.mxu0
      %v993 = vadd.f32 0.0, %v992
      %v994 = vpop.f32.mrf.mxu0
      %v995 = vpop.f32.mrf.mxu0
      %v996 = vadd.f32 0.0, %v995
      %v997 = vpop.f32.mrf.mxu0
      %998 = vmatprep.mubr.bf16.mxu0 0
      %999 = vmatmul.mubr.bf16.gmra.mxu0 %v711
      %v1000 = vpop.f32.mrf.mxu0
      %v1001 = vadd.f32 0.0, %v1000
      %v1002 = vpop.f32.mrf.mxu0
      %v1003 = vpop.f32.mrf.mxu0
      %v1004 = vadd.f32 0.0, %v1003
      %v1005 = vpop.f32.mrf.mxu0
      %1006 = vmatprep.mubr.bf16.mxu0 0
      %1007 = vmatmul.mubr.bf16.gmra.mxu0 %v714
      %v1008 = vpop.f32.mrf.mxu0
      %v1009 = vadd.f32 0.0, %v1008
      %v1010 = vpop.f32.mrf.mxu0
      %v1011 = vpop.f32.mrf.mxu0
      %v1012 = vadd.f32 0.0, %v1011
      %v1013 = vpop.f32.mrf.mxu0
      %1014 = vmatprep.mubr.bf16.mxu0 0
      %1015 = vmatmul.mubr.bf16.gmra.mxu0 %v717
      %v1016 = vpop.f32.mrf.mxu0
      %v1017 = vadd.f32 0.0, %v1016
      %v1018 = vpop.f32.mrf.mxu0
      %v1019 = vpop.f32.mrf.mxu0
      %v1020 = vadd.f32 0.0, %v1019
      %v1021 = vpop.f32.mrf.mxu0
      %1022 = vmatprep.mubr.bf16.mxu0 0
      %1023 = vmatmul.mubr.bf16.gmra.mxu0 %v720
      %v1024 = vpop.f32.mrf.mxu0
      %v1025 = vadd.f32 0.0, %v1024
      %v1026 = vpop.f32.mrf.mxu0
      %v1027 = vpop.f32.mrf.mxu0
      %v1028 = vadd.f32 0.0, %v1027
      %v1029 = vpop.f32.mrf.mxu0
      %1030 = vmatprep.mubr.bf16.mxu0 0
      %1031 = vmatmul.mubr.bf16.gmra.mxu0 %v723
      %v1032 = vpop.f32.mrf.mxu0
      %v1033 = vadd.f32 0.0, %v1032
      %v1034 = vpop.f32.mrf.mxu0
      %v1035 = vpop.f32.mrf.mxu0
      %v1036 = vadd.f32 0.0, %v1035
      %v1037 = vpop.f32.mrf.mxu0
      %1038 = vmatprep.mubr.bf16.mxu0 0
      %1039 = vmatmul.mubr.bf16.gmra.mxu0 %v726
      %v1040 = vpop.f32.mrf.mxu0
      %v1041 = vadd.f32 0.0, %v1040
      %v1042 = vpop.f32.mrf.mxu0
      %v1043 = vpop.f32.mrf.mxu0
      %v1044 = vadd.f32 0.0, %v1043
      %v1045 = vpop.f32.mrf.mxu0
      %1046 = vmatprep.mubr.bf16.mxu0 0
      %1047 = vmatmul.mubr.bf16.gmra.mxu0 %v729
      %v1048 = vpop.f32.mrf.mxu0
      %v1049 = vadd.f32 0.0, %v1048
      %v1050 = vpop.f32.mrf.mxu0
      %v1051 = vpop.f32.mrf.mxu0
      %v1052 = vadd.f32 0.0, %v1051
      %v1053 = vpop.f32.mrf.mxu0
      %1054 = vmatprep.mubr.bf16.mxu0 0
      %1055 = vmatmul.mubr.bf16.gmra.mxu0 %v732
      %v1056 = vpop.f32.mrf.mxu0
      %v1057 = vadd.f32 0.0, %v1056
      %v1058 = vpop.f32.mrf.mxu0
      %v1059 = vpop.f32.mrf.mxu0
      %v1060 = vadd.f32 0.0, %v1059
      %v1061 = vpop.f32.mrf.mxu0
      %1062 = vmatprep.mubr.bf16.mxu0 0
      %1063 = vmatmul.mubr.bf16.gmra.mxu0 %v735
      %v1064 = vpop.f32.mrf.mxu0
      %v1065 = vadd.f32 0.0, %v1064
      %v1066 = vpop.f32.mrf.mxu0
      %v1067 = vpop.f32.mrf.mxu0
      %v1068 = vadd.f32 0.0, %v1067
      %v1069 = vpop.f32.mrf.mxu0
      %1070 = vmatprep.mubr.bf16.mxu0 0
      %1071 = vmatmul.mubr.bf16.gmra.mxu0 %v738
      %v1072 = vpop.f32.mrf.mxu0
      %v1073 = vadd.f32 0.0, %v1072
      %v1074 = vpop.f32.mrf.mxu0
      %v1075 = vpop.f32.mrf.mxu0
      %v1076 = vadd.f32 0.0, %v1075
      %v1077 = vpop.f32.mrf.mxu0
      %1078 = vmatprep.mubr.bf16.mxu0 0
      %1079 = vmatmul.mubr.bf16.gmra.mxu0 %v741
      %v1080 = vpop.f32.mrf.mxu0
      %v1081 = vadd.f32 0.0, %v1080
      %v1082 = vpop.f32.mrf.mxu0
      %v1083 = vpop.f32.mrf.mxu0
      %v1084 = vadd.f32 0.0, %v1083
      %v1085 = vpop.f32.mrf.mxu0
      %1086 = vmatprep.mubr.bf16.mxu0 0
      %1087 = vmatmul.mubr.bf16.gmra.mxu0 %v744
      %v1088 = vpop.f32.mrf.mxu0
      %v1089 = vadd.f32 0.0, %v1088
      %v1090 = vpop.f32.mrf.mxu0
      %v1091 = vpop.f32.mrf.mxu0
      %v1092 = vadd.f32 0.0, %v1091
      %v1093 = vpop.f32.mrf.mxu0
      %1094 = vmatprep.mubr.bf16.mxu0 0
      %1095 = vmatmul.mubr.bf16.gmra.mxu0 %v747
      %v1096 = vpop.f32.mrf.mxu0
      %v1097 = vadd.f32 0.0, %v1096
      %v1098 = vpop.f32.mrf.mxu0
      %v1099 = vpop.f32.mrf.mxu0
      %v1100 = vadd.f32 0.0, %v1099
      %v1101 = vpop.f32.mrf.mxu0
      %1102 = vmatprep.mubr.bf16.mxu0 0
      %1103 = vmatmul.mubr.bf16.gmra.mxu0 %v750
      %v1104 = vpop.f32.mrf.mxu0
      %v1105 = vadd.f32 0.0, %v1104
      %v1106 = vpop.f32.mrf.mxu0
      %v1107 = vpop.f32.mrf.mxu0
      %v1108 = vadd.f32 0.0, %v1107
      %v1109 = vpop.f32.mrf.mxu0
      %1110 = vmatprep.mubr.bf16.mxu0 0
      %1111 = vmatmul.mubr.bf16.gmra.mxu0 %v753
      %v1112 = vpop.f32.mrf.mxu0
      %v1113 = vadd.f32 0.0, %v1112
      %v1114 = vpop.f32.mrf.mxu0
      %v1115 = vpop.f32.mrf.mxu0
      %v1116 = vadd.f32 0.0, %v1115
      %v1117 = vpop.f32.mrf.mxu0
      %1118 = vmatprep.mubr.bf16.mxu0 0
      %1119 = vmatmul.mubr.bf16.gmra.mxu0 %v756
      %v1120 = vpop.f32.mrf.mxu0
      %v1121 = vadd.f32 0.0, %v1120
      %v1122 = vpop.f32.mrf.mxu0
      %v1123 = vpop.f32.mrf.mxu0
      %v1124 = vadd.f32 0.0, %v1123
      %v1125 = vpop.f32.mrf.mxu0
      %1126 = vmatprep.mubr.bf16.mxu0 0
      %1127 = vmatmul.mubr.bf16.gmra.mxu0 %v759
      %v1128 = vpop.f32.mrf.mxu0
      %v1129 = vadd.f32 0.0, %v1128
      %v1130 = vpop.f32.mrf.mxu0
      %v1131 = vpop.f32.mrf.mxu0
      %v1132 = vadd.f32 0.0, %v1131
      %v1133 = vpop.f32.mrf.mxu0
      %1134 = vmatprep.mubr.bf16.mxu0 0
      %1135 = vmatmul.mubr.bf16.gmra.mxu0 %v762
      %v1136 = vpop.f32.mrf.mxu0
      %v1137 = vadd.f32 0.0, %v1136
      %v1138 = vpop.f32.mrf.mxu0
      %v1139 = vpop.f32.mrf.mxu0
      %v1140 = vadd.f32 0.0, %v1139
      %v1141 = vpop.f32.mrf.mxu0
      %1142 = vmatprep.mubr.bf16.mxu0 0
      %1143 = vmatmul.mubr.bf16.gmra.mxu0 %v765
      %v1144 = vpop.f32.mrf.mxu0
      %v1145 = vadd.f32 0.0, %v1144
      %v1146 = vpop.f32.mrf.mxu0
      %v1147 = vpop.f32.mrf.mxu0
      %v1148 = vadd.f32 0.0, %v1147
      %v1149 = vpop.f32.mrf.mxu0
      %1150 = vmatprep.mubr.bf16.mxu0 0
      %1151 = vmatmul.mubr.bf16.gmra.mxu0 %v768
      %v1152 = vpop.f32.mrf.mxu0
      %v1153 = vadd.f32 0.0, %v1152
      %v1154 = vpop.f32.mrf.mxu0
      %v1155 = vpop.f32.mrf.mxu0
      %v1156 = vadd.f32 0.0, %v1155
      %v1157 = vpop.f32.mrf.mxu0
      %1158 = vmatprep.mubr.bf16.mxu0 0
      %1159 = vmatmul.mubr.bf16.gmra.mxu0 %v771
      %v1160 = vpop.f32.mrf.mxu0
      %v1161 = vadd.f32 0.0, %v1160
      %v1162 = vpop.f32.mrf.mxu0
      %v1163 = vpop.f32.mrf.mxu0
      %v1164 = vadd.f32 0.0, %v1163
      %v1165 = vpop.f32.mrf.mxu0
      %1166 = vmatprep.mubr.bf16.mxu0 0
      %1167 = vmatmul.mubr.bf16.gmra.mxu0 %v774
      %v1168 = vpop.f32.mrf.mxu0
      %v1169 = vadd.f32 0.0, %v1168
      %v1170 = vpop.f32.mrf.mxu0
      %v1171 = vpop.f32.mrf.mxu0
      %v1172 = vadd.f32 0.0, %v1171
      %v1173 = vpop.f32.mrf.mxu0
      %1174 = vmatprep.mubr.bf16.mxu0 0
      %1175 = vmatmul.mubr.bf16.gmra.mxu0 %v777
      %v1176 = vpop.f32.mrf.mxu0
      %v1177 = vadd.f32 0.0, %v1176
      %v1178 = vpop.f32.mrf.mxu0
      %v1179 = vpop.f32.mrf.mxu0
      %v1180 = vadd.f32 0.0, %v1179
      %v1181 = vpop.f32.mrf.mxu0
      %1182 = vmatprep.mubr.bf16.mxu0 0
      %1183 = vmatmul.mubr.bf16.gmra.mxu0 %v780
      %v1184 = vpop.f32.mrf.mxu0
      %v1185 = vadd.f32 0.0, %v1184
      %v1186 = vpop.f32.mrf.mxu0
      %v1187 = vpop.f32.mrf.mxu0
      %v1188 = vadd.f32 0.0, %v1187
      %v1189 = vpop.f32.mrf.mxu0
      %1190 = vmatprep.mubr.bf16.mxu0 0
      %1191 = vmatmul.mubr.bf16.gmra.mxu0 %v783
      %v1192 = vpop.f32.mrf.mxu0
      %v1193 = vadd.f32 0.0, %v1192
      %v1194 = vpop.f32.mrf.mxu0
      %v1195 = vpop.f32.mrf.mxu0
      %v1196 = vadd.f32 0.0, %v1195
      %v1197 = vpop.f32.mrf.mxu0
      %1198 = vmatprep.mubr.bf16.mxu0 0
      %1199 = vmatmul.mubr.bf16.gmra.mxu0 %v786
      %v1200 = vpop.f32.mrf.mxu0
      %v1201 = vadd.f32 0.0, %v1200
      %v1202 = vpop.f32.mrf.mxu0
      %v1203 = vpop.f32.mrf.mxu0
      %v1204 = vadd.f32 0.0, %v1203
      %v1205 = vpop.f32.mrf.mxu0
      %1206 = vmatprep.mubr.bf16.mxu0 0
      %1207 = vmatmul.mubr.bf16.gmra.mxu0 %v789
      %v1208 = vpop.f32.mrf.mxu0
      %v1209 = vadd.f32 0.0, %v1208
      %v1210 = vpop.f32.mrf.mxu0
      %v1211 = vpop.f32.mrf.mxu0
      %v1212 = vadd.f32 0.0, %v1211
      %v1213 = vpop.f32.mrf.mxu0
      %1214 = vmatprep.mubr.bf16.mxu0 0
      %1215 = vmatmul.mubr.bf16.gmra.mxu0 %v792
      %v1216 = vpop.f32.mrf.mxu0
      %v1217 = vadd.f32 0.0, %v1216
      %v1218 = vpop.f32.mrf.mxu0
      %v1219 = vpop.f32.mrf.mxu0
      %v1220 = vadd.f32 0.0, %v1219
      %v1221 = vpop.f32.mrf.mxu0
      %1222 = vdwg.mxu0
      %v1223 = vld [vmem:[%s274 + $0x188] sm:$0xf]
      %v1224 = vld [vmem:[%s274 + $0x18c] sm:$0xf]
      %v1225 = vld [vmem:[%s274 + $0x190] sm:$0xf]
      %v1226 = vld [vmem:[%s274 + $0x194] sm:$0xf]
      %v1227 = vld [vmem:[%s274 + $0x198] sm:$0xf]
      %v1228 = vld [vmem:[%s274 + $0x19c] sm:$0xf]
      %v1229 = vld [vmem:[%s274 + $0x1a0] sm:$0xf]
      %v1230 = vld [vmem:[%s274 + $0x1a4] sm:$0xf]
      %v1231 = vld [vmem:[%s274 + $0x1a8] sm:$0xf]
      %v1232 = vld [vmem:[%s274 + $0x1ac] sm:$0xf]
      %v1233 = vld [vmem:[%s274 + $0x1b0] sm:$0xf]
      %v1234 = vld [vmem:[%s274 + $0x1b4] sm:$0xf]
      %v1235 = vld [vmem:[%s274 + $0x1b8] sm:$0xf]
      %v1236 = vld [vmem:[%s274 + $0x1bc] sm:$0xf]
      %v1237 = vld [vmem:[%s274 + $0x1c0] sm:$0xf]
      %v1238 = vld [vmem:[%s274 + $0x1c4] sm:$0xf]
      %v1239 = vld [vmem:[%s274 + $0x1c8] sm:$0xf]
      %v1240 = vld [vmem:[%s274 + $0x1cc] sm:$0xf]
      %v1241 = vld [vmem:[%s274 + $0x1d0] sm:$0xf]
      %v1242 = vld [vmem:[%s274 + $0x1d4] sm:$0xf]
      %v1243 = vld [vmem:[%s274 + $0x1d8] sm:$0xf]
      %v1244 = vld [vmem:[%s274 + $0x1dc] sm:$0xf]
      %v1245 = vld [vmem:[%s274 + $0x1e0] sm:$0xf]
      %v1246 = vld [vmem:[%s274 + $0x1e4] sm:$0xf]
      %v1247 = vld [vmem:[%s274 + $0x1e8] sm:$0xf]
      %v1248 = vld [vmem:[%s274 + $0x1ec] sm:$0xf]
      %v1249 = vld [vmem:[%s274 + $0x1f0] sm:$0xf]
      %v1250 = vld [vmem:[%s274 + $0x1f4] sm:$0xf]
      %v1251 = vld [vmem:[%s274 + $0x1f8] sm:$0xf]
      %v1252 = vld [vmem:[%s274 + $0x1fc] sm:$0xf]
      %v1253 = vld [vmem:[%s274 + $0x200] sm:$0xf]
      %v1254 = vld [vmem:[%s274 + $0x204] sm:$0xf]
      %v1255 = vld [vmem:[%s274 + $0x208] sm:$0xf]
      %v1256 = vld [vmem:[%s274 + $0x20c] sm:$0xf]
      %v1257 = vld [vmem:[%s274 + $0x210] sm:$0xf]
      %v1258 = vld [vmem:[%s274 + $0x214] sm:$0xf]
      %v1259 = vld [vmem:[%s274 + $0x218] sm:$0xf]
      %v1260 = vld [vmem:[%s274 + $0x21c] sm:$0xf]
      %v1261 = vld [vmem:[%s274 + $0x220] sm:$0xf]
      %v1262 = vld [vmem:[%s274 + $0x224] sm:$0xf]
      %v1263 = vld [vmem:[%s274 + $0x228] sm:$0xf]
      %v1264 = vld [vmem:[%s274 + $0x22c] sm:$0xf]
      %v1265 = vld [vmem:[%s274 + $0x230] sm:$0xf]
      %v1266 = vld [vmem:[%s274 + $0x234] sm:$0xf]
      %v1267 = vld [vmem:[%s274 + $0x238] sm:$0xf]
      %v1268 = vld [vmem:[%s274 + $0x23c] sm:$0xf]
      %v1269 = vld [vmem:[%s274 + $0x240] sm:$0xf]
      %v1270 = vld [vmem:[%s274 + $0x244] sm:$0xf]
      %v1271 = vld [vmem:[%s274 + $0x248] sm:$0xf]
      %v1272 = vld [vmem:[%s274 + $0x24c] sm:$0xf]
      %v1273 = vld [vmem:[%s274 + $0x250] sm:$0xf]
      %v1274 = vld [vmem:[%s274 + $0x254] sm:$0xf]
      %v1275 = vld [vmem:[%s274 + $0x258] sm:$0xf]
      %v1276 = vld [vmem:[%s274 + $0x25c] sm:$0xf]
      %v1277 = vld [vmem:[%s274 + $0x260] sm:$0xf]
      %v1278 = vld [vmem:[%s274 + $0x264] sm:$0xf]
      %v1279 = vld [vmem:[%s274 + $0x268] sm:$0xf]
      %v1280 = vld [vmem:[%s274 + $0x26c] sm:$0xf]
      %v1281 = vld [vmem:[%s274 + $0x270] sm:$0xf]
      %v1282 = vld [vmem:[%s274 + $0x274] sm:$0xf]
      %v1283 = vld [vmem:[%s274 + $0x278] sm:$0xf]
      %v1284 = vld [vmem:[%s274 + $0x27c] sm:$0xf]
      %v1285 = vld [vmem:[%s274 + $0x280] sm:$0xf]
      %v1286 = vld [vmem:[%s274 + $0x284] sm:$0xf]
      %v1287 = vld [vmem:[%s274 + $0x288] sm:$0xf]
      %v1288 = vld [vmem:[%s274 + $0x28c] sm:$0xf]
      %v1289 = vld [vmem:[%s274 + $0x290] sm:$0xf]
      %v1290 = vld [vmem:[%s274 + $0x294] sm:$0xf]
      %v1291 = vld [vmem:[%s274 + $0x298] sm:$0xf]
      %v1292 = vld [vmem:[%s274 + $0x29c] sm:$0xf]
      %v1293 = vld [vmem:[%s274 + $0x2a0] sm:$0xf]
      %v1294 = vld [vmem:[%s274 + $0x2a4] sm:$0xf]
      %v1295 = vld [vmem:[%s274 + $0x2a8] sm:$0xf]
      %v1296 = vld [vmem:[%s274 + $0x2ac] sm:$0xf]
      %v1297 = vld [vmem:[%s274 + $0x2b0] sm:$0xf]
      %v1298 = vld [vmem:[%s274 + $0x2b4] sm:$0xf]
      %v1299 = vld [vmem:[%s274 + $0x2b8] sm:$0xf]
      %v1300 = vld [vmem:[%s274 + $0x2bc] sm:$0xf]
      %v1301 = vld [vmem:[%s274 + $0x2c0] sm:$0xf]
      %v1302 = vld [vmem:[%s274 + $0x2c4] sm:$0xf]
      %v1303 = vld [vmem:[%s274 + $0x2c8] sm:$0xf]
      %v1304 = vld [vmem:[%s274 + $0x2cc] sm:$0xf]
      %v1305 = vld [vmem:[%s274 + $0x2d0] sm:$0xf]
      %v1306 = vld [vmem:[%s274 + $0x2d4] sm:$0xf]
      %v1307 = vld [vmem:[%s274 + $0x2d8] sm:$0xf]
      %v1308 = vld [vmem:[%s274 + $0x2dc] sm:$0xf]
      %v1309 = vld [vmem:[%s274 + $0x2e0] sm:$0xf]
      %v1310 = vld [vmem:[%s274 + $0x2e4] sm:$0xf]
      %v1311 = vld [vmem:[%s274 + $0x2e8] sm:$0xf]
      %v1312 = vld [vmem:[%s274 + $0x2ec] sm:$0xf]
      %v1313 = vld [vmem:[%s274 + $0x2f0] sm:$0xf]
      %v1314 = vld [vmem:[%s274 + $0x2f4] sm:$0xf]
      %v1315 = vld [vmem:[%s274 + $0x2f8] sm:$0xf]
      %v1316 = vld [vmem:[%s274 + $0x2fc] sm:$0xf]
      %v1317 = vld [vmem:[%s274 + $0x300] sm:$0xf]
      %v1318 = vld [vmem:[%s274 + $0x304] sm:$0xf]
      %v1319 = vld [vmem:[%s274 + $0x308] sm:$0xf]
      %v1320 = vld [vmem:[%s274 + $0x30c] sm:$0xf]
      %v1419 = vunpack.c.l.b16 %v1223
      %v1420 = vunpack.c.l.b16 %v1224
      %v1421 = vunpack.c.l.b16 %v1225
      %v1422 = vunpack.c.l.b16 %v1226
      %v1423 = vunpack.c.l.b16 %v1227
      %v1424 = vunpack.c.l.b16 %v1228
      %v1425 = vunpack.c.l.b16 %v1229
      %v1426 = vunpack.c.l.b16 %v1230
      %v1427 = vunpack.c.l.b16 %v1231
      %v1428 = vunpack.c.l.b16 %v1232
      %v1429 = vunpack.c.l.b16 %v1233
      %v1430 = vunpack.c.l.b16 %v1234
      %v1431 = vunpack.c.l.b16 %v1235
      %v1432 = vunpack.c.l.b16 %v1236
      %v1433 = vunpack.c.l.b16 %v1237
      %v1434 = vunpack.c.l.b16 %v1238
      %v1435 = vunpack.c.l.b16 %v1239
      %v1436 = vunpack.c.l.b16 %v1240
      %v1437 = vunpack.c.l.b16 %v1241
      %v1438 = vunpack.c.l.b16 %v1242
      %v1439 = vunpack.c.l.b16 %v1243
      %v1440 = vunpack.c.l.b16 %v1244
      %v1441 = vunpack.c.l.b16 %v1245
      %v1442 = vunpack.c.l.b16 %v1246
      %v1443 = vunpack.c.l.b16 %v1247
      %v1444 = vunpack.c.l.b16 %v1248
      %v1445 = vunpack.c.l.b16 %v1249
      %v1446 = vunpack.c.l.b16 %v1250
      %v1447 = vunpack.c.l.b16 %v1251
      %v1448 = vunpack.c.l.b16 %v1252
      %v1449 = vunpack.c.l.b16 %v1253
      %v1450 = vunpack.c.l.b16 %v1254
      %v1451 = vunpack.c.l.b16 %v1255
      %v1452 = vunpack.c.l.b16 %v1256
      %v1453 = vunpack.c.l.b16 %v1257
      %v1454 = vunpack.c.l.b16 %v1258
      %v1455 = vunpack.c.l.b16 %v1259
      %v1456 = vunpack.c.l.b16 %v1260
      %v1457 = vunpack.c.l.b16 %v1261
      %v1458 = vunpack.c.l.b16 %v1262
      %v1459 = vunpack.c.l.b16 %v1263
      %v1460 = vunpack.c.l.b16 %v1264
      %v1461 = vunpack.c.l.b16 %v1265
      %v1462 = vunpack.c.l.b16 %v1266
      %v1463 = vunpack.c.l.b16 %v1267
      %v1464 = vunpack.c.l.b16 %v1268
      %v1465 = vunpack.c.l.b16 %v1269
      %v1466 = vunpack.c.l.b16 %v1270
      %v1467 = vunpack.c.l.b16 %v1271
      %v1468 = vunpack.c.l.b16 %v1272
      %v1469 = vunpack.c.l.b16 %v1273
      %v1470 = vunpack.c.l.b16 %v1274
      %v1471 = vunpack.c.l.b16 %v1275
      %v1472 = vunpack.c.l.b16 %v1276
      %v1473 = vunpack.c.l.b16 %v1277
      %v1474 = vunpack.c.l.b16 %v1278
      %v1475 = vunpack.c.l.b16 %v1279
      %v1476 = vunpack.c.l.b16 %v1280
      %v1477 = vunpack.c.l.b16 %v1281
      %v1478 = vunpack.c.l.b16 %v1282
      %v1479 = vunpack.c.l.b16 %v1283
      %v1480 = vunpack.c.l.b16 %v1284
      %v1481 = vunpack.c.l.b16 %v1285
      %v1482 = vunpack.c.l.b16 %v1286
      %v1483 = vunpack.c.l.b16 %v1287
      %v1484 = vunpack.c.l.b16 %v1288
      %v1485 = vunpack.c.l.b16 %v1289
      %v1486 = vunpack.c.l.b16 %v1290
      %v1487 = vunpack.c.l.b16 %v1291
      %v1488 = vunpack.c.l.b16 %v1292
      %v1489 = vunpack.c.l.b16 %v1293
      %v1490 = vunpack.c.l.b16 %v1294
      %v1491 = vunpack.c.l.b16 %v1295
      %v1492 = vunpack.c.l.b16 %v1296
      %v1493 = vunpack.c.l.b16 %v1297
      %v1494 = vunpack.c.l.b16 %v1298
      %v1495 = vunpack.c.l.b16 %v1299
      %v1496 = vunpack.c.l.b16 %v1300
      %v1497 = vunpack.c.l.b16 %v1301
      %v1498 = vunpack.c.l.b16 %v1302
      %v1499 = vunpack.c.l.b16 %v1303
      %v1500 = vunpack.c.l.b16 %v1304
      %v1501 = vunpack.c.l.b16 %v1305
      %v1502 = vunpack.c.l.b16 %v1306
      %v1503 = vunpack.c.l.b16 %v1307
      %v1504 = vunpack.c.l.b16 %v1308
      %v1505 = vunpack.c.l.b16 %v1309
      %v1506 = vunpack.c.l.b16 %v1310
      %v1507 = vunpack.c.l.b16 %v1311
      %v1508 = vunpack.c.l.b16 %v1312
      %v1509 = vunpack.c.l.b16 %v1313
      %v1510 = vunpack.c.l.b16 %v1314
      %v1511 = vunpack.c.l.b16 %v1315
      %v1512 = vunpack.c.l.b16 %v1316
      %v1513 = vunpack.c.l.b16 %v1317
      %v1514 = vunpack.c.l.b16 %v1318
      %v1515 = vunpack.c.l.b16 %v1319
      %v1516 = vunpack.c.l.b16 %v1320
      %v1517 = vpack.c.b16 %v1420, %v1419
      %v1518 = vpack.c.b16 %v1422, %v1421
      %v1519 = vpack.c.b16 %v1424, %v1423
      %v1520 = vpack.c.b16 %v1426, %v1425
      %v1521 = vpack.c.b16 %v1428, %v1427
      %v1522 = vpack.c.b16 %v1430, %v1429
      %v1523 = vpack.c.b16 %v1432, %v1431
      %v1524 = vpack.c.b16 %v1434, %v1433
      %v1525 = vpack.c.b16 %v1436, %v1435
      %v1526 = vpack.c.b16 %v1438, %v1437
      %v1527 = vpack.c.b16 %v1440, %v1439
      %v1528 = vpack.c.b16 %v1442, %v1441
      %v1529 = vpack.c.b16 %v1444, %v1443
      %v1530 = vpack.c.b16 %v1446, %v1445
      %v1531 = vpack.c.b16 %v1448, %v1447
      %v1532 = vpack.c.b16 %v1450, %v1449
      %v1533 = vpack.c.b16 %v1452, %v1451
      %v1534 = vpack.c.b16 %v1454, %v1453
      %v1535 = vpack.c.b16 %v1456, %v1455
      %v1536 = vpack.c.b16 %v1458, %v1457
      %v1537 = vpack.c.b16 %v1460, %v1459
      %v1538 = vpack.c.b16 %v1462, %v1461
      %v1539 = vpack.c.b16 %v1464, %v1463
      %v1540 = vpack.c.b16 %v1466, %v1465
      %v1541 = vpack.c.b16 %v1468, %v1467
      %v1542 = vpack.c.b16 %v1470, %v1469
      %v1543 = vpack.c.b16 %v1472, %v1471
      %v1544 = vpack.c.b16 %v1474, %v1473
      %v1545 = vpack.c.b16 %v1476, %v1475
      %v1546 = vpack.c.b16 %v1478, %v1477
      %v1547 = vpack.c.b16 %v1480, %v1479
      %v1548 = vpack.c.b16 %v1482, %v1481
      %v1549 = vpack.c.b16 %v1484, %v1483
      %v1550 = vpack.c.b16 %v1486, %v1485
      %v1551 = vpack.c.b16 %v1488, %v1487
      %v1552 = vpack.c.b16 %v1490, %v1489
      %v1553 = vpack.c.b16 %v1492, %v1491
      %v1554 = vpack.c.b16 %v1494, %v1493
      %v1555 = vpack.c.b16 %v1496, %v1495
      %v1556 = vpack.c.b16 %v1498, %v1497
      %v1557 = vpack.c.b16 %v1500, %v1499
      %v1558 = vpack.c.b16 %v1502, %v1501
      %v1559 = vpack.c.b16 %v1504, %v1503
      %v1560 = vpack.c.b16 %v1506, %v1505
      %v1561 = vpack.c.b16 %v1508, %v1507
      %v1562 = vpack.c.b16 %v1510, %v1509
      %v1563 = vpack.c.b16 %v1512, %v1511
      %v1564 = vpack.c.b16 %v1514, %v1513
      %v1565 = vpack.c.b16 %v1516, %v1515
      %v1567 = vsel %vm646, %v1517, 0
      %v1570 = vsel %vm646, %v1518, 0
      %v1573 = vsel %vm646, %v1519, 0
      %v1576 = vsel %vm646, %v1520, 0
      %v1579 = vsel %vm646, %v1521, 0
      %v1582 = vsel %vm646, %v1522, 0
      %v1585 = vsel %vm646, %v1523, 0
      %v1588 = vsel %vm646, %v1524, 0
      %v1591 = vsel %vm646, %v1525, 0
      %v1594 = vsel %vm646, %v1526, 0
      %v1597 = vsel %vm646, %v1527, 0
      %v1600 = vsel %vm646, %v1528, 0
      %v1603 = vsel %vm646, %v1529, 0
      %v1606 = vsel %vm646, %v1530, 0
      %v1609 = vsel %vm646, %v1531, 0
      %v1612 = vsel %vm646, %v1532, 0
      %v1615 = vsel %vm646, %v1533, 0
      %v1618 = vsel %vm646, %v1534, 0
      %v1621 = vsel %vm646, %v1535, 0
      %v1624 = vsel %vm646, %v1536, 0
      %v1627 = vsel %vm646, %v1537, 0
      %v1630 = vsel %vm646, %v1538, 0
      %v1633 = vsel %vm646, %v1539, 0
      %v1636 = vsel %vm646, %v1540, 0
      %v1639 = vsel %vm646, %v1541, 0
      %v1642 = vsel %vm646, %v1542, 0
      %v1645 = vsel %vm646, %v1543, 0
      %v1648 = vsel %vm646, %v1544, 0
      %v1651 = vsel %vm646, %v1545, 0
      %v1654 = vsel %vm646, %v1546, 0
      %v1657 = vsel %vm646, %v1547, 0
      %v1660 = vsel %vm646, %v1548, 0
      %v1663 = vsel %vm646, %v1549, 0
      %v1666 = vsel %vm646, %v1550, 0
      %v1669 = vsel %vm646, %v1551, 0
      %v1672 = vsel %vm646, %v1552, 0
      %v1675 = vsel %vm646, %v1553, 0
      %v1678 = vsel %vm646, %v1554, 0
      %v1681 = vsel %vm646, %v1555, 0
      %v1684 = vsel %vm646, %v1556, 0
      %v1687 = vsel %vm646, %v1557, 0
      %v1690 = vsel %vm646, %v1558, 0
      %v1693 = vsel %vm646, %v1559, 0
      %v1696 = vsel %vm646, %v1560, 0
      %v1699 = vsel %vm646, %v1561, 0
      %v1702 = vsel %vm646, %v1562, 0
      %v1705 = vsel %vm646, %v1563, 0
      %v1708 = vsel %vm646, %v1564, 0
      %v1711 = vsel %vm646, %v1565, 0
      %1713 = vmatprep.subr.bf16.mxu0 0
      %1714 = vmatpush1.bf16.msra.mxu0 0
      %1715 = vmatprep.subr.bf16.mxu0 0
      %1716 = vmatpush1.bf16.msra.mxu0 0
      %1717 = vmatprep.subr.bf16.mxu0 0
      %1718 = vmatpush1.bf16.msra.mxu0 0
      %1719 = vmatprep.subr.bf16.mxu0 0
      %1720 = vmatpush1.bf16.msra.mxu0 0
      %1721 = vmatprep.subr.bf16.mxu0 0
      %1722 = vmatpush1.bf16.msra.mxu0 0
      %1723 = vmatprep.subr.bf16.mxu0 0
      %1724 = vmatpush1.bf16.msra.mxu0 %v796
      %1725 = vmatprep.subr.bf16.mxu0 0
      %1726 = vmatpush1.bf16.msra.mxu0 %v642
      %1727 = vmatprep.subr.bf16.mxu0 0
      %1728 = vmatpush1.bf16.msra.mxu0 %v641
      %1729 = vmatprep.subr.bf16.mxu0 0
      %1730 = vmatpush2.bf16.msra.mxu0 0
      %1731 = vmatprep.subr.bf16.mxu0 0
      %1732 = vmatpush2.bf16.msra.mxu0 0
      %1733 = vmatprep.subr.bf16.mxu0 0
      %1734 = vmatpush2.bf16.msra.mxu0 0
      %1735 = vmatprep.subr.bf16.mxu0 0
      %1736 = vmatpush2.bf16.msra.mxu0 0
      %1737 = vmatprep.subr.bf16.mxu0 0
      %1738 = vmatpush2.bf16.msra.mxu0 0
      %1739 = vmatprep.subr.bf16.mxu0 0
      %1740 = vmatpush2.bf16.msra.mxu0 0
      %1741 = vmatprep.subr.bf16.mxu0 0
      %1742 = vmatpush2.bf16.msra.mxu0 0
      %1743 = vmatprep.subr.bf16.mxu0 0
      %1744 = vmatpush2.bf16.msra.mxu0 0
      %1745 = vmatprep.mubr.bf16.mxu0 0
      %1746 = vmatmul.mubr.bf16.gmra.mxu0 %v1567
      %v1747 = vpop.f32.mrf.mxu0
      %v1748 = vadd.f32 0.0, %v1747
      %v1749 = vpop.f32.mrf.mxu0
      %v1750 = vpop.f32.mrf.mxu0
      %v1751 = vadd.f32 0.0, %v1750
      %v1752 = vpop.f32.mrf.mxu0
      %1753 = vmatprep.mubr.bf16.mxu0 0
      %1754 = vmatmul.mubr.bf16.gmra.mxu0 %v1570
      %v1755 = vpop.f32.mrf.mxu0
      %v1756 = vadd.f32 0.0, %v1755
      %v1757 = vpop.f32.mrf.mxu0
      %v1758 = vpop.f32.mrf.mxu0
      %v1759 = vadd.f32 0.0, %v1758
      %v1760 = vpop.f32.mrf.mxu0
      %1761 = vmatprep.mubr.bf16.mxu0 0
      %1762 = vmatmul.mubr.bf16.gmra.mxu0 %v1573
      %v1763 = vpop.f32.mrf.mxu0
      %v1764 = vadd.f32 0.0, %v1763
      %v1765 = vpop.f32.mrf.mxu0
      %v1766 = vpop.f32.mrf.mxu0
      %v1767 = vadd.f32 0.0, %v1766
      %v1768 = vpop.f32.mrf.mxu0
      %1769 = vmatprep.mubr.bf16.mxu0 0
      %1770 = vmatmul.mubr.bf16.gmra.mxu0 %v1576
      %v1771 = vpop.f32.mrf.mxu0
      %v1772 = vadd.f32 0.0, %v1771
      %v1773 = vpop.f32.mrf.mxu0
      %v1774 = vpop.f32.mrf.mxu0
      %v1775 = vadd.f32 0.0, %v1774
      %v1776 = vpop.f32.mrf.mxu0
      %1777 = vmatprep.mubr.bf16.mxu0 0
      %1778 = vmatmul.mubr.bf16.gmra.mxu0 %v1579
      %v1779 = vpop.f32.mrf.mxu0
      %v1780 = vadd.f32 0.0, %v1779
      %v1781 = vpop.f32.mrf.mxu0
      %v1782 = vpop.f32.mrf.mxu0
      %v1783 = vadd.f32 0.0, %v1782
      %v1784 = vpop.f32.mrf.mxu0
      %1785 = vmatprep.mubr.bf16.mxu0 0
      %1786 = vmatmul.mubr.bf16.gmra.mxu0 %v1582
      %v1787 = vpop.f32.mrf.mxu0
      %v1788 = vadd.f32 0.0, %v1787
      %v1789 = vpop.f32.mrf.mxu0
      %v1790 = vpop.f32.mrf.mxu0
      %v1791 = vadd.f32 0.0, %v1790
      %v1792 = vpop.f32.mrf.mxu0
      %1793 = vmatprep.mubr.bf16.mxu0 0
      %1794 = vmatmul.mubr.bf16.gmra.mxu0 %v1585
      %v1795 = vpop.f32.mrf.mxu0
      %v1796 = vadd.f32 0.0, %v1795
      %v1797 = vpop.f32.mrf.mxu0
      %v1798 = vpop.f32.mrf.mxu0
      %v1799 = vadd.f32 0.0, %v1798
      %v1800 = vpop.f32.mrf.mxu0
      %1801 = vmatprep.mubr.bf16.mxu0 0
      %1802 = vmatmul.mubr.bf16.gmra.mxu0 %v1588
      %v1803 = vpop.f32.mrf.mxu0
      %v1804 = vadd.f32 0.0, %v1803
      %v1805 = vpop.f32.mrf.mxu0
      %v1806 = vpop.f32.mrf.mxu0
      %v1807 = vadd.f32 0.0, %v1806
      %v1808 = vpop.f32.mrf.mxu0
      %1809 = vmatprep.mubr.bf16.mxu0 0
      %1810 = vmatmul.mubr.bf16.gmra.mxu0 %v1591
      %v1811 = vpop.f32.mrf.mxu0
      %v1812 = vadd.f32 0.0, %v1811
      %v1813 = vpop.f32.mrf.mxu0
      %v1814 = vpop.f32.mrf.mxu0
      %v1815 = vadd.f32 0.0, %v1814
      %v1816 = vpop.f32.mrf.mxu0
      %1817 = vmatprep.mubr.bf16.mxu0 0
      %1818 = vmatmul.mubr.bf16.gmra.mxu0 %v1594
      %v1819 = vpop.f32.mrf.mxu0
      %v1820 = vadd.f32 0.0, %v1819
      %v1821 = vpop.f32.mrf.mxu0
      %v1822 = vpop.f32.mrf.mxu0
      %v1823 = vadd.f32 0.0, %v1822
      %v1824 = vpop.f32.mrf.mxu0
      %1825 = vmatprep.mubr.bf16.mxu0 0
      %1826 = vmatmul.mubr.bf16.gmra.mxu0 %v1597
      %v1827 = vpop.f32.mrf.mxu0
      %v1828 = vadd.f32 0.0, %v1827
      %v1829 = vpop.f32.mrf.mxu0
      %v1830 = vpop.f32.mrf.mxu0
      %v1831 = vadd.f32 0.0, %v1830
      %v1832 = vpop.f32.mrf.mxu0
      %1833 = vmatprep.mubr.bf16.mxu0 0
      %1834 = vmatmul.mubr.bf16.gmra.mxu0 %v1600
      %v1835 = vpop.f32.mrf.mxu0
      %v1836 = vadd.f32 0.0, %v1835
      %v1837 = vpop.f32.mrf.mxu0
      %v1838 = vpop.f32.mrf.mxu0
      %v1839 = vadd.f32 0.0, %v1838
      %v1840 = vpop.f32.mrf.mxu0
      %1841 = vmatprep.mubr.bf16.mxu0 0
      %1842 = vmatmul.mubr.bf16.gmra.mxu0 %v1603
      %v1843 = vpop.f32.mrf.mxu0
      %v1844 = vadd.f32 0.0, %v1843
      %v1845 = vpop.f32.mrf.mxu0
      %v1846 = vpop.f32.mrf.mxu0
      %v1847 = vadd.f32 0.0, %v1846
      %v1848 = vpop.f32.mrf.mxu0
      %1849 = vmatprep.mubr.bf16.mxu0 0
      %1850 = vmatmul.mubr.bf16.gmra.mxu0 %v1606
      %v1851 = vpop.f32.mrf.mxu0
      %v1852 = vadd.f32 0.0, %v1851
      %v1853 = vpop.f32.mrf.mxu0
      %v1854 = vpop.f32.mrf.mxu0
      %v1855 = vadd.f32 0.0, %v1854
      %v1856 = vpop.f32.mrf.mxu0
      %1857 = vmatprep.mubr.bf16.mxu0 0
      %1858 = vmatmul.mubr.bf16.gmra.mxu0 %v1609
      %v1859 = vpop.f32.mrf.mxu0
      %v1860 = vadd.f32 0.0, %v1859
      %v1861 = vpop.f32.mrf.mxu0
      %v1862 = vpop.f32.mrf.mxu0
      %v1863 = vadd.f32 0.0, %v1862
      %v1864 = vpop.f32.mrf.mxu0
      %1865 = vmatprep.mubr.bf16.mxu0 0
      %1866 = vmatmul.mubr.bf16.gmra.mxu0 %v1612
      %v1867 = vpop.f32.mrf.mxu0
      %v1868 = vadd.f32 0.0, %v1867
      %v1869 = vpop.f32.mrf.mxu0
      %v1870 = vpop.f32.mrf.mxu0
      %v1871 = vadd.f32 0.0, %v1870
      %v1872 = vpop.f32.mrf.mxu0
      %1873 = vmatprep.mubr.bf16.mxu0 0
      %1874 = vmatmul.mubr.bf16.gmra.mxu0 %v1615
      %v1875 = vpop.f32.mrf.mxu0
      %v1876 = vadd.f32 0.0, %v1875
      %v1877 = vpop.f32.mrf.mxu0
      %v1878 = vpop.f32.mrf.mxu0
      %v1879 = vadd.f32 0.0, %v1878
      %v1880 = vpop.f32.mrf.mxu0
      %1881 = vmatprep.mubr.bf16.mxu0 0
      %1882 = vmatmul.mubr.bf16.gmra.mxu0 %v1618
      %v1883 = vpop.f32.mrf.mxu0
      %v1884 = vadd.f32 0.0, %v1883
      %v1885 = vpop.f32.mrf.mxu0
      %v1886 = vpop.f32.mrf.mxu0
      %v1887 = vadd.f32 0.0, %v1886
      %v1888 = vpop.f32.mrf.mxu0
      %1889 = vmatprep.mubr.bf16.mxu0 0
      %1890 = vmatmul.mubr.bf16.gmra.mxu0 %v1621
      %v1891 = vpop.f32.mrf.mxu0
      %v1892 = vadd.f32 0.0, %v1891
      %v1893 = vpop.f32.mrf.mxu0
      %v1894 = vpop.f32.mrf.mxu0
      %v1895 = vadd.f32 0.0, %v1894
      %v1896 = vpop.f32.mrf.mxu0
      %1897 = vmatprep.mubr.bf16.mxu0 0
      %1898 = vmatmul.mubr.bf16.gmra.mxu0 %v1624
      %v1899 = vpop.f32.mrf.mxu0
      %v1900 = vadd.f32 0.0, %v1899
      %v1901 = vpop.f32.mrf.mxu0
      %v1902 = vpop.f32.mrf.mxu0
      %v1903 = vadd.f32 0.0, %v1902
      %v1904 = vpop.f32.mrf.mxu0
      %1905 = vmatprep.mubr.bf16.mxu0 0
      %1906 = vmatmul.mubr.bf16.gmra.mxu0 %v1627
      %v1907 = vpop.f32.mrf.mxu0
      %v1908 = vadd.f32 0.0, %v1907
      %v1909 = vpop.f32.mrf.mxu0
      %v1910 = vpop.f32.mrf.mxu0
      %v1911 = vadd.f32 0.0, %v1910
      %v1912 = vpop.f32.mrf.mxu0
      %1913 = vmatprep.mubr.bf16.mxu0 0
      %1914 = vmatmul.mubr.bf16.gmra.mxu0 %v1630
      %v1915 = vpop.f32.mrf.mxu0
      %v1916 = vadd.f32 0.0, %v1915
      %v1917 = vpop.f32.mrf.mxu0
      %v1918 = vpop.f32.mrf.mxu0
      %v1919 = vadd.f32 0.0, %v1918
      %v1920 = vpop.f32.mrf.mxu0
      %1921 = vmatprep.mubr.bf16.mxu0 0
      %1922 = vmatmul.mubr.bf16.gmra.mxu0 %v1633
      %v1923 = vpop.f32.mrf.mxu0
      %v1924 = vadd.f32 0.0, %v1923
      %v1925 = vpop.f32.mrf.mxu0
      %v1926 = vpop.f32.mrf.mxu0
      %v1927 = vadd.f32 0.0, %v1926
      %v1928 = vpop.f32.mrf.mxu0
      %1929 = vmatprep.mubr.bf16.mxu0 0
      %1930 = vmatmul.mubr.bf16.gmra.mxu0 %v1636
      %v1931 = vpop.f32.mrf.mxu0
      %v1932 = vadd.f32 0.0, %v1931
      %v1933 = vpop.f32.mrf.mxu0
      %v1934 = vpop.f32.mrf.mxu0
      %v1935 = vadd.f32 0.0, %v1934
      %v1936 = vpop.f32.mrf.mxu0
      %1937 = vmatprep.mubr.bf16.mxu0 0
      %1938 = vmatmul.mubr.bf16.gmra.mxu0 %v1639
      %v1939 = vpop.f32.mrf.mxu0
      %v1940 = vadd.f32 0.0, %v1939
      %v1941 = vpop.f32.mrf.mxu0
      %v1942 = vpop.f32.mrf.mxu0
      %v1943 = vadd.f32 0.0, %v1942
      %v1944 = vpop.f32.mrf.mxu0
      %1945 = vmatprep.mubr.bf16.mxu0 0
      %1946 = vmatmul.mubr.bf16.gmra.mxu0 %v1642
      %v1947 = vpop.f32.mrf.mxu0
      %v1948 = vadd.f32 0.0, %v1947
      %v1949 = vpop.f32.mrf.mxu0
      %v1950 = vpop.f32.mrf.mxu0
      %v1951 = vadd.f32 0.0, %v1950
      %v1952 = vpop.f32.mrf.mxu0
      %1953 = vmatprep.mubr.bf16.mxu0 0
      %1954 = vmatmul.mubr.bf16.gmra.mxu0 %v1645
      %v1955 = vpop.f32.mrf.mxu0
      %v1956 = vadd.f32 0.0, %v1955
      %v1957 = vpop.f32.mrf.mxu0
      %v1958 = vpop.f32.mrf.mxu0
      %v1959 = vadd.f32 0.0, %v1958
      %v1960 = vpop.f32.mrf.mxu0
      %1961 = vmatprep.mubr.bf16.mxu0 0
      %1962 = vmatmul.mubr.bf16.gmra.mxu0 %v1648
      %v1963 = vpop.f32.mrf.mxu0
      %v1964 = vadd.f32 0.0, %v1963
      %v1965 = vpop.f32.mrf.mxu0
      %v1966 = vpop.f32.mrf.mxu0
      %v1967 = vadd.f32 0.0, %v1966
      %v1968 = vpop.f32.mrf.mxu0
      %1969 = vmatprep.mubr.bf16.mxu0 0
      %1970 = vmatmul.mubr.bf16.gmra.mxu0 %v1651
      %v1971 = vpop.f32.mrf.mxu0
      %v1972 = vadd.f32 0.0, %v1971
      %v1973 = vpop.f32.mrf.mxu0
      %v1974 = vpop.f32.mrf.mxu0
      %v1975 = vadd.f32 0.0, %v1974
      %v1976 = vpop.f32.mrf.mxu0
      %1977 = vmatprep.mubr.bf16.mxu0 0
      %1978 = vmatmul.mubr.bf16.gmra.mxu0 %v1654
      %v1979 = vpop.f32.mrf.mxu0
      %v1980 = vadd.f32 0.0, %v1979
      %v1981 = vpop.f32.mrf.mxu0
      %v1982 = vpop.f32.mrf.mxu0
      %v1983 = vadd.f32 0.0, %v1982
      %v1984 = vpop.f32.mrf.mxu0
      %1985 = vmatprep.mubr.bf16.mxu0 0
      %1986 = vmatmul.mubr.bf16.gmra.mxu0 %v1657
      %v1987 = vpop.f32.mrf.mxu0
      %v1988 = vadd.f32 0.0, %v1987
      %v1989 = vpop.f32.mrf.mxu0
      %v1990 = vpop.f32.mrf.mxu0
      %v1991 = vadd.f32 0.0, %v1990
      %v1992 = vpop.f32.mrf.mxu0
      %1993 = vmatprep.mubr.bf16.mxu0 0
      %1994 = vmatmul.mubr.bf16.gmra.mxu0 %v1660
      %v1995 = vpop.f32.mrf.mxu0
      %v1996 = vadd.f32 0.0, %v1995
      %v1997 = vpop.f32.mrf.mxu0
      %v1998 = vpop.f32.mrf.mxu0
      %v1999 = vadd.f32 0.0, %v1998
      %v2000 = vpop.f32.mrf.mxu0
      %2001 = vmatprep.mubr.bf16.mxu0 0
      %2002 = vmatmul.mubr.bf16.gmra.mxu0 %v1663
      %v2003 = vpop.f32.mrf.mxu0
      %v2004 = vadd.f32 0.0, %v2003
      %v2005 = vpop.f32.mrf.mxu0
      %v2006 = vpop.f32.mrf.mxu0
      %v2007 = vadd.f32 0.0, %v2006
      %v2008 = vpop.f32.mrf.mxu0
      %2009 = vmatprep.mubr.bf16.mxu0 0
      %2010 = vmatmul.mubr.bf16.gmra.mxu0 %v1666
      %v2011 = vpop.f32.mrf.mxu0
      %v2012 = vadd.f32 0.0, %v2011
      %v2013 = vpop.f32.mrf.mxu0
      %v2014 = vpop.f32.mrf.mxu0
      %v2015 = vadd.f32 0.0, %v2014
      %v2016 = vpop.f32.mrf.mxu0
      %2017 = vmatprep.mubr.bf16.mxu0 0
      %2018 = vmatmul.mubr.bf16.gmra.mxu0 %v1669
      %v2019 = vpop.f32.mrf.mxu0
      %v2020 = vadd.f32 0.0, %v2019
      %v2021 = vpop.f32.mrf.mxu0
      %v2022 = vpop.f32.mrf.mxu0
      %v2023 = vadd.f32 0.0, %v2022
      %v2024 = vpop.f32.mrf.mxu0
      %2025 = vmatprep.mubr.bf16.mxu0 0
      %2026 = vmatmul.mubr.bf16.gmra.mxu0 %v1672
      %v2027 = vpop.f32.mrf.mxu0
      %v2028 = vadd.f32 0.0, %v2027
      %v2029 = vpop.f32.mrf.mxu0
      %v2030 = vpop.f32.mrf.mxu0
      %v2031 = vadd.f32 0.0, %v2030
      %v2032 = vpop.f32.mrf.mxu0
      %2033 = vmatprep.mubr.bf16.mxu0 0
      %2034 = vmatmul.mubr.bf16.gmra.mxu0 %v1675
      %v2035 = vpop.f32.mrf.mxu0
      %v2036 = vadd.f32 0.0, %v2035
      %v2037 = vpop.f32.mrf.mxu0
      %v2038 = vpop.f32.mrf.mxu0
      %v2039 = vadd.f32 0.0, %v2038
      %v2040 = vpop.f32.mrf.mxu0
      %2041 = vmatprep.mubr.bf16.mxu0 0
      %2042 = vmatmul.mubr.bf16.gmra.mxu0 %v1678
      %v2043 = vpop.f32.mrf.mxu0
      %v2044 = vadd.f32 0.0, %v2043
      %v2045 = vpop.f32.mrf.mxu0
      %v2046 = vpop.f32.mrf.mxu0
      %v2047 = vadd.f32 0.0, %v2046
      %v2048 = vpop.f32.mrf.mxu0
      %2049 = vmatprep.mubr.bf16.mxu0 0
      %2050 = vmatmul.mubr.bf16.gmra.mxu0 %v1681
      %v2051 = vpop.f32.mrf.mxu0
      %v2052 = vadd.f32 0.0, %v2051
      %v2053 = vpop.f32.mrf.mxu0
      %v2054 = vpop.f32.mrf.mxu0
      %v2055 = vadd.f32 0.0, %v2054
      %v2056 = vpop.f32.mrf.mxu0
      %2057 = vmatprep.mubr.bf16.mxu0 0
      %2058 = vmatmul.mubr.bf16.gmra.mxu0 %v1684
      %v2059 = vpop.f32.mrf.mxu0
      %v2060 = vadd.f32 0.0, %v2059
      %v2061 = vpop.f32.mrf.mxu0
      %v2062 = vpop.f32.mrf.mxu0
      %v2063 = vadd.f32 0.0, %v2062
      %v2064 = vpop.f32.mrf.mxu0
      %2065 = vmatprep.mubr.bf16.mxu0 0
      %2066 = vmatmul.mubr.bf16.gmra.mxu0 %v1687
      %v2067 = vpop.f32.mrf.mxu0
      %v2068 = vadd.f32 0.0, %v2067
      %v2069 = vpop.f32.mrf.mxu0
      %v2070 = vpop.f32.mrf.mxu0
      %v2071 = vadd.f32 0.0, %v2070
      %v2072 = vpop.f32.mrf.mxu0
      %2073 = vmatprep.mubr.bf16.mxu0 0
      %2074 = vmatmul.mubr.bf16.gmra.mxu0 %v1690
      %v2075 = vpop.f32.mrf.mxu0
      %v2076 = vadd.f32 0.0, %v2075
      %v2077 = vpop.f32.mrf.mxu0
      %v2078 = vpop.f32.mrf.mxu0
      %v2079 = vadd.f32 0.0, %v2078
      %v2080 = vpop.f32.mrf.mxu0
      %2081 = vmatprep.mubr.bf16.mxu0 0
      %2082 = vmatmul.mubr.bf16.gmra.mxu0 %v1693
      %v2083 = vpop.f32.mrf.mxu0
      %v2084 = vadd.f32 0.0, %v2083
      %v2085 = vpop.f32.mrf.mxu0
      %v2086 = vpop.f32.mrf.mxu0
      %v2087 = vadd.f32 0.0, %v2086
      %v2088 = vpop.f32.mrf.mxu0
      %2089 = vmatprep.mubr.bf16.mxu0 0
      %2090 = vmatmul.mubr.bf16.gmra.mxu0 %v1696
      %v2091 = vpop.f32.mrf.mxu0
      %v2092 = vadd.f32 0.0, %v2091
      %v2093 = vpop.f32.mrf.mxu0
      %v2094 = vpop.f32.mrf.mxu0
      %v2095 = vadd.f32 0.0, %v2094
      %v2096 = vpop.f32.mrf.mxu0
      %2097 = vmatprep.mubr.bf16.mxu0 0
      %2098 = vmatmul.mubr.bf16.gmra.mxu0 %v1699
      %v2099 = vpop.f32.mrf.mxu0
      %v2100 = vadd.f32 0.0, %v2099
      %v2101 = vpop.f32.mrf.mxu0
      %v2102 = vpop.f32.mrf.mxu0
      %v2103 = vadd.f32 0.0, %v2102
      %v2104 = vpop.f32.mrf.mxu0
      %2105 = vmatprep.mubr.bf16.mxu0 0
      %2106 = vmatmul.mubr.bf16.gmra.mxu0 %v1702
      %v2107 = vpop.f32.mrf.mxu0
      %v2108 = vadd.f32 0.0, %v2107
      %v2109 = vpop.f32.mrf.mxu0
      %v2110 = vpop.f32.mrf.mxu0
      %v2111 = vadd.f32 0.0, %v2110
      %v2112 = vpop.f32.mrf.mxu0
      %2113 = vmatprep.mubr.bf16.mxu0 0
      %2114 = vmatmul.mubr.bf16.gmra.mxu0 %v1705
      %v2115 = vpop.f32.mrf.mxu0
      %v2116 = vadd.f32 0.0, %v2115
      %v2117 = vpop.f32.mrf.mxu0
      %v2118 = vpop.f32.mrf.mxu0
      %v2119 = vadd.f32 0.0, %v2118
      %v2120 = vpop.f32.mrf.mxu0
      %2121 = vmatprep.mubr.bf16.mxu0 0
      %2122 = vmatmul.mubr.bf16.gmra.mxu0 %v1708
      %v2123 = vpop.f32.mrf.mxu0
      %v2124 = vadd.f32 0.0, %v2123
      %v2125 = vpop.f32.mrf.mxu0
      %v2126 = vpop.f32.mrf.mxu0
      %v2127 = vadd.f32 0.0, %v2126
      %v2128 = vpop.f32.mrf.mxu0
      %2129 = vmatprep.mubr.bf16.mxu0 0
      %2130 = vmatmul.mubr.bf16.gmra.mxu0 %v1711
      %v2131 = vpop.f32.mrf.mxu0
      %v2132 = vadd.f32 0.0, %v2131
      %v2133 = vpop.f32.mrf.mxu0
      %v2134 = vpop.f32.mrf.mxu0
      %v2135 = vadd.f32 0.0, %v2134
      %v2136 = vpop.f32.mrf.mxu0
      %2137 = vdwg.mxu0
      %v2138 = vmax.f32 %v833, %v1748
      %v2139 = vmax.f32 %v836, %v1751
      %v2140 = vmax.f32 %v841, %v1756
      %v2141 = vmax.f32 %v844, %v1759
      %v2142 = vmax.f32 %v849, %v1764
      %v2143 = vmax.f32 %v852, %v1767
      %v2144 = vmax.f32 %v857, %v1772
      %v2145 = vmax.f32 %v860, %v1775
      %v2146 = vmax.f32 %v865, %v1780
      %v2147 = vmax.f32 %v868, %v1783
      %v2148 = vmax.f32 %v873, %v1788
      %v2149 = vmax.f32 %v876, %v1791
      %v2150 = vmax.f32 %v881, %v1796
      %v2151 = vmax.f32 %v884, %v1799
      %v2152 = vmax.f32 %v889, %v1804
      %v2153 = vmax.f32 %v892, %v1807
      %v2154 = vmax.f32 %v897, %v1812
      %v2155 = vmax.f32 %v900, %v1815
      %v2156 = vmax.f32 %v905, %v1820
      %v2157 = vmax.f32 %v908, %v1823
      %v2158 = vmax.f32 %v913, %v1828
      %v2159 = vmax.f32 %v916, %v1831
      %v2160 = vmax.f32 %v921, %v1836
      %v2161 = vmax.f32 %v924, %v1839
      %v2162 = vmax.f32 %v929, %v1844
      %v2163 = vmax.f32 %v932, %v1847
      %v2164 = vmax.f32 %v937, %v1852
      %v2165 = vmax.f32 %v940, %v1855
      %v2166 = vmax.f32 %v945, %v1860
      %v2167 = vmax.f32 %v948, %v1863
      %v2168 = vmax.f32 %v953, %v1868
      %v2169 = vmax.f32 %v956, %v1871
      %v2170 = vmax.f32 %v961, %v1876
      %v2171 = vmax.f32 %v964, %v1879
      %v2172 = vmax.f32 %v969, %v1884
      %v2173 = vmax.f32 %v972, %v1887
      %v2174 = vmax.f32 %v977, %v1892
      %v2175 = vmax.f32 %v980, %v1895
      %v2176 = vmax.f32 %v985, %v1900
      %v2177 = vmax.f32 %v988, %v1903
      %v2178 = vmax.f32 %v993, %v1908
      %v2179 = vmax.f32 %v996, %v1911
      %v2180 = vmax.f32 %v1001, %v1916
      %v2181 = vmax.f32 %v1004, %v1919
      %v2182 = vmax.f32 %v1009, %v1924
      %v2183 = vmax.f32 %v1012, %v1927
      %v2184 = vmax.f32 %v1017, %v1932
      %v2185 = vmax.f32 %v1020, %v1935
      %v2186 = vmax.f32 %v1025, %v1940
      %v2187 = vmax.f32 %v1028, %v1943
      %v2188 = vmax.f32 %v1033, %v1948
      %v2189 = vmax.f32 %v1036, %v1951
      %v2190 = vmax.f32 %v1041, %v1956
      %v2191 = vmax.f32 %v1044, %v1959
      %v2192 = vmax.f32 %v1049, %v1964
      %v2193 = vmax.f32 %v1052, %v1967
      %v2194 = vmax.f32 %v1057, %v1972
      %v2195 = vmax.f32 %v1060, %v1975
      %v2196 = vmax.f32 %v1065, %v1980
      %v2197 = vmax.f32 %v1068, %v1983
      %v2198 = vmax.f32 %v1073, %v1988
      %v2199 = vmax.f32 %v1076, %v1991
      %v2200 = vmax.f32 %v1081, %v1996
      %v2201 = vmax.f32 %v1084, %v1999
      %v2202 = vmax.f32 %v1089, %v2004
      %v2203 = vmax.f32 %v1092, %v2007
      %v2204 = vmax.f32 %v1097, %v2012
      %v2205 = vmax.f32 %v1100, %v2015
      %v2206 = vmax.f32 %v1105, %v2020
      %v2207 = vmax.f32 %v1108, %v2023
      %v2208 = vmax.f32 %v1113, %v2028
      %v2209 = vmax.f32 %v1116, %v2031
      %v2210 = vmax.f32 %v1121, %v2036
      %v2211 = vmax.f32 %v1124, %v2039
      %v2212 = vmax.f32 %v1129, %v2044
      %v2213 = vmax.f32 %v1132, %v2047
      %v2214 = vmax.f32 %v1137, %v2052
      %v2215 = vmax.f32 %v1140, %v2055
      %v2216 = vmax.f32 %v1145, %v2060
      %v2217 = vmax.f32 %v1148, %v2063
      %v2218 = vmax.f32 %v1153, %v2068
      %v2219 = vmax.f32 %v1156, %v2071
      %v2220 = vmax.f32 %v1161, %v2076
      %v2221 = vmax.f32 %v1164, %v2079
      %v2222 = vmax.f32 %v1169, %v2084
      %v2223 = vmax.f32 %v1172, %v2087
      %v2224 = vmax.f32 %v1177, %v2092
      %v2225 = vmax.f32 %v1180, %v2095
      %v2226 = vmax.f32 %v1185, %v2100
      %v2227 = vmax.f32 %v1188, %v2103
      %v2228 = vmax.f32 %v1193, %v2108
      %v2229 = vmax.f32 %v1196, %v2111
      %v2230 = vmax.f32 %v1201, %v2116
      %v2231 = vmax.f32 %v1204, %v2119
      %v2232 = vmax.f32 %v1209, %v2124
      %v2233 = vmax.f32 %v1212, %v2127
      %v2234 = vmax.f32 %v1217, %v2132
      %v2235 = vmax.f32 %v1220, %v2135
      %v2236 = vld [vmem:[%s274 + $0x310] sm:$0xf]
      %v2237 = vld [vmem:[%s274 + $0x314] sm:$0xf]
      %v2238 = vld [vmem:[%s274 + $0x318] sm:$0xf]
      %v2239 = vld [vmem:[%s274 + $0x31c] sm:$0xf]
      %v2240 = vld [vmem:[%s274 + $0x320] sm:$0xf]
      %v2241 = vld [vmem:[%s274 + $0x324] sm:$0xf]
      %v2242 = vld [vmem:[%s274 + $0x328] sm:$0xf]
      %v2243 = vld [vmem:[%s274 + $0x32c] sm:$0xf]
      %v2244 = vld [vmem:[%s274 + $0x330] sm:$0xf]
      %v2245 = vld [vmem:[%s274 + $0x334] sm:$0xf]
      %v2246 = vld [vmem:[%s274 + $0x338] sm:$0xf]
      %v2247 = vld [vmem:[%s274 + $0x33c] sm:$0xf]
      %v2248 = vld [vmem:[%s274 + $0x340] sm:$0xf]
      %v2249 = vld [vmem:[%s274 + $0x344] sm:$0xf]
      %v2250 = vld [vmem:[%s274 + $0x348] sm:$0xf]
      %v2251 = vld [vmem:[%s274 + $0x34c] sm:$0xf]
      %v2252 = vld [vmem:[%s274 + $0x350] sm:$0xf]
      %v2253 = vld [vmem:[%s274 + $0x354] sm:$0xf]
      %v2254 = vld [vmem:[%s274 + $0x358] sm:$0xf]
      %v2255 = vld [vmem:[%s274 + $0x35c] sm:$0xf]
      %v2256 = vld [vmem:[%s274 + $0x360] sm:$0xf]
      %v2257 = vld [vmem:[%s274 + $0x364] sm:$0xf]
      %v2258 = vld [vmem:[%s274 + $0x368] sm:$0xf]
      %v2259 = vld [vmem:[%s274 + $0x36c] sm:$0xf]
      %v2260 = vld [vmem:[%s274 + $0x370] sm:$0xf]
      %v2261 = vld [vmem:[%s274 + $0x374] sm:$0xf]
      %v2262 = vld [vmem:[%s274 + $0x378] sm:$0xf]
      %v2263 = vld [vmem:[%s274 + $0x37c] sm:$0xf]
      %v2264 = vld [vmem:[%s274 + $0x380] sm:$0xf]
      %v2265 = vld [vmem:[%s274 + $0x384] sm:$0xf]
      %v2266 = vld [vmem:[%s274 + $0x388] sm:$0xf]
      %v2267 = vld [vmem:[%s274 + $0x38c] sm:$0xf]
      %v2268 = vld [vmem:[%s274 + $0x390] sm:$0xf]
      %v2269 = vld [vmem:[%s274 + $0x394] sm:$0xf]
      %v2270 = vld [vmem:[%s274 + $0x398] sm:$0xf]
      %v2271 = vld [vmem:[%s274 + $0x39c] sm:$0xf]
      %v2272 = vld [vmem:[%s274 + $0x3a0] sm:$0xf]
      %v2273 = vld [vmem:[%s274 + $0x3a4] sm:$0xf]
      %v2274 = vld [vmem:[%s274 + $0x3a8] sm:$0xf]
      %v2275 = vld [vmem:[%s274 + $0x3ac] sm:$0xf]
      %v2276 = vld [vmem:[%s274 + $0x3b0] sm:$0xf]
      %v2277 = vld [vmem:[%s274 + $0x3b4] sm:$0xf]
      %v2278 = vld [vmem:[%s274 + $0x3b8] sm:$0xf]
      %v2279 = vld [vmem:[%s274 + $0x3bc] sm:$0xf]
      %v2280 = vld [vmem:[%s274 + $0x3c0] sm:$0xf]
      %v2281 = vld [vmem:[%s274 + $0x3c4] sm:$0xf]
      %v2282 = vld [vmem:[%s274 + $0x3c8] sm:$0xf]
      %v2283 = vld [vmem:[%s274 + $0x3cc] sm:$0xf]
      %v2284 = vld [vmem:[%s274 + $0x3d0] sm:$0xf]
      %v2285 = vld [vmem:[%s274 + $0x3d4] sm:$0xf]
      %v2286 = vld [vmem:[%s274 + $0x3d8] sm:$0xf]
      %v2287 = vld [vmem:[%s274 + $0x3dc] sm:$0xf]
      %v2288 = vld [vmem:[%s274 + $0x3e0] sm:$0xf]
      %v2289 = vld [vmem:[%s274 + $0x3e4] sm:$0xf]
      %v2290 = vld [vmem:[%s274 + $0x3e8] sm:$0xf]
      %v2291 = vld [vmem:[%s274 + $0x3ec] sm:$0xf]
      %v2292 = vld [vmem:[%s274 + $0x3f0] sm:$0xf]
      %v2293 = vld [vmem:[%s274 + $0x3f4] sm:$0xf]
      %v2294 = vld [vmem:[%s274 + $0x3f8] sm:$0xf]
      %v2295 = vld [vmem:[%s274 + $0x3fc] sm:$0xf]
      %v2296 = vld [vmem:[%s274 + $0x400] sm:$0xf]
      %v2297 = vld [vmem:[%s274 + $0x404] sm:$0xf]
      %v2298 = vld [vmem:[%s274 + $0x408] sm:$0xf]
      %v2299 = vld [vmem:[%s274 + $0x40c] sm:$0xf]
      %v2300 = vld [vmem:[%s274 + $0x410] sm:$0xf]
      %v2301 = vld [vmem:[%s274 + $0x414] sm:$0xf]
      %v2302 = vld [vmem:[%s274 + $0x418] sm:$0xf]
      %v2303 = vld [vmem:[%s274 + $0x41c] sm:$0xf]
      %v2304 = vld [vmem:[%s274 + $0x420] sm:$0xf]
      %v2305 = vld [vmem:[%s274 + $0x424] sm:$0xf]
      %v2306 = vld [vmem:[%s274 + $0x428] sm:$0xf]
      %v2307 = vld [vmem:[%s274 + $0x42c] sm:$0xf]
      %v2308 = vld [vmem:[%s274 + $0x430] sm:$0xf]
      %v2309 = vld [vmem:[%s274 + $0x434] sm:$0xf]
      %v2310 = vld [vmem:[%s274 + $0x438] sm:$0xf]
      %v2311 = vld [vmem:[%s274 + $0x43c] sm:$0xf]
      %v2312 = vld [vmem:[%s274 + $0x440] sm:$0xf]
      %v2313 = vld [vmem:[%s274 + $0x444] sm:$0xf]
      %v2314 = vld [vmem:[%s274 + $0x448] sm:$0xf]
      %v2315 = vld [vmem:[%s274 + $0x44c] sm:$0xf]
      %v2316 = vld [vmem:[%s274 + $0x450] sm:$0xf]
      %v2317 = vld [vmem:[%s274 + $0x454] sm:$0xf]
      %v2318 = vld [vmem:[%s274 + $0x458] sm:$0xf]
      %v2319 = vld [vmem:[%s274 + $0x45c] sm:$0xf]
      %v2320 = vld [vmem:[%s274 + $0x460] sm:$0xf]
      %v2321 = vld [vmem:[%s274 + $0x464] sm:$0xf]
      %v2322 = vld [vmem:[%s274 + $0x468] sm:$0xf]
      %v2323 = vld [vmem:[%s274 + $0x46c] sm:$0xf]
      %v2324 = vld [vmem:[%s274 + $0x470] sm:$0xf]
      %v2325 = vld [vmem:[%s274 + $0x474] sm:$0xf]
      %v2326 = vld [vmem:[%s274 + $0x478] sm:$0xf]
      %v2327 = vld [vmem:[%s274 + $0x47c] sm:$0xf]
      %v2328 = vld [vmem:[%s274 + $0x480] sm:$0xf]
      %v2329 = vld [vmem:[%s274 + $0x484] sm:$0xf]
      %v2330 = vld [vmem:[%s274 + $0x488] sm:$0xf]
      %v2331 = vld [vmem:[%s274 + $0x48c] sm:$0xf]
      %v2332 = vld [vmem:[%s274 + $0x490] sm:$0xf]
      %v2333 = vld [vmem:[%s274 + $0x494] sm:$0xf]
      %v2432 = vunpack.c.l.b16 %v2236
      %v2433 = vunpack.c.l.b16 %v2237
      %v2434 = vunpack.c.l.b16 %v2238
      %v2435 = vunpack.c.l.b16 %v2239
      %v2436 = vunpack.c.l.b16 %v2240
      %v2437 = vunpack.c.l.b16 %v2241
      %v2438 = vunpack.c.l.b16 %v2242
      %v2439 = vunpack.c.l.b16 %v2243
      %v2440 = vunpack.c.l.b16 %v2244
      %v2441 = vunpack.c.l.b16 %v2245
      %v2442 = vunpack.c.l.b16 %v2246
      %v2443 = vunpack.c.l.b16 %v2247
      %v2444 = vunpack.c.l.b16 %v2248
      %v2445 = vunpack.c.l.b16 %v2249
      %v2446 = vunpack.c.l.b16 %v2250
      %v2447 = vunpack.c.l.b16 %v2251
      %v2448 = vunpack.c.l.b16 %v2252
      %v2449 = vunpack.c.l.b16 %v2253
      %v2450 = vunpack.c.l.b16 %v2254
      %v2451 = vunpack.c.l.b16 %v2255
      %v2452 = vunpack.c.l.b16 %v2256
      %v2453 = vunpack.c.l.b16 %v2257
      %v2454 = vunpack.c.l.b16 %v2258
      %v2455 = vunpack.c.l.b16 %v2259
      %v2456 = vunpack.c.l.b16 %v2260
      %v2457 = vunpack.c.l.b16 %v2261
      %v2458 = vunpack.c.l.b16 %v2262
      %v2459 = vunpack.c.l.b16 %v2263
      %v2460 = vunpack.c.l.b16 %v2264
      %v2461 = vunpack.c.l.b16 %v2265
      %v2462 = vunpack.c.l.b16 %v2266
      %v2463 = vunpack.c.l.b16 %v2267
      %v2464 = vunpack.c.l.b16 %v2268
      %v2465 = vunpack.c.l.b16 %v2269
      %v2466 = vunpack.c.l.b16 %v2270
      %v2467 = vunpack.c.l.b16 %v2271
      %v2468 = vunpack.c.l.b16 %v2272
      %v2469 = vunpack.c.l.b16 %v2273
      %v2470 = vunpack.c.l.b16 %v2274
      %v2471 = vunpack.c.l.b16 %v2275
      %v2472 = vunpack.c.l.b16 %v2276
      %v2473 = vunpack.c.l.b16 %v2277
      %v2474 = vunpack.c.l.b16 %v2278
      %v2475 = vunpack.c.l.b16 %v2279
      %v2476 = vunpack.c.l.b16 %v2280
      %v2477 = vunpack.c.l.b16 %v2281
      %v2478 = vunpack.c.l.b16 %v2282
      %v2479 = vunpack.c.l.b16 %v2283
      %v2480 = vunpack.c.l.b16 %v2284
      %v2481 = vunpack.c.l.b16 %v2285
      %v2482 = vunpack.c.l.b16 %v2286
      %v2483 = vunpack.c.l.b16 %v2287
      %v2484 = vunpack.c.l.b16 %v2288
      %v2485 = vunpack.c.l.b16 %v2289
      %v2486 = vunpack.c.l.b16 %v2290
      %v2487 = vunpack.c.l.b16 %v2291
      %v2488 = vunpack.c.l.b16 %v2292
      %v2489 = vunpack.c.l.b16 %v2293
      %v2490 = vunpack.c.l.b16 %v2294
      %v2491 = vunpack.c.l.b16 %v2295
      %v2492 = vunpack.c.l.b16 %v2296
      %v2493 = vunpack.c.l.b16 %v2297
      %v2494 = vunpack.c.l.b16 %v2298
      %v2495 = vunpack.c.l.b16 %v2299
      %v2496 = vunpack.c.l.b16 %v2300
      %v2497 = vunpack.c.l.b16 %v2301
      %v2498 = vunpack.c.l.b16 %v2302
      %v2499 = vunpack.c.l.b16 %v2303
      %v2500 = vunpack.c.l.b16 %v2304
      %v2501 = vunpack.c.l.b16 %v2305
      %v2502 = vunpack.c.l.b16 %v2306
      %v2503 = vunpack.c.l.b16 %v2307
      %v2504 = vunpack.c.l.b16 %v2308
      %v2505 = vunpack.c.l.b16 %v2309
      %v2506 = vunpack.c.l.b16 %v2310
      %v2507 = vunpack.c.l.b16 %v2311
      %v2508 = vunpack.c.l.b16 %v2312
      %v2509 = vunpack.c.l.b16 %v2313
      %v2510 = vunpack.c.l.b16 %v2314
      %v2511 = vunpack.c.l.b16 %v2315
      %v2512 = vunpack.c.l.b16 %v2316
      %v2513 = vunpack.c.l.b16 %v2317
      %v2514 = vunpack.c.l.b16 %v2318
      %v2515 = vunpack.c.l.b16 %v2319
      %v2516 = vunpack.c.l.b16 %v2320
      %v2517 = vunpack.c.l.b16 %v2321
      %v2518 = vunpack.c.l.b16 %v2322
      %v2519 = vunpack.c.l.b16 %v2323
      %v2520 = vunpack.c.l.b16 %v2324
      %v2521 = vunpack.c.l.b16 %v2325
      %v2522 = vunpack.c.l.b16 %v2326
      %v2523 = vunpack.c.l.b16 %v2327
      %v2524 = vunpack.c.l.b16 %v2328
      %v2525 = vunpack.c.l.b16 %v2329
      %v2526 = vunpack.c.l.b16 %v2330
      %v2527 = vunpack.c.l.b16 %v2331
      %v2528 = vunpack.c.l.b16 %v2332
      %v2529 = vunpack.c.l.b16 %v2333
      %v2530 = vpack.c.b16 %v2433, %v2432
      %v2531 = vpack.c.b16 %v2435, %v2434
      %v2532 = vpack.c.b16 %v2437, %v2436
      %v2533 = vpack.c.b16 %v2439, %v2438
      %v2534 = vpack.c.b16 %v2441, %v2440
      %v2535 = vpack.c.b16 %v2443, %v2442
      %v2536 = vpack.c.b16 %v2445, %v2444
      %v2537 = vpack.c.b16 %v2447, %v2446
      %v2538 = vpack.c.b16 %v2449, %v2448
      %v2539 = vpack.c.b16 %v2451, %v2450
      %v2540 = vpack.c.b16 %v2453, %v2452
      %v2541 = vpack.c.b16 %v2455, %v2454
      %v2542 = vpack.c.b16 %v2457, %v2456
      %v2543 = vpack.c.b16 %v2459, %v2458
      %v2544 = vpack.c.b16 %v2461, %v2460
      %v2545 = vpack.c.b16 %v2463, %v2462
      %v2546 = vpack.c.b16 %v2465, %v2464
      %v2547 = vpack.c.b16 %v2467, %v2466
      %v2548 = vpack.c.b16 %v2469, %v2468
      %v2549 = vpack.c.b16 %v2471, %v2470
      %v2550 = vpack.c.b16 %v2473, %v2472
      %v2551 = vpack.c.b16 %v2475, %v2474
      %v2552 = vpack.c.b16 %v2477, %v2476
      %v2553 = vpack.c.b16 %v2479, %v2478
      %v2554 = vpack.c.b16 %v2481, %v2480
      %v2555 = vpack.c.b16 %v2483, %v2482
      %v2556 = vpack.c.b16 %v2485, %v2484
      %v2557 = vpack.c.b16 %v2487, %v2486
      %v2558 = vpack.c.b16 %v2489, %v2488
      %v2559 = vpack.c.b16 %v2491, %v2490
      %v2560 = vpack.c.b16 %v2493, %v2492
      %v2561 = vpack.c.b16 %v2495, %v2494
      %v2562 = vpack.c.b16 %v2497, %v2496
      %v2563 = vpack.c.b16 %v2499, %v2498
      %v2564 = vpack.c.b16 %v2501, %v2500
      %v2565 = vpack.c.b16 %v2503, %v2502
      %v2566 = vpack.c.b16 %v2505, %v2504
      %v2567 = vpack.c.b16 %v2507, %v2506
      %v2568 = vpack.c.b16 %v2509, %v2508
      %v2569 = vpack.c.b16 %v2511, %v2510
      %v2570 = vpack.c.b16 %v2513, %v2512
      %v2571 = vpack.c.b16 %v2515, %v2514
      %v2572 = vpack.c.b16 %v2517, %v2516
      %v2573 = vpack.c.b16 %v2519, %v2518
      %v2574 = vpack.c.b16 %v2521, %v2520
      %v2575 = vpack.c.b16 %v2523, %v2522
      %v2576 = vpack.c.b16 %v2525, %v2524
      %v2577 = vpack.c.b16 %v2527, %v2526
      %v2578 = vpack.c.b16 %v2529, %v2528
      %v2580 = vsel %vm646, %v2530, 0
      %v2583 = vsel %vm646, %v2531, 0
      %v2586 = vsel %vm646, %v2532, 0
      %v2589 = vsel %vm646, %v2533, 0
      %v2592 = vsel %vm646, %v2534, 0
      %v2595 = vsel %vm646, %v2535, 0
      %v2598 = vsel %vm646, %v2536, 0
      %v2601 = vsel %vm646, %v2537, 0
      %v2604 = vsel %vm646, %v2538, 0
      %v2607 = vsel %vm646, %v2539, 0
      %v2610 = vsel %vm646, %v2540, 0
      %v2613 = vsel %vm646, %v2541, 0
      %v2616 = vsel %vm646, %v2542, 0
      %v2619 = vsel %vm646, %v2543, 0
      %v2622 = vsel %vm646, %v2544, 0
      %v2625 = vsel %vm646, %v2545, 0
      %v2628 = vsel %vm646, %v2546, 0
      %v2631 = vsel %vm646, %v2547, 0
      %v2634 = vsel %vm646, %v2548, 0
      %v2637 = vsel %vm646, %v2549, 0
      %v2640 = vsel %vm646, %v2550, 0
      %v2643 = vsel %vm646, %v2551, 0
      %v2646 = vsel %vm646, %v2552, 0
      %v2649 = vsel %vm646, %v2553, 0
      %v2652 = vsel %vm646, %v2554, 0
      %v2655 = vsel %vm646, %v2555, 0
      %v2658 = vsel %vm646, %v2556, 0
      %v2661 = vsel %vm646, %v2557, 0
      %v2664 = vsel %vm646, %v2558, 0
      %v2667 = vsel %vm646, %v2559, 0
      %v2670 = vsel %vm646, %v2560, 0
      %v2673 = vsel %vm646, %v2561, 0
      %v2676 = vsel %vm646, %v2562, 0
      %v2679 = vsel %vm646, %v2563, 0
      %v2682 = vsel %vm646, %v2564, 0
      %v2685 = vsel %vm646, %v2565, 0
      %v2688 = vsel %vm646, %v2566, 0
      %v2691 = vsel %vm646, %v2567, 0
      %v2694 = vsel %vm646, %v2568, 0
      %v2697 = vsel %vm646, %v2569, 0
      %v2700 = vsel %vm646, %v2570, 0
      %v2703 = vsel %vm646, %v2571, 0
      %v2706 = vsel %vm646, %v2572, 0
      %v2709 = vsel %vm646, %v2573, 0
      %v2712 = vsel %vm646, %v2574, 0
      %v2715 = vsel %vm646, %v2575, 0
      %v2718 = vsel %vm646, %v2576, 0
      %v2721 = vsel %vm646, %v2577, 0
      %v2724 = vsel %vm646, %v2578, 0
      %2726 = vmatprep.subr.bf16.mxu0 0
      %2727 = vmatpush1.bf16.msra.mxu0 0
      %2728 = vmatprep.subr.bf16.mxu0 0
      %2729 = vmatpush1.bf16.msra.mxu0 0
      %2730 = vmatprep.subr.bf16.mxu0 0
      %2731 = vmatpush1.bf16.msra.mxu0 0
      %2732 = vmatprep.subr.bf16.mxu0 0
      %2733 = vmatpush1.bf16.msra.mxu0 0
      %2734 = vmatprep.subr.bf16.mxu0 0
      %2735 = vmatpush1.bf16.msra.mxu0 0
      %2736 = vmatprep.subr.bf16.mxu0 0
      %2737 = vmatpush1.bf16.msra.mxu0 %v796
      %2738 = vmatprep.subr.bf16.mxu0 0
      %2739 = vmatpush1.bf16.msra.mxu0 %v642
      %2740 = vmatprep.subr.bf16.mxu0 0
      %2741 = vmatpush1.bf16.msra.mxu0 %v641
      %2742 = vmatprep.subr.bf16.mxu0 0
      %2743 = vmatpush2.bf16.msra.mxu0 0
      %2744 = vmatprep.subr.bf16.mxu0 0
      %2745 = vmatpush2.bf16.msra.mxu0 0
      %2746 = vmatprep.subr.bf16.mxu0 0
      %2747 = vmatpush2.bf16.msra.mxu0 0
      %2748 = vmatprep.subr.bf16.mxu0 0
      %2749 = vmatpush2.bf16.msra.mxu0 0
      %2750 = vmatprep.subr.bf16.mxu0 0
      %2751 = vmatpush2.bf16.msra.mxu0 0
      %2752 = vmatprep.subr.bf16.mxu0 0
      %2753 = vmatpush2.bf16.msra.mxu0 0
      %2754 = vmatprep.subr.bf16.mxu0 0
      %2755 = vmatpush2.bf16.msra.mxu0 0
      %2756 = vmatprep.subr.bf16.mxu0 0
      %2757 = vmatpush2.bf16.msra.mxu0 0
      %2758 = vmatprep.mubr.bf16.mxu0 0
      %2759 = vmatmul.mubr.bf16.gmra.mxu0 %v2580
      %v2760 = vpop.f32.mrf.mxu0
      %v2761 = vadd.f32 0.0, %v2760
      %v2762 = vpop.f32.mrf.mxu0
      %v2763 = vpop.f32.mrf.mxu0
      %v2764 = vadd.f32 0.0, %v2763
      %v2765 = vpop.f32.mrf.mxu0
      %2766 = vmatprep.mubr.bf16.mxu0 0
      %2767 = vmatmul.mubr.bf16.gmra.mxu0 %v2583
      %v2768 = vpop.f32.mrf.mxu0
      %v2769 = vadd.f32 0.0, %v2768
      %v2770 = vpop.f32.mrf.mxu0
      %v2771 = vpop.f32.mrf.mxu0
      %v2772 = vadd.f32 0.0, %v2771
      %v2773 = vpop.f32.mrf.mxu0
      %2774 = vmatprep.mubr.bf16.mxu0 0
      %2775 = vmatmul.mubr.bf16.gmra.mxu0 %v2586
      %v2776 = vpop.f32.mrf.mxu0
      %v2777 = vadd.f32 0.0, %v2776
      %v2778 = vpop.f32.mrf.mxu0
      %v2779 = vpop.f32.mrf.mxu0
      %v2780 = vadd.f32 0.0, %v2779
      %v2781 = vpop.f32.mrf.mxu0
      %2782 = vmatprep.mubr.bf16.mxu0 0
      %2783 = vmatmul.mubr.bf16.gmra.mxu0 %v2589
      %v2784 = vpop.f32.mrf.mxu0
      %v2785 = vadd.f32 0.0, %v2784
      %v2786 = vpop.f32.mrf.mxu0
      %v2787 = vpop.f32.mrf.mxu0
      %v2788 = vadd.f32 0.0, %v2787
      %v2789 = vpop.f32.mrf.mxu0
      %2790 = vmatprep.mubr.bf16.mxu0 0
      %2791 = vmatmul.mubr.bf16.gmra.mxu0 %v2592
      %v2792 = vpop.f32.mrf.mxu0
      %v2793 = vadd.f32 0.0, %v2792
      %v2794 = vpop.f32.mrf.mxu0
      %v2795 = vpop.f32.mrf.mxu0
      %v2796 = vadd.f32 0.0, %v2795
      %v2797 = vpop.f32.mrf.mxu0
      %2798 = vmatprep.mubr.bf16.mxu0 0
      %2799 = vmatmul.mubr.bf16.gmra.mxu0 %v2595
      %v2800 = vpop.f32.mrf.mxu0
      %v2801 = vadd.f32 0.0, %v2800
      %v2802 = vpop.f32.mrf.mxu0
      %v2803 = vpop.f32.mrf.mxu0
      %v2804 = vadd.f32 0.0, %v2803
      %v2805 = vpop.f32.mrf.mxu0
      %2806 = vmatprep.mubr.bf16.mxu0 0
      %2807 = vmatmul.mubr.bf16.gmra.mxu0 %v2598
      %v2808 = vpop.f32.mrf.mxu0
      %v2809 = vadd.f32 0.0, %v2808
      %v2810 = vpop.f32.mrf.mxu0
      %v2811 = vpop.f32.mrf.mxu0
      %v2812 = vadd.f32 0.0, %v2811
      %v2813 = vpop.f32.mrf.mxu0
      %2814 = vmatprep.mubr.bf16.mxu0 0
      %2815 = vmatmul.mubr.bf16.gmra.mxu0 %v2601
      %v2816 = vpop.f32.mrf.mxu0
      %v2817 = vadd.f32 0.0, %v2816
      %v2818 = vpop.f32.mrf.mxu0
      %v2819 = vpop.f32.mrf.mxu0
      %v2820 = vadd.f32 0.0, %v2819
      %v2821 = vpop.f32.mrf.mxu0
      %2822 = vmatprep.mubr.bf16.mxu0 0
      %2823 = vmatmul.mubr.bf16.gmra.mxu0 %v2604
      %v2824 = vpop.f32.mrf.mxu0
      %v2825 = vadd.f32 0.0, %v2824
      %v2826 = vpop.f32.mrf.mxu0
      %v2827 = vpop.f32.mrf.mxu0
      %v2828 = vadd.f32 0.0, %v2827
      %v2829 = vpop.f32.mrf.mxu0
      %2830 = vmatprep.mubr.bf16.mxu0 0
      %2831 = vmatmul.mubr.bf16.gmra.mxu0 %v2607
      %v2832 = vpop.f32.mrf.mxu0
      %v2833 = vadd.f32 0.0, %v2832
      %v2834 = vpop.f32.mrf.mxu0
      %v2835 = vpop.f32.mrf.mxu0
      %v2836 = vadd.f32 0.0, %v2835
      %v2837 = vpop.f32.mrf.mxu0
      %2838 = vmatprep.mubr.bf16.mxu0 0
      %2839 = vmatmul.mubr.bf16.gmra.mxu0 %v2610
      %v2840 = vpop.f32.mrf.mxu0
      %v2841 = vadd.f32 0.0, %v2840
      %v2842 = vpop.f32.mrf.mxu0
      %v2843 = vpop.f32.mrf.mxu0
      %v2844 = vadd.f32 0.0, %v2843
      %v2845 = vpop.f32.mrf.mxu0
      %2846 = vmatprep.mubr.bf16.mxu0 0
      %2847 = vmatmul.mubr.bf16.gmra.mxu0 %v2613
      %v2848 = vpop.f32.mrf.mxu0
      %v2849 = vadd.f32 0.0, %v2848
      %v2850 = vpop.f32.mrf.mxu0
      %v2851 = vpop.f32.mrf.mxu0
      %v2852 = vadd.f32 0.0, %v2851
      %v2853 = vpop.f32.mrf.mxu0
      %2854 = vmatprep.mubr.bf16.mxu0 0
      %2855 = vmatmul.mubr.bf16.gmra.mxu0 %v2616
      %v2856 = vpop.f32.mrf.mxu0
      %v2857 = vadd.f32 0.0, %v2856
      %v2858 = vpop.f32.mrf.mxu0
      %v2859 = vpop.f32.mrf.mxu0
      %v2860 = vadd.f32 0.0, %v2859
      %v2861 = vpop.f32.mrf.mxu0
      %2862 = vmatprep.mubr.bf16.mxu0 0
      %2863 = vmatmul.mubr.bf16.gmra.mxu0 %v2619
      %v2864 = vpop.f32.mrf.mxu0
      %v2865 = vadd.f32 0.0, %v2864
      %v2866 = vpop.f32.mrf.mxu0
      %v2867 = vpop.f32.mrf.mxu0
      %v2868 = vadd.f32 0.0, %v2867
      %v2869 = vpop.f32.mrf.mxu0
      %2870 = vmatprep.mubr.bf16.mxu0 0
      %2871 = vmatmul.mubr.bf16.gmra.mxu0 %v2622
      %v2872 = vpop.f32.mrf.mxu0
      %v2873 = vadd.f32 0.0, %v2872
      %v2874 = vpop.f32.mrf.mxu0
      %v2875 = vpop.f32.mrf.mxu0
      %v2876 = vadd.f32 0.0, %v2875
      %v2877 = vpop.f32.mrf.mxu0
      %2878 = vmatprep.mubr.bf16.mxu0 0
      %2879 = vmatmul.mubr.bf16.gmra.mxu0 %v2625
      %v2880 = vpop.f32.mrf.mxu0
      %v2881 = vadd.f32 0.0, %v2880
      %v2882 = vpop.f32.mrf.mxu0
      %v2883 = vpop.f32.mrf.mxu0
      %v2884 = vadd.f32 0.0, %v2883
      %v2885 = vpop.f32.mrf.mxu0
      %2886 = vmatprep.mubr.bf16.mxu0 0
      %2887 = vmatmul.mubr.bf16.gmra.mxu0 %v2628
      %v2888 = vpop.f32.mrf.mxu0
      %v2889 = vadd.f32 0.0, %v2888
      %v2890 = vpop.f32.mrf.mxu0
      %v2891 = vpop.f32.mrf.mxu0
      %v2892 = vadd.f32 0.0, %v2891
      %v2893 = vpop.f32.mrf.mxu0
      %2894 = vmatprep.mubr.bf16.mxu0 0
      %2895 = vmatmul.mubr.bf16.gmra.mxu0 %v2631
      %v2896 = vpop.f32.mrf.mxu0
      %v2897 = vadd.f32 0.0, %v2896
      %v2898 = vpop.f32.mrf.mxu0
      %v2899 = vpop.f32.mrf.mxu0
      %v2900 = vadd.f32 0.0, %v2899
      %v2901 = vpop.f32.mrf.mxu0
      %2902 = vmatprep.mubr.bf16.mxu0 0
      %2903 = vmatmul.mubr.bf16.gmra.mxu0 %v2634
      %v2904 = vpop.f32.mrf.mxu0
      %v2905 = vadd.f32 0.0, %v2904
      %v2906 = vpop.f32.mrf.mxu0
      %v2907 = vpop.f32.mrf.mxu0
      %v2908 = vadd.f32 0.0, %v2907
      %v2909 = vpop.f32.mrf.mxu0
      %2910 = vmatprep.mubr.bf16.mxu0 0
      %2911 = vmatmul.mubr.bf16.gmra.mxu0 %v2637
      %v2912 = vpop.f32.mrf.mxu0
      %v2913 = vadd.f32 0.0, %v2912
      %v2914 = vpop.f32.mrf.mxu0
      %v2915 = vpop.f32.mrf.mxu0
      %v2916 = vadd.f32 0.0, %v2915
      %v2917 = vpop.f32.mrf.mxu0
      %2918 = vmatprep.mubr.bf16.mxu0 0
      %2919 = vmatmul.mubr.bf16.gmra.mxu0 %v2640
      %v2920 = vpop.f32.mrf.mxu0
      %v2921 = vadd.f32 0.0, %v2920
      %v2922 = vpop.f32.mrf.mxu0
      %v2923 = vpop.f32.mrf.mxu0
      %v2924 = vadd.f32 0.0, %v2923
      %v2925 = vpop.f32.mrf.mxu0
      %2926 = vmatprep.mubr.bf16.mxu0 0
      %2927 = vmatmul.mubr.bf16.gmra.mxu0 %v2643
      %v2928 = vpop.f32.mrf.mxu0
      %v2929 = vadd.f32 0.0, %v2928
      %v2930 = vpop.f32.mrf.mxu0
      %v2931 = vpop.f32.mrf.mxu0
      %v2932 = vadd.f32 0.0, %v2931
      %v2933 = vpop.f32.mrf.mxu0
      %2934 = vmatprep.mubr.bf16.mxu0 0
      %2935 = vmatmul.mubr.bf16.gmra.mxu0 %v2646
      %v2936 = vpop.f32.mrf.mxu0
      %v2937 = vadd.f32 0.0, %v2936
      %v2938 = vpop.f32.mrf.mxu0
      %v2939 = vpop.f32.mrf.mxu0
      %v2940 = vadd.f32 0.0, %v2939
      %v2941 = vpop.f32.mrf.mxu0
      %2942 = vmatprep.mubr.bf16.mxu0 0
      %2943 = vmatmul.mubr.bf16.gmra.mxu0 %v2649
      %v2944 = vpop.f32.mrf.mxu0
      %v2945 = vadd.f32 0.0, %v2944
      %v2946 = vpop.f32.mrf.mxu0
      %v2947 = vpop.f32.mrf.mxu0
      %v2948 = vadd.f32 0.0, %v2947
      %v2949 = vpop.f32.mrf.mxu0
      %2950 = vmatprep.mubr.bf16.mxu0 0
      %2951 = vmatmul.mubr.bf16.gmra.mxu0 %v2652
      %v2952 = vpop.f32.mrf.mxu0
      %v2953 = vadd.f32 0.0, %v2952
      %v2954 = vpop.f32.mrf.mxu0
      %v2955 = vpop.f32.mrf.mxu0
      %v2956 = vadd.f32 0.0, %v2955
      %v2957 = vpop.f32.mrf.mxu0
      %2958 = vmatprep.mubr.bf16.mxu0 0
      %2959 = vmatmul.mubr.bf16.gmra.mxu0 %v2655
      %v2960 = vpop.f32.mrf.mxu0
      %v2961 = vadd.f32 0.0, %v2960
      %v2962 = vpop.f32.mrf.mxu0
      %v2963 = vpop.f32.mrf.mxu0
      %v2964 = vadd.f32 0.0, %v2963
      %v2965 = vpop.f32.mrf.mxu0
      %2966 = vmatprep.mubr.bf16.mxu0 0
      %2967 = vmatmul.mubr.bf16.gmra.mxu0 %v2658
      %v2968 = vpop.f32.mrf.mxu0
      %v2969 = vadd.f32 0.0, %v2968
      %v2970 = vpop.f32.mrf.mxu0
      %v2971 = vpop.f32.mrf.mxu0
      %v2972 = vadd.f32 0.0, %v2971
      %v2973 = vpop.f32.mrf.mxu0
      %2974 = vmatprep.mubr.bf16.mxu0 0
      %2975 = vmatmul.mubr.bf16.gmra.mxu0 %v2661
      %v2976 = vpop.f32.mrf.mxu0
      %v2977 = vadd.f32 0.0, %v2976
      %v2978 = vpop.f32.mrf.mxu0
      %v2979 = vpop.f32.mrf.mxu0
      %v2980 = vadd.f32 0.0, %v2979
      %v2981 = vpop.f32.mrf.mxu0
      %2982 = vmatprep.mubr.bf16.mxu0 0
      %2983 = vmatmul.mubr.bf16.gmra.mxu0 %v2664
      %v2984 = vpop.f32.mrf.mxu0
      %v2985 = vadd.f32 0.0, %v2984
      %v2986 = vpop.f32.mrf.mxu0
      %v2987 = vpop.f32.mrf.mxu0
      %v2988 = vadd.f32 0.0, %v2987
      %v2989 = vpop.f32.mrf.mxu0
      %2990 = vmatprep.mubr.bf16.mxu0 0
      %2991 = vmatmul.mubr.bf16.gmra.mxu0 %v2667
      %v2992 = vpop.f32.mrf.mxu0
      %v2993 = vadd.f32 0.0, %v2992
      %v2994 = vpop.f32.mrf.mxu0
      %v2995 = vpop.f32.mrf.mxu0
      %v2996 = vadd.f32 0.0, %v2995
      %v2997 = vpop.f32.mrf.mxu0
      %2998 = vmatprep.mubr.bf16.mxu0 0
      %2999 = vmatmul.mubr.bf16.gmra.mxu0 %v2670
      %v3000 = vpop.f32.mrf.mxu0
      %v3001 = vadd.f32 0.0, %v3000
      %v3002 = vpop.f32.mrf.mxu0
      %v3003 = vpop.f32.mrf.mxu0
      %v3004 = vadd.f32 0.0, %v3003
      %v3005 = vpop.f32.mrf.mxu0
      %3006 = vmatprep.mubr.bf16.mxu0 0
      %3007 = vmatmul.mubr.bf16.gmra.mxu0 %v2673
      %v3008 = vpop.f32.mrf.mxu0
      %v3009 = vadd.f32 0.0, %v3008
      %v3010 = vpop.f32.mrf.mxu0
      %v3011 = vpop.f32.mrf.mxu0
      %v3012 = vadd.f32 0.0, %v3011
      %v3013 = vpop.f32.mrf.mxu0
      %3014 = vmatprep.mubr.bf16.mxu0 0
      %3015 = vmatmul.mubr.bf16.gmra.mxu0 %v2676
      %v3016 = vpop.f32.mrf.mxu0
      %v3017 = vadd.f32 0.0, %v3016
      %v3018 = vpop.f32.mrf.mxu0
      %v3019 = vpop.f32.mrf.mxu0
      %v3020 = vadd.f32 0.0, %v3019
      %v3021 = vpop.f32.mrf.mxu0
      %3022 = vmatprep.mubr.bf16.mxu0 0
      %3023 = vmatmul.mubr.bf16.gmra.mxu0 %v2679
      %v3024 = vpop.f32.mrf.mxu0
      %v3025 = vadd.f32 0.0, %v3024
      %v3026 = vpop.f32.mrf.mxu0
      %v3027 = vpop.f32.mrf.mxu0
      %v3028 = vadd.f32 0.0, %v3027
      %v3029 = vpop.f32.mrf.mxu0
      %3030 = vmatprep.mubr.bf16.mxu0 0
      %3031 = vmatmul.mubr.bf16.gmra.mxu0 %v2682
      %v3032 = vpop.f32.mrf.mxu0
      %v3033 = vadd.f32 0.0, %v3032
      %v3034 = vpop.f32.mrf.mxu0
      %v3035 = vpop.f32.mrf.mxu0
      %v3036 = vadd.f32 0.0, %v3035
      %v3037 = vpop.f32.mrf.mxu0
      %3038 = vmatprep.mubr.bf16.mxu0 0
      %3039 = vmatmul.mubr.bf16.gmra.mxu0 %v2685
      %v3040 = vpop.f32.mrf.mxu0
      %v3041 = vadd.f32 0.0, %v3040
      %v3042 = vpop.f32.mrf.mxu0
      %v3043 = vpop.f32.mrf.mxu0
      %v3044 = vadd.f32 0.0, %v3043
      %v3045 = vpop.f32.mrf.mxu0
      %3046 = vmatprep.mubr.bf16.mxu0 0
      %3047 = vmatmul.mubr.bf16.gmra.mxu0 %v2688
      %v3048 = vpop.f32.mrf.mxu0
      %v3049 = vadd.f32 0.0, %v3048
      %v3050 = vpop.f32.mrf.mxu0
      %v3051 = vpop.f32.mrf.mxu0
      %v3052 = vadd.f32 0.0, %v3051
      %v3053 = vpop.f32.mrf.mxu0
      %3054 = vmatprep.mubr.bf16.mxu0 0
      %3055 = vmatmul.mubr.bf16.gmra.mxu0 %v2691
      %v3056 = vpop.f32.mrf.mxu0
      %v3057 = vadd.f32 0.0, %v3056
      %v3058 = vpop.f32.mrf.mxu0
      %v3059 = vpop.f32.mrf.mxu0
      %v3060 = vadd.f32 0.0, %v3059
      %v3061 = vpop.f32.mrf.mxu0
      %3062 = vmatprep.mubr.bf16.mxu0 0
      %3063 = vmatmul.mubr.bf16.gmra.mxu0 %v2694
      %v3064 = vpop.f32.mrf.mxu0
      %v3065 = vadd.f32 0.0, %v3064
      %v3066 = vpop.f32.mrf.mxu0
      %v3067 = vpop.f32.mrf.mxu0
      %v3068 = vadd.f32 0.0, %v3067
      %v3069 = vpop.f32.mrf.mxu0
      %3070 = vmatprep.mubr.bf16.mxu0 0
      %3071 = vmatmul.mubr.bf16.gmra.mxu0 %v2697
      %v3072 = vpop.f32.mrf.mxu0
      %v3073 = vadd.f32 0.0, %v3072
      %v3074 = vpop.f32.mrf.mxu0
      %v3075 = vpop.f32.mrf.mxu0
      %v3076 = vadd.f32 0.0, %v3075
      %v3077 = vpop.f32.mrf.mxu0
      %3078 = vmatprep.mubr.bf16.mxu0 0
      %3079 = vmatmul.mubr.bf16.gmra.mxu0 %v2700
      %v3080 = vpop.f32.mrf.mxu0
      %v3081 = vadd.f32 0.0, %v3080
      %v3082 = vpop.f32.mrf.mxu0
      %v3083 = vpop.f32.mrf.mxu0
      %v3084 = vadd.f32 0.0, %v3083
      %v3085 = vpop.f32.mrf.mxu0
      %3086 = vmatprep.mubr.bf16.mxu0 0
      %3087 = vmatmul.mubr.bf16.gmra.mxu0 %v2703
      %v3088 = vpop.f32.mrf.mxu0
      %v3089 = vadd.f32 0.0, %v3088
      %v3090 = vpop.f32.mrf.mxu0
      %v3091 = vpop.f32.mrf.mxu0
      %v3092 = vadd.f32 0.0, %v3091
      %v3093 = vpop.f32.mrf.mxu0
      %3094 = vmatprep.mubr.bf16.mxu0 0
      %3095 = vmatmul.mubr.bf16.gmra.mxu0 %v2706
      %v3096 = vpop.f32.mrf.mxu0
      %v3097 = vadd.f32 0.0, %v3096
      %v3098 = vpop.f32.mrf.mxu0
      %v3099 = vpop.f32.mrf.mxu0
      %v3100 = vadd.f32 0.0, %v3099
      %v3101 = vpop.f32.mrf.mxu0
      %3102 = vmatprep.mubr.bf16.mxu0 0
      %3103 = vmatmul.mubr.bf16.gmra.mxu0 %v2709
      %v3104 = vpop.f32.mrf.mxu0
      %v3105 = vadd.f32 0.0, %v3104
      %v3106 = vpop.f32.mrf.mxu0
      %v3107 = vpop.f32.mrf.mxu0
      %v3108 = vadd.f32 0.0, %v3107
      %v3109 = vpop.f32.mrf.mxu0
      %3110 = vmatprep.mubr.bf16.mxu0 0
      %3111 = vmatmul.mubr.bf16.gmra.mxu0 %v2712
      %v3112 = vpop.f32.mrf.mxu0
      %v3113 = vadd.f32 0.0, %v3112
      %v3114 = vpop.f32.mrf.mxu0
      %v3115 = vpop.f32.mrf.mxu0
      %v3116 = vadd.f32 0.0, %v3115
      %v3117 = vpop.f32.mrf.mxu0
      %3118 = vmatprep.mubr.bf16.mxu0 0
      %3119 = vmatmul.mubr.bf16.gmra.mxu0 %v2715
      %v3120 = vpop.f32.mrf.mxu0
      %v3121 = vadd.f32 0.0, %v3120
      %v3122 = vpop.f32.mrf.mxu0
      %v3123 = vpop.f32.mrf.mxu0
      %v3124 = vadd.f32 0.0, %v3123
      %v3125 = vpop.f32.mrf.mxu0
      %3126 = vmatprep.mubr.bf16.mxu0 0
      %3127 = vmatmul.mubr.bf16.gmra.mxu0 %v2718
      %v3128 = vpop.f32.mrf.mxu0
      %v3129 = vadd.f32 0.0, %v3128
      %v3130 = vpop.f32.mrf.mxu0
      %v3131 = vpop.f32.mrf.mxu0
      %v3132 = vadd.f32 0.0, %v3131
      %v3133 = vpop.f32.mrf.mxu0
      %3134 = vmatprep.mubr.bf16.mxu0 0
      %3135 = vmatmul.mubr.bf16.gmra.mxu0 %v2721
      %v3136 = vpop.f32.mrf.mxu0
      %v3137 = vadd.f32 0.0, %v3136
      %v3138 = vpop.f32.mrf.mxu0
      %v3139 = vpop.f32.mrf.mxu0
      %v3140 = vadd.f32 0.0, %v3139
      %v3141 = vpop.f32.mrf.mxu0
      %3142 = vmatprep.mubr.bf16.mxu0 0
      %3143 = vmatmul.mubr.bf16.gmra.mxu0 %v2724
      %v3144 = vpop.f32.mrf.mxu0
      %v3145 = vadd.f32 0.0, %v3144
      %v3146 = vpop.f32.mrf.mxu0
      %v3147 = vpop.f32.mrf.mxu0
      %v3148 = vadd.f32 0.0, %v3147
      %v3149 = vpop.f32.mrf.mxu0
      %3150 = vdwg.mxu0
      %v3151 = vmax.f32 %v2138, %v2761
      %v3152 = vmax.f32 %v2139, %v2764
      %v3153 = vmax.f32 %v2140, %v2769
      %v3154 = vmax.f32 %v2141, %v2772
      %v3155 = vmax.f32 %v2142, %v2777
      %v3156 = vmax.f32 %v2143, %v2780
      %v3157 = vmax.f32 %v2144, %v2785
      %v3158 = vmax.f32 %v2145, %v2788
      %v3159 = vmax.f32 %v2146, %v2793
      %v3160 = vmax.f32 %v2147, %v2796
      %v3161 = vmax.f32 %v2148, %v2801
      %v3162 = vmax.f32 %v2149, %v2804
      %v3163 = vmax.f32 %v2150, %v2809
      %v3164 = vmax.f32 %v2151, %v2812
      %v3165 = vmax.f32 %v2152, %v2817
      %v3166 = vmax.f32 %v2153, %v2820
      %v3167 = vmax.f32 %v2154, %v2825
      %v3168 = vmax.f32 %v2155, %v2828
      %v3169 = vmax.f32 %v2156, %v2833
      %v3170 = vmax.f32 %v2157, %v2836
      %v3171 = vmax.f32 %v2158, %v2841
      %v3172 = vmax.f32 %v2159, %v2844
      %v3173 = vmax.f32 %v2160, %v2849
      %v3174 = vmax.f32 %v2161, %v2852
      %v3175 = vmax.f32 %v2162, %v2857
      %v3176 = vmax.f32 %v2163, %v2860
      %v3177 = vmax.f32 %v2164, %v2865
      %v3178 = vmax.f32 %v2165, %v2868
      %v3179 = vmax.f32 %v2166, %v2873
      %v3180 = vmax.f32 %v2167, %v2876
      %v3181 = vmax.f32 %v2168, %v2881
      %v3182 = vmax.f32 %v2169, %v2884
      %v3183 = vmax.f32 %v2170, %v2889
      %v3184 = vmax.f32 %v2171, %v2892
      %v3185 = vmax.f32 %v2172, %v2897
      %v3186 = vmax.f32 %v2173, %v2900
      %v3187 = vmax.f32 %v2174, %v2905
      %v3188 = vmax.f32 %v2175, %v2908
      %v3189 = vmax.f32 %v2176, %v2913
      %v3190 = vmax.f32 %v2177, %v2916
      %v3191 = vmax.f32 %v2178, %v2921
      %v3192 = vmax.f32 %v2179, %v2924
      %v3193 = vmax.f32 %v2180, %v2929
      %v3194 = vmax.f32 %v2181, %v2932
      %v3195 = vmax.f32 %v2182, %v2937
      %v3196 = vmax.f32 %v2183, %v2940
      %v3197 = vmax.f32 %v2184, %v2945
      %v3198 = vmax.f32 %v2185, %v2948
      %v3199 = vmax.f32 %v2186, %v2953
      %v3200 = vmax.f32 %v2187, %v2956
      %v3201 = vmax.f32 %v2188, %v2961
      %v3202 = vmax.f32 %v2189, %v2964
      %v3203 = vmax.f32 %v2190, %v2969
      %v3204 = vmax.f32 %v2191, %v2972
      %v3205 = vmax.f32 %v2192, %v2977
      %v3206 = vmax.f32 %v2193, %v2980
      %v3207 = vmax.f32 %v2194, %v2985
      %v3208 = vmax.f32 %v2195, %v2988
      %v3209 = vmax.f32 %v2196, %v2993
      %v3210 = vmax.f32 %v2197, %v2996
      %v3211 = vmax.f32 %v2198, %v3001
      %v3212 = vmax.f32 %v2199, %v3004
      %v3213 = vmax.f32 %v2200, %v3009
      %v3214 = vmax.f32 %v2201, %v3012
      %v3215 = vmax.f32 %v2202, %v3017
      %v3216 = vmax.f32 %v2203, %v3020
      %v3217 = vmax.f32 %v2204, %v3025
      %v3218 = vmax.f32 %v2205, %v3028
      %v3219 = vmax.f32 %v2206, %v3033
      %v3220 = vmax.f32 %v2207, %v3036
      %v3221 = vmax.f32 %v2208, %v3041
      %v3222 = vmax.f32 %v2209, %v3044
      %v3223 = vmax.f32 %v2210, %v3049
      %v3224 = vmax.f32 %v2211, %v3052
      %v3225 = vmax.f32 %v2212, %v3057
      %v3226 = vmax.f32 %v2213, %v3060
      %v3227 = vmax.f32 %v2214, %v3065
      %v3228 = vmax.f32 %v2215, %v3068
      %v3229 = vmax.f32 %v2216, %v3073
      %v3230 = vmax.f32 %v2217, %v3076
      %v3231 = vmax.f32 %v2218, %v3081
      %v3232 = vmax.f32 %v2219, %v3084
      %v3233 = vmax.f32 %v2220, %v3089
      %v3234 = vmax.f32 %v2221, %v3092
      %v3235 = vmax.f32 %v2222, %v3097
      %v3236 = vmax.f32 %v2223, %v3100
      %v3237 = vmax.f32 %v2224, %v3105
      %v3238 = vmax.f32 %v2225, %v3108
      %v3239 = vmax.f32 %v2226, %v3113
      %v3240 = vmax.f32 %v2227, %v3116
      %v3241 = vmax.f32 %v2228, %v3121
      %v3242 = vmax.f32 %v2229, %v3124
      %v3243 = vmax.f32 %v2230, %v3129
      %v3244 = vmax.f32 %v2231, %v3132
      %v3245 = vmax.f32 %v2232, %v3137
      %v3246 = vmax.f32 %v2233, %v3140
      %v3247 = vmax.f32 %v2234, %v3145
      %v3248 = vmax.f32 %v2235, %v3148
      %v3249 = vld [vmem:[%s274 + $0x498] sm:$0xf]
      %v3250 = vld [vmem:[%s274 + $0x49c] sm:$0xf]
      %v3251 = vld [vmem:[%s274 + $0x4a0] sm:$0xf]
      %v3252 = vld [vmem:[%s274 + $0x4a4] sm:$0xf]
      %v3253 = vld [vmem:[%s274 + $0x4a8] sm:$0xf]
      %v3254 = vld [vmem:[%s274 + $0x4ac] sm:$0xf]
      %v3255 = vld [vmem:[%s274 + $0x4b0] sm:$0xf]
      %v3256 = vld [vmem:[%s274 + $0x4b4] sm:$0xf]
      %v3257 = vld [vmem:[%s274 + $0x4b8] sm:$0xf]
      %v3258 = vld [vmem:[%s274 + $0x4bc] sm:$0xf]
      %v3259 = vld [vmem:[%s274 + $0x4c0] sm:$0xf]
      %v3260 = vld [vmem:[%s274 + $0x4c4] sm:$0xf]
      %v3261 = vld [vmem:[%s274 + $0x4c8] sm:$0xf]
      %v3262 = vld [vmem:[%s274 + $0x4cc] sm:$0xf]
      %v3263 = vld [vmem:[%s274 + $0x4d0] sm:$0xf]
      %v3264 = vld [vmem:[%s274 + $0x4d4] sm:$0xf]
      %v3265 = vld [vmem:[%s274 + $0x4d8] sm:$0xf]
      %v3266 = vld [vmem:[%s274 + $0x4dc] sm:$0xf]
      %v3267 = vld [vmem:[%s274 + $0x4e0] sm:$0xf]
      %v3268 = vld [vmem:[%s274 + $0x4e4] sm:$0xf]
      %v3269 = vld [vmem:[%s274 + $0x4e8] sm:$0xf]
      %v3270 = vld [vmem:[%s274 + $0x4ec] sm:$0xf]
      %v3271 = vld [vmem:[%s274 + $0x4f0] sm:$0xf]
      %v3272 = vld [vmem:[%s274 + $0x4f4] sm:$0xf]
      %v3273 = vld [vmem:[%s274 + $0x4f8] sm:$0xf]
      %v3274 = vld [vmem:[%s274 + $0x4fc] sm:$0xf]
      %v3275 = vld [vmem:[%s274 + $0x500] sm:$0xf]
      %v3276 = vld [vmem:[%s274 + $0x504] sm:$0xf]
      %v3277 = vld [vmem:[%s274 + $0x508] sm:$0xf]
      %v3278 = vld [vmem:[%s274 + $0x50c] sm:$0xf]
      %v3279 = vld [vmem:[%s274 + $0x510] sm:$0xf]
      %v3280 = vld [vmem:[%s274 + $0x514] sm:$0xf]
      %v3281 = vld [vmem:[%s274 + $0x518] sm:$0xf]
      %v3282 = vld [vmem:[%s274 + $0x51c] sm:$0xf]
      %v3283 = vld [vmem:[%s274 + $0x520] sm:$0xf]
      %v3284 = vld [vmem:[%s274 + $0x524] sm:$0xf]
      %v3285 = vld [vmem:[%s274 + $0x528] sm:$0xf]
      %v3286 = vld [vmem:[%s274 + $0x52c] sm:$0xf]
      %v3287 = vld [vmem:[%s274 + $0x530] sm:$0xf]
      %v3288 = vld [vmem:[%s274 + $0x534] sm:$0xf]
      %v3289 = vld [vmem:[%s274 + $0x538] sm:$0xf]
      %v3290 = vld [vmem:[%s274 + $0x53c] sm:$0xf]
      %v3291 = vld [vmem:[%s274 + $0x540] sm:$0xf]
      %v3292 = vld [vmem:[%s274 + $0x544] sm:$0xf]
      %v3293 = vld [vmem:[%s274 + $0x548] sm:$0xf]
      %v3294 = vld [vmem:[%s274 + $0x54c] sm:$0xf]
      %v3295 = vld [vmem:[%s274 + $0x550] sm:$0xf]
      %v3296 = vld [vmem:[%s274 + $0x554] sm:$0xf]
      %v3297 = vld [vmem:[%s274 + $0x558] sm:$0xf]
      %v3298 = vld [vmem:[%s274 + $0x55c] sm:$0xf]
      %v3299 = vld [vmem:[%s274 + $0x560] sm:$0xf]
      %v3300 = vld [vmem:[%s274 + $0x564] sm:$0xf]
      %v3301 = vld [vmem:[%s274 + $0x568] sm:$0xf]
      %v3302 = vld [vmem:[%s274 + $0x56c] sm:$0xf]
      %v3303 = vld [vmem:[%s274 + $0x570] sm:$0xf]
      %v3304 = vld [vmem:[%s274 + $0x574] sm:$0xf]
      %v3305 = vld [vmem:[%s274 + $0x578] sm:$0xf]
      %v3306 = vld [vmem:[%s274 + $0x57c] sm:$0xf]
      %v3307 = vld [vmem:[%s274 + $0x580] sm:$0xf]
      %v3308 = vld [vmem:[%s274 + $0x584] sm:$0xf]
      %v3309 = vld [vmem:[%s274 + $0x588] sm:$0xf]
      %v3310 = vld [vmem:[%s274 + $0x58c] sm:$0xf]
      %v3311 = vld [vmem:[%s274 + $0x590] sm:$0xf]
      %v3312 = vld [vmem:[%s274 + $0x594] sm:$0xf]
      %v3313 = vld [vmem:[%s274 + $0x598] sm:$0xf]
      %v3314 = vld [vmem:[%s274 + $0x59c] sm:$0xf]
      %v3315 = vld [vmem:[%s274 + $0x5a0] sm:$0xf]
      %v3316 = vld [vmem:[%s274 + $0x5a4] sm:$0xf]
      %v3317 = vld [vmem:[%s274 + $0x5a8] sm:$0xf]
      %v3318 = vld [vmem:[%s274 + $0x5ac] sm:$0xf]
      %v3319 = vld [vmem:[%s274 + $0x5b0] sm:$0xf]
      %v3320 = vld [vmem:[%s274 + $0x5b4] sm:$0xf]
      %v3321 = vld [vmem:[%s274 + $0x5b8] sm:$0xf]
      %v3322 = vld [vmem:[%s274 + $0x5bc] sm:$0xf]
      %v3323 = vld [vmem:[%s274 + $0x5c0] sm:$0xf]
      %v3324 = vld [vmem:[%s274 + $0x5c4] sm:$0xf]
      %v3325 = vld [vmem:[%s274 + $0x5c8] sm:$0xf]
      %v3326 = vld [vmem:[%s274 + $0x5cc] sm:$0xf]
      %v3327 = vld [vmem:[%s274 + $0x5d0] sm:$0xf]
      %v3328 = vld [vmem:[%s274 + $0x5d4] sm:$0xf]
      %v3329 = vld [vmem:[%s274 + $0x5d8] sm:$0xf]
      %v3330 = vld [vmem:[%s274 + $0x5dc] sm:$0xf]
      %v3331 = vld [vmem:[%s274 + $0x5e0] sm:$0xf]
      %v3332 = vld [vmem:[%s274 + $0x5e4] sm:$0xf]
      %v3333 = vld [vmem:[%s274 + $0x5e8] sm:$0xf]
      %v3334 = vld [vmem:[%s274 + $0x5ec] sm:$0xf]
      %v3335 = vld [vmem:[%s274 + $0x5f0] sm:$0xf]
      %v3336 = vld [vmem:[%s274 + $0x5f4] sm:$0xf]
      %v3337 = vld [vmem:[%s274 + $0x5f8] sm:$0xf]
      %v3338 = vld [vmem:[%s274 + $0x5fc] sm:$0xf]
      %v3339 = vld [vmem:[%s274 + $0x600] sm:$0xf]
      %v3340 = vld [vmem:[%s274 + $0x604] sm:$0xf]
      %v3341 = vld [vmem:[%s274 + $0x608] sm:$0xf]
      %v3342 = vld [vmem:[%s274 + $0x60c] sm:$0xf]
      %v3343 = vld [vmem:[%s274 + $0x610] sm:$0xf]
      %v3344 = vld [vmem:[%s274 + $0x614] sm:$0xf]
      %v3345 = vld [vmem:[%s274 + $0x618] sm:$0xf]
      %v3346 = vld [vmem:[%s274 + $0x61c] sm:$0xf]
      %v3445 = vunpack.c.l.b16 %v3249
      %v3446 = vunpack.c.l.b16 %v3250
      %v3447 = vunpack.c.l.b16 %v3251
      %v3448 = vunpack.c.l.b16 %v3252
      %v3449 = vunpack.c.l.b16 %v3253
      %v3450 = vunpack.c.l.b16 %v3254
      %v3451 = vunpack.c.l.b16 %v3255
      %v3452 = vunpack.c.l.b16 %v3256
      %v3453 = vunpack.c.l.b16 %v3257
      %v3454 = vunpack.c.l.b16 %v3258
      %v3455 = vunpack.c.l.b16 %v3259
      %v3456 = vunpack.c.l.b16 %v3260
      %v3457 = vunpack.c.l.b16 %v3261
      %v3458 = vunpack.c.l.b16 %v3262
      %v3459 = vunpack.c.l.b16 %v3263
      %v3460 = vunpack.c.l.b16 %v3264
      %v3461 = vunpack.c.l.b16 %v3265
      %v3462 = vunpack.c.l.b16 %v3266
      %v3463 = vunpack.c.l.b16 %v3267
      %v3464 = vunpack.c.l.b16 %v3268
      %v3465 = vunpack.c.l.b16 %v3269
      %v3466 = vunpack.c.l.b16 %v3270
      %v3467 = vunpack.c.l.b16 %v3271
      %v3468 = vunpack.c.l.b16 %v3272
      %v3469 = vunpack.c.l.b16 %v3273
      %v3470 = vunpack.c.l.b16 %v3274
      %v3471 = vunpack.c.l.b16 %v3275
      %v3472 = vunpack.c.l.b16 %v3276
      %v3473 = vunpack.c.l.b16 %v3277
      %v3474 = vunpack.c.l.b16 %v3278
      %v3475 = vunpack.c.l.b16 %v3279
      %v3476 = vunpack.c.l.b16 %v3280
      %v3477 = vunpack.c.l.b16 %v3281
      %v3478 = vunpack.c.l.b16 %v3282
      %v3479 = vunpack.c.l.b16 %v3283
      %v3480 = vunpack.c.l.b16 %v3284
      %v3481 = vunpack.c.l.b16 %v3285
      %v3482 = vunpack.c.l.b16 %v3286
      %v3483 = vunpack.c.l.b16 %v3287
      %v3484 = vunpack.c.l.b16 %v3288
      %v3485 = vunpack.c.l.b16 %v3289
      %v3486 = vunpack.c.l.b16 %v3290
      %v3487 = vunpack.c.l.b16 %v3291
      %v3488 = vunpack.c.l.b16 %v3292
      %v3489 = vunpack.c.l.b16 %v3293
      %v3490 = vunpack.c.l.b16 %v3294
      %v3491 = vunpack.c.l.b16 %v3295
      %v3492 = vunpack.c.l.b16 %v3296
      %v3493 = vunpack.c.l.b16 %v3297
      %v3494 = vunpack.c.l.b16 %v3298
      %v3495 = vunpack.c.l.b16 %v3299
      %v3496 = vunpack.c.l.b16 %v3300
      %v3497 = vunpack.c.l.b16 %v3301
      %v3498 = vunpack.c.l.b16 %v3302
      %v3499 = vunpack.c.l.b16 %v3303
      %v3500 = vunpack.c.l.b16 %v3304
      %v3501 = vunpack.c.l.b16 %v3305
      %v3502 = vunpack.c.l.b16 %v3306
      %v3503 = vunpack.c.l.b16 %v3307
      %v3504 = vunpack.c.l.b16 %v3308
      %v3505 = vunpack.c.l.b16 %v3309
      %v3506 = vunpack.c.l.b16 %v3310
      %v3507 = vunpack.c.l.b16 %v3311
      %v3508 = vunpack.c.l.b16 %v3312
      %v3509 = vunpack.c.l.b16 %v3313
      %v3510 = vunpack.c.l.b16 %v3314
      %v3511 = vunpack.c.l.b16 %v3315
      %v3512 = vunpack.c.l.b16 %v3316
      %v3513 = vunpack.c.l.b16 %v3317
      %v3514 = vunpack.c.l.b16 %v3318
      %v3515 = vunpack.c.l.b16 %v3319
      %v3516 = vunpack.c.l.b16 %v3320
      %v3517 = vunpack.c.l.b16 %v3321
      %v3518 = vunpack.c.l.b16 %v3322
      %v3519 = vunpack.c.l.b16 %v3323
      %v3520 = vunpack.c.l.b16 %v3324
      %v3521 = vunpack.c.l.b16 %v3325
      %v3522 = vunpack.c.l.b16 %v3326
      %v3523 = vunpack.c.l.b16 %v3327
      %v3524 = vunpack.c.l.b16 %v3328
      %v3525 = vunpack.c.l.b16 %v3329
      %v3526 = vunpack.c.l.b16 %v3330
      %v3527 = vunpack.c.l.b16 %v3331
      %v3528 = vunpack.c.l.b16 %v3332
      %v3529 = vunpack.c.l.b16 %v3333
      %v3530 = vunpack.c.l.b16 %v3334
      %v3531 = vunpack.c.l.b16 %v3335
      %v3532 = vunpack.c.l.b16 %v3336
      %v3533 = vunpack.c.l.b16 %v3337
      %v3534 = vunpack.c.l.b16 %v3338
      %v3535 = vunpack.c.l.b16 %v3339
      %v3536 = vunpack.c.l.b16 %v3340
      %v3537 = vunpack.c.l.b16 %v3341
      %v3538 = vunpack.c.l.b16 %v3342
      %v3539 = vunpack.c.l.b16 %v3343
      %v3540 = vunpack.c.l.b16 %v3344
      %v3541 = vunpack.c.l.b16 %v3345
      %v3542 = vunpack.c.l.b16 %v3346
      %v3543 = vpack.c.b16 %v3446, %v3445
      %v3544 = vpack.c.b16 %v3448, %v3447
      %v3545 = vpack.c.b16 %v3450, %v3449
      %v3546 = vpack.c.b16 %v3452, %v3451
      %v3547 = vpack.c.b16 %v3454, %v3453
      %v3548 = vpack.c.b16 %v3456, %v3455
      %v3549 = vpack.c.b16 %v3458, %v3457
      %v3550 = vpack.c.b16 %v3460, %v3459
      %v3551 = vpack.c.b16 %v3462, %v3461
      %v3552 = vpack.c.b16 %v3464, %v3463
      %v3553 = vpack.c.b16 %v3466, %v3465
      %v3554 = vpack.c.b16 %v3468, %v3467
      %v3555 = vpack.c.b16 %v3470, %v3469
      %v3556 = vpack.c.b16 %v3472, %v3471
      %v3557 = vpack.c.b16 %v3474, %v3473
      %v3558 = vpack.c.b16 %v3476, %v3475
      %v3559 = vpack.c.b16 %v3478, %v3477
      %v3560 = vpack.c.b16 %v3480, %v3479
      %v3561 = vpack.c.b16 %v3482, %v3481
      %v3562 = vpack.c.b16 %v3484, %v3483
      %v3563 = vpack.c.b16 %v3486, %v3485
      %v3564 = vpack.c.b16 %v3488, %v3487
      %v3565 = vpack.c.b16 %v3490, %v3489
      %v3566 = vpack.c.b16 %v3492, %v3491
      %v3567 = vpack.c.b16 %v3494, %v3493
      %v3568 = vpack.c.b16 %v3496, %v3495
      %v3569 = vpack.c.b16 %v3498, %v3497
      %v3570 = vpack.c.b16 %v3500, %v3499
      %v3571 = vpack.c.b16 %v3502, %v3501
      %v3572 = vpack.c.b16 %v3504, %v3503
      %v3573 = vpack.c.b16 %v3506, %v3505
      %v3574 = vpack.c.b16 %v3508, %v3507
      %v3575 = vpack.c.b16 %v3510, %v3509
      %v3576 = vpack.c.b16 %v3512, %v3511
      %v3577 = vpack.c.b16 %v3514, %v3513
      %v3578 = vpack.c.b16 %v3516, %v3515
      %v3579 = vpack.c.b16 %v3518, %v3517
      %v3580 = vpack.c.b16 %v3520, %v3519
      %v3581 = vpack.c.b16 %v3522, %v3521
      %v3582 = vpack.c.b16 %v3524, %v3523
      %v3583 = vpack.c.b16 %v3526, %v3525
      %v3584 = vpack.c.b16 %v3528, %v3527
      %v3585 = vpack.c.b16 %v3530, %v3529
      %v3586 = vpack.c.b16 %v3532, %v3531
      %v3587 = vpack.c.b16 %v3534, %v3533
      %v3588 = vpack.c.b16 %v3536, %v3535
      %v3589 = vpack.c.b16 %v3538, %v3537
      %v3590 = vpack.c.b16 %v3540, %v3539
      %v3591 = vpack.c.b16 %v3542, %v3541
      %v3593 = vsel %vm646, %v3543, 0
      %v3596 = vsel %vm646, %v3544, 0
      %v3599 = vsel %vm646, %v3545, 0
      %v3602 = vsel %vm646, %v3546, 0
      %v3605 = vsel %vm646, %v3547, 0
      %v3608 = vsel %vm646, %v3548, 0
      %v3611 = vsel %vm646, %v3549, 0
      %v3614 = vsel %vm646, %v3550, 0
      %v3617 = vsel %vm646, %v3551, 0
      %v3620 = vsel %vm646, %v3552, 0
      %v3623 = vsel %vm646, %v3553, 0
      %v3626 = vsel %vm646, %v3554, 0
      %v3629 = vsel %vm646, %v3555, 0
      %v3632 = vsel %vm646, %v3556, 0
      %v3635 = vsel %vm646, %v3557, 0
      %v3638 = vsel %vm646, %v3558, 0
      %v3641 = vsel %vm646, %v3559, 0
      %v3644 = vsel %vm646, %v3560, 0
      %v3647 = vsel %vm646, %v3561, 0
      %v3650 = vsel %vm646, %v3562, 0
      %v3653 = vsel %vm646, %v3563, 0
      %v3656 = vsel %vm646, %v3564, 0
      %v3659 = vsel %vm646, %v3565, 0
      %v3662 = vsel %vm646, %v3566, 0
      %v3665 = vsel %vm646, %v3567, 0
      %v3668 = vsel %vm646, %v3568, 0
      %v3671 = vsel %vm646, %v3569, 0
      %v3674 = vsel %vm646, %v3570, 0
      %v3677 = vsel %vm646, %v3571, 0
      %v3680 = vsel %vm646, %v3572, 0
      %v3683 = vsel %vm646, %v3573, 0
      %v3686 = vsel %vm646, %v3574, 0
      %v3689 = vsel %vm646, %v3575, 0
      %v3692 = vsel %vm646, %v3576, 0
      %v3695 = vsel %vm646, %v3577, 0
      %v3698 = vsel %vm646, %v3578, 0
      %v3701 = vsel %vm646, %v3579, 0
      %v3704 = vsel %vm646, %v3580, 0
      %v3707 = vsel %vm646, %v3581, 0
      %v3710 = vsel %vm646, %v3582, 0
      %v3713 = vsel %vm646, %v3583, 0
      %v3716 = vsel %vm646, %v3584, 0
      %v3719 = vsel %vm646, %v3585, 0
      %v3722 = vsel %vm646, %v3586, 0
      %v3725 = vsel %vm646, %v3587, 0
      %v3728 = vsel %vm646, %v3588, 0
      %v3731 = vsel %vm646, %v3589, 0
      %v3734 = vsel %vm646, %v3590, 0
      %v3737 = vsel %vm646, %v3591, 0
      %3739 = vmatprep.subr.bf16.mxu0 0
      %3740 = vmatpush1.bf16.msra.mxu0 0
      %3741 = vmatprep.subr.bf16.mxu0 0
      %3742 = vmatpush1.bf16.msra.mxu0 0
      %3743 = vmatprep.subr.bf16.mxu0 0
      %3744 = vmatpush1.bf16.msra.mxu0 0
      %3745 = vmatprep.subr.bf16.mxu0 0
      %3746 = vmatpush1.bf16.msra.mxu0 0
      %3747 = vmatprep.subr.bf16.mxu0 0
      %3748 = vmatpush1.bf16.msra.mxu0 0
      %3749 = vmatprep.subr.bf16.mxu0 0
      %3750 = vmatpush1.bf16.msra.mxu0 %v796
      %3751 = vmatprep.subr.bf16.mxu0 0
      %3752 = vmatpush1.bf16.msra.mxu0 %v642
      %3753 = vmatprep.subr.bf16.mxu0 0
      %3754 = vmatpush1.bf16.msra.mxu0 %v641
      %3755 = vmatprep.subr.bf16.mxu0 0
      %3756 = vmatpush2.bf16.msra.mxu0 0
      %3757 = vmatprep.subr.bf16.mxu0 0
      %3758 = vmatpush2.bf16.msra.mxu0 0
      %3759 = vmatprep.subr.bf16.mxu0 0
      %3760 = vmatpush2.bf16.msra.mxu0 0
      %3761 = vmatprep.subr.bf16.mxu0 0
      %3762 = vmatpush2.bf16.msra.mxu0 0
      %3763 = vmatprep.subr.bf16.mxu0 0
      %3764 = vmatpush2.bf16.msra.mxu0 0
      %3765 = vmatprep.subr.bf16.mxu0 0
      %3766 = vmatpush2.bf16.msra.mxu0 0
      %3767 = vmatprep.subr.bf16.mxu0 0
      %3768 = vmatpush2.bf16.msra.mxu0 0
      %3769 = vmatprep.subr.bf16.mxu0 0
      %3770 = vmatpush2.bf16.msra.mxu0 0
      %3771 = vmatprep.mubr.bf16.mxu0 0
      %3772 = vmatmul.mubr.bf16.gmra.mxu0 %v3593
      %v3773 = vpop.f32.mrf.mxu0
      %v3774 = vadd.f32 0.0, %v3773
      %v3775 = vpop.f32.mrf.mxu0
      %v3776 = vpop.f32.mrf.mxu0
      %v3777 = vadd.f32 0.0, %v3776
      %v3778 = vpop.f32.mrf.mxu0
      %3779 = vmatprep.mubr.bf16.mxu0 0
      %3780 = vmatmul.mubr.bf16.gmra.mxu0 %v3596
      %v3781 = vpop.f32.mrf.mxu0
      %v3782 = vadd.f32 0.0, %v3781
      %v3783 = vpop.f32.mrf.mxu0
      %v3784 = vpop.f32.mrf.mxu0
      %v3785 = vadd.f32 0.0, %v3784
      %v3786 = vpop.f32.mrf.mxu0
      %3787 = vmatprep.mubr.bf16.mxu0 0
      %3788 = vmatmul.mubr.bf16.gmra.mxu0 %v3599
      %v3789 = vpop.f32.mrf.mxu0
      %v3790 = vadd.f32 0.0, %v3789
      %v3791 = vpop.f32.mrf.mxu0
      %v3792 = vpop.f32.mrf.mxu0
      %v3793 = vadd.f32 0.0, %v3792
      %v3794 = vpop.f32.mrf.mxu0
      %3795 = vmatprep.mubr.bf16.mxu0 0
      %3796 = vmatmul.mubr.bf16.gmra.mxu0 %v3602
      %v3797 = vpop.f32.mrf.mxu0
      %v3798 = vadd.f32 0.0, %v3797
      %v3799 = vpop.f32.mrf.mxu0
      %v3800 = vpop.f32.mrf.mxu0
      %v3801 = vadd.f32 0.0, %v3800
      %v3802 = vpop.f32.mrf.mxu0
      %3803 = vmatprep.mubr.bf16.mxu0 0
      %3804 = vmatmul.mubr.bf16.gmra.mxu0 %v3605
      %v3805 = vpop.f32.mrf.mxu0
      %v3806 = vadd.f32 0.0, %v3805
      %v3807 = vpop.f32.mrf.mxu0
      %v3808 = vpop.f32.mrf.mxu0
      %v3809 = vadd.f32 0.0, %v3808
      %v3810 = vpop.f32.mrf.mxu0
      %3811 = vmatprep.mubr.bf16.mxu0 0
      %3812 = vmatmul.mubr.bf16.gmra.mxu0 %v3608
      %v3813 = vpop.f32.mrf.mxu0
      %v3814 = vadd.f32 0.0, %v3813
      %v3815 = vpop.f32.mrf.mxu0
      %v3816 = vpop.f32.mrf.mxu0
      %v3817 = vadd.f32 0.0, %v3816
      %v3818 = vpop.f32.mrf.mxu0
      %3819 = vmatprep.mubr.bf16.mxu0 0
      %3820 = vmatmul.mubr.bf16.gmra.mxu0 %v3611
      %v3821 = vpop.f32.mrf.mxu0
      %v3822 = vadd.f32 0.0, %v3821
      %v3823 = vpop.f32.mrf.mxu0
      %v3824 = vpop.f32.mrf.mxu0
      %v3825 = vadd.f32 0.0, %v3824
      %v3826 = vpop.f32.mrf.mxu0
      %3827 = vmatprep.mubr.bf16.mxu0 0
      %3828 = vmatmul.mubr.bf16.gmra.mxu0 %v3614
      %v3829 = vpop.f32.mrf.mxu0
      %v3830 = vadd.f32 0.0, %v3829
      %v3831 = vpop.f32.mrf.mxu0
      %v3832 = vpop.f32.mrf.mxu0
      %v3833 = vadd.f32 0.0, %v3832
      %v3834 = vpop.f32.mrf.mxu0
      %3835 = vmatprep.mubr.bf16.mxu0 0
      %3836 = vmatmul.mubr.bf16.gmra.mxu0 %v3617
      %v3837 = vpop.f32.mrf.mxu0
      %v3838 = vadd.f32 0.0, %v3837
      %v3839 = vpop.f32.mrf.mxu0
      %v3840 = vpop.f32.mrf.mxu0
      %v3841 = vadd.f32 0.0, %v3840
      %v3842 = vpop.f32.mrf.mxu0
      %3843 = vmatprep.mubr.bf16.mxu0 0
      %3844 = vmatmul.mubr.bf16.gmra.mxu0 %v3620
      %v3845 = vpop.f32.mrf.mxu0
      %v3846 = vadd.f32 0.0, %v3845
      %v3847 = vpop.f32.mrf.mxu0
      %v3848 = vpop.f32.mrf.mxu0
      %v3849 = vadd.f32 0.0, %v3848
      %v3850 = vpop.f32.mrf.mxu0
      %3851 = vmatprep.mubr.bf16.mxu0 0
      %3852 = vmatmul.mubr.bf16.gmra.mxu0 %v3623
      %v3853 = vpop.f32.mrf.mxu0
      %v3854 = vadd.f32 0.0, %v3853
      %v3855 = vpop.f32.mrf.mxu0
      %v3856 = vpop.f32.mrf.mxu0
      %v3857 = vadd.f32 0.0, %v3856
      %v3858 = vpop.f32.mrf.mxu0
      %3859 = vmatprep.mubr.bf16.mxu0 0
      %3860 = vmatmul.mubr.bf16.gmra.mxu0 %v3626
      %v3861 = vpop.f32.mrf.mxu0
      %v3862 = vadd.f32 0.0, %v3861
      %v3863 = vpop.f32.mrf.mxu0
      %v3864 = vpop.f32.mrf.mxu0
      %v3865 = vadd.f32 0.0, %v3864
      %v3866 = vpop.f32.mrf.mxu0
      %3867 = vmatprep.mubr.bf16.mxu0 0
      %3868 = vmatmul.mubr.bf16.gmra.mxu0 %v3629
      %v3869 = vpop.f32.mrf.mxu0
      %v3870 = vadd.f32 0.0, %v3869
      %v3871 = vpop.f32.mrf.mxu0
      %v3872 = vpop.f32.mrf.mxu0
      %v3873 = vadd.f32 0.0, %v3872
      %v3874 = vpop.f32.mrf.mxu0
      %3875 = vmatprep.mubr.bf16.mxu0 0
      %3876 = vmatmul.mubr.bf16.gmra.mxu0 %v3632
      %v3877 = vpop.f32.mrf.mxu0
      %v3878 = vadd.f32 0.0, %v3877
      %v3879 = vpop.f32.mrf.mxu0
      %v3880 = vpop.f32.mrf.mxu0
      %v3881 = vadd.f32 0.0, %v3880
      %v3882 = vpop.f32.mrf.mxu0
      %3883 = vmatprep.mubr.bf16.mxu0 0
      %3884 = vmatmul.mubr.bf16.gmra.mxu0 %v3635
      %v3885 = vpop.f32.mrf.mxu0
      %v3886 = vadd.f32 0.0, %v3885
      %v3887 = vpop.f32.mrf.mxu0
      %v3888 = vpop.f32.mrf.mxu0
      %v3889 = vadd.f32 0.0, %v3888
      %v3890 = vpop.f32.mrf.mxu0
      %3891 = vmatprep.mubr.bf16.mxu0 0
      %3892 = vmatmul.mubr.bf16.gmra.mxu0 %v3638
      %v3893 = vpop.f32.mrf.mxu0
      %v3894 = vadd.f32 0.0, %v3893
      %v3895 = vpop.f32.mrf.mxu0
      %v3896 = vpop.f32.mrf.mxu0
      %v3897 = vadd.f32 0.0, %v3896
      %v3898 = vpop.f32.mrf.mxu0
      %3899 = vmatprep.mubr.bf16.mxu0 0
      %3900 = vmatmul.mubr.bf16.gmra.mxu0 %v3641
      %v3901 = vpop.f32.mrf.mxu0
      %v3902 = vadd.f32 0.0, %v3901
      %v3903 = vpop.f32.mrf.mxu0
      %v3904 = vpop.f32.mrf.mxu0
      %v3905 = vadd.f32 0.0, %v3904
      %v3906 = vpop.f32.mrf.mxu0
      %3907 = vmatprep.mubr.bf16.mxu0 0
      %3908 = vmatmul.mubr.bf16.gmra.mxu0 %v3644
      %v3909 = vpop.f32.mrf.mxu0
      %v3910 = vadd.f32 0.0, %v3909
      %v3911 = vpop.f32.mrf.mxu0
      %v3912 = vpop.f32.mrf.mxu0
      %v3913 = vadd.f32 0.0, %v3912
      %v3914 = vpop.f32.mrf.mxu0
      %3915 = vmatprep.mubr.bf16.mxu0 0
      %3916 = vmatmul.mubr.bf16.gmra.mxu0 %v3647
      %v3917 = vpop.f32.mrf.mxu0
      %v3918 = vadd.f32 0.0, %v3917
      %v3919 = vpop.f32.mrf.mxu0
      %v3920 = vpop.f32.mrf.mxu0
      %v3921 = vadd.f32 0.0, %v3920
      %v3922 = vpop.f32.mrf.mxu0
      %3923 = vmatprep.mubr.bf16.mxu0 0
      %3924 = vmatmul.mubr.bf16.gmra.mxu0 %v3650
      %v3925 = vpop.f32.mrf.mxu0
      %v3926 = vadd.f32 0.0, %v3925
      %v3927 = vpop.f32.mrf.mxu0
      %v3928 = vpop.f32.mrf.mxu0
      %v3929 = vadd.f32 0.0, %v3928
      %v3930 = vpop.f32.mrf.mxu0
      %3931 = vmatprep.mubr.bf16.mxu0 0
      %3932 = vmatmul.mubr.bf16.gmra.mxu0 %v3653
      %v3933 = vpop.f32.mrf.mxu0
      %v3934 = vadd.f32 0.0, %v3933
      %v3935 = vpop.f32.mrf.mxu0
      %v3936 = vpop.f32.mrf.mxu0
      %v3937 = vadd.f32 0.0, %v3936
      %v3938 = vpop.f32.mrf.mxu0
      %3939 = vmatprep.mubr.bf16.mxu0 0
      %3940 = vmatmul.mubr.bf16.gmra.mxu0 %v3656
      %v3941 = vpop.f32.mrf.mxu0
      %v3942 = vadd.f32 0.0, %v3941
      %v3943 = vpop.f32.mrf.mxu0
      %v3944 = vpop.f32.mrf.mxu0
      %v3945 = vadd.f32 0.0, %v3944
      %v3946 = vpop.f32.mrf.mxu0
      %3947 = vmatprep.mubr.bf16.mxu0 0
      %3948 = vmatmul.mubr.bf16.gmra.mxu0 %v3659
      %v3949 = vpop.f32.mrf.mxu0
      %v3950 = vadd.f32 0.0, %v3949
      %v3951 = vpop.f32.mrf.mxu0
      %v3952 = vpop.f32.mrf.mxu0
      %v3953 = vadd.f32 0.0, %v3952
      %v3954 = vpop.f32.mrf.mxu0
      %3955 = vmatprep.mubr.bf16.mxu0 0
      %3956 = vmatmul.mubr.bf16.gmra.mxu0 %v3662
      %v3957 = vpop.f32.mrf.mxu0
      %v3958 = vadd.f32 0.0, %v3957
      %v3959 = vpop.f32.mrf.mxu0
      %v3960 = vpop.f32.mrf.mxu0
      %v3961 = vadd.f32 0.0, %v3960
      %v3962 = vpop.f32.mrf.mxu0
      %3963 = vmatprep.mubr.bf16.mxu0 0
      %3964 = vmatmul.mubr.bf16.gmra.mxu0 %v3665
      %v3965 = vpop.f32.mrf.mxu0
      %v3966 = vadd.f32 0.0, %v3965
      %v3967 = vpop.f32.mrf.mxu0
      %v3968 = vpop.f32.mrf.mxu0
      %v3969 = vadd.f32 0.0, %v3968
      %v3970 = vpop.f32.mrf.mxu0
      %3971 = vmatprep.mubr.bf16.mxu0 0
      %3972 = vmatmul.mubr.bf16.gmra.mxu0 %v3668
      %v3973 = vpop.f32.mrf.mxu0
      %v3974 = vadd.f32 0.0, %v3973
      %v3975 = vpop.f32.mrf.mxu0
      %v3976 = vpop.f32.mrf.mxu0
      %v3977 = vadd.f32 0.0, %v3976
      %v3978 = vpop.f32.mrf.mxu0
      %3979 = vmatprep.mubr.bf16.mxu0 0
      %3980 = vmatmul.mubr.bf16.gmra.mxu0 %v3671
      %v3981 = vpop.f32.mrf.mxu0
      %v3982 = vadd.f32 0.0, %v3981
      %v3983 = vpop.f32.mrf.mxu0
      %v3984 = vpop.f32.mrf.mxu0
      %v3985 = vadd.f32 0.0, %v3984
      %v3986 = vpop.f32.mrf.mxu0
      %3987 = vmatprep.mubr.bf16.mxu0 0
      %3988 = vmatmul.mubr.bf16.gmra.mxu0 %v3674
      %v3989 = vpop.f32.mrf.mxu0
      %v3990 = vadd.f32 0.0, %v3989
      %v3991 = vpop.f32.mrf.mxu0
      %v3992 = vpop.f32.mrf.mxu0
      %v3993 = vadd.f32 0.0, %v3992
      %v3994 = vpop.f32.mrf.mxu0
      %3995 = vmatprep.mubr.bf16.mxu0 0
      %3996 = vmatmul.mubr.bf16.gmra.mxu0 %v3677
      %v3997 = vpop.f32.mrf.mxu0
      %v3998 = vadd.f32 0.0, %v3997
      %v3999 = vpop.f32.mrf.mxu0
      %v4000 = vpop.f32.mrf.mxu0
      %v4001 = vadd.f32 0.0, %v4000
      %v4002 = vpop.f32.mrf.mxu0
      %4003 = vmatprep.mubr.bf16.mxu0 0
      %4004 = vmatmul.mubr.bf16.gmra.mxu0 %v3680
      %v4005 = vpop.f32.mrf.mxu0
      %v4006 = vadd.f32 0.0, %v4005
      %v4007 = vpop.f32.mrf.mxu0
      %v4008 = vpop.f32.mrf.mxu0
      %v4009 = vadd.f32 0.0, %v4008
      %v4010 = vpop.f32.mrf.mxu0
      %4011 = vmatprep.mubr.bf16.mxu0 0
      %4012 = vmatmul.mubr.bf16.gmra.mxu0 %v3683
      %v4013 = vpop.f32.mrf.mxu0
      %v4014 = vadd.f32 0.0, %v4013
      %v4015 = vpop.f32.mrf.mxu0
      %v4016 = vpop.f32.mrf.mxu0
      %v4017 = vadd.f32 0.0, %v4016
      %v4018 = vpop.f32.mrf.mxu0
      %4019 = vmatprep.mubr.bf16.mxu0 0
      %4020 = vmatmul.mubr.bf16.gmra.mxu0 %v3686
      %v4021 = vpop.f32.mrf.mxu0
      %v4022 = vadd.f32 0.0, %v4021
      %v4023 = vpop.f32.mrf.mxu0
      %v4024 = vpop.f32.mrf.mxu0
      %v4025 = vadd.f32 0.0, %v4024
      %v4026 = vpop.f32.mrf.mxu0
      %4027 = vmatprep.mubr.bf16.mxu0 0
      %4028 = vmatmul.mubr.bf16.gmra.mxu0 %v3689
      %v4029 = vpop.f32.mrf.mxu0
      %v4030 = vadd.f32 0.0, %v4029
      %v4031 = vpop.f32.mrf.mxu0
      %v4032 = vpop.f32.mrf.mxu0
      %v4033 = vadd.f32 0.0, %v4032
      %v4034 = vpop.f32.mrf.mxu0
      %4035 = vmatprep.mubr.bf16.mxu0 0
      %4036 = vmatmul.mubr.bf16.gmra.mxu0 %v3692
      %v4037 = vpop.f32.mrf.mxu0
      %v4038 = vadd.f32 0.0, %v4037
      %v4039 = vpop.f32.mrf.mxu0
      %v4040 = vpop.f32.mrf.mxu0
      %v4041 = vadd.f32 0.0, %v4040
      %v4042 = vpop.f32.mrf.mxu0
      %4043 = vmatprep.mubr.bf16.mxu0 0
      %4044 = vmatmul.mubr.bf16.gmra.mxu0 %v3695
      %v4045 = vpop.f32.mrf.mxu0
      %v4046 = vadd.f32 0.0, %v4045
      %v4047 = vpop.f32.mrf.mxu0
      %v4048 = vpop.f32.mrf.mxu0
      %v4049 = vadd.f32 0.0, %v4048
      %v4050 = vpop.f32.mrf.mxu0
      %4051 = vmatprep.mubr.bf16.mxu0 0
      %4052 = vmatmul.mubr.bf16.gmra.mxu0 %v3698
      %v4053 = vpop.f32.mrf.mxu0
      %v4054 = vadd.f32 0.0, %v4053
      %v4055 = vpop.f32.mrf.mxu0
      %v4056 = vpop.f32.mrf.mxu0
      %v4057 = vadd.f32 0.0, %v4056
      %v4058 = vpop.f32.mrf.mxu0
      %4059 = vmatprep.mubr.bf16.mxu0 0
      %4060 = vmatmul.mubr.bf16.gmra.mxu0 %v3701
      %v4061 = vpop.f32.mrf.mxu0
      %v4062 = vadd.f32 0.0, %v4061
      %v4063 = vpop.f32.mrf.mxu0
      %v4064 = vpop.f32.mrf.mxu0
      %v4065 = vadd.f32 0.0, %v4064
      %v4066 = vpop.f32.mrf.mxu0
      %4067 = vmatprep.mubr.bf16.mxu0 0
      %4068 = vmatmul.mubr.bf16.gmra.mxu0 %v3704
      %v4069 = vpop.f32.mrf.mxu0
      %v4070 = vadd.f32 0.0, %v4069
      %v4071 = vpop.f32.mrf.mxu0
      %v4072 = vpop.f32.mrf.mxu0
      %v4073 = vadd.f32 0.0, %v4072
      %v4074 = vpop.f32.mrf.mxu0
      %4075 = vmatprep.mubr.bf16.mxu0 0
      %4076 = vmatmul.mubr.bf16.gmra.mxu0 %v3707
      %v4077 = vpop.f32.mrf.mxu0
      %v4078 = vadd.f32 0.0, %v4077
      %v4079 = vpop.f32.mrf.mxu0
      %v4080 = vpop.f32.mrf.mxu0
      %v4081 = vadd.f32 0.0, %v4080
      %v4082 = vpop.f32.mrf.mxu0
      %4083 = vmatprep.mubr.bf16.mxu0 0
      %4084 = vmatmul.mubr.bf16.gmra.mxu0 %v3710
      %v4085 = vpop.f32.mrf.mxu0
      %v4086 = vadd.f32 0.0, %v4085
      %v4087 = vpop.f32.mrf.mxu0
      %v4088 = vpop.f32.mrf.mxu0
      %v4089 = vadd.f32 0.0, %v4088
      %v4090 = vpop.f32.mrf.mxu0
      %4091 = vmatprep.mubr.bf16.mxu0 0
      %4092 = vmatmul.mubr.bf16.gmra.mxu0 %v3713
      %v4093 = vpop.f32.mrf.mxu0
      %v4094 = vadd.f32 0.0, %v4093
      %v4095 = vpop.f32.mrf.mxu0
      %v4096 = vpop.f32.mrf.mxu0
      %v4097 = vadd.f32 0.0, %v4096
      %v4098 = vpop.f32.mrf.mxu0
      %4099 = vmatprep.mubr.bf16.mxu0 0
      %4100 = vmatmul.mubr.bf16.gmra.mxu0 %v3716
      %v4101 = vpop.f32.mrf.mxu0
      %v4102 = vadd.f32 0.0, %v4101
      %v4103 = vpop.f32.mrf.mxu0
      %v4104 = vpop.f32.mrf.mxu0
      %v4105 = vadd.f32 0.0, %v4104
      %v4106 = vpop.f32.mrf.mxu0
      %4107 = vmatprep.mubr.bf16.mxu0 0
      %4108 = vmatmul.mubr.bf16.gmra.mxu0 %v3719
      %v4109 = vpop.f32.mrf.mxu0
      %v4110 = vadd.f32 0.0, %v4109
      %v4111 = vpop.f32.mrf.mxu0
      %v4112 = vpop.f32.mrf.mxu0
      %v4113 = vadd.f32 0.0, %v4112
      %v4114 = vpop.f32.mrf.mxu0
      %4115 = vmatprep.mubr.bf16.mxu0 0
      %4116 = vmatmul.mubr.bf16.gmra.mxu0 %v3722
      %v4117 = vpop.f32.mrf.mxu0
      %v4118 = vadd.f32 0.0, %v4117
      %v4119 = vpop.f32.mrf.mxu0
      %v4120 = vpop.f32.mrf.mxu0
      %v4121 = vadd.f32 0.0, %v4120
      %v4122 = vpop.f32.mrf.mxu0
      %4123 = vmatprep.mubr.bf16.mxu0 0
      %4124 = vmatmul.mubr.bf16.gmra.mxu0 %v3725
      %v4125 = vpop.f32.mrf.mxu0
      %v4126 = vadd.f32 0.0, %v4125
      %v4127 = vpop.f32.mrf.mxu0
      %v4128 = vpop.f32.mrf.mxu0
      %v4129 = vadd.f32 0.0, %v4128
      %v4130 = vpop.f32.mrf.mxu0
      %4131 = vmatprep.mubr.bf16.mxu0 0
      %4132 = vmatmul.mubr.bf16.gmra.mxu0 %v3728
      %v4133 = vpop.f32.mrf.mxu0
      %v4134 = vadd.f32 0.0, %v4133
      %v4135 = vpop.f32.mrf.mxu0
      %v4136 = vpop.f32.mrf.mxu0
      %v4137 = vadd.f32 0.0, %v4136
      %v4138 = vpop.f32.mrf.mxu0
      %4139 = vmatprep.mubr.bf16.mxu0 0
      %4140 = vmatmul.mubr.bf16.gmra.mxu0 %v3731
      %v4141 = vpop.f32.mrf.mxu0
      %v4142 = vadd.f32 0.0, %v4141
      %v4143 = vpop.f32.mrf.mxu0
      %v4144 = vpop.f32.mrf.mxu0
      %v4145 = vadd.f32 0.0, %v4144
      %v4146 = vpop.f32.mrf.mxu0
      %4147 = vmatprep.mubr.bf16.mxu0 0
      %4148 = vmatmul.mubr.bf16.gmra.mxu0 %v3734
      %v4149 = vpop.f32.mrf.mxu0
      %v4150 = vadd.f32 0.0, %v4149
      %v4151 = vpop.f32.mrf.mxu0
      %v4152 = vpop.f32.mrf.mxu0
      %v4153 = vadd.f32 0.0, %v4152
      %v4154 = vpop.f32.mrf.mxu0
      %4155 = vmatprep.mubr.bf16.mxu0 0
      %4156 = vmatmul.mubr.bf16.gmra.mxu0 %v3737
      %v4157 = vpop.f32.mrf.mxu0
      %v4158 = vadd.f32 0.0, %v4157
      %v4159 = vpop.f32.mrf.mxu0
      %v4160 = vpop.f32.mrf.mxu0
      %v4161 = vadd.f32 0.0, %v4160
      %v4162 = vpop.f32.mrf.mxu0
      %4163 = vdwg.mxu0
      %v4164 = vmax.f32 %v3151, %v3774
      %v4165 = vmax.f32 %v3152, %v3777
      %v4166 = vmax.f32 %v3153, %v3782
      %v4167 = vmax.f32 %v3154, %v3785
      %v4168 = vmax.f32 %v3155, %v3790
      %v4169 = vmax.f32 %v3156, %v3793
      %v4170 = vmax.f32 %v3157, %v3798
      %v4171 = vmax.f32 %v3158, %v3801
      %v4172 = vmax.f32 %v3159, %v3806
      %v4173 = vmax.f32 %v3160, %v3809
      %v4174 = vmax.f32 %v3161, %v3814
      %v4175 = vmax.f32 %v3162, %v3817
      %v4176 = vmax.f32 %v3163, %v3822
      %v4177 = vmax.f32 %v3164, %v3825
      %v4178 = vmax.f32 %v3165, %v3830
      %v4179 = vmax.f32 %v3166, %v3833
      %v4180 = vmax.f32 %v3167, %v3838
      %v4181 = vmax.f32 %v3168, %v3841
      %v4182 = vmax.f32 %v3169, %v3846
      %v4183 = vmax.f32 %v3170, %v3849
      %v4184 = vmax.f32 %v3171, %v3854
      %v4185 = vmax.f32 %v3172, %v3857
      %v4186 = vmax.f32 %v3173, %v3862
      %v4187 = vmax.f32 %v3174, %v3865
      %v4188 = vmax.f32 %v3175, %v3870
      %v4189 = vmax.f32 %v3176, %v3873
      %v4190 = vmax.f32 %v3177, %v3878
      %v4191 = vmax.f32 %v3178, %v3881
      %v4192 = vmax.f32 %v3179, %v3886
      %v4193 = vmax.f32 %v3180, %v3889
      %v4194 = vmax.f32 %v3181, %v3894
      %v4195 = vmax.f32 %v3182, %v3897
      %v4196 = vmax.f32 %v3183, %v3902
      %v4197 = vmax.f32 %v3184, %v3905
      %v4198 = vmax.f32 %v3185, %v3910
      %v4199 = vmax.f32 %v3186, %v3913
      %v4200 = vmax.f32 %v3187, %v3918
      %v4201 = vmax.f32 %v3188, %v3921
      %v4202 = vmax.f32 %v3189, %v3926
      %v4203 = vmax.f32 %v3190, %v3929
      %v4204 = vmax.f32 %v3191, %v3934
      %v4205 = vmax.f32 %v3192, %v3937
      %v4206 = vmax.f32 %v3193, %v3942
      %v4207 = vmax.f32 %v3194, %v3945
      %v4208 = vmax.f32 %v3195, %v3950
      %v4209 = vmax.f32 %v3196, %v3953
      %v4210 = vmax.f32 %v3197, %v3958
      %v4211 = vmax.f32 %v3198, %v3961
      %v4212 = vmax.f32 %v3199, %v3966
      %v4213 = vmax.f32 %v3200, %v3969
      %v4214 = vmax.f32 %v3201, %v3974
      %v4215 = vmax.f32 %v3202, %v3977
      %v4216 = vmax.f32 %v3203, %v3982
      %v4217 = vmax.f32 %v3204, %v3985
      %v4218 = vmax.f32 %v3205, %v3990
      %v4219 = vmax.f32 %v3206, %v3993
      %v4220 = vmax.f32 %v3207, %v3998
      %v4221 = vmax.f32 %v3208, %v4001
      %v4222 = vmax.f32 %v3209, %v4006
      %v4223 = vmax.f32 %v3210, %v4009
      %v4224 = vmax.f32 %v3211, %v4014
      %v4225 = vmax.f32 %v3212, %v4017
      %v4226 = vmax.f32 %v3213, %v4022
      %v4227 = vmax.f32 %v3214, %v4025
      %v4228 = vmax.f32 %v3215, %v4030
      %v4229 = vmax.f32 %v3216, %v4033
      %v4230 = vmax.f32 %v3217, %v4038
      %v4231 = vmax.f32 %v3218, %v4041
      %v4232 = vmax.f32 %v3219, %v4046
      %v4233 = vmax.f32 %v3220, %v4049
      %v4234 = vmax.f32 %v3221, %v4054
      %v4235 = vmax.f32 %v3222, %v4057
      %v4236 = vmax.f32 %v3223, %v4062
      %v4237 = vmax.f32 %v3224, %v4065
      %v4238 = vmax.f32 %v3225, %v4070
      %v4239 = vmax.f32 %v3226, %v4073
      %v4240 = vmax.f32 %v3227, %v4078
      %v4241 = vmax.f32 %v3228, %v4081
      %v4242 = vmax.f32 %v3229, %v4086
      %v4243 = vmax.f32 %v3230, %v4089
      %v4244 = vmax.f32 %v3231, %v4094
      %v4245 = vmax.f32 %v3232, %v4097
      %v4246 = vmax.f32 %v3233, %v4102
      %v4247 = vmax.f32 %v3234, %v4105
      %v4248 = vmax.f32 %v3235, %v4110
      %v4249 = vmax.f32 %v3236, %v4113
      %v4250 = vmax.f32 %v3237, %v4118
      %v4251 = vmax.f32 %v3238, %v4121
      %v4252 = vmax.f32 %v3239, %v4126
      %v4253 = vmax.f32 %v3240, %v4129
      %v4254 = vmax.f32 %v3241, %v4134
      %v4255 = vmax.f32 %v3242, %v4137
      %v4256 = vmax.f32 %v3243, %v4142
      %v4257 = vmax.f32 %v3244, %v4145
      %v4258 = vmax.f32 %v3245, %v4150
      %v4259 = vmax.f32 %v3246, %v4153
      %v4260 = vmax.f32 %v3247, %v4158
      %v4261 = vmax.f32 %v3248, %v4161
      %v4262 = vld [vmem:[%s2] sm:$0x1]
      %v4264 = vlaneseq
      %v4265 = vshrl.u32 %v4264, 7
      %v4266 = vsub.s32 0, %v4265
      %v4267 = vrot.slane %v4262, %v4266
      %v4269 = vadd.f32 %v4164, %v4267
      %v4270 = vadd.f32 %v4165, %v4267
      %v4271 = vadd.f32 %v4166, %v4267
      %v4272 = vadd.f32 %v4167, %v4267
      %v4273 = vadd.f32 %v4168, %v4267
      %v4274 = vadd.f32 %v4169, %v4267
      %v4275 = vadd.f32 %v4170, %v4267
      %v4276 = vadd.f32 %v4171, %v4267
      %v4277 = vadd.f32 %v4172, %v4267
      %v4278 = vadd.f32 %v4173, %v4267
      %v4279 = vadd.f32 %v4174, %v4267
      %v4280 = vadd.f32 %v4175, %v4267
      %v4281 = vadd.f32 %v4176, %v4267
      %v4282 = vadd.f32 %v4177, %v4267
      %v4283 = vadd.f32 %v4178, %v4267
      %v4284 = vadd.f32 %v4179, %v4267
      %v4285 = vadd.f32 %v4180, %v4267
      %v4286 = vadd.f32 %v4181, %v4267
      %v4287 = vadd.f32 %v4182, %v4267
      %v4288 = vadd.f32 %v4183, %v4267
      %v4289 = vadd.f32 %v4184, %v4267
      %v4290 = vadd.f32 %v4185, %v4267
      %v4291 = vadd.f32 %v4186, %v4267
      %v4292 = vadd.f32 %v4187, %v4267
      %v4293 = vadd.f32 %v4188, %v4267
      %v4294 = vadd.f32 %v4189, %v4267
      %v4295 = vadd.f32 %v4190, %v4267
      %v4296 = vadd.f32 %v4191, %v4267
      %v4297 = vadd.f32 %v4192, %v4267
      %v4298 = vadd.f32 %v4193, %v4267
      %v4299 = vadd.f32 %v4194, %v4267
      %v4300 = vadd.f32 %v4195, %v4267
      %v4301 = vadd.f32 %v4196, %v4267
      %v4302 = vadd.f32 %v4197, %v4267
      %v4303 = vadd.f32 %v4198, %v4267
      %v4304 = vadd.f32 %v4199, %v4267
      %v4305 = vadd.f32 %v4200, %v4267
      %v4306 = vadd.f32 %v4201, %v4267
      %v4307 = vadd.f32 %v4202, %v4267
      %v4308 = vadd.f32 %v4203, %v4267
      %v4309 = vadd.f32 %v4204, %v4267
      %v4310 = vadd.f32 %v4205, %v4267
      %v4311 = vadd.f32 %v4206, %v4267
      %v4312 = vadd.f32 %v4207, %v4267
      %v4313 = vadd.f32 %v4208, %v4267
      %v4314 = vadd.f32 %v4209, %v4267
      %v4315 = vadd.f32 %v4210, %v4267
      %v4316 = vadd.f32 %v4211, %v4267
      %v4317 = vadd.f32 %v4212, %v4267
      %v4318 = vadd.f32 %v4213, %v4267
      %v4319 = vadd.f32 %v4214, %v4267
      %v4320 = vadd.f32 %v4215, %v4267
      %v4321 = vadd.f32 %v4216, %v4267
      %v4322 = vadd.f32 %v4217, %v4267
      %v4323 = vadd.f32 %v4218, %v4267
      %v4324 = vadd.f32 %v4219, %v4267
      %v4325 = vadd.f32 %v4220, %v4267
      %v4326 = vadd.f32 %v4221, %v4267
      %v4327 = vadd.f32 %v4222, %v4267
      %v4328 = vadd.f32 %v4223, %v4267
      %v4329 = vadd.f32 %v4224, %v4267
      %v4330 = vadd.f32 %v4225, %v4267
      %v4331 = vadd.f32 %v4226, %v4267
      %v4332 = vadd.f32 %v4227, %v4267
      %v4333 = vadd.f32 %v4228, %v4267
      %v4334 = vadd.f32 %v4229, %v4267
      %v4335 = vadd.f32 %v4230, %v4267
      %v4336 = vadd.f32 %v4231, %v4267
      %v4337 = vadd.f32 %v4232, %v4267
      %v4338 = vadd.f32 %v4233, %v4267
      %v4339 = vadd.f32 %v4234, %v4267
      %v4340 = vadd.f32 %v4235, %v4267
      %v4341 = vadd.f32 %v4236, %v4267
      %v4342 = vadd.f32 %v4237, %v4267
      %v4343 = vadd.f32 %v4238, %v4267
      %v4344 = vadd.f32 %v4239, %v4267
      %v4345 = vadd.f32 %v4240, %v4267
      %v4346 = vadd.f32 %v4241, %v4267
      %v4347 = vadd.f32 %v4242, %v4267
      %v4348 = vadd.f32 %v4243, %v4267
      %v4349 = vadd.f32 %v4244, %v4267
      %v4350 = vadd.f32 %v4245, %v4267
      %v4351 = vadd.f32 %v4246, %v4267
      %v4352 = vadd.f32 %v4247, %v4267
      %v4353 = vadd.f32 %v4248, %v4267
      %v4354 = vadd.f32 %v4249, %v4267
      %v4355 = vadd.f32 %v4250, %v4267
      %v4356 = vadd.f32 %v4251, %v4267
      %v4357 = vadd.f32 %v4252, %v4267
      %v4358 = vadd.f32 %v4253, %v4267
      %v4359 = vadd.f32 %v4254, %v4267
      %v4360 = vadd.f32 %v4255, %v4267
      %v4361 = vadd.f32 %v4256, %v4267
      %v4362 = vadd.f32 %v4257, %v4267
      %v4363 = vadd.f32 %v4258, %v4267
      %v4364 = vadd.f32 %v4259, %v4267
      %v4365 = vadd.f32 %v4260, %v4267
      %v4366 = vadd.f32 %v4261, %v4267
      %v4367 = vmax.f32 %v4269, 0.0
      %v4368 = vmax.f32 %v4270, 0.0
      %v4369 = vmax.f32 %v4271, 0.0
      %v4370 = vmax.f32 %v4272, 0.0
      %v4371 = vmax.f32 %v4273, 0.0
      %v4372 = vmax.f32 %v4274, 0.0
      %v4373 = vmax.f32 %v4275, 0.0
      %v4374 = vmax.f32 %v4276, 0.0
      %v4375 = vmax.f32 %v4277, 0.0
      %v4376 = vmax.f32 %v4278, 0.0
      %v4377 = vmax.f32 %v4279, 0.0
      %v4378 = vmax.f32 %v4280, 0.0
      %v4379 = vmax.f32 %v4281, 0.0
      %v4380 = vmax.f32 %v4282, 0.0
      %v4381 = vmax.f32 %v4283, 0.0
      %v4382 = vmax.f32 %v4284, 0.0
      %v4383 = vmax.f32 %v4285, 0.0
      %v4384 = vmax.f32 %v4286, 0.0
      %v4385 = vmax.f32 %v4287, 0.0
      %v4386 = vmax.f32 %v4288, 0.0
      %v4387 = vmax.f32 %v4289, 0.0
      %v4388 = vmax.f32 %v4290, 0.0
      %v4389 = vmax.f32 %v4291, 0.0
      %v4390 = vmax.f32 %v4292, 0.0
      %v4391 = vmax.f32 %v4293, 0.0
      %v4392 = vmax.f32 %v4294, 0.0
      %v4393 = vmax.f32 %v4295, 0.0
      %v4394 = vmax.f32 %v4296, 0.0
      %v4395 = vmax.f32 %v4297, 0.0
      %v4396 = vmax.f32 %v4298, 0.0
      %v4397 = vmax.f32 %v4299, 0.0
      %v4398 = vmax.f32 %v4300, 0.0
      %v4399 = vmax.f32 %v4301, 0.0
      %v4400 = vmax.f32 %v4302, 0.0
      %v4401 = vmax.f32 %v4303, 0.0
      %v4402 = vmax.f32 %v4304, 0.0
      %v4403 = vmax.f32 %v4305, 0.0
      %v4404 = vmax.f32 %v4306, 0.0
      %v4405 = vmax.f32 %v4307, 0.0
      %v4406 = vmax.f32 %v4308, 0.0
      %v4407 = vmax.f32 %v4309, 0.0
      %v4408 = vmax.f32 %v4310, 0.0
      %v4409 = vmax.f32 %v4311, 0.0
      %v4410 = vmax.f32 %v4312, 0.0
      %v4411 = vmax.f32 %v4313, 0.0
      %v4412 = vmax.f32 %v4314, 0.0
      %v4413 = vmax.f32 %v4315, 0.0
      %v4414 = vmax.f32 %v4316, 0.0
      %v4415 = vmax.f32 %v4317, 0.0
      %v4416 = vmax.f32 %v4318, 0.0
      %v4417 = vmax.f32 %v4319, 0.0
      %v4418 = vmax.f32 %v4320, 0.0
      %v4419 = vmax.f32 %v4321, 0.0
      %v4420 = vmax.f32 %v4322, 0.0
      %v4421 = vmax.f32 %v4323, 0.0
      %v4422 = vmax.f32 %v4324, 0.0
      %v4423 = vmax.f32 %v4325, 0.0
      %v4424 = vmax.f32 %v4326, 0.0
      %v4425 = vmax.f32 %v4327, 0.0
      %v4426 = vmax.f32 %v4328, 0.0
      %v4427 = vmax.f32 %v4329, 0.0
      %v4428 = vmax.f32 %v4330, 0.0
      %v4429 = vmax.f32 %v4331, 0.0
      %v4430 = vmax.f32 %v4332, 0.0
      %v4431 = vmax.f32 %v4333, 0.0
      %v4432 = vmax.f32 %v4334, 0.0
      %v4433 = vmax.f32 %v4335, 0.0
      %v4434 = vmax.f32 %v4336, 0.0
      %v4435 = vmax.f32 %v4337, 0.0
      %v4436 = vmax.f32 %v4338, 0.0
      %v4437 = vmax.f32 %v4339, 0.0
      %v4438 = vmax.f32 %v4340, 0.0
      %v4439 = vmax.f32 %v4341, 0.0
      %v4440 = vmax.f32 %v4342, 0.0
      %v4441 = vmax.f32 %v4343, 0.0
      %v4442 = vmax.f32 %v4344, 0.0
      %v4443 = vmax.f32 %v4345, 0.0
      %v4444 = vmax.f32 %v4346, 0.0
      %v4445 = vmax.f32 %v4347, 0.0
      %v4446 = vmax.f32 %v4348, 0.0
      %v4447 = vmax.f32 %v4349, 0.0
      %v4448 = vmax.f32 %v4350, 0.0
      %v4449 = vmax.f32 %v4351, 0.0
      %v4450 = vmax.f32 %v4352, 0.0
      %v4451 = vmax.f32 %v4353, 0.0
      %v4452 = vmax.f32 %v4354, 0.0
      %v4453 = vmax.f32 %v4355, 0.0
      %v4454 = vmax.f32 %v4356, 0.0
      %v4455 = vmax.f32 %v4357, 0.0
      %v4456 = vmax.f32 %v4358, 0.0
      %v4457 = vmax.f32 %v4359, 0.0
      %v4458 = vmax.f32 %v4360, 0.0
      %v4459 = vmax.f32 %v4361, 0.0
      %v4460 = vmax.f32 %v4362, 0.0
      %v4461 = vmax.f32 %v4363, 0.0
      %v4462 = vmax.f32 %v4364, 0.0
      %v4463 = vmax.f32 %v4365, 0.0
      %v4464 = vmax.f32 %v4366, 0.0
      %v4465 = vpack.c.bf16 %v4368, %v4367
      %v4466 = vpack.c.bf16 %v4370, %v4369
      %v4467 = vpack.c.bf16 %v4372, %v4371
      %v4468 = vpack.c.bf16 %v4374, %v4373
      %v4469 = vpack.c.bf16 %v4376, %v4375
      %v4470 = vpack.c.bf16 %v4378, %v4377
      %v4471 = vpack.c.bf16 %v4380, %v4379
      %v4472 = vpack.c.bf16 %v4382, %v4381
      %v4473 = vpack.c.bf16 %v4384, %v4383
      %v4474 = vpack.c.bf16 %v4386, %v4385
      %v4475 = vpack.c.bf16 %v4388, %v4387
      %v4476 = vpack.c.bf16 %v4390, %v4389
      %v4477 = vpack.c.bf16 %v4392, %v4391
      %v4478 = vpack.c.bf16 %v4394, %v4393
      %v4479 = vpack.c.bf16 %v4396, %v4395
      %v4480 = vpack.c.bf16 %v4398, %v4397
      %v4481 = vpack.c.bf16 %v4400, %v4399
      %v4482 = vpack.c.bf16 %v4402, %v4401
      %v4483 = vpack.c.bf16 %v4404, %v4403
      %v4484 = vpack.c.bf16 %v4406, %v4405
      %v4485 = vpack.c.bf16 %v4408, %v4407
      %v4486 = vpack.c.bf16 %v4410, %v4409
      %v4487 = vpack.c.bf16 %v4412, %v4411
      %v4488 = vpack.c.bf16 %v4414, %v4413
      %v4489 = vpack.c.bf16 %v4416, %v4415
      %v4490 = vpack.c.bf16 %v4418, %v4417
      %v4491 = vpack.c.bf16 %v4420, %v4419
      %v4492 = vpack.c.bf16 %v4422, %v4421
      %v4493 = vpack.c.bf16 %v4424, %v4423
      %v4494 = vpack.c.bf16 %v4426, %v4425
      %v4495 = vpack.c.bf16 %v4428, %v4427
      %v4496 = vpack.c.bf16 %v4430, %v4429
      %v4497 = vpack.c.bf16 %v4432, %v4431
      %v4498 = vpack.c.bf16 %v4434, %v4433
      %v4499 = vpack.c.bf16 %v4436, %v4435
      %v4500 = vpack.c.bf16 %v4438, %v4437
      %v4501 = vpack.c.bf16 %v4440, %v4439
      %v4502 = vpack.c.bf16 %v4442, %v4441
      %v4503 = vpack.c.bf16 %v4444, %v4443
      %v4504 = vpack.c.bf16 %v4446, %v4445
      %v4505 = vpack.c.bf16 %v4448, %v4447
      %v4506 = vpack.c.bf16 %v4450, %v4449
      %v4507 = vpack.c.bf16 %v4452, %v4451
      %v4508 = vpack.c.bf16 %v4454, %v4453
      %v4509 = vpack.c.bf16 %v4456, %v4455
      %v4510 = vpack.c.bf16 %v4458, %v4457
      %v4511 = vpack.c.bf16 %v4460, %v4459
      %v4512 = vpack.c.bf16 %v4462, %v4461
      %v4513 = vpack.c.bf16 %v4464, %v4463
      %v4514 = vld [vmem:[%s3] sm:$0xf]
      %v4515 = vld [vmem:[%s3 + $0x4] sm:$0xf]
      %v4516 = vld [vmem:[%s3 + $0x8] sm:$0xf]
      %v4517 = vld [vmem:[%s3 + $0xc] sm:$0xf]
      %v4518 = vld [vmem:[%s3 + $0x10] sm:$0xf]
      %v4519 = vld [vmem:[%s3 + $0x14] sm:$0xf]
      %v4520 = vld [vmem:[%s3 + $0x18] sm:$0xf]
      %v4521 = vld [vmem:[%s3 + $0x1c] sm:$0xf]
      %v4522 = vld [vmem:[%s3 + $0x20] sm:$0xf]
      %v4523 = vld [vmem:[%s3 + $0x24] sm:$0xf]
      %v4524 = vld [vmem:[%s3 + $0x28] sm:$0xf]
      %v4525 = vld [vmem:[%s3 + $0x2c] sm:$0xf]
      %v4526 = vld [vmem:[%s3 + $0x30] sm:$0xf]
      %v4527 = vld [vmem:[%s3 + $0x34] sm:$0xf]
      %v4528 = vld [vmem:[%s3 + $0x38] sm:$0xf]
      %v4529 = vld [vmem:[%s3 + $0x3c] sm:$0xf]
      %s4530 = scalar_lea.vmem %s3, 64
      %v4531 = vld [vmem:[%s4530] sm:$0xf]
      %v4532 = vld [vmem:[%s4530 + $0x4] sm:$0xf]
      %v4533 = vld [vmem:[%s4530 + $0x8] sm:$0xf]
      %v4534 = vld [vmem:[%s4530 + $0xc] sm:$0xf]
      %v4535 = vld [vmem:[%s4530 + $0x10] sm:$0xf]
      %v4536 = vld [vmem:[%s4530 + $0x14] sm:$0xf]
      %v4537 = vld [vmem:[%s4530 + $0x18] sm:$0xf]
      %v4538 = vld [vmem:[%s4530 + $0x1c] sm:$0xf]
      %v4539 = vld [vmem:[%s4530 + $0x20] sm:$0xf]
      %v4540 = vld [vmem:[%s4530 + $0x24] sm:$0xf]
      %v4541 = vld [vmem:[%s4530 + $0x28] sm:$0xf]
      %v4542 = vld [vmem:[%s4530 + $0x2c] sm:$0xf]
      %v4543 = vld [vmem:[%s4530 + $0x30] sm:$0xf]
      %v4544 = vld [vmem:[%s4530 + $0x34] sm:$0xf]
      %v4545 = vld [vmem:[%s4530 + $0x38] sm:$0xf]
      %v4546 = vld [vmem:[%s4530 + $0x3c] sm:$0xf]
      %v4563 = vunpack.c.l.b16 %v4531
      %v4564 = vunpack.c.l.b16 %v4532
      %v4565 = vunpack.c.l.b16 %v4533
      %v4566 = vunpack.c.l.b16 %v4534
      %v4567 = vunpack.c.l.b16 %v4535
      %v4568 = vunpack.c.l.b16 %v4536
      %v4569 = vunpack.c.l.b16 %v4537
      %v4570 = vunpack.c.l.b16 %v4538
      %v4571 = vunpack.c.l.b16 %v4539
      %v4572 = vunpack.c.l.b16 %v4540
      %v4573 = vunpack.c.l.b16 %v4541
      %v4574 = vunpack.c.l.b16 %v4542
      %v4575 = vunpack.c.l.b16 %v4543
      %v4576 = vunpack.c.l.b16 %v4544
      %v4577 = vunpack.c.l.b16 %v4545
      %v4578 = vunpack.c.l.b16 %v4546
      %v4579 = vpack.c.b16 %v4564, %v4563
      %v4580 = vpack.c.b16 %v4566, %v4565
      %v4581 = vpack.c.b16 %v4568, %v4567
      %v4582 = vpack.c.b16 %v4570, %v4569
      %v4583 = vpack.c.b16 %v4572, %v4571
      %v4584 = vpack.c.b16 %v4574, %v4573
      %v4585 = vpack.c.b16 %v4576, %v4575
      %v4586 = vpack.c.b16 %v4578, %v4577
      %4595 = vmatprep.subr.bf16.mxu0 0
      %4596 = vmatpush1.bf16.msra.mxu0 %v4586
      %4597 = vmatprep.subr.bf16.mxu0 0
      %4598 = vmatpush1.bf16.msra.mxu0 %v4585
      %4599 = vmatprep.subr.bf16.mxu0 0
      %4600 = vmatpush1.bf16.msra.mxu0 %v4584
      %4601 = vmatprep.subr.bf16.mxu0 0
      %4602 = vmatpush1.bf16.msra.mxu0 %v4583
      %4603 = vmatprep.subr.bf16.mxu0 0
      %4604 = vmatpush1.bf16.msra.mxu0 %v4582
      %4605 = vmatprep.subr.bf16.mxu0 0
      %4606 = vmatpush1.bf16.msra.mxu0 %v4581
      %4607 = vmatprep.subr.bf16.mxu0 0
      %4608 = vmatpush1.bf16.msra.mxu0 %v4580
      %4609 = vmatprep.subr.bf16.mxu0 0
      %4610 = vmatpush1.bf16.msra.mxu0 %v4579
      %4611 = vmatprep.subr.bf16.mxu0 0
      %4612 = vmatpush2.bf16.msra.mxu0 0
      %4613 = vmatprep.subr.bf16.mxu0 0
      %4614 = vmatpush2.bf16.msra.mxu0 0
      %4615 = vmatprep.subr.bf16.mxu0 0
      %4616 = vmatpush2.bf16.msra.mxu0 0
      %4617 = vmatprep.subr.bf16.mxu0 0
      %4618 = vmatpush2.bf16.msra.mxu0 0
      %4619 = vmatprep.subr.bf16.mxu0 0
      %4620 = vmatpush2.bf16.msra.mxu0 0
      %4621 = vmatprep.subr.bf16.mxu0 0
      %4622 = vmatpush2.bf16.msra.mxu0 0
      %4623 = vmatprep.subr.bf16.mxu0 0
      %4624 = vmatpush2.bf16.msra.mxu0 0
      %4625 = vmatprep.subr.bf16.mxu0 0
      %4626 = vmatpush2.bf16.msra.mxu0 0
      %4627 = vmatprep.mubr.bf16.mxu0 0
      %4628 = vmatmul.mubr.bf16.gmra.mxu0 %v4466
      %v4629 = vpop.f32.mrf.mxu0
      %v4630 = vadd.f32 0.0, %v4629
      %v4631 = vpop.f32.mrf.mxu0
      %v4632 = vpop.f32.mrf.mxu0
      %v4633 = vadd.f32 0.0, %v4632
      %v4634 = vpop.f32.mrf.mxu0
      %4635 = vdwg.mxu0
      %v4652 = vunpack.c.l.b16 %v4514
      %v4653 = vunpack.c.l.b16 %v4515
      %v4654 = vunpack.c.l.b16 %v4516
      %v4655 = vunpack.c.l.b16 %v4517
      %v4656 = vunpack.c.l.b16 %v4518
      %v4657 = vunpack.c.l.b16 %v4519
      %v4658 = vunpack.c.l.b16 %v4520
      %v4659 = vunpack.c.l.b16 %v4521
      %v4660 = vunpack.c.l.b16 %v4522
      %v4661 = vunpack.c.l.b16 %v4523
      %v4662 = vunpack.c.l.b16 %v4524
      %v4663 = vunpack.c.l.b16 %v4525
      %v4664 = vunpack.c.l.b16 %v4526
      %v4665 = vunpack.c.l.b16 %v4527
      %v4666 = vunpack.c.l.b16 %v4528
      %v4667 = vunpack.c.l.b16 %v4529
      %v4668 = vpack.c.b16 %v4653, %v4652
      %v4669 = vpack.c.b16 %v4655, %v4654
      %v4670 = vpack.c.b16 %v4657, %v4656
      %v4671 = vpack.c.b16 %v4659, %v4658
      %v4672 = vpack.c.b16 %v4661, %v4660
      %v4673 = vpack.c.b16 %v4663, %v4662
      %v4674 = vpack.c.b16 %v4665, %v4664
      %v4675 = vpack.c.b16 %v4667, %v4666
      %4684 = vmatprep.subr.bf16.mxu0 0
      %4685 = vmatpush1.bf16.msra.mxu0 %v4675
      %4686 = vmatprep.subr.bf16.mxu0 0
      %4687 = vmatpush1.bf16.msra.mxu0 %v4674
      %4688 = vmatprep.subr.bf16.mxu0 0
      %4689 = vmatpush1.bf16.msra.mxu0 %v4673
      %4690 = vmatprep.subr.bf16.mxu0 0
      %4691 = vmatpush1.bf16.msra.mxu0 %v4672
      %4692 = vmatprep.subr.bf16.mxu0 0
      %4693 = vmatpush1.bf16.msra.mxu0 %v4671
      %4694 = vmatprep.subr.bf16.mxu0 0
      %4695 = vmatpush1.bf16.msra.mxu0 %v4670
      %4696 = vmatprep.subr.bf16.mxu0 0
      %4697 = vmatpush1.bf16.msra.mxu0 %v4669
      %4698 = vmatprep.subr.bf16.mxu0 0
      %4699 = vmatpush1.bf16.msra.mxu0 %v4668
      %4700 = vmatprep.subr.bf16.mxu0 0
      %4701 = vmatpush2.bf16.msra.mxu0 0
      %4702 = vmatprep.subr.bf16.mxu0 0
      %4703 = vmatpush2.bf16.msra.mxu0 0
      %4704 = vmatprep.subr.bf16.mxu0 0
      %4705 = vmatpush2.bf16.msra.mxu0 0
      %4706 = vmatprep.subr.bf16.mxu0 0
      %4707 = vmatpush2.bf16.msra.mxu0 0
      %4708 = vmatprep.subr.bf16.mxu0 0
      %4709 = vmatpush2.bf16.msra.mxu0 0
      %4710 = vmatprep.subr.bf16.mxu0 0
      %4711 = vmatpush2.bf16.msra.mxu0 0
      %4712 = vmatprep.subr.bf16.mxu0 0
      %4713 = vmatpush2.bf16.msra.mxu0 0
      %4714 = vmatprep.subr.bf16.mxu0 0
      %4715 = vmatpush2.bf16.msra.mxu0 0
      %4716 = vmatprep.mubr.bf16.mxu0 0
      %4717 = vmatmul.mubr.bf16.gmra.mxu0 %v4465
      %v4718 = vpop.f32.mrf.mxu0
      %v4719 = vadd.f32 %v4630, %v4718
      %v4720 = vpop.f32.mrf.mxu0
      %v4721 = vpop.f32.mrf.mxu0
      %v4722 = vadd.f32 %v4633, %v4721
      %v4723 = vpop.f32.mrf.mxu0
      %4724 = vdwg.mxu0
      %s4725 = scalar_lea.vmem %s3, 128
      %v4726 = vld [vmem:[%s4725] sm:$0xf]
      %v4727 = vld [vmem:[%s4725 + $0x4] sm:$0xf]
      %v4728 = vld [vmem:[%s4725 + $0x8] sm:$0xf]
      %v4729 = vld [vmem:[%s4725 + $0xc] sm:$0xf]
      %v4730 = vld [vmem:[%s4725 + $0x10] sm:$0xf]
      %v4731 = vld [vmem:[%s4725 + $0x14] sm:$0xf]
      %v4732 = vld [vmem:[%s4725 + $0x18] sm:$0xf]
      %v4733 = vld [vmem:[%s4725 + $0x1c] sm:$0xf]
      %v4734 = vld [vmem:[%s4725 + $0x20] sm:$0xf]
      %v4735 = vld [vmem:[%s4725 + $0x24] sm:$0xf]
      %v4736 = vld [vmem:[%s4725 + $0x28] sm:$0xf]
      %v4737 = vld [vmem:[%s4725 + $0x2c] sm:$0xf]
      %v4738 = vld [vmem:[%s4725 + $0x30] sm:$0xf]
      %v4739 = vld [vmem:[%s4725 + $0x34] sm:$0xf]
      %v4740 = vld [vmem:[%s4725 + $0x38] sm:$0xf]
      %v4741 = vld [vmem:[%s4725 + $0x3c] sm:$0xf]
      %v4758 = vunpack.c.l.b16 %v4726
      %v4759 = vunpack.c.l.b16 %v4727
      %v4760 = vunpack.c.l.b16 %v4728
      %v4761 = vunpack.c.l.b16 %v4729
      %v4762 = vunpack.c.l.b16 %v4730
      %v4763 = vunpack.c.l.b16 %v4731
      %v4764 = vunpack.c.l.b16 %v4732
      %v4765 = vunpack.c.l.b16 %v4733
      %v4766 = vunpack.c.l.b16 %v4734
      %v4767 = vunpack.c.l.b16 %v4735
      %v4768 = vunpack.c.l.b16 %v4736
      %v4769 = vunpack.c.l.b16 %v4737
      %v4770 = vunpack.c.l.b16 %v4738
      %v4771 = vunpack.c.l.b16 %v4739
      %v4772 = vunpack.c.l.b16 %v4740
      %v4773 = vunpack.c.l.b16 %v4741
      %v4774 = vpack.c.b16 %v4759, %v4758
      %v4775 = vpack.c.b16 %v4761, %v4760
      %v4776 = vpack.c.b16 %v4763, %v4762
      %v4777 = vpack.c.b16 %v4765, %v4764
      %v4778 = vpack.c.b16 %v4767, %v4766
      %v4779 = vpack.c.b16 %v4769, %v4768
      %v4780 = vpack.c.b16 %v4771, %v4770
      %v4781 = vpack.c.b16 %v4773, %v4772
      %4790 = vmatprep.subr.bf16.mxu0 0
      %4791 = vmatpush1.bf16.msra.mxu0 %v4781
      %4792 = vmatprep.subr.bf16.mxu0 0
      %4793 = vmatpush1.bf16.msra.mxu0 %v4780
      %4794 = vmatprep.subr.bf16.mxu0 0
      %4795 = vmatpush1.bf16.msra.mxu0 %v4779
      %4796 = vmatprep.subr.bf16.mxu0 0
      %4797 = vmatpush1.bf16.msra.mxu0 %v4778
      %4798 = vmatprep.subr.bf16.mxu0 0
      %4799 = vmatpush1.bf16.msra.mxu0 %v4777
      %4800 = vmatprep.subr.bf16.mxu0 0
      %4801 = vmatpush1.bf16.msra.mxu0 %v4776
      %4802 = vmatprep.subr.bf16.mxu0 0
      %4803 = vmatpush1.bf16.msra.mxu0 %v4775
      %4804 = vmatprep.subr.bf16.mxu0 0
      %4805 = vmatpush1.bf16.msra.mxu0 %v4774
      %4806 = vmatprep.subr.bf16.mxu0 0
      %4807 = vmatpush2.bf16.msra.mxu0 0
      %4808 = vmatprep.subr.bf16.mxu0 0
      %4809 = vmatpush2.bf16.msra.mxu0 0
      %4810 = vmatprep.subr.bf16.mxu0 0
      %4811 = vmatpush2.bf16.msra.mxu0 0
      %4812 = vmatprep.subr.bf16.mxu0 0
      %4813 = vmatpush2.bf16.msra.mxu0 0
      %4814 = vmatprep.subr.bf16.mxu0 0
      %4815 = vmatpush2.bf16.msra.mxu0 0
      %4816 = vmatprep.subr.bf16.mxu0 0
      %4817 = vmatpush2.bf16.msra.mxu0 0
      %4818 = vmatprep.subr.bf16.mxu0 0
      %4819 = vmatpush2.bf16.msra.mxu0 0
      %4820 = vmatprep.subr.bf16.mxu0 0
      %4821 = vmatpush2.bf16.msra.mxu0 0
      %4822 = vmatprep.mubr.bf16.mxu0 0
      %4823 = vmatmul.mubr.bf16.gmra.mxu0 %v4467
      %v4824 = vpop.f32.mrf.mxu0
      %v4825 = vadd.f32 0.0, %v4824
      %v4826 = vpop.f32.mrf.mxu0
      %v4827 = vpop.f32.mrf.mxu0
      %v4828 = vadd.f32 0.0, %v4827
      %v4829 = vpop.f32.mrf.mxu0
      %4830 = vdwg.mxu0
      %v4831 = vadd.f32 %v4719, %v4825
      %v4832 = vadd.f32 %v4722, %v4828
      %s4833 = scalar_lea.vmem %s3, 192
      %v4834 = vld [vmem:[%s4833] sm:$0xf]
      %v4835 = vld [vmem:[%s4833 + $0x4] sm:$0xf]
      %v4836 = vld [vmem:[%s4833 + $0x8] sm:$0xf]
      %v4837 = vld [vmem:[%s4833 + $0xc] sm:$0xf]
      %v4838 = vld [vmem:[%s4833 + $0x10] sm:$0xf]
      %v4839 = vld [vmem:[%s4833 + $0x14] sm:$0xf]
      %v4840 = vld [vmem:[%s4833 + $0x18] sm:$0xf]
      %v4841 = vld [vmem:[%s4833 + $0x1c] sm:$0xf]
      %v4842 = vld [vmem:[%s4833 + $0x20] sm:$0xf]
      %v4843 = vld [vmem:[%s4833 + $0x24] sm:$0xf]
      %v4844 = vld [vmem:[%s4833 + $0x28] sm:$0xf]
      %v4845 = vld [vmem:[%s4833 + $0x2c] sm:$0xf]
      %v4846 = vld [vmem:[%s4833 + $0x30] sm:$0xf]
      %v4847 = vld [vmem:[%s4833 + $0x34] sm:$0xf]
      %v4848 = vld [vmem:[%s4833 + $0x38] sm:$0xf]
      %v4849 = vld [vmem:[%s4833 + $0x3c] sm:$0xf]
      %v4866 = vunpack.c.l.b16 %v4834
      %v4867 = vunpack.c.l.b16 %v4835
      %v4868 = vunpack.c.l.b16 %v4836
      %v4869 = vunpack.c.l.b16 %v4837
      %v4870 = vunpack.c.l.b16 %v4838
      %v4871 = vunpack.c.l.b16 %v4839
      %v4872 = vunpack.c.l.b16 %v4840
      %v4873 = vunpack.c.l.b16 %v4841
      %v4874 = vunpack.c.l.b16 %v4842
      %v4875 = vunpack.c.l.b16 %v4843
      %v4876 = vunpack.c.l.b16 %v4844
      %v4877 = vunpack.c.l.b16 %v4845
      %v4878 = vunpack.c.l.b16 %v4846
      %v4879 = vunpack.c.l.b16 %v4847
      %v4880 = vunpack.c.l.b16 %v4848
      %v4881 = vunpack.c.l.b16 %v4849
      %v4882 = vpack.c.b16 %v4867, %v4866
      %v4883 = vpack.c.b16 %v4869, %v4868
      %v4884 = vpack.c.b16 %v4871, %v4870
      %v4885 = vpack.c.b16 %v4873, %v4872
      %v4886 = vpack.c.b16 %v4875, %v4874
      %v4887 = vpack.c.b16 %v4877, %v4876
      %v4888 = vpack.c.b16 %v4879, %v4878
      %v4889 = vpack.c.b16 %v4881, %v4880
      %4898 = vmatprep.subr.bf16.mxu0 0
      %4899 = vmatpush1.bf16.msra.mxu0 %v4889
      %4900 = vmatprep.subr.bf16.mxu0 0
      %4901 = vmatpush1.bf16.msra.mxu0 %v4888
      %4902 = vmatprep.subr.bf16.mxu0 0
      %4903 = vmatpush1.bf16.msra.mxu0 %v4887
      %4904 = vmatprep.subr.bf16.mxu0 0
      %4905 = vmatpush1.bf16.msra.mxu0 %v4886
      %4906 = vmatprep.subr.bf16.mxu0 0
      %4907 = vmatpush1.bf16.msra.mxu0 %v4885
      %4908 = vmatprep.subr.bf16.mxu0 0
      %4909 = vmatpush1.bf16.msra.mxu0 %v4884
      %4910 = vmatprep.subr.bf16.mxu0 0
      %4911 = vmatpush1.bf16.msra.mxu0 %v4883
      %4912 = vmatprep.subr.bf16.mxu0 0
      %4913 = vmatpush1.bf16.msra.mxu0 %v4882
      %4914 = vmatprep.subr.bf16.mxu0 0
      %4915 = vmatpush2.bf16.msra.mxu0 0
      %4916 = vmatprep.subr.bf16.mxu0 0
      %4917 = vmatpush2.bf16.msra.mxu0 0
      %4918 = vmatprep.subr.bf16.mxu0 0
      %4919 = vmatpush2.bf16.msra.mxu0 0
      %4920 = vmatprep.subr.bf16.mxu0 0
      %4921 = vmatpush2.bf16.msra.mxu0 0
      %4922 = vmatprep.subr.bf16.mxu0 0
      %4923 = vmatpush2.bf16.msra.mxu0 0
      %4924 = vmatprep.subr.bf16.mxu0 0
      %4925 = vmatpush2.bf16.msra.mxu0 0
      %4926 = vmatprep.subr.bf16.mxu0 0
      %4927 = vmatpush2.bf16.msra.mxu0 0
      %4928 = vmatprep.subr.bf16.mxu0 0
      %4929 = vmatpush2.bf16.msra.mxu0 0
      %4930 = vmatprep.mubr.bf16.mxu0 0
      %4931 = vmatmul.mubr.bf16.gmra.mxu0 %v4468
      %v4932 = vpop.f32.mrf.mxu0
      %v4933 = vadd.f32 0.0, %v4932
      %v4934 = vpop.f32.mrf.mxu0
      %v4935 = vpop.f32.mrf.mxu0
      %v4936 = vadd.f32 0.0, %v4935
      %v4937 = vpop.f32.mrf.mxu0
      %4938 = vdwg.mxu0
      %v4939 = vadd.f32 %v4831, %v4933
      %v4940 = vadd.f32 %v4832, %v4936
      %s4941 = scalar_lea.vmem %s3, 256
      %v4942 = vld [vmem:[%s4941] sm:$0xf]
      %v4943 = vld [vmem:[%s4941 + $0x4] sm:$0xf]
      %v4944 = vld [vmem:[%s4941 + $0x8] sm:$0xf]
      %v4945 = vld [vmem:[%s4941 + $0xc] sm:$0xf]
      %v4946 = vld [vmem:[%s4941 + $0x10] sm:$0xf]
      %v4947 = vld [vmem:[%s4941 + $0x14] sm:$0xf]
      %v4948 = vld [vmem:[%s4941 + $0x18] sm:$0xf]
      %v4949 = vld [vmem:[%s4941 + $0x1c] sm:$0xf]
      %v4950 = vld [vmem:[%s4941 + $0x20] sm:$0xf]
      %v4951 = vld [vmem:[%s4941 + $0x24] sm:$0xf]
      %v4952 = vld [vmem:[%s4941 + $0x28] sm:$0xf]
      %v4953 = vld [vmem:[%s4941 + $0x2c] sm:$0xf]
      %v4954 = vld [vmem:[%s4941 + $0x30] sm:$0xf]
      %v4955 = vld [vmem:[%s4941 + $0x34] sm:$0xf]
      %v4956 = vld [vmem:[%s4941 + $0x38] sm:$0xf]
      %v4957 = vld [vmem:[%s4941 + $0x3c] sm:$0xf]
      %v4974 = vunpack.c.l.b16 %v4942
      %v4975 = vunpack.c.l.b16 %v4943
      %v4976 = vunpack.c.l.b16 %v4944
      %v4977 = vunpack.c.l.b16 %v4945
      %v4978 = vunpack.c.l.b16 %v4946
      %v4979 = vunpack.c.l.b16 %v4947
      %v4980 = vunpack.c.l.b16 %v4948
      %v4981 = vunpack.c.l.b16 %v4949
      %v4982 = vunpack.c.l.b16 %v4950
      %v4983 = vunpack.c.l.b16 %v4951
      %v4984 = vunpack.c.l.b16 %v4952
      %v4985 = vunpack.c.l.b16 %v4953
      %v4986 = vunpack.c.l.b16 %v4954
      %v4987 = vunpack.c.l.b16 %v4955
      %v4988 = vunpack.c.l.b16 %v4956
      %v4989 = vunpack.c.l.b16 %v4957
      %v4990 = vpack.c.b16 %v4975, %v4974
      %v4991 = vpack.c.b16 %v4977, %v4976
      %v4992 = vpack.c.b16 %v4979, %v4978
      %v4993 = vpack.c.b16 %v4981, %v4980
      %v4994 = vpack.c.b16 %v4983, %v4982
      %v4995 = vpack.c.b16 %v4985, %v4984
      %v4996 = vpack.c.b16 %v4987, %v4986
      %v4997 = vpack.c.b16 %v4989, %v4988
      %5006 = vmatprep.subr.bf16.mxu0 0
      %5007 = vmatpush1.bf16.msra.mxu0 %v4997
      %5008 = vmatprep.subr.bf16.mxu0 0
      %5009 = vmatpush1.bf16.msra.mxu0 %v4996
      %5010 = vmatprep.subr.bf16.mxu0 0
      %5011 = vmatpush1.bf16.msra.mxu0 %v4995
      %5012 = vmatprep.subr.bf16.mxu0 0
      %5013 = vmatpush1.bf16.msra.mxu0 %v4994
      %5014 = vmatprep.subr.bf16.mxu0 0
      %5015 = vmatpush1.bf16.msra.mxu0 %v4993
      %5016 = vmatprep.subr.bf16.mxu0 0
      %5017 = vmatpush1.bf16.msra.mxu0 %v4992
      %5018 = vmatprep.subr.bf16.mxu0 0
      %5019 = vmatpush1.bf16.msra.mxu0 %v4991
      %5020 = vmatprep.subr.bf16.mxu0 0
      %5021 = vmatpush1.bf16.msra.mxu0 %v4990
      %5022 = vmatprep.subr.bf16.mxu0 0
      %5023 = vmatpush2.bf16.msra.mxu0 0
      %5024 = vmatprep.subr.bf16.mxu0 0
      %5025 = vmatpush2.bf16.msra.mxu0 0
      %5026 = vmatprep.subr.bf16.mxu0 0
      %5027 = vmatpush2.bf16.msra.mxu0 0
      %5028 = vmatprep.subr.bf16.mxu0 0
      %5029 = vmatpush2.bf16.msra.mxu0 0
      %5030 = vmatprep.subr.bf16.mxu0 0
      %5031 = vmatpush2.bf16.msra.mxu0 0
      %5032 = vmatprep.subr.bf16.mxu0 0
      %5033 = vmatpush2.bf16.msra.mxu0 0
      %5034 = vmatprep.subr.bf16.mxu0 0
      %5035 = vmatpush2.bf16.msra.mxu0 0
      %5036 = vmatprep.subr.bf16.mxu0 0
      %5037 = vmatpush2.bf16.msra.mxu0 0
      %5038 = vmatprep.mubr.bf16.mxu0 0
      %5039 = vmatmul.mubr.bf16.gmra.mxu0 %v4469
      %v5040 = vpop.f32.mrf.mxu0
      %v5041 = vadd.f32 0.0, %v5040
      %v5042 = vpop.f32.mrf.mxu0
      %v5043 = vpop.f32.mrf.mxu0
      %v5044 = vadd.f32 0.0, %v5043
      %v5045 = vpop.f32.mrf.mxu0
      %5046 = vdwg.mxu0
      %v5047 = vadd.f32 %v4939, %v5041
      %v5048 = vadd.f32 %v4940, %v5044
      %s5049 = scalar_lea.vmem %s3, 320
      %v5050 = vld [vmem:[%s5049] sm:$0xf]
      %v5051 = vld [vmem:[%s5049 + $0x4] sm:$0xf]
      %v5052 = vld [vmem:[%s5049 + $0x8] sm:$0xf]
      %v5053 = vld [vmem:[%s5049 + $0xc] sm:$0xf]
      %v5054 = vld [vmem:[%s5049 + $0x10] sm:$0xf]
      %v5055 = vld [vmem:[%s5049 + $0x14] sm:$0xf]
      %v5056 = vld [vmem:[%s5049 + $0x18] sm:$0xf]
      %v5057 = vld [vmem:[%s5049 + $0x1c] sm:$0xf]
      %v5058 = vld [vmem:[%s5049 + $0x20] sm:$0xf]
      %v5059 = vld [vmem:[%s5049 + $0x24] sm:$0xf]
      %v5060 = vld [vmem:[%s5049 + $0x28] sm:$0xf]
      %v5061 = vld [vmem:[%s5049 + $0x2c] sm:$0xf]
      %v5062 = vld [vmem:[%s5049 + $0x30] sm:$0xf]
      %v5063 = vld [vmem:[%s5049 + $0x34] sm:$0xf]
      %v5064 = vld [vmem:[%s5049 + $0x38] sm:$0xf]
      %v5065 = vld [vmem:[%s5049 + $0x3c] sm:$0xf]
      %v5082 = vunpack.c.l.b16 %v5050
      %v5083 = vunpack.c.l.b16 %v5051
      %v5084 = vunpack.c.l.b16 %v5052
      %v5085 = vunpack.c.l.b16 %v5053
      %v5086 = vunpack.c.l.b16 %v5054
      %v5087 = vunpack.c.l.b16 %v5055
      %v5088 = vunpack.c.l.b16 %v5056
      %v5089 = vunpack.c.l.b16 %v5057
      %v5090 = vunpack.c.l.b16 %v5058
      %v5091 = vunpack.c.l.b16 %v5059
      %v5092 = vunpack.c.l.b16 %v5060
      %v5093 = vunpack.c.l.b16 %v5061
      %v5094 = vunpack.c.l.b16 %v5062
      %v5095 = vunpack.c.l.b16 %v5063
      %v5096 = vunpack.c.l.b16 %v5064
      %v5097 = vunpack.c.l.b16 %v5065
      %v5098 = vpack.c.b16 %v5083, %v5082
      %v5099 = vpack.c.b16 %v5085, %v5084
      %v5100 = vpack.c.b16 %v5087, %v5086
      %v5101 = vpack.c.b16 %v5089, %v5088
      %v5102 = vpack.c.b16 %v5091, %v5090
      %v5103 = vpack.c.b16 %v5093, %v5092
      %v5104 = vpack.c.b16 %v5095, %v5094
      %v5105 = vpack.c.b16 %v5097, %v5096
      %5114 = vmatprep.subr.bf16.mxu0 0
      %5115 = vmatpush1.bf16.msra.mxu0 %v5105
      %5116 = vmatprep.subr.bf16.mxu0 0
      %5117 = vmatpush1.bf16.msra.mxu0 %v5104
      %5118 = vmatprep.subr.bf16.mxu0 0
      %5119 = vmatpush1.bf16.msra.mxu0 %v5103
      %5120 = vmatprep.subr.bf16.mxu0 0
      %5121 = vmatpush1.bf16.msra.mxu0 %v5102
      %5122 = vmatprep.subr.bf16.mxu0 0
      %5123 = vmatpush1.bf16.msra.mxu0 %v5101
      %5124 = vmatprep.subr.bf16.mxu0 0
      %5125 = vmatpush1.bf16.msra.mxu0 %v5100
      %5126 = vmatprep.subr.bf16.mxu0 0
      %5127 = vmatpush1.bf16.msra.mxu0 %v5099
      %5128 = vmatprep.subr.bf16.mxu0 0
      %5129 = vmatpush1.bf16.msra.mxu0 %v5098
      %5130 = vmatprep.subr.bf16.mxu0 0
      %5131 = vmatpush2.bf16.msra.mxu0 0
      %5132 = vmatprep.subr.bf16.mxu0 0
      %5133 = vmatpush2.bf16.msra.mxu0 0
      %5134 = vmatprep.subr.bf16.mxu0 0
      %5135 = vmatpush2.bf16.msra.mxu0 0
      %5136 = vmatprep.subr.bf16.mxu0 0
      %5137 = vmatpush2.bf16.msra.mxu0 0
      %5138 = vmatprep.subr.bf16.mxu0 0
      %5139 = vmatpush2.bf16.msra.mxu0 0
      %5140 = vmatprep.subr.bf16.mxu0 0
      %5141 = vmatpush2.bf16.msra.mxu0 0
      %5142 = vmatprep.subr.bf16.mxu0 0
      %5143 = vmatpush2.bf16.msra.mxu0 0
      %5144 = vmatprep.subr.bf16.mxu0 0
      %5145 = vmatpush2.bf16.msra.mxu0 0
      %5146 = vmatprep.mubr.bf16.mxu0 0
      %5147 = vmatmul.mubr.bf16.gmra.mxu0 %v4470
      %v5148 = vpop.f32.mrf.mxu0
      %v5149 = vadd.f32 0.0, %v5148
      %v5150 = vpop.f32.mrf.mxu0
      %v5151 = vpop.f32.mrf.mxu0
      %v5152 = vadd.f32 0.0, %v5151
      %v5153 = vpop.f32.mrf.mxu0
      %5154 = vdwg.mxu0
      %v5155 = vadd.f32 %v5047, %v5149
      %v5156 = vadd.f32 %v5048, %v5152
      %s5157 = scalar_lea.vmem %s3, 384
      %v5158 = vld [vmem:[%s5157] sm:$0xf]
      %v5159 = vld [vmem:[%s5157 + $0x4] sm:$0xf]
      %v5160 = vld [vmem:[%s5157 + $0x8] sm:$0xf]
      %v5161 = vld [vmem:[%s5157 + $0xc] sm:$0xf]
      %v5162 = vld [vmem:[%s5157 + $0x10] sm:$0xf]
      %v5163 = vld [vmem:[%s5157 + $0x14] sm:$0xf]
      %v5164 = vld [vmem:[%s5157 + $0x18] sm:$0xf]
      %v5165 = vld [vmem:[%s5157 + $0x1c] sm:$0xf]
      %v5166 = vld [vmem:[%s5157 + $0x20] sm:$0xf]
      %v5167 = vld [vmem:[%s5157 + $0x24] sm:$0xf]
      %v5168 = vld [vmem:[%s5157 + $0x28] sm:$0xf]
      %v5169 = vld [vmem:[%s5157 + $0x2c] sm:$0xf]
      %v5170 = vld [vmem:[%s5157 + $0x30] sm:$0xf]
      %v5171 = vld [vmem:[%s5157 + $0x34] sm:$0xf]
      %v5172 = vld [vmem:[%s5157 + $0x38] sm:$0xf]
      %v5173 = vld [vmem:[%s5157 + $0x3c] sm:$0xf]
      %v5190 = vunpack.c.l.b16 %v5158
      %v5191 = vunpack.c.l.b16 %v5159
      %v5192 = vunpack.c.l.b16 %v5160
      %v5193 = vunpack.c.l.b16 %v5161
      %v5194 = vunpack.c.l.b16 %v5162
      %v5195 = vunpack.c.l.b16 %v5163
      %v5196 = vunpack.c.l.b16 %v5164
      %v5197 = vunpack.c.l.b16 %v5165
      %v5198 = vunpack.c.l.b16 %v5166
      %v5199 = vunpack.c.l.b16 %v5167
      %v5200 = vunpack.c.l.b16 %v5168
      %v5201 = vunpack.c.l.b16 %v5169
      %v5202 = vunpack.c.l.b16 %v5170
      %v5203 = vunpack.c.l.b16 %v5171
      %v5204 = vunpack.c.l.b16 %v5172
      %v5205 = vunpack.c.l.b16 %v5173
      %v5206 = vpack.c.b16 %v5191, %v5190
      %v5207 = vpack.c.b16 %v5193, %v5192
      %v5208 = vpack.c.b16 %v5195, %v5194
      %v5209 = vpack.c.b16 %v5197, %v5196
      %v5210 = vpack.c.b16 %v5199, %v5198
      %v5211 = vpack.c.b16 %v5201, %v5200
      %v5212 = vpack.c.b16 %v5203, %v5202
      %v5213 = vpack.c.b16 %v5205, %v5204
      %5222 = vmatprep.subr.bf16.mxu0 0
      %5223 = vmatpush1.bf16.msra.mxu0 %v5213
      %5224 = vmatprep.subr.bf16.mxu0 0
      %5225 = vmatpush1.bf16.msra.mxu0 %v5212
      %5226 = vmatprep.subr.bf16.mxu0 0
      %5227 = vmatpush1.bf16.msra.mxu0 %v5211
      %5228 = vmatprep.subr.bf16.mxu0 0
      %5229 = vmatpush1.bf16.msra.mxu0 %v5210
      %5230 = vmatprep.subr.bf16.mxu0 0
      %5231 = vmatpush1.bf16.msra.mxu0 %v5209
      %5232 = vmatprep.subr.bf16.mxu0 0
      %5233 = vmatpush1.bf16.msra.mxu0 %v5208
      %5234 = vmatprep.subr.bf16.mxu0 0
      %5235 = vmatpush1.bf16.msra.mxu0 %v5207
      %5236 = vmatprep.subr.bf16.mxu0 0
      %5237 = vmatpush1.bf16.msra.mxu0 %v5206
      %5238 = vmatprep.subr.bf16.mxu0 0
      %5239 = vmatpush2.bf16.msra.mxu0 0
      %5240 = vmatprep.subr.bf16.mxu0 0
      %5241 = vmatpush2.bf16.msra.mxu0 0
      %5242 = vmatprep.subr.bf16.mxu0 0
      %5243 = vmatpush2.bf16.msra.mxu0 0
      %5244 = vmatprep.subr.bf16.mxu0 0
      %5245 = vmatpush2.bf16.msra.mxu0 0
      %5246 = vmatprep.subr.bf16.mxu0 0
      %5247 = vmatpush2.bf16.msra.mxu0 0
      %5248 = vmatprep.subr.bf16.mxu0 0
      %5249 = vmatpush2.bf16.msra.mxu0 0
      %5250 = vmatprep.subr.bf16.mxu0 0
      %5251 = vmatpush2.bf16.msra.mxu0 0
      %5252 = vmatprep.subr.bf16.mxu0 0
      %5253 = vmatpush2.bf16.msra.mxu0 0
      %5254 = vmatprep.mubr.bf16.mxu0 0
      %5255 = vmatmul.mubr.bf16.gmra.mxu0 %v4471
      %v5256 = vpop.f32.mrf.mxu0
      %v5257 = vadd.f32 0.0, %v5256
      %v5258 = vpop.f32.mrf.mxu0
      %v5259 = vpop.f32.mrf.mxu0
      %v5260 = vadd.f32 0.0, %v5259
      %v5261 = vpop.f32.mrf.mxu0
      %5262 = vdwg.mxu0
      %v5263 = vadd.f32 %v5155, %v5257
      %v5264 = vadd.f32 %v5156, %v5260
      %s5265 = scalar_lea.vmem %s3, 448
      %v5266 = vld [vmem:[%s5265] sm:$0xf]
      %v5267 = vld [vmem:[%s5265 + $0x4] sm:$0xf]
      %v5268 = vld [vmem:[%s5265 + $0x8] sm:$0xf]
      %v5269 = vld [vmem:[%s5265 + $0xc] sm:$0xf]
      %v5270 = vld [vmem:[%s5265 + $0x10] sm:$0xf]
      %v5271 = vld [vmem:[%s5265 + $0x14] sm:$0xf]
      %v5272 = vld [vmem:[%s5265 + $0x18] sm:$0xf]
      %v5273 = vld [vmem:[%s5265 + $0x1c] sm:$0xf]
      %v5274 = vld [vmem:[%s5265 + $0x20] sm:$0xf]
      %v5275 = vld [vmem:[%s5265 + $0x24] sm:$0xf]
      %v5276 = vld [vmem:[%s5265 + $0x28] sm:$0xf]
      %v5277 = vld [vmem:[%s5265 + $0x2c] sm:$0xf]
      %v5278 = vld [vmem:[%s5265 + $0x30] sm:$0xf]
      %v5279 = vld [vmem:[%s5265 + $0x34] sm:$0xf]
      %v5280 = vld [vmem:[%s5265 + $0x38] sm:$0xf]
      %v5281 = vld [vmem:[%s5265 + $0x3c] sm:$0xf]
      %v5298 = vunpack.c.l.b16 %v5266
      %v5299 = vunpack.c.l.b16 %v5267
      %v5300 = vunpack.c.l.b16 %v5268
      %v5301 = vunpack.c.l.b16 %v5269
      %v5302 = vunpack.c.l.b16 %v5270
      %v5303 = vunpack.c.l.b16 %v5271
      %v5304 = vunpack.c.l.b16 %v5272
      %v5305 = vunpack.c.l.b16 %v5273
      %v5306 = vunpack.c.l.b16 %v5274
      %v5307 = vunpack.c.l.b16 %v5275
      %v5308 = vunpack.c.l.b16 %v5276
      %v5309 = vunpack.c.l.b16 %v5277
      %v5310 = vunpack.c.l.b16 %v5278
      %v5311 = vunpack.c.l.b16 %v5279
      %v5312 = vunpack.c.l.b16 %v5280
      %v5313 = vunpack.c.l.b16 %v5281
      %v5314 = vpack.c.b16 %v5299, %v5298
      %v5315 = vpack.c.b16 %v5301, %v5300
      %v5316 = vpack.c.b16 %v5303, %v5302
      %v5317 = vpack.c.b16 %v5305, %v5304
      %v5318 = vpack.c.b16 %v5307, %v5306
      %v5319 = vpack.c.b16 %v5309, %v5308
      %v5320 = vpack.c.b16 %v5311, %v5310
      %v5321 = vpack.c.b16 %v5313, %v5312
      %5330 = vmatprep.subr.bf16.mxu0 0
      %5331 = vmatpush1.bf16.msra.mxu0 %v5321
      %5332 = vmatprep.subr.bf16.mxu0 0
      %5333 = vmatpush1.bf16.msra.mxu0 %v5320
      %5334 = vmatprep.subr.bf16.mxu0 0
      %5335 = vmatpush1.bf16.msra.mxu0 %v5319
      %5336 = vmatprep.subr.bf16.mxu0 0
      %5337 = vmatpush1.bf16.msra.mxu0 %v5318
      %5338 = vmatprep.subr.bf16.mxu0 0
      %5339 = vmatpush1.bf16.msra.mxu0 %v5317
      %5340 = vmatprep.subr.bf16.mxu0 0
      %5341 = vmatpush1.bf16.msra.mxu0 %v5316
      %5342 = vmatprep.subr.bf16.mxu0 0
      %5343 = vmatpush1.bf16.msra.mxu0 %v5315
      %5344 = vmatprep.subr.bf16.mxu0 0
      %5345 = vmatpush1.bf16.msra.mxu0 %v5314
      %5346 = vmatprep.subr.bf16.mxu0 0
      %5347 = vmatpush2.bf16.msra.mxu0 0
      %5348 = vmatprep.subr.bf16.mxu0 0
      %5349 = vmatpush2.bf16.msra.mxu0 0
      %5350 = vmatprep.subr.bf16.mxu0 0
      %5351 = vmatpush2.bf16.msra.mxu0 0
      %5352 = vmatprep.subr.bf16.mxu0 0
      %5353 = vmatpush2.bf16.msra.mxu0 0
      %5354 = vmatprep.subr.bf16.mxu0 0
      %5355 = vmatpush2.bf16.msra.mxu0 0
      %5356 = vmatprep.subr.bf16.mxu0 0
      %5357 = vmatpush2.bf16.msra.mxu0 0
      %5358 = vmatprep.subr.bf16.mxu0 0
      %5359 = vmatpush2.bf16.msra.mxu0 0
      %5360 = vmatprep.subr.bf16.mxu0 0
      %5361 = vmatpush2.bf16.msra.mxu0 0
      %5362 = vmatprep.mubr.bf16.mxu0 0
      %5363 = vmatmul.mubr.bf16.gmra.mxu0 %v4472
      %v5364 = vpop.f32.mrf.mxu0
      %v5365 = vadd.f32 0.0, %v5364
      %v5366 = vpop.f32.mrf.mxu0
      %v5367 = vpop.f32.mrf.mxu0
      %v5368 = vadd.f32 0.0, %v5367
      %v5369 = vpop.f32.mrf.mxu0
      %5370 = vdwg.mxu0
      %v5371 = vadd.f32 %v5263, %v5365
      %v5372 = vadd.f32 %v5264, %v5368
      %s5373 = scalar_lea.vmem %s3, 512
      %v5374 = vld [vmem:[%s5373] sm:$0xf]
      %v5375 = vld [vmem:[%s5373 + $0x4] sm:$0xf]
      %v5376 = vld [vmem:[%s5373 + $0x8] sm:$0xf]
      %v5377 = vld [vmem:[%s5373 + $0xc] sm:$0xf]
      %v5378 = vld [vmem:[%s5373 + $0x10] sm:$0xf]
      %v5379 = vld [vmem:[%s5373 + $0x14] sm:$0xf]
      %v5380 = vld [vmem:[%s5373 + $0x18] sm:$0xf]
      %v5381 = vld [vmem:[%s5373 + $0x1c] sm:$0xf]
      %v5382 = vld [vmem:[%s5373 + $0x20] sm:$0xf]
      %v5383 = vld [vmem:[%s5373 + $0x24] sm:$0xf]
      %v5384 = vld [vmem:[%s5373 + $0x28] sm:$0xf]
      %v5385 = vld [vmem:[%s5373 + $0x2c] sm:$0xf]
      %v5386 = vld [vmem:[%s5373 + $0x30] sm:$0xf]
      %v5387 = vld [vmem:[%s5373 + $0x34] sm:$0xf]
      %v5388 = vld [vmem:[%s5373 + $0x38] sm:$0xf]
      %v5389 = vld [vmem:[%s5373 + $0x3c] sm:$0xf]
      %v5406 = vunpack.c.l.b16 %v5374
      %v5407 = vunpack.c.l.b16 %v5375
      %v5408 = vunpack.c.l.b16 %v5376
      %v5409 = vunpack.c.l.b16 %v5377
      %v5410 = vunpack.c.l.b16 %v5378
      %v5411 = vunpack.c.l.b16 %v5379
      %v5412 = vunpack.c.l.b16 %v5380
      %v5413 = vunpack.c.l.b16 %v5381
      %v5414 = vunpack.c.l.b16 %v5382
      %v5415 = vunpack.c.l.b16 %v5383
      %v5416 = vunpack.c.l.b16 %v5384
      %v5417 = vunpack.c.l.b16 %v5385
      %v5418 = vunpack.c.l.b16 %v5386
      %v5419 = vunpack.c.l.b16 %v5387
      %v5420 = vunpack.c.l.b16 %v5388
      %v5421 = vunpack.c.l.b16 %v5389
      %v5422 = vpack.c.b16 %v5407, %v5406
      %v5423 = vpack.c.b16 %v5409, %v5408
      %v5424 = vpack.c.b16 %v5411, %v5410
      %v5425 = vpack.c.b16 %v5413, %v5412
      %v5426 = vpack.c.b16 %v5415, %v5414
      %v5427 = vpack.c.b16 %v5417, %v5416
      %v5428 = vpack.c.b16 %v5419, %v5418
      %v5429 = vpack.c.b16 %v5421, %v5420
      %5438 = vmatprep.subr.bf16.mxu0 0
      %5439 = vmatpush1.bf16.msra.mxu0 %v5429
      %5440 = vmatprep.subr.bf16.mxu0 0
      %5441 = vmatpush1.bf16.msra.mxu0 %v5428
      %5442 = vmatprep.subr.bf16.mxu0 0
      %5443 = vmatpush1.bf16.msra.mxu0 %v5427
      %5444 = vmatprep.subr.bf16.mxu0 0
      %5445 = vmatpush1.bf16.msra.mxu0 %v5426
      %5446 = vmatprep.subr.bf16.mxu0 0
      %5447 = vmatpush1.bf16.msra.mxu0 %v5425
      %5448 = vmatprep.subr.bf16.mxu0 0
      %5449 = vmatpush1.bf16.msra.mxu0 %v5424
      %5450 = vmatprep.subr.bf16.mxu0 0
      %5451 = vmatpush1.bf16.msra.mxu0 %v5423
      %5452 = vmatprep.subr.bf16.mxu0 0
      %5453 = vmatpush1.bf16.msra.mxu0 %v5422
      %5454 = vmatprep.subr.bf16.mxu0 0
      %5455 = vmatpush2.bf16.msra.mxu0 0
      %5456 = vmatprep.subr.bf16.mxu0 0
      %5457 = vmatpush2.bf16.msra.mxu0 0
      %5458 = vmatprep.subr.bf16.mxu0 0
      %5459 = vmatpush2.bf16.msra.mxu0 0
      %5460 = vmatprep.subr.bf16.mxu0 0
      %5461 = vmatpush2.bf16.msra.mxu0 0
      %5462 = vmatprep.subr.bf16.mxu0 0
      %5463 = vmatpush2.bf16.msra.mxu0 0
      %5464 = vmatprep.subr.bf16.mxu0 0
      %5465 = vmatpush2.bf16.msra.mxu0 0
      %5466 = vmatprep.subr.bf16.mxu0 0
      %5467 = vmatpush2.bf16.msra.mxu0 0
      %5468 = vmatprep.subr.bf16.mxu0 0
      %5469 = vmatpush2.bf16.msra.mxu0 0
      %5470 = vmatprep.mubr.bf16.mxu0 0
      %5471 = vmatmul.mubr.bf16.gmra.mxu0 %v4473
      %v5472 = vpop.f32.mrf.mxu0
      %v5473 = vadd.f32 0.0, %v5472
      %v5474 = vpop.f32.mrf.mxu0
      %v5475 = vpop.f32.mrf.mxu0
      %v5476 = vadd.f32 0.0, %v5475
      %v5477 = vpop.f32.mrf.mxu0
      %5478 = vdwg.mxu0
      %v5479 = vadd.f32 %v5371, %v5473
      %v5480 = vadd.f32 %v5372, %v5476
      %s5481 = scalar_lea.vmem %s3, 576
      %v5482 = vld [vmem:[%s5481] sm:$0xf]
      %v5483 = vld [vmem:[%s5481 + $0x4] sm:$0xf]
      %v5484 = vld [vmem:[%s5481 + $0x8] sm:$0xf]
      %v5485 = vld [vmem:[%s5481 + $0xc] sm:$0xf]
      %v5486 = vld [vmem:[%s5481 + $0x10] sm:$0xf]
      %v5487 = vld [vmem:[%s5481 + $0x14] sm:$0xf]
      %v5488 = vld [vmem:[%s5481 + $0x18] sm:$0xf]
      %v5489 = vld [vmem:[%s5481 + $0x1c] sm:$0xf]
      %v5490 = vld [vmem:[%s5481 + $0x20] sm:$0xf]
      %v5491 = vld [vmem:[%s5481 + $0x24] sm:$0xf]
      %v5492 = vld [vmem:[%s5481 + $0x28] sm:$0xf]
      %v5493 = vld [vmem:[%s5481 + $0x2c] sm:$0xf]
      %v5494 = vld [vmem:[%s5481 + $0x30] sm:$0xf]
      %v5495 = vld [vmem:[%s5481 + $0x34] sm:$0xf]
      %v5496 = vld [vmem:[%s5481 + $0x38] sm:$0xf]
      %v5497 = vld [vmem:[%s5481 + $0x3c] sm:$0xf]
      %v5514 = vunpack.c.l.b16 %v5482
      %v5515 = vunpack.c.l.b16 %v5483
      %v5516 = vunpack.c.l.b16 %v5484
      %v5517 = vunpack.c.l.b16 %v5485
      %v5518 = vunpack.c.l.b16 %v5486
      %v5519 = vunpack.c.l.b16 %v5487
      %v5520 = vunpack.c.l.b16 %v5488
      %v5521 = vunpack.c.l.b16 %v5489
      %v5522 = vunpack.c.l.b16 %v5490
      %v5523 = vunpack.c.l.b16 %v5491
      %v5524 = vunpack.c.l.b16 %v5492
      %v5525 = vunpack.c.l.b16 %v5493
      %v5526 = vunpack.c.l.b16 %v5494
      %v5527 = vunpack.c.l.b16 %v5495
      %v5528 = vunpack.c.l.b16 %v5496
      %v5529 = vunpack.c.l.b16 %v5497
      %v5530 = vpack.c.b16 %v5515, %v5514
      %v5531 = vpack.c.b16 %v5517, %v5516
      %v5532 = vpack.c.b16 %v5519, %v5518
      %v5533 = vpack.c.b16 %v5521, %v5520
      %v5534 = vpack.c.b16 %v5523, %v5522
      %v5535 = vpack.c.b16 %v5525, %v5524
      %v5536 = vpack.c.b16 %v5527, %v5526
      %v5537 = vpack.c.b16 %v5529, %v5528
      %5546 = vmatprep.subr.bf16.mxu0 0
      %5547 = vmatpush1.bf16.msra.mxu0 %v5537
      %5548 = vmatprep.subr.bf16.mxu0 0
      %5549 = vmatpush1.bf16.msra.mxu0 %v5536
      %5550 = vmatprep.subr.bf16.mxu0 0
      %5551 = vmatpush1.bf16.msra.mxu0 %v5535
      %5552 = vmatprep.subr.bf16.mxu0 0
      %5553 = vmatpush1.bf16.msra.mxu0 %v5534
      %5554 = vmatprep.subr.bf16.mxu0 0
      %5555 = vmatpush1.bf16.msra.mxu0 %v5533
      %5556 = vmatprep.subr.bf16.mxu0 0
      %5557 = vmatpush1.bf16.msra.mxu0 %v5532
      %5558 = vmatprep.subr.bf16.mxu0 0
      %5559 = vmatpush1.bf16.msra.mxu0 %v5531
      %5560 = vmatprep.subr.bf16.mxu0 0
      %5561 = vmatpush1.bf16.msra.mxu0 %v5530
      %5562 = vmatprep.subr.bf16.mxu0 0
      %5563 = vmatpush2.bf16.msra.mxu0 0
      %5564 = vmatprep.subr.bf16.mxu0 0
      %5565 = vmatpush2.bf16.msra.mxu0 0
      %5566 = vmatprep.subr.bf16.mxu0 0
      %5567 = vmatpush2.bf16.msra.mxu0 0
      %5568 = vmatprep.subr.bf16.mxu0 0
      %5569 = vmatpush2.bf16.msra.mxu0 0
      %5570 = vmatprep.subr.bf16.mxu0 0
      %5571 = vmatpush2.bf16.msra.mxu0 0
      %5572 = vmatprep.subr.bf16.mxu0 0
      %5573 = vmatpush2.bf16.msra.mxu0 0
      %5574 = vmatprep.subr.bf16.mxu0 0
      %5575 = vmatpush2.bf16.msra.mxu0 0
      %5576 = vmatprep.subr.bf16.mxu0 0
      %5577 = vmatpush2.bf16.msra.mxu0 0
      %5578 = vmatprep.mubr.bf16.mxu0 0
      %5579 = vmatmul.mubr.bf16.gmra.mxu0 %v4474
      %v5580 = vpop.f32.mrf.mxu0
      %v5581 = vadd.f32 0.0, %v5580
      %v5582 = vpop.f32.mrf.mxu0
      %v5583 = vpop.f32.mrf.mxu0
      %v5584 = vadd.f32 0.0, %v5583
      %v5585 = vpop.f32.mrf.mxu0
      %5586 = vdwg.mxu0
      %v5587 = vadd.f32 %v5479, %v5581
      %v5588 = vadd.f32 %v5480, %v5584
      %s5589 = scalar_lea.vmem %s3, 640
      %v5590 = vld [vmem:[%s5589] sm:$0xf]
      %v5591 = vld [vmem:[%s5589 + $0x4] sm:$0xf]
      %v5592 = vld [vmem:[%s5589 + $0x8] sm:$0xf]
      %v5593 = vld [vmem:[%s5589 + $0xc] sm:$0xf]
      %v5594 = vld [vmem:[%s5589 + $0x10] sm:$0xf]
      %v5595 = vld [vmem:[%s5589 + $0x14] sm:$0xf]
      %v5596 = vld [vmem:[%s5589 + $0x18] sm:$0xf]
      %v5597 = vld [vmem:[%s5589 + $0x1c] sm:$0xf]
      %v5598 = vld [vmem:[%s5589 + $0x20] sm:$0xf]
      %v5599 = vld [vmem:[%s5589 + $0x24] sm:$0xf]
      %v5600 = vld [vmem:[%s5589 + $0x28] sm:$0xf]
      %v5601 = vld [vmem:[%s5589 + $0x2c] sm:$0xf]
      %v5602 = vld [vmem:[%s5589 + $0x30] sm:$0xf]
      %v5603 = vld [vmem:[%s5589 + $0x34] sm:$0xf]
      %v5604 = vld [vmem:[%s5589 + $0x38] sm:$0xf]
      %v5605 = vld [vmem:[%s5589 + $0x3c] sm:$0xf]
      %v5622 = vunpack.c.l.b16 %v5590
      %v5623 = vunpack.c.l.b16 %v5591
      %v5624 = vunpack.c.l.b16 %v5592
      %v5625 = vunpack.c.l.b16 %v5593
      %v5626 = vunpack.c.l.b16 %v5594
      %v5627 = vunpack.c.l.b16 %v5595
      %v5628 = vunpack.c.l.b16 %v5596
      %v5629 = vunpack.c.l.b16 %v5597
      %v5630 = vunpack.c.l.b16 %v5598
      %v5631 = vunpack.c.l.b16 %v5599
      %v5632 = vunpack.c.l.b16 %v5600
      %v5633 = vunpack.c.l.b16 %v5601
      %v5634 = vunpack.c.l.b16 %v5602
      %v5635 = vunpack.c.l.b16 %v5603
      %v5636 = vunpack.c.l.b16 %v5604
      %v5637 = vunpack.c.l.b16 %v5605
      %v5638 = vpack.c.b16 %v5623, %v5622
      %v5639 = vpack.c.b16 %v5625, %v5624
      %v5640 = vpack.c.b16 %v5627, %v5626
      %v5641 = vpack.c.b16 %v5629, %v5628
      %v5642 = vpack.c.b16 %v5631, %v5630
      %v5643 = vpack.c.b16 %v5633, %v5632
      %v5644 = vpack.c.b16 %v5635, %v5634
      %v5645 = vpack.c.b16 %v5637, %v5636
      %5654 = vmatprep.subr.bf16.mxu0 0
      %5655 = vmatpush1.bf16.msra.mxu0 %v5645
      %5656 = vmatprep.subr.bf16.mxu0 0
      %5657 = vmatpush1.bf16.msra.mxu0 %v5644
      %5658 = vmatprep.subr.bf16.mxu0 0
      %5659 = vmatpush1.bf16.msra.mxu0 %v5643
      %5660 = vmatprep.subr.bf16.mxu0 0
      %5661 = vmatpush1.bf16.msra.mxu0 %v5642
      %5662 = vmatprep.subr.bf16.mxu0 0
      %5663 = vmatpush1.bf16.msra.mxu0 %v5641
      %5664 = vmatprep.subr.bf16.mxu0 0
      %5665 = vmatpush1.bf16.msra.mxu0 %v5640
      %5666 = vmatprep.subr.bf16.mxu0 0
      %5667 = vmatpush1.bf16.msra.mxu0 %v5639
      %5668 = vmatprep.subr.bf16.mxu0 0
      %5669 = vmatpush1.bf16.msra.mxu0 %v5638
      %5670 = vmatprep.subr.bf16.mxu0 0
      %5671 = vmatpush2.bf16.msra.mxu0 0
      %5672 = vmatprep.subr.bf16.mxu0 0
      %5673 = vmatpush2.bf16.msra.mxu0 0
      %5674 = vmatprep.subr.bf16.mxu0 0
      %5675 = vmatpush2.bf16.msra.mxu0 0
      %5676 = vmatprep.subr.bf16.mxu0 0
      %5677 = vmatpush2.bf16.msra.mxu0 0
      %5678 = vmatprep.subr.bf16.mxu0 0
      %5679 = vmatpush2.bf16.msra.mxu0 0
      %5680 = vmatprep.subr.bf16.mxu0 0
      %5681 = vmatpush2.bf16.msra.mxu0 0
      %5682 = vmatprep.subr.bf16.mxu0 0
      %5683 = vmatpush2.bf16.msra.mxu0 0
      %5684 = vmatprep.subr.bf16.mxu0 0
      %5685 = vmatpush2.bf16.msra.mxu0 0
      %5686 = vmatprep.mubr.bf16.mxu0 0
      %5687 = vmatmul.mubr.bf16.gmra.mxu0 %v4475
      %v5688 = vpop.f32.mrf.mxu0
      %v5689 = vadd.f32 0.0, %v5688
      %v5690 = vpop.f32.mrf.mxu0
      %v5691 = vpop.f32.mrf.mxu0
      %v5692 = vadd.f32 0.0, %v5691
      %v5693 = vpop.f32.mrf.mxu0
      %5694 = vdwg.mxu0
      %v5695 = vadd.f32 %v5587, %v5689
      %v5696 = vadd.f32 %v5588, %v5692
      %s5697 = scalar_lea.vmem %s3, 704
      %v5698 = vld [vmem:[%s5697] sm:$0xf]
      %v5699 = vld [vmem:[%s5697 + $0x4] sm:$0xf]
      %v5700 = vld [vmem:[%s5697 + $0x8] sm:$0xf]
      %v5701 = vld [vmem:[%s5697 + $0xc] sm:$0xf]
      %v5702 = vld [vmem:[%s5697 + $0x10] sm:$0xf]
      %v5703 = vld [vmem:[%s5697 + $0x14] sm:$0xf]
      %v5704 = vld [vmem:[%s5697 + $0x18] sm:$0xf]
      %v5705 = vld [vmem:[%s5697 + $0x1c] sm:$0xf]
      %v5706 = vld [vmem:[%s5697 + $0x20] sm:$0xf]
      %v5707 = vld [vmem:[%s5697 + $0x24] sm:$0xf]
      %v5708 = vld [vmem:[%s5697 + $0x28] sm:$0xf]
      %v5709 = vld [vmem:[%s5697 + $0x2c] sm:$0xf]
      %v5710 = vld [vmem:[%s5697 + $0x30] sm:$0xf]
      %v5711 = vld [vmem:[%s5697 + $0x34] sm:$0xf]
      %v5712 = vld [vmem:[%s5697 + $0x38] sm:$0xf]
      %v5713 = vld [vmem:[%s5697 + $0x3c] sm:$0xf]
      %v5730 = vunpack.c.l.b16 %v5698
      %v5731 = vunpack.c.l.b16 %v5699
      %v5732 = vunpack.c.l.b16 %v5700
      %v5733 = vunpack.c.l.b16 %v5701
      %v5734 = vunpack.c.l.b16 %v5702
      %v5735 = vunpack.c.l.b16 %v5703
      %v5736 = vunpack.c.l.b16 %v5704
      %v5737 = vunpack.c.l.b16 %v5705
      %v5738 = vunpack.c.l.b16 %v5706
      %v5739 = vunpack.c.l.b16 %v5707
      %v5740 = vunpack.c.l.b16 %v5708
      %v5741 = vunpack.c.l.b16 %v5709
      %v5742 = vunpack.c.l.b16 %v5710
      %v5743 = vunpack.c.l.b16 %v5711
      %v5744 = vunpack.c.l.b16 %v5712
      %v5745 = vunpack.c.l.b16 %v5713
      %v5746 = vpack.c.b16 %v5731, %v5730
      %v5747 = vpack.c.b16 %v5733, %v5732
      %v5748 = vpack.c.b16 %v5735, %v5734
      %v5749 = vpack.c.b16 %v5737, %v5736
      %v5750 = vpack.c.b16 %v5739, %v5738
      %v5751 = vpack.c.b16 %v5741, %v5740
      %v5752 = vpack.c.b16 %v5743, %v5742
      %v5753 = vpack.c.b16 %v5745, %v5744
      %5762 = vmatprep.subr.bf16.mxu0 0
      %5763 = vmatpush1.bf16.msra.mxu0 %v5753
      %5764 = vmatprep.subr.bf16.mxu0 0
      %5765 = vmatpush1.bf16.msra.mxu0 %v5752
      %5766 = vmatprep.subr.bf16.mxu0 0
      %5767 = vmatpush1.bf16.msra.mxu0 %v5751
      %5768 = vmatprep.subr.bf16.mxu0 0
      %5769 = vmatpush1.bf16.msra.mxu0 %v5750
      %5770 = vmatprep.subr.bf16.mxu0 0
      %5771 = vmatpush1.bf16.msra.mxu0 %v5749
      %5772 = vmatprep.subr.bf16.mxu0 0
      %5773 = vmatpush1.bf16.msra.mxu0 %v5748
      %5774 = vmatprep.subr.bf16.mxu0 0
      %5775 = vmatpush1.bf16.msra.mxu0 %v5747
      %5776 = vmatprep.subr.bf16.mxu0 0
      %5777 = vmatpush1.bf16.msra.mxu0 %v5746
      %5778 = vmatprep.subr.bf16.mxu0 0
      %5779 = vmatpush2.bf16.msra.mxu0 0
      %5780 = vmatprep.subr.bf16.mxu0 0
      %5781 = vmatpush2.bf16.msra.mxu0 0
      %5782 = vmatprep.subr.bf16.mxu0 0
      %5783 = vmatpush2.bf16.msra.mxu0 0
      %5784 = vmatprep.subr.bf16.mxu0 0
      %5785 = vmatpush2.bf16.msra.mxu0 0
      %5786 = vmatprep.subr.bf16.mxu0 0
      %5787 = vmatpush2.bf16.msra.mxu0 0
      %5788 = vmatprep.subr.bf16.mxu0 0
      %5789 = vmatpush2.bf16.msra.mxu0 0
      %5790 = vmatprep.subr.bf16.mxu0 0
      %5791 = vmatpush2.bf16.msra.mxu0 0
      %5792 = vmatprep.subr.bf16.mxu0 0
      %5793 = vmatpush2.bf16.msra.mxu0 0
      %5794 = vmatprep.mubr.bf16.mxu0 0
      %5795 = vmatmul.mubr.bf16.gmra.mxu0 %v4476
      %v5796 = vpop.f32.mrf.mxu0
      %v5797 = vadd.f32 0.0, %v5796
      %v5798 = vpop.f32.mrf.mxu0
      %v5799 = vpop.f32.mrf.mxu0
      %v5800 = vadd.f32 0.0, %v5799
      %v5801 = vpop.f32.mrf.mxu0
      %5802 = vdwg.mxu0
      %v5803 = vadd.f32 %v5695, %v5797
      %v5804 = vadd.f32 %v5696, %v5800
      %s5805 = scalar_lea.vmem %s3, 768
      %v5806 = vld [vmem:[%s5805] sm:$0xf]
      %v5807 = vld [vmem:[%s5805 + $0x4] sm:$0xf]
      %v5808 = vld [vmem:[%s5805 + $0x8] sm:$0xf]
      %v5809 = vld [vmem:[%s5805 + $0xc] sm:$0xf]
      %v5810 = vld [vmem:[%s5805 + $0x10] sm:$0xf]
      %v5811 = vld [vmem:[%s5805 + $0x14] sm:$0xf]
      %v5812 = vld [vmem:[%s5805 + $0x18] sm:$0xf]
      %v5813 = vld [vmem:[%s5805 + $0x1c] sm:$0xf]
      %v5814 = vld [vmem:[%s5805 + $0x20] sm:$0xf]
      %v5815 = vld [vmem:[%s5805 + $0x24] sm:$0xf]
      %v5816 = vld [vmem:[%s5805 + $0x28] sm:$0xf]
      %v5817 = vld [vmem:[%s5805 + $0x2c] sm:$0xf]
      %v5818 = vld [vmem:[%s5805 + $0x30] sm:$0xf]
      %v5819 = vld [vmem:[%s5805 + $0x34] sm:$0xf]
      %v5820 = vld [vmem:[%s5805 + $0x38] sm:$0xf]
      %v5821 = vld [vmem:[%s5805 + $0x3c] sm:$0xf]
      %v5838 = vunpack.c.l.b16 %v5806
      %v5839 = vunpack.c.l.b16 %v5807
      %v5840 = vunpack.c.l.b16 %v5808
      %v5841 = vunpack.c.l.b16 %v5809
      %v5842 = vunpack.c.l.b16 %v5810
      %v5843 = vunpack.c.l.b16 %v5811
      %v5844 = vunpack.c.l.b16 %v5812
      %v5845 = vunpack.c.l.b16 %v5813
      %v5846 = vunpack.c.l.b16 %v5814
      %v5847 = vunpack.c.l.b16 %v5815
      %v5848 = vunpack.c.l.b16 %v5816
      %v5849 = vunpack.c.l.b16 %v5817
      %v5850 = vunpack.c.l.b16 %v5818
      %v5851 = vunpack.c.l.b16 %v5819
      %v5852 = vunpack.c.l.b16 %v5820
      %v5853 = vunpack.c.l.b16 %v5821
      %v5854 = vpack.c.b16 %v5839, %v5838
      %v5855 = vpack.c.b16 %v5841, %v5840
      %v5856 = vpack.c.b16 %v5843, %v5842
      %v5857 = vpack.c.b16 %v5845, %v5844
      %v5858 = vpack.c.b16 %v5847, %v5846
      %v5859 = vpack.c.b16 %v5849, %v5848
      %v5860 = vpack.c.b16 %v5851, %v5850
      %v5861 = vpack.c.b16 %v5853, %v5852
      %5870 = vmatprep.subr.bf16.mxu0 0
      %5871 = vmatpush1.bf16.msra.mxu0 %v5861
      %5872 = vmatprep.subr.bf16.mxu0 0
      %5873 = vmatpush1.bf16.msra.mxu0 %v5860
      %5874 = vmatprep.subr.bf16.mxu0 0
      %5875 = vmatpush1.bf16.msra.mxu0 %v5859
      %5876 = vmatprep.subr.bf16.mxu0 0
      %5877 = vmatpush1.bf16.msra.mxu0 %v5858
      %5878 = vmatprep.subr.bf16.mxu0 0
      %5879 = vmatpush1.bf16.msra.mxu0 %v5857
      %5880 = vmatprep.subr.bf16.mxu0 0
      %5881 = vmatpush1.bf16.msra.mxu0 %v5856
      %5882 = vmatprep.subr.bf16.mxu0 0
      %5883 = vmatpush1.bf16.msra.mxu0 %v5855
      %5884 = vmatprep.subr.bf16.mxu0 0
      %5885 = vmatpush1.bf16.msra.mxu0 %v5854
      %5886 = vmatprep.subr.bf16.mxu0 0
      %5887 = vmatpush2.bf16.msra.mxu0 0
      %5888 = vmatprep.subr.bf16.mxu0 0
      %5889 = vmatpush2.bf16.msra.mxu0 0
      %5890 = vmatprep.subr.bf16.mxu0 0
      %5891 = vmatpush2.bf16.msra.mxu0 0
      %5892 = vmatprep.subr.bf16.mxu0 0
      %5893 = vmatpush2.bf16.msra.mxu0 0
      %5894 = vmatprep.subr.bf16.mxu0 0
      %5895 = vmatpush2.bf16.msra.mxu0 0
      %5896 = vmatprep.subr.bf16.mxu0 0
      %5897 = vmatpush2.bf16.msra.mxu0 0
      %5898 = vmatprep.subr.bf16.mxu0 0
      %5899 = vmatpush2.bf16.msra.mxu0 0
      %5900 = vmatprep.subr.bf16.mxu0 0
      %5901 = vmatpush2.bf16.msra.mxu0 0
      %5902 = vmatprep.mubr.bf16.mxu0 0
      %5903 = vmatmul.mubr.bf16.gmra.mxu0 %v4477
      %v5904 = vpop.f32.mrf.mxu0
      %v5905 = vadd.f32 0.0, %v5904
      %v5906 = vpop.f32.mrf.mxu0
      %v5907 = vpop.f32.mrf.mxu0
      %v5908 = vadd.f32 0.0, %v5907
      %v5909 = vpop.f32.mrf.mxu0
      %5910 = vdwg.mxu0
      %v5911 = vadd.f32 %v5803, %v5905
      %v5912 = vadd.f32 %v5804, %v5908
      %s5913 = scalar_lea.vmem %s3, 832
      %v5914 = vld [vmem:[%s5913] sm:$0xf]
      %v5915 = vld [vmem:[%s5913 + $0x4] sm:$0xf]
      %v5916 = vld [vmem:[%s5913 + $0x8] sm:$0xf]
      %v5917 = vld [vmem:[%s5913 + $0xc] sm:$0xf]
      %v5918 = vld [vmem:[%s5913 + $0x10] sm:$0xf]
      %v5919 = vld [vmem:[%s5913 + $0x14] sm:$0xf]
      %v5920 = vld [vmem:[%s5913 + $0x18] sm:$0xf]
      %v5921 = vld [vmem:[%s5913 + $0x1c] sm:$0xf]
      %v5922 = vld [vmem:[%s5913 + $0x20] sm:$0xf]
      %v5923 = vld [vmem:[%s5913 + $0x24] sm:$0xf]
      %v5924 = vld [vmem:[%s5913 + $0x28] sm:$0xf]
      %v5925 = vld [vmem:[%s5913 + $0x2c] sm:$0xf]
      %v5926 = vld [vmem:[%s5913 + $0x30] sm:$0xf]
      %v5927 = vld [vmem:[%s5913 + $0x34] sm:$0xf]
      %v5928 = vld [vmem:[%s5913 + $0x38] sm:$0xf]
      %v5929 = vld [vmem:[%s5913 + $0x3c] sm:$0xf]
      %v5946 = vunpack.c.l.b16 %v5914
      %v5947 = vunpack.c.l.b16 %v5915
      %v5948 = vunpack.c.l.b16 %v5916
      %v5949 = vunpack.c.l.b16 %v5917
      %v5950 = vunpack.c.l.b16 %v5918
      %v5951 = vunpack.c.l.b16 %v5919
      %v5952 = vunpack.c.l.b16 %v5920
      %v5953 = vunpack.c.l.b16 %v5921
      %v5954 = vunpack.c.l.b16 %v5922
      %v5955 = vunpack.c.l.b16 %v5923
      %v5956 = vunpack.c.l.b16 %v5924
      %v5957 = vunpack.c.l.b16 %v5925
      %v5958 = vunpack.c.l.b16 %v5926
      %v5959 = vunpack.c.l.b16 %v5927
      %v5960 = vunpack.c.l.b16 %v5928
      %v5961 = vunpack.c.l.b16 %v5929
      %v5962 = vpack.c.b16 %v5947, %v5946
      %v5963 = vpack.c.b16 %v5949, %v5948
      %v5964 = vpack.c.b16 %v5951, %v5950
      %v5965 = vpack.c.b16 %v5953, %v5952
      %v5966 = vpack.c.b16 %v5955, %v5954
      %v5967 = vpack.c.b16 %v5957, %v5956
      %v5968 = vpack.c.b16 %v5959, %v5958
      %v5969 = vpack.c.b16 %v5961, %v5960
      %5978 = vmatprep.subr.bf16.mxu0 0
      %5979 = vmatpush1.bf16.msra.mxu0 %v5969
      %5980 = vmatprep.subr.bf16.mxu0 0
      %5981 = vmatpush1.bf16.msra.mxu0 %v5968
      %5982 = vmatprep.subr.bf16.mxu0 0
      %5983 = vmatpush1.bf16.msra.mxu0 %v5967
      %5984 = vmatprep.subr.bf16.mxu0 0
      %5985 = vmatpush1.bf16.msra.mxu0 %v5966
      %5986 = vmatprep.subr.bf16.mxu0 0
      %5987 = vmatpush1.bf16.msra.mxu0 %v5965
      %5988 = vmatprep.subr.bf16.mxu0 0
      %5989 = vmatpush1.bf16.msra.mxu0 %v5964
      %5990 = vmatprep.subr.bf16.mxu0 0
      %5991 = vmatpush1.bf16.msra.mxu0 %v5963
      %5992 = vmatprep.subr.bf16.mxu0 0
      %5993 = vmatpush1.bf16.msra.mxu0 %v5962
      %5994 = vmatprep.subr.bf16.mxu0 0
      %5995 = vmatpush2.bf16.msra.mxu0 0
      %5996 = vmatprep.subr.bf16.mxu0 0
      %5997 = vmatpush2.bf16.msra.mxu0 0
      %5998 = vmatprep.subr.bf16.mxu0 0
      %5999 = vmatpush2.bf16.msra.mxu0 0
      %6000 = vmatprep.subr.bf16.mxu0 0
      %6001 = vmatpush2.bf16.msra.mxu0 0
      %6002 = vmatprep.subr.bf16.mxu0 0
      %6003 = vmatpush2.bf16.msra.mxu0 0
      %6004 = vmatprep.subr.bf16.mxu0 0
      %6005 = vmatpush2.bf16.msra.mxu0 0
      %6006 = vmatprep.subr.bf16.mxu0 0
      %6007 = vmatpush2.bf16.msra.mxu0 0
      %6008 = vmatprep.subr.bf16.mxu0 0
      %6009 = vmatpush2.bf16.msra.mxu0 0
      %6010 = vmatprep.mubr.bf16.mxu0 0
      %6011 = vmatmul.mubr.bf16.gmra.mxu0 %v4478
      %v6012 = vpop.f32.mrf.mxu0
      %v6013 = vadd.f32 0.0, %v6012
      %v6014 = vpop.f32.mrf.mxu0
      %v6015 = vpop.f32.mrf.mxu0
      %v6016 = vadd.f32 0.0, %v6015
      %v6017 = vpop.f32.mrf.mxu0
      %6018 = vdwg.mxu0
      %v6019 = vadd.f32 %v5911, %v6013
      %v6020 = vadd.f32 %v5912, %v6016
      %s6021 = scalar_lea.vmem %s3, 896
      %v6022 = vld [vmem:[%s6021] sm:$0xf]
      %v6023 = vld [vmem:[%s6021 + $0x4] sm:$0xf]
      %v6024 = vld [vmem:[%s6021 + $0x8] sm:$0xf]
      %v6025 = vld [vmem:[%s6021 + $0xc] sm:$0xf]
      %v6026 = vld [vmem:[%s6021 + $0x10] sm:$0xf]
      %v6027 = vld [vmem:[%s6021 + $0x14] sm:$0xf]
      %v6028 = vld [vmem:[%s6021 + $0x18] sm:$0xf]
      %v6029 = vld [vmem:[%s6021 + $0x1c] sm:$0xf]
      %v6030 = vld [vmem:[%s6021 + $0x20] sm:$0xf]
      %v6031 = vld [vmem:[%s6021 + $0x24] sm:$0xf]
      %v6032 = vld [vmem:[%s6021 + $0x28] sm:$0xf]
      %v6033 = vld [vmem:[%s6021 + $0x2c] sm:$0xf]
      %v6034 = vld [vmem:[%s6021 + $0x30] sm:$0xf]
      %v6035 = vld [vmem:[%s6021 + $0x34] sm:$0xf]
      %v6036 = vld [vmem:[%s6021 + $0x38] sm:$0xf]
      %v6037 = vld [vmem:[%s6021 + $0x3c] sm:$0xf]
      %v6054 = vunpack.c.l.b16 %v6022
      %v6055 = vunpack.c.l.b16 %v6023
      %v6056 = vunpack.c.l.b16 %v6024
      %v6057 = vunpack.c.l.b16 %v6025
      %v6058 = vunpack.c.l.b16 %v6026
      %v6059 = vunpack.c.l.b16 %v6027
      %v6060 = vunpack.c.l.b16 %v6028
      %v6061 = vunpack.c.l.b16 %v6029
      %v6062 = vunpack.c.l.b16 %v6030
      %v6063 = vunpack.c.l.b16 %v6031
      %v6064 = vunpack.c.l.b16 %v6032
      %v6065 = vunpack.c.l.b16 %v6033
      %v6066 = vunpack.c.l.b16 %v6034
      %v6067 = vunpack.c.l.b16 %v6035
      %v6068 = vunpack.c.l.b16 %v6036
      %v6069 = vunpack.c.l.b16 %v6037
      %v6070 = vpack.c.b16 %v6055, %v6054
      %v6071 = vpack.c.b16 %v6057, %v6056
      %v6072 = vpack.c.b16 %v6059, %v6058
      %v6073 = vpack.c.b16 %v6061, %v6060
      %v6074 = vpack.c.b16 %v6063, %v6062
      %v6075 = vpack.c.b16 %v6065, %v6064
      %v6076 = vpack.c.b16 %v6067, %v6066
      %v6077 = vpack.c.b16 %v6069, %v6068
      %6086 = vmatprep.subr.bf16.mxu0 0
      %6087 = vmatpush1.bf16.msra.mxu0 %v6077
      %6088 = vmatprep.subr.bf16.mxu0 0
      %6089 = vmatpush1.bf16.msra.mxu0 %v6076
      %6090 = vmatprep.subr.bf16.mxu0 0
      %6091 = vmatpush1.bf16.msra.mxu0 %v6075
      %6092 = vmatprep.subr.bf16.mxu0 0
      %6093 = vmatpush1.bf16.msra.mxu0 %v6074
      %6094 = vmatprep.subr.bf16.mxu0 0
      %6095 = vmatpush1.bf16.msra.mxu0 %v6073
      %6096 = vmatprep.subr.bf16.mxu0 0
      %6097 = vmatpush1.bf16.msra.mxu0 %v6072
      %6098 = vmatprep.subr.bf16.mxu0 0
      %6099 = vmatpush1.bf16.msra.mxu0 %v6071
      %6100 = vmatprep.subr.bf16.mxu0 0
      %6101 = vmatpush1.bf16.msra.mxu0 %v6070
      %6102 = vmatprep.subr.bf16.mxu0 0
      %6103 = vmatpush2.bf16.msra.mxu0 0
      %6104 = vmatprep.subr.bf16.mxu0 0
      %6105 = vmatpush2.bf16.msra.mxu0 0
      %6106 = vmatprep.subr.bf16.mxu0 0
      %6107 = vmatpush2.bf16.msra.mxu0 0
      %6108 = vmatprep.subr.bf16.mxu0 0
      %6109 = vmatpush2.bf16.msra.mxu0 0
      %6110 = vmatprep.subr.bf16.mxu0 0
      %6111 = vmatpush2.bf16.msra.mxu0 0
      %6112 = vmatprep.subr.bf16.mxu0 0
      %6113 = vmatpush2.bf16.msra.mxu0 0
      %6114 = vmatprep.subr.bf16.mxu0 0
      %6115 = vmatpush2.bf16.msra.mxu0 0
      %6116 = vmatprep.subr.bf16.mxu0 0
      %6117 = vmatpush2.bf16.msra.mxu0 0
      %6118 = vmatprep.mubr.bf16.mxu0 0
      %6119 = vmatmul.mubr.bf16.gmra.mxu0 %v4479
      %v6120 = vpop.f32.mrf.mxu0
      %v6121 = vadd.f32 0.0, %v6120
      %v6122 = vpop.f32.mrf.mxu0
      %v6123 = vpop.f32.mrf.mxu0
      %v6124 = vadd.f32 0.0, %v6123
      %v6125 = vpop.f32.mrf.mxu0
      %6126 = vdwg.mxu0
      %v6127 = vadd.f32 %v6019, %v6121
      %v6128 = vadd.f32 %v6020, %v6124
      %s6129 = scalar_lea.vmem %s3, 960
      %v6130 = vld [vmem:[%s6129] sm:$0xf]
      %v6131 = vld [vmem:[%s6129 + $0x4] sm:$0xf]
      %v6132 = vld [vmem:[%s6129 + $0x8] sm:$0xf]
      %v6133 = vld [vmem:[%s6129 + $0xc] sm:$0xf]
      %v6134 = vld [vmem:[%s6129 + $0x10] sm:$0xf]
      %v6135 = vld [vmem:[%s6129 + $0x14] sm:$0xf]
      %v6136 = vld [vmem:[%s6129 + $0x18] sm:$0xf]
      %v6137 = vld [vmem:[%s6129 + $0x1c] sm:$0xf]
      %v6138 = vld [vmem:[%s6129 + $0x20] sm:$0xf]
      %v6139 = vld [vmem:[%s6129 + $0x24] sm:$0xf]
      %v6140 = vld [vmem:[%s6129 + $0x28] sm:$0xf]
      %v6141 = vld [vmem:[%s6129 + $0x2c] sm:$0xf]
      %v6142 = vld [vmem:[%s6129 + $0x30] sm:$0xf]
      %v6143 = vld [vmem:[%s6129 + $0x34] sm:$0xf]
      %v6144 = vld [vmem:[%s6129 + $0x38] sm:$0xf]
      %v6145 = vld [vmem:[%s6129 + $0x3c] sm:$0xf]
      %v6162 = vunpack.c.l.b16 %v6130
      %v6163 = vunpack.c.l.b16 %v6131
      %v6164 = vunpack.c.l.b16 %v6132
      %v6165 = vunpack.c.l.b16 %v6133
      %v6166 = vunpack.c.l.b16 %v6134
      %v6167 = vunpack.c.l.b16 %v6135
      %v6168 = vunpack.c.l.b16 %v6136
      %v6169 = vunpack.c.l.b16 %v6137
      %v6170 = vunpack.c.l.b16 %v6138
      %v6171 = vunpack.c.l.b16 %v6139
      %v6172 = vunpack.c.l.b16 %v6140
      %v6173 = vunpack.c.l.b16 %v6141
      %v6174 = vunpack.c.l.b16 %v6142
      %v6175 = vunpack.c.l.b16 %v6143
      %v6176 = vunpack.c.l.b16 %v6144
      %v6177 = vunpack.c.l.b16 %v6145
      %v6178 = vpack.c.b16 %v6163, %v6162
      %v6179 = vpack.c.b16 %v6165, %v6164
      %v6180 = vpack.c.b16 %v6167, %v6166
      %v6181 = vpack.c.b16 %v6169, %v6168
      %v6182 = vpack.c.b16 %v6171, %v6170
      %v6183 = vpack.c.b16 %v6173, %v6172
      %v6184 = vpack.c.b16 %v6175, %v6174
      %v6185 = vpack.c.b16 %v6177, %v6176
      %6194 = vmatprep.subr.bf16.mxu0 0
      %6195 = vmatpush1.bf16.msra.mxu0 %v6185
      %6196 = vmatprep.subr.bf16.mxu0 0
      %6197 = vmatpush1.bf16.msra.mxu0 %v6184
      %6198 = vmatprep.subr.bf16.mxu0 0
      %6199 = vmatpush1.bf16.msra.mxu0 %v6183
      %6200 = vmatprep.subr.bf16.mxu0 0
      %6201 = vmatpush1.bf16.msra.mxu0 %v6182
      %6202 = vmatprep.subr.bf16.mxu0 0
      %6203 = vmatpush1.bf16.msra.mxu0 %v6181
      %6204 = vmatprep.subr.bf16.mxu0 0
      %6205 = vmatpush1.bf16.msra.mxu0 %v6180
      %6206 = vmatprep.subr.bf16.mxu0 0
      %6207 = vmatpush1.bf16.msra.mxu0 %v6179
      %6208 = vmatprep.subr.bf16.mxu0 0
      %6209 = vmatpush1.bf16.msra.mxu0 %v6178
      %6210 = vmatprep.subr.bf16.mxu0 0
      %6211 = vmatpush2.bf16.msra.mxu0 0
      %6212 = vmatprep.subr.bf16.mxu0 0
      %6213 = vmatpush2.bf16.msra.mxu0 0
      %6214 = vmatprep.subr.bf16.mxu0 0
      %6215 = vmatpush2.bf16.msra.mxu0 0
      %6216 = vmatprep.subr.bf16.mxu0 0
      %6217 = vmatpush2.bf16.msra.mxu0 0
      %6218 = vmatprep.subr.bf16.mxu0 0
      %6219 = vmatpush2.bf16.msra.mxu0 0
      %6220 = vmatprep.subr.bf16.mxu0 0
      %6221 = vmatpush2.bf16.msra.mxu0 0
      %6222 = vmatprep.subr.bf16.mxu0 0
      %6223 = vmatpush2.bf16.msra.mxu0 0
      %6224 = vmatprep.subr.bf16.mxu0 0
      %6225 = vmatpush2.bf16.msra.mxu0 0
      %6226 = vmatprep.mubr.bf16.mxu0 0
      %6227 = vmatmul.mubr.bf16.gmra.mxu0 %v4480
      %v6228 = vpop.f32.mrf.mxu0
      %v6229 = vadd.f32 0.0, %v6228
      %v6230 = vpop.f32.mrf.mxu0
      %v6231 = vpop.f32.mrf.mxu0
      %v6232 = vadd.f32 0.0, %v6231
      %v6233 = vpop.f32.mrf.mxu0
      %6234 = vdwg.mxu0
      %v6235 = vadd.f32 %v6127, %v6229
      %v6236 = vadd.f32 %v6128, %v6232
      %s6237 = scalar_lea.vmem %s3, 1024
      %v6238 = vld [vmem:[%s6237] sm:$0xf]
      %v6239 = vld [vmem:[%s6237 + $0x4] sm:$0xf]
      %v6240 = vld [vmem:[%s6237 + $0x8] sm:$0xf]
      %v6241 = vld [vmem:[%s6237 + $0xc] sm:$0xf]
      %v6242 = vld [vmem:[%s6237 + $0x10] sm:$0xf]
      %v6243 = vld [vmem:[%s6237 + $0x14] sm:$0xf]
      %v6244 = vld [vmem:[%s6237 + $0x18] sm:$0xf]
      %v6245 = vld [vmem:[%s6237 + $0x1c] sm:$0xf]
      %v6246 = vld [vmem:[%s6237 + $0x20] sm:$0xf]
      %v6247 = vld [vmem:[%s6237 + $0x24] sm:$0xf]
      %v6248 = vld [vmem:[%s6237 + $0x28] sm:$0xf]
      %v6249 = vld [vmem:[%s6237 + $0x2c] sm:$0xf]
      %v6250 = vld [vmem:[%s6237 + $0x30] sm:$0xf]
      %v6251 = vld [vmem:[%s6237 + $0x34] sm:$0xf]
      %v6252 = vld [vmem:[%s6237 + $0x38] sm:$0xf]
      %v6253 = vld [vmem:[%s6237 + $0x3c] sm:$0xf]
      %v6270 = vunpack.c.l.b16 %v6238
      %v6271 = vunpack.c.l.b16 %v6239
      %v6272 = vunpack.c.l.b16 %v6240
      %v6273 = vunpack.c.l.b16 %v6241
      %v6274 = vunpack.c.l.b16 %v6242
      %v6275 = vunpack.c.l.b16 %v6243
      %v6276 = vunpack.c.l.b16 %v6244
      %v6277 = vunpack.c.l.b16 %v6245
      %v6278 = vunpack.c.l.b16 %v6246
      %v6279 = vunpack.c.l.b16 %v6247
      %v6280 = vunpack.c.l.b16 %v6248
      %v6281 = vunpack.c.l.b16 %v6249
      %v6282 = vunpack.c.l.b16 %v6250
      %v6283 = vunpack.c.l.b16 %v6251
      %v6284 = vunpack.c.l.b16 %v6252
      %v6285 = vunpack.c.l.b16 %v6253
      %v6286 = vpack.c.b16 %v6271, %v6270
      %v6287 = vpack.c.b16 %v6273, %v6272
      %v6288 = vpack.c.b16 %v6275, %v6274
      %v6289 = vpack.c.b16 %v6277, %v6276
      %v6290 = vpack.c.b16 %v6279, %v6278
      %v6291 = vpack.c.b16 %v6281, %v6280
      %v6292 = vpack.c.b16 %v6283, %v6282
      %v6293 = vpack.c.b16 %v6285, %v6284
      %6302 = vmatprep.subr.bf16.mxu0 0
      %6303 = vmatpush1.bf16.msra.mxu0 %v6293
      %6304 = vmatprep.subr.bf16.mxu0 0
      %6305 = vmatpush1.bf16.msra.mxu0 %v6292
      %6306 = vmatprep.subr.bf16.mxu0 0
      %6307 = vmatpush1.bf16.msra.mxu0 %v6291
      %6308 = vmatprep.subr.bf16.mxu0 0
      %6309 = vmatpush1.bf16.msra.mxu0 %v6290
      %6310 = vmatprep.subr.bf16.mxu0 0
      %6311 = vmatpush1.bf16.msra.mxu0 %v6289
      %6312 = vmatprep.subr.bf16.mxu0 0
      %6313 = vmatpush1.bf16.msra.mxu0 %v6288
      %6314 = vmatprep.subr.bf16.mxu0 0
      %6315 = vmatpush1.bf16.msra.mxu0 %v6287
      %6316 = vmatprep.subr.bf16.mxu0 0
      %6317 = vmatpush1.bf16.msra.mxu0 %v6286
      %6318 = vmatprep.subr.bf16.mxu0 0
      %6319 = vmatpush2.bf16.msra.mxu0 0
      %6320 = vmatprep.subr.bf16.mxu0 0
      %6321 = vmatpush2.bf16.msra.mxu0 0
      %6322 = vmatprep.subr.bf16.mxu0 0
      %6323 = vmatpush2.bf16.msra.mxu0 0
      %6324 = vmatprep.subr.bf16.mxu0 0
      %6325 = vmatpush2.bf16.msra.mxu0 0
      %6326 = vmatprep.subr.bf16.mxu0 0
      %6327 = vmatpush2.bf16.msra.mxu0 0
      %6328 = vmatprep.subr.bf16.mxu0 0
      %6329 = vmatpush2.bf16.msra.mxu0 0
      %6330 = vmatprep.subr.bf16.mxu0 0
      %6331 = vmatpush2.bf16.msra.mxu0 0
      %6332 = vmatprep.subr.bf16.mxu0 0
      %6333 = vmatpush2.bf16.msra.mxu0 0
      %6334 = vmatprep.mubr.bf16.mxu0 0
      %6335 = vmatmul.mubr.bf16.gmra.mxu0 %v4481
      %v6336 = vpop.f32.mrf.mxu0
      %v6337 = vadd.f32 0.0, %v6336
      %v6338 = vpop.f32.mrf.mxu0
      %v6339 = vpop.f32.mrf.mxu0
      %v6340 = vadd.f32 0.0, %v6339
      %v6341 = vpop.f32.mrf.mxu0
      %6342 = vdwg.mxu0
      %v6343 = vadd.f32 %v6235, %v6337
      %v6344 = vadd.f32 %v6236, %v6340
      %s6345 = scalar_lea.vmem %s3, 1088
      %v6346 = vld [vmem:[%s6345] sm:$0xf]
      %v6347 = vld [vmem:[%s6345 + $0x4] sm:$0xf]
      %v6348 = vld [vmem:[%s6345 + $0x8] sm:$0xf]
      %v6349 = vld [vmem:[%s6345 + $0xc] sm:$0xf]
      %v6350 = vld [vmem:[%s6345 + $0x10] sm:$0xf]
      %v6351 = vld [vmem:[%s6345 + $0x14] sm:$0xf]
      %v6352 = vld [vmem:[%s6345 + $0x18] sm:$0xf]
      %v6353 = vld [vmem:[%s6345 + $0x1c] sm:$0xf]
      %v6354 = vld [vmem:[%s6345 + $0x20] sm:$0xf]
      %v6355 = vld [vmem:[%s6345 + $0x24] sm:$0xf]
      %v6356 = vld [vmem:[%s6345 + $0x28] sm:$0xf]
      %v6357 = vld [vmem:[%s6345 + $0x2c] sm:$0xf]
      %v6358 = vld [vmem:[%s6345 + $0x30] sm:$0xf]
      %v6359 = vld [vmem:[%s6345 + $0x34] sm:$0xf]
      %v6360 = vld [vmem:[%s6345 + $0x38] sm:$0xf]
      %v6361 = vld [vmem:[%s6345 + $0x3c] sm:$0xf]
      %v6378 = vunpack.c.l.b16 %v6346
      %v6379 = vunpack.c.l.b16 %v6347
      %v6380 = vunpack.c.l.b16 %v6348
      %v6381 = vunpack.c.l.b16 %v6349
      %v6382 = vunpack.c.l.b16 %v6350
      %v6383 = vunpack.c.l.b16 %v6351
      %v6384 = vunpack.c.l.b16 %v6352
      %v6385 = vunpack.c.l.b16 %v6353
      %v6386 = vunpack.c.l.b16 %v6354
      %v6387 = vunpack.c.l.b16 %v6355
      %v6388 = vunpack.c.l.b16 %v6356
      %v6389 = vunpack.c.l.b16 %v6357
      %v6390 = vunpack.c.l.b16 %v6358
      %v6391 = vunpack.c.l.b16 %v6359
      %v6392 = vunpack.c.l.b16 %v6360
      %v6393 = vunpack.c.l.b16 %v6361
      %v6394 = vpack.c.b16 %v6379, %v6378
      %v6395 = vpack.c.b16 %v6381, %v6380
      %v6396 = vpack.c.b16 %v6383, %v6382
      %v6397 = vpack.c.b16 %v6385, %v6384
      %v6398 = vpack.c.b16 %v6387, %v6386
      %v6399 = vpack.c.b16 %v6389, %v6388
      %v6400 = vpack.c.b16 %v6391, %v6390
      %v6401 = vpack.c.b16 %v6393, %v6392
      %6410 = vmatprep.subr.bf16.mxu0 0
      %6411 = vmatpush1.bf16.msra.mxu0 %v6401
      %6412 = vmatprep.subr.bf16.mxu0 0
      %6413 = vmatpush1.bf16.msra.mxu0 %v6400
      %6414 = vmatprep.subr.bf16.mxu0 0
      %6415 = vmatpush1.bf16.msra.mxu0 %v6399
      %6416 = vmatprep.subr.bf16.mxu0 0
      %6417 = vmatpush1.bf16.msra.mxu0 %v6398
      %6418 = vmatprep.subr.bf16.mxu0 0
      %6419 = vmatpush1.bf16.msra.mxu0 %v6397
      %6420 = vmatprep.subr.bf16.mxu0 0
      %6421 = vmatpush1.bf16.msra.mxu0 %v6396
      %6422 = vmatprep.subr.bf16.mxu0 0
      %6423 = vmatpush1.bf16.msra.mxu0 %v6395
      %6424 = vmatprep.subr.bf16.mxu0 0
      %6425 = vmatpush1.bf16.msra.mxu0 %v6394
      %6426 = vmatprep.subr.bf16.mxu0 0
      %6427 = vmatpush2.bf16.msra.mxu0 0
      %6428 = vmatprep.subr.bf16.mxu0 0
      %6429 = vmatpush2.bf16.msra.mxu0 0
      %6430 = vmatprep.subr.bf16.mxu0 0
      %6431 = vmatpush2.bf16.msra.mxu0 0
      %6432 = vmatprep.subr.bf16.mxu0 0
      %6433 = vmatpush2.bf16.msra.mxu0 0
      %6434 = vmatprep.subr.bf16.mxu0 0
      %6435 = vmatpush2.bf16.msra.mxu0 0
      %6436 = vmatprep.subr.bf16.mxu0 0
      %6437 = vmatpush2.bf16.msra.mxu0 0
      %6438 = vmatprep.subr.bf16.mxu0 0
      %6439 = vmatpush2.bf16.msra.mxu0 0
      %6440 = vmatprep.subr.bf16.mxu0 0
      %6441 = vmatpush2.bf16.msra.mxu0 0
      %6442 = vmatprep.mubr.bf16.mxu0 0
      %6443 = vmatmul.mubr.bf16.gmra.mxu0 %v4482
      %v6444 = vpop.f32.mrf.mxu0
      %v6445 = vadd.f32 0.0, %v6444
      %v6446 = vpop.f32.mrf.mxu0
      %v6447 = vpop.f32.mrf.mxu0
      %v6448 = vadd.f32 0.0, %v6447
      %v6449 = vpop.f32.mrf.mxu0
      %6450 = vdwg.mxu0
      %v6451 = vadd.f32 %v6343, %v6445
      %v6452 = vadd.f32 %v6344, %v6448
      %s6453 = scalar_lea.vmem %s3, 1152
      %v6454 = vld [vmem:[%s6453] sm:$0xf]
      %v6455 = vld [vmem:[%s6453 + $0x4] sm:$0xf]
      %v6456 = vld [vmem:[%s6453 + $0x8] sm:$0xf]
      %v6457 = vld [vmem:[%s6453 + $0xc] sm:$0xf]
      %v6458 = vld [vmem:[%s6453 + $0x10] sm:$0xf]
      %v6459 = vld [vmem:[%s6453 + $0x14] sm:$0xf]
      %v6460 = vld [vmem:[%s6453 + $0x18] sm:$0xf]
      %v6461 = vld [vmem:[%s6453 + $0x1c] sm:$0xf]
      %v6462 = vld [vmem:[%s6453 + $0x20] sm:$0xf]
      %v6463 = vld [vmem:[%s6453 + $0x24] sm:$0xf]
      %v6464 = vld [vmem:[%s6453 + $0x28] sm:$0xf]
      %v6465 = vld [vmem:[%s6453 + $0x2c] sm:$0xf]
      %v6466 = vld [vmem:[%s6453 + $0x30] sm:$0xf]
      %v6467 = vld [vmem:[%s6453 + $0x34] sm:$0xf]
      %v6468 = vld [vmem:[%s6453 + $0x38] sm:$0xf]
      %v6469 = vld [vmem:[%s6453 + $0x3c] sm:$0xf]
      %v6486 = vunpack.c.l.b16 %v6454
      %v6487 = vunpack.c.l.b16 %v6455
      %v6488 = vunpack.c.l.b16 %v6456
      %v6489 = vunpack.c.l.b16 %v6457
      %v6490 = vunpack.c.l.b16 %v6458
      %v6491 = vunpack.c.l.b16 %v6459
      %v6492 = vunpack.c.l.b16 %v6460
      %v6493 = vunpack.c.l.b16 %v6461
      %v6494 = vunpack.c.l.b16 %v6462
      %v6495 = vunpack.c.l.b16 %v6463
      %v6496 = vunpack.c.l.b16 %v6464
      %v6497 = vunpack.c.l.b16 %v6465
      %v6498 = vunpack.c.l.b16 %v6466
      %v6499 = vunpack.c.l.b16 %v6467
      %v6500 = vunpack.c.l.b16 %v6468
      %v6501 = vunpack.c.l.b16 %v6469
      %v6502 = vpack.c.b16 %v6487, %v6486
      %v6503 = vpack.c.b16 %v6489, %v6488
      %v6504 = vpack.c.b16 %v6491, %v6490
      %v6505 = vpack.c.b16 %v6493, %v6492
      %v6506 = vpack.c.b16 %v6495, %v6494
      %v6507 = vpack.c.b16 %v6497, %v6496
      %v6508 = vpack.c.b16 %v6499, %v6498
      %v6509 = vpack.c.b16 %v6501, %v6500
      %6518 = vmatprep.subr.bf16.mxu0 0
      %6519 = vmatpush1.bf16.msra.mxu0 %v6509
      %6520 = vmatprep.subr.bf16.mxu0 0
      %6521 = vmatpush1.bf16.msra.mxu0 %v6508
      %6522 = vmatprep.subr.bf16.mxu0 0
      %6523 = vmatpush1.bf16.msra.mxu0 %v6507
      %6524 = vmatprep.subr.bf16.mxu0 0
      %6525 = vmatpush1.bf16.msra.mxu0 %v6506
      %6526 = vmatprep.subr.bf16.mxu0 0
      %6527 = vmatpush1.bf16.msra.mxu0 %v6505
      %6528 = vmatprep.subr.bf16.mxu0 0
      %6529 = vmatpush1.bf16.msra.mxu0 %v6504
      %6530 = vmatprep.subr.bf16.mxu0 0
      %6531 = vmatpush1.bf16.msra.mxu0 %v6503
      %6532 = vmatprep.subr.bf16.mxu0 0
      %6533 = vmatpush1.bf16.msra.mxu0 %v6502
      %6534 = vmatprep.subr.bf16.mxu0 0
      %6535 = vmatpush2.bf16.msra.mxu0 0
      %6536 = vmatprep.subr.bf16.mxu0 0
      %6537 = vmatpush2.bf16.msra.mxu0 0
      %6538 = vmatprep.subr.bf16.mxu0 0
      %6539 = vmatpush2.bf16.msra.mxu0 0
      %6540 = vmatprep.subr.bf16.mxu0 0
      %6541 = vmatpush2.bf16.msra.mxu0 0
      %6542 = vmatprep.subr.bf16.mxu0 0
      %6543 = vmatpush2.bf16.msra.mxu0 0
      %6544 = vmatprep.subr.bf16.mxu0 0
      %6545 = vmatpush2.bf16.msra.mxu0 0
      %6546 = vmatprep.subr.bf16.mxu0 0
      %6547 = vmatpush2.bf16.msra.mxu0 0
      %6548 = vmatprep.subr.bf16.mxu0 0
      %6549 = vmatpush2.bf16.msra.mxu0 0
      %6550 = vmatprep.mubr.bf16.mxu0 0
      %6551 = vmatmul.mubr.bf16.gmra.mxu0 %v4483
      %v6552 = vpop.f32.mrf.mxu0
      %v6553 = vadd.f32 0.0, %v6552
      %v6554 = vpop.f32.mrf.mxu0
      %v6555 = vpop.f32.mrf.mxu0
      %v6556 = vadd.f32 0.0, %v6555
      %v6557 = vpop.f32.mrf.mxu0
      %6558 = vdwg.mxu0
      %v6559 = vadd.f32 %v6451, %v6553
      %v6560 = vadd.f32 %v6452, %v6556
      %s6561 = scalar_lea.vmem %s3, 1216
      %v6562 = vld [vmem:[%s6561] sm:$0xf]
      %v6563 = vld [vmem:[%s6561 + $0x4] sm:$0xf]
      %v6564 = vld [vmem:[%s6561 + $0x8] sm:$0xf]
      %v6565 = vld [vmem:[%s6561 + $0xc] sm:$0xf]
      %v6566 = vld [vmem:[%s6561 + $0x10] sm:$0xf]
      %v6567 = vld [vmem:[%s6561 + $0x14] sm:$0xf]
      %v6568 = vld [vmem:[%s6561 + $0x18] sm:$0xf]
      %v6569 = vld [vmem:[%s6561 + $0x1c] sm:$0xf]
      %v6570 = vld [vmem:[%s6561 + $0x20] sm:$0xf]
      %v6571 = vld [vmem:[%s6561 + $0x24] sm:$0xf]
      %v6572 = vld [vmem:[%s6561 + $0x28] sm:$0xf]
      %v6573 = vld [vmem:[%s6561 + $0x2c] sm:$0xf]
      %v6574 = vld [vmem:[%s6561 + $0x30] sm:$0xf]
      %v6575 = vld [vmem:[%s6561 + $0x34] sm:$0xf]
      %v6576 = vld [vmem:[%s6561 + $0x38] sm:$0xf]
      %v6577 = vld [vmem:[%s6561 + $0x3c] sm:$0xf]
      %v6594 = vunpack.c.l.b16 %v6562
      %v6595 = vunpack.c.l.b16 %v6563
      %v6596 = vunpack.c.l.b16 %v6564
      %v6597 = vunpack.c.l.b16 %v6565
      %v6598 = vunpack.c.l.b16 %v6566
      %v6599 = vunpack.c.l.b16 %v6567
      %v6600 = vunpack.c.l.b16 %v6568
      %v6601 = vunpack.c.l.b16 %v6569
      %v6602 = vunpack.c.l.b16 %v6570
      %v6603 = vunpack.c.l.b16 %v6571
      %v6604 = vunpack.c.l.b16 %v6572
      %v6605 = vunpack.c.l.b16 %v6573
      %v6606 = vunpack.c.l.b16 %v6574
      %v6607 = vunpack.c.l.b16 %v6575
      %v6608 = vunpack.c.l.b16 %v6576
      %v6609 = vunpack.c.l.b16 %v6577
      %v6610 = vpack.c.b16 %v6595, %v6594
      %v6611 = vpack.c.b16 %v6597, %v6596
      %v6612 = vpack.c.b16 %v6599, %v6598
      %v6613 = vpack.c.b16 %v6601, %v6600
      %v6614 = vpack.c.b16 %v6603, %v6602
      %v6615 = vpack.c.b16 %v6605, %v6604
      %v6616 = vpack.c.b16 %v6607, %v6606
      %v6617 = vpack.c.b16 %v6609, %v6608
      %6626 = vmatprep.subr.bf16.mxu0 0
      %6627 = vmatpush1.bf16.msra.mxu0 %v6617
      %6628 = vmatprep.subr.bf16.mxu0 0
      %6629 = vmatpush1.bf16.msra.mxu0 %v6616
      %6630 = vmatprep.subr.bf16.mxu0 0
      %6631 = vmatpush1.bf16.msra.mxu0 %v6615
      %6632 = vmatprep.subr.bf16.mxu0 0
      %6633 = vmatpush1.bf16.msra.mxu0 %v6614
      %6634 = vmatprep.subr.bf16.mxu0 0
      %6635 = vmatpush1.bf16.msra.mxu0 %v6613
      %6636 = vmatprep.subr.bf16.mxu0 0
      %6637 = vmatpush1.bf16.msra.mxu0 %v6612
      %6638 = vmatprep.subr.bf16.mxu0 0
      %6639 = vmatpush1.bf16.msra.mxu0 %v6611
      %6640 = vmatprep.subr.bf16.mxu0 0
      %6641 = vmatpush1.bf16.msra.mxu0 %v6610
      %6642 = vmatprep.subr.bf16.mxu0 0
      %6643 = vmatpush2.bf16.msra.mxu0 0
      %6644 = vmatprep.subr.bf16.mxu0 0
      %6645 = vmatpush2.bf16.msra.mxu0 0
      %6646 = vmatprep.subr.bf16.mxu0 0
      %6647 = vmatpush2.bf16.msra.mxu0 0
      %6648 = vmatprep.subr.bf16.mxu0 0
      %6649 = vmatpush2.bf16.msra.mxu0 0
      %6650 = vmatprep.subr.bf16.mxu0 0
      %6651 = vmatpush2.bf16.msra.mxu0 0
      %6652 = vmatprep.subr.bf16.mxu0 0
      %6653 = vmatpush2.bf16.msra.mxu0 0
      %6654 = vmatprep.subr.bf16.mxu0 0
      %6655 = vmatpush2.bf16.msra.mxu0 0
      %6656 = vmatprep.subr.bf16.mxu0 0
      %6657 = vmatpush2.bf16.msra.mxu0 0
      %6658 = vmatprep.mubr.bf16.mxu0 0
      %6659 = vmatmul.mubr.bf16.gmra.mxu0 %v4484
      %v6660 = vpop.f32.mrf.mxu0
      %v6661 = vadd.f32 0.0, %v6660
      %v6662 = vpop.f32.mrf.mxu0
      %v6663 = vpop.f32.mrf.mxu0
      %v6664 = vadd.f32 0.0, %v6663
      %v6665 = vpop.f32.mrf.mxu0
      %6666 = vdwg.mxu0
      %v6667 = vadd.f32 %v6559, %v6661
      %v6668 = vadd.f32 %v6560, %v6664
      %s6669 = scalar_lea.vmem %s3, 1280
      %v6670 = vld [vmem:[%s6669] sm:$0xf]
      %v6671 = vld [vmem:[%s6669 + $0x4] sm:$0xf]
      %v6672 = vld [vmem:[%s6669 + $0x8] sm:$0xf]
      %v6673 = vld [vmem:[%s6669 + $0xc] sm:$0xf]
      %v6674 = vld [vmem:[%s6669 + $0x10] sm:$0xf]
      %v6675 = vld [vmem:[%s6669 + $0x14] sm:$0xf]
      %v6676 = vld [vmem:[%s6669 + $0x18] sm:$0xf]
      %v6677 = vld [vmem:[%s6669 + $0x1c] sm:$0xf]
      %v6678 = vld [vmem:[%s6669 + $0x20] sm:$0xf]
      %v6679 = vld [vmem:[%s6669 + $0x24] sm:$0xf]
      %v6680 = vld [vmem:[%s6669 + $0x28] sm:$0xf]
      %v6681 = vld [vmem:[%s6669 + $0x2c] sm:$0xf]
      %v6682 = vld [vmem:[%s6669 + $0x30] sm:$0xf]
      %v6683 = vld [vmem:[%s6669 + $0x34] sm:$0xf]
      %v6684 = vld [vmem:[%s6669 + $0x38] sm:$0xf]
      %v6685 = vld [vmem:[%s6669 + $0x3c] sm:$0xf]
      %v6702 = vunpack.c.l.b16 %v6670
      %v6703 = vunpack.c.l.b16 %v6671
      %v6704 = vunpack.c.l.b16 %v6672
      %v6705 = vunpack.c.l.b16 %v6673
      %v6706 = vunpack.c.l.b16 %v6674
      %v6707 = vunpack.c.l.b16 %v6675
      %v6708 = vunpack.c.l.b16 %v6676
      %v6709 = vunpack.c.l.b16 %v6677
      %v6710 = vunpack.c.l.b16 %v6678
      %v6711 = vunpack.c.l.b16 %v6679
      %v6712 = vunpack.c.l.b16 %v6680
      %v6713 = vunpack.c.l.b16 %v6681
      %v6714 = vunpack.c.l.b16 %v6682
      %v6715 = vunpack.c.l.b16 %v6683
      %v6716 = vunpack.c.l.b16 %v6684
      %v6717 = vunpack.c.l.b16 %v6685
      %v6718 = vpack.c.b16 %v6703, %v6702
      %v6719 = vpack.c.b16 %v6705, %v6704
      %v6720 = vpack.c.b16 %v6707, %v6706
      %v6721 = vpack.c.b16 %v6709, %v6708
      %v6722 = vpack.c.b16 %v6711, %v6710
      %v6723 = vpack.c.b16 %v6713, %v6712
      %v6724 = vpack.c.b16 %v6715, %v6714
      %v6725 = vpack.c.b16 %v6717, %v6716
      %6734 = vmatprep.subr.bf16.mxu0 0
      %6735 = vmatpush1.bf16.msra.mxu0 %v6725
      %6736 = vmatprep.subr.bf16.mxu0 0
      %6737 = vmatpush1.bf16.msra.mxu0 %v6724
      %6738 = vmatprep.subr.bf16.mxu0 0
      %6739 = vmatpush1.bf16.msra.mxu0 %v6723
      %6740 = vmatprep.subr.bf16.mxu0 0
      %6741 = vmatpush1.bf16.msra.mxu0 %v6722
      %6742 = vmatprep.subr.bf16.mxu0 0
      %6743 = vmatpush1.bf16.msra.mxu0 %v6721
      %6744 = vmatprep.subr.bf16.mxu0 0
      %6745 = vmatpush1.bf16.msra.mxu0 %v6720
      %6746 = vmatprep.subr.bf16.mxu0 0
      %6747 = vmatpush1.bf16.msra.mxu0 %v6719
      %6748 = vmatprep.subr.bf16.mxu0 0
      %6749 = vmatpush1.bf16.msra.mxu0 %v6718
      %6750 = vmatprep.subr.bf16.mxu0 0
      %6751 = vmatpush2.bf16.msra.mxu0 0
      %6752 = vmatprep.subr.bf16.mxu0 0
      %6753 = vmatpush2.bf16.msra.mxu0 0
      %6754 = vmatprep.subr.bf16.mxu0 0
      %6755 = vmatpush2.bf16.msra.mxu0 0
      %6756 = vmatprep.subr.bf16.mxu0 0
      %6757 = vmatpush2.bf16.msra.mxu0 0
      %6758 = vmatprep.subr.bf16.mxu0 0
      %6759 = vmatpush2.bf16.msra.mxu0 0
      %6760 = vmatprep.subr.bf16.mxu0 0
      %6761 = vmatpush2.bf16.msra.mxu0 0
      %6762 = vmatprep.subr.bf16.mxu0 0
      %6763 = vmatpush2.bf16.msra.mxu0 0
      %6764 = vmatprep.subr.bf16.mxu0 0
      %6765 = vmatpush2.bf16.msra.mxu0 0
      %6766 = vmatprep.mubr.bf16.mxu0 0
      %6767 = vmatmul.mubr.bf16.gmra.mxu0 %v4485
      %v6768 = vpop.f32.mrf.mxu0
      %v6769 = vadd.f32 0.0, %v6768
      %v6770 = vpop.f32.mrf.mxu0
      %v6771 = vpop.f32.mrf.mxu0
      %v6772 = vadd.f32 0.0, %v6771
      %v6773 = vpop.f32.mrf.mxu0
      %6774 = vdwg.mxu0
      %v6775 = vadd.f32 %v6667, %v6769
      %v6776 = vadd.f32 %v6668, %v6772
      %s6777 = scalar_lea.vmem %s3, 1344
      %v6778 = vld [vmem:[%s6777] sm:$0xf]
      %v6779 = vld [vmem:[%s6777 + $0x4] sm:$0xf]
      %v6780 = vld [vmem:[%s6777 + $0x8] sm:$0xf]
      %v6781 = vld [vmem:[%s6777 + $0xc] sm:$0xf]
      %v6782 = vld [vmem:[%s6777 + $0x10] sm:$0xf]
      %v6783 = vld [vmem:[%s6777 + $0x14] sm:$0xf]
      %v6784 = vld [vmem:[%s6777 + $0x18] sm:$0xf]
      %v6785 = vld [vmem:[%s6777 + $0x1c] sm:$0xf]
      %v6786 = vld [vmem:[%s6777 + $0x20] sm:$0xf]
      %v6787 = vld [vmem:[%s6777 + $0x24] sm:$0xf]
      %v6788 = vld [vmem:[%s6777 + $0x28] sm:$0xf]
      %v6789 = vld [vmem:[%s6777 + $0x2c] sm:$0xf]
      %v6790 = vld [vmem:[%s6777 + $0x30] sm:$0xf]
      %v6791 = vld [vmem:[%s6777 + $0x34] sm:$0xf]
      %v6792 = vld [vmem:[%s6777 + $0x38] sm:$0xf]
      %v6793 = vld [vmem:[%s6777 + $0x3c] sm:$0xf]
      %v6810 = vunpack.c.l.b16 %v6778
      %v6811 = vunpack.c.l.b16 %v6779
      %v6812 = vunpack.c.l.b16 %v6780
      %v6813 = vunpack.c.l.b16 %v6781
      %v6814 = vunpack.c.l.b16 %v6782
      %v6815 = vunpack.c.l.b16 %v6783
      %v6816 = vunpack.c.l.b16 %v6784
      %v6817 = vunpack.c.l.b16 %v6785
      %v6818 = vunpack.c.l.b16 %v6786
      %v6819 = vunpack.c.l.b16 %v6787
      %v6820 = vunpack.c.l.b16 %v6788
      %v6821 = vunpack.c.l.b16 %v6789
      %v6822 = vunpack.c.l.b16 %v6790
      %v6823 = vunpack.c.l.b16 %v6791
      %v6824 = vunpack.c.l.b16 %v6792
      %v6825 = vunpack.c.l.b16 %v6793
      %v6826 = vpack.c.b16 %v6811, %v6810
      %v6827 = vpack.c.b16 %v6813, %v6812
      %v6828 = vpack.c.b16 %v6815, %v6814
      %v6829 = vpack.c.b16 %v6817, %v6816
      %v6830 = vpack.c.b16 %v6819, %v6818
      %v6831 = vpack.c.b16 %v6821, %v6820
      %v6832 = vpack.c.b16 %v6823, %v6822
      %v6833 = vpack.c.b16 %v6825, %v6824
      %6842 = vmatprep.subr.bf16.mxu0 0
      %6843 = vmatpush1.bf16.msra.mxu0 %v6833
      %6844 = vmatprep.subr.bf16.mxu0 0
      %6845 = vmatpush1.bf16.msra.mxu0 %v6832
      %6846 = vmatprep.subr.bf16.mxu0 0
      %6847 = vmatpush1.bf16.msra.mxu0 %v6831
      %6848 = vmatprep.subr.bf16.mxu0 0
      %6849 = vmatpush1.bf16.msra.mxu0 %v6830
      %6850 = vmatprep.subr.bf16.mxu0 0
      %6851 = vmatpush1.bf16.msra.mxu0 %v6829
      %6852 = vmatprep.subr.bf16.mxu0 0
      %6853 = vmatpush1.bf16.msra.mxu0 %v6828
      %6854 = vmatprep.subr.bf16.mxu0 0
      %6855 = vmatpush1.bf16.msra.mxu0 %v6827
      %6856 = vmatprep.subr.bf16.mxu0 0
      %6857 = vmatpush1.bf16.msra.mxu0 %v6826
      %6858 = vmatprep.subr.bf16.mxu0 0
      %6859 = vmatpush2.bf16.msra.mxu0 0
      %6860 = vmatprep.subr.bf16.mxu0 0
      %6861 = vmatpush2.bf16.msra.mxu0 0
      %6862 = vmatprep.subr.bf16.mxu0 0
      %6863 = vmatpush2.bf16.msra.mxu0 0
      %6864 = vmatprep.subr.bf16.mxu0 0
      %6865 = vmatpush2.bf16.msra.mxu0 0
      %6866 = vmatprep.subr.bf16.mxu0 0
      %6867 = vmatpush2.bf16.msra.mxu0 0
      %6868 = vmatprep.subr.bf16.mxu0 0
      %6869 = vmatpush2.bf16.msra.mxu0 0
      %6870 = vmatprep.subr.bf16.mxu0 0
      %6871 = vmatpush2.bf16.msra.mxu0 0
      %6872 = vmatprep.subr.bf16.mxu0 0
      %6873 = vmatpush2.bf16.msra.mxu0 0
      %6874 = vmatprep.mubr.bf16.mxu0 0
      %6875 = vmatmul.mubr.bf16.gmra.mxu0 %v4486
      %v6876 = vpop.f32.mrf.mxu0
      %v6877 = vadd.f32 0.0, %v6876
      %v6878 = vpop.f32.mrf.mxu0
      %v6879 = vpop.f32.mrf.mxu0
      %v6880 = vadd.f32 0.0, %v6879
      %v6881 = vpop.f32.mrf.mxu0
      %6882 = vdwg.mxu0
      %v6883 = vadd.f32 %v6775, %v6877
      %v6884 = vadd.f32 %v6776, %v6880
      %s6885 = scalar_lea.vmem %s3, 1408
      %v6886 = vld [vmem:[%s6885] sm:$0xf]
      %v6887 = vld [vmem:[%s6885 + $0x4] sm:$0xf]
      %v6888 = vld [vmem:[%s6885 + $0x8] sm:$0xf]
      %v6889 = vld [vmem:[%s6885 + $0xc] sm:$0xf]
      %v6890 = vld [vmem:[%s6885 + $0x10] sm:$0xf]
      %v6891 = vld [vmem:[%s6885 + $0x14] sm:$0xf]
      %v6892 = vld [vmem:[%s6885 + $0x18] sm:$0xf]
      %v6893 = vld [vmem:[%s6885 + $0x1c] sm:$0xf]
      %v6894 = vld [vmem:[%s6885 + $0x20] sm:$0xf]
      %v6895 = vld [vmem:[%s6885 + $0x24] sm:$0xf]
      %v6896 = vld [vmem:[%s6885 + $0x28] sm:$0xf]
      %v6897 = vld [vmem:[%s6885 + $0x2c] sm:$0xf]
      %v6898 = vld [vmem:[%s6885 + $0x30] sm:$0xf]
      %v6899 = vld [vmem:[%s6885 + $0x34] sm:$0xf]
      %v6900 = vld [vmem:[%s6885 + $0x38] sm:$0xf]
      %v6901 = vld [vmem:[%s6885 + $0x3c] sm:$0xf]
      %v6918 = vunpack.c.l.b16 %v6886
      %v6919 = vunpack.c.l.b16 %v6887
      %v6920 = vunpack.c.l.b16 %v6888
      %v6921 = vunpack.c.l.b16 %v6889
      %v6922 = vunpack.c.l.b16 %v6890
      %v6923 = vunpack.c.l.b16 %v6891
      %v6924 = vunpack.c.l.b16 %v6892
      %v6925 = vunpack.c.l.b16 %v6893
      %v6926 = vunpack.c.l.b16 %v6894
      %v6927 = vunpack.c.l.b16 %v6895
      %v6928 = vunpack.c.l.b16 %v6896
      %v6929 = vunpack.c.l.b16 %v6897
      %v6930 = vunpack.c.l.b16 %v6898
      %v6931 = vunpack.c.l.b16 %v6899
      %v6932 = vunpack.c.l.b16 %v6900
      %v6933 = vunpack.c.l.b16 %v6901
      %v6934 = vpack.c.b16 %v6919, %v6918
      %v6935 = vpack.c.b16 %v6921, %v6920
      %v6936 = vpack.c.b16 %v6923, %v6922
      %v6937 = vpack.c.b16 %v6925, %v6924
      %v6938 = vpack.c.b16 %v6927, %v6926
      %v6939 = vpack.c.b16 %v6929, %v6928
      %v6940 = vpack.c.b16 %v6931, %v6930
      %v6941 = vpack.c.b16 %v6933, %v6932
      %6950 = vmatprep.subr.bf16.mxu0 0
      %6951 = vmatpush1.bf16.msra.mxu0 %v6941
      %6952 = vmatprep.subr.bf16.mxu0 0
      %6953 = vmatpush1.bf16.msra.mxu0 %v6940
      %6954 = vmatprep.subr.bf16.mxu0 0
      %6955 = vmatpush1.bf16.msra.mxu0 %v6939
      %6956 = vmatprep.subr.bf16.mxu0 0
      %6957 = vmatpush1.bf16.msra.mxu0 %v6938
      %6958 = vmatprep.subr.bf16.mxu0 0
      %6959 = vmatpush1.bf16.msra.mxu0 %v6937
      %6960 = vmatprep.subr.bf16.mxu0 0
      %6961 = vmatpush1.bf16.msra.mxu0 %v6936
      %6962 = vmatprep.subr.bf16.mxu0 0
      %6963 = vmatpush1.bf16.msra.mxu0 %v6935
      %6964 = vmatprep.subr.bf16.mxu0 0
      %6965 = vmatpush1.bf16.msra.mxu0 %v6934
      %6966 = vmatprep.subr.bf16.mxu0 0
      %6967 = vmatpush2.bf16.msra.mxu0 0
      %6968 = vmatprep.subr.bf16.mxu0 0
      %6969 = vmatpush2.bf16.msra.mxu0 0
      %6970 = vmatprep.subr.bf16.mxu0 0
      %6971 = vmatpush2.bf16.msra.mxu0 0
      %6972 = vmatprep.subr.bf16.mxu0 0
      %6973 = vmatpush2.bf16.msra.mxu0 0
      %6974 = vmatprep.subr.bf16.mxu0 0
      %6975 = vmatpush2.bf16.msra.mxu0 0
      %6976 = vmatprep.subr.bf16.mxu0 0
      %6977 = vmatpush2.bf16.msra.mxu0 0
      %6978 = vmatprep.subr.bf16.mxu0 0
      %6979 = vmatpush2.bf16.msra.mxu0 0
      %6980 = vmatprep.subr.bf16.mxu0 0
      %6981 = vmatpush2.bf16.msra.mxu0 0
      %6982 = vmatprep.mubr.bf16.mxu0 0
      %6983 = vmatmul.mubr.bf16.gmra.mxu0 %v4487
      %v6984 = vpop.f32.mrf.mxu0
      %v6985 = vadd.f32 0.0, %v6984
      %v6986 = vpop.f32.mrf.mxu0
      %v6987 = vpop.f32.mrf.mxu0
      %v6988 = vadd.f32 0.0, %v6987
      %v6989 = vpop.f32.mrf.mxu0
      %6990 = vdwg.mxu0
      %v6991 = vadd.f32 %v6883, %v6985
      %v6992 = vadd.f32 %v6884, %v6988
      %s6993 = scalar_lea.vmem %s3, 1472
      %v6994 = vld [vmem:[%s6993] sm:$0xf]
      %v6995 = vld [vmem:[%s6993 + $0x4] sm:$0xf]
      %v6996 = vld [vmem:[%s6993 + $0x8] sm:$0xf]
      %v6997 = vld [vmem:[%s6993 + $0xc] sm:$0xf]
      %v6998 = vld [vmem:[%s6993 + $0x10] sm:$0xf]
      %v6999 = vld [vmem:[%s6993 + $0x14] sm:$0xf]
      %v7000 = vld [vmem:[%s6993 + $0x18] sm:$0xf]
      %v7001 = vld [vmem:[%s6993 + $0x1c] sm:$0xf]
      %v7002 = vld [vmem:[%s6993 + $0x20] sm:$0xf]
      %v7003 = vld [vmem:[%s6993 + $0x24] sm:$0xf]
      %v7004 = vld [vmem:[%s6993 + $0x28] sm:$0xf]
      %v7005 = vld [vmem:[%s6993 + $0x2c] sm:$0xf]
      %v7006 = vld [vmem:[%s6993 + $0x30] sm:$0xf]
      %v7007 = vld [vmem:[%s6993 + $0x34] sm:$0xf]
      %v7008 = vld [vmem:[%s6993 + $0x38] sm:$0xf]
      %v7009 = vld [vmem:[%s6993 + $0x3c] sm:$0xf]
      %v7026 = vunpack.c.l.b16 %v6994
      %v7027 = vunpack.c.l.b16 %v6995
      %v7028 = vunpack.c.l.b16 %v6996
      %v7029 = vunpack.c.l.b16 %v6997
      %v7030 = vunpack.c.l.b16 %v6998
      %v7031 = vunpack.c.l.b16 %v6999
      %v7032 = vunpack.c.l.b16 %v7000
      %v7033 = vunpack.c.l.b16 %v7001
      %v7034 = vunpack.c.l.b16 %v7002
      %v7035 = vunpack.c.l.b16 %v7003
      %v7036 = vunpack.c.l.b16 %v7004
      %v7037 = vunpack.c.l.b16 %v7005
      %v7038 = vunpack.c.l.b16 %v7006
      %v7039 = vunpack.c.l.b16 %v7007
      %v7040 = vunpack.c.l.b16 %v7008
      %v7041 = vunpack.c.l.b16 %v7009
      %v7042 = vpack.c.b16 %v7027, %v7026
      %v7043 = vpack.c.b16 %v7029, %v7028
      %v7044 = vpack.c.b16 %v7031, %v7030
      %v7045 = vpack.c.b16 %v7033, %v7032
      %v7046 = vpack.c.b16 %v7035, %v7034
      %v7047 = vpack.c.b16 %v7037, %v7036
      %v7048 = vpack.c.b16 %v7039, %v7038
      %v7049 = vpack.c.b16 %v7041, %v7040
      %7058 = vmatprep.subr.bf16.mxu0 0
      %7059 = vmatpush1.bf16.msra.mxu0 %v7049
      %7060 = vmatprep.subr.bf16.mxu0 0
      %7061 = vmatpush1.bf16.msra.mxu0 %v7048
      %7062 = vmatprep.subr.bf16.mxu0 0
      %7063 = vmatpush1.bf16.msra.mxu0 %v7047
      %7064 = vmatprep.subr.bf16.mxu0 0
      %7065 = vmatpush1.bf16.msra.mxu0 %v7046
      %7066 = vmatprep.subr.bf16.mxu0 0
      %7067 = vmatpush1.bf16.msra.mxu0 %v7045
      %7068 = vmatprep.subr.bf16.mxu0 0
      %7069 = vmatpush1.bf16.msra.mxu0 %v7044
      %7070 = vmatprep.subr.bf16.mxu0 0
      %7071 = vmatpush1.bf16.msra.mxu0 %v7043
      %7072 = vmatprep.subr.bf16.mxu0 0
      %7073 = vmatpush1.bf16.msra.mxu0 %v7042
      %7074 = vmatprep.subr.bf16.mxu0 0
      %7075 = vmatpush2.bf16.msra.mxu0 0
      %7076 = vmatprep.subr.bf16.mxu0 0
      %7077 = vmatpush2.bf16.msra.mxu0 0
      %7078 = vmatprep.subr.bf16.mxu0 0
      %7079 = vmatpush2.bf16.msra.mxu0 0
      %7080 = vmatprep.subr.bf16.mxu0 0
      %7081 = vmatpush2.bf16.msra.mxu0 0
      %7082 = vmatprep.subr.bf16.mxu0 0
      %7083 = vmatpush2.bf16.msra.mxu0 0
      %7084 = vmatprep.subr.bf16.mxu0 0
      %7085 = vmatpush2.bf16.msra.mxu0 0
      %7086 = vmatprep.subr.bf16.mxu0 0
      %7087 = vmatpush2.bf16.msra.mxu0 0
      %7088 = vmatprep.subr.bf16.mxu0 0
      %7089 = vmatpush2.bf16.msra.mxu0 0
      %7090 = vmatprep.mubr.bf16.mxu0 0
      %7091 = vmatmul.mubr.bf16.gmra.mxu0 %v4488
      %v7092 = vpop.f32.mrf.mxu0
      %v7093 = vadd.f32 0.0, %v7092
      %v7094 = vpop.f32.mrf.mxu0
      %v7095 = vpop.f32.mrf.mxu0
      %v7096 = vadd.f32 0.0, %v7095
      %v7097 = vpop.f32.mrf.mxu0
      %7098 = vdwg.mxu0
      %v7099 = vadd.f32 %v6991, %v7093
      %v7100 = vadd.f32 %v6992, %v7096
      %s7101 = scalar_lea.vmem %s3, 1536
      %v7102 = vld [vmem:[%s7101] sm:$0xf]
      %v7103 = vld [vmem:[%s7101 + $0x4] sm:$0xf]
      %v7104 = vld [vmem:[%s7101 + $0x8] sm:$0xf]
      %v7105 = vld [vmem:[%s7101 + $0xc] sm:$0xf]
      %v7106 = vld [vmem:[%s7101 + $0x10] sm:$0xf]
      %v7107 = vld [vmem:[%s7101 + $0x14] sm:$0xf]
      %v7108 = vld [vmem:[%s7101 + $0x18] sm:$0xf]
      %v7109 = vld [vmem:[%s7101 + $0x1c] sm:$0xf]
      %v7110 = vld [vmem:[%s7101 + $0x20] sm:$0xf]
      %v7111 = vld [vmem:[%s7101 + $0x24] sm:$0xf]
      %v7112 = vld [vmem:[%s7101 + $0x28] sm:$0xf]
      %v7113 = vld [vmem:[%s7101 + $0x2c] sm:$0xf]
      %v7114 = vld [vmem:[%s7101 + $0x30] sm:$0xf]
      %v7115 = vld [vmem:[%s7101 + $0x34] sm:$0xf]
      %v7116 = vld [vmem:[%s7101 + $0x38] sm:$0xf]
      %v7117 = vld [vmem:[%s7101 + $0x3c] sm:$0xf]
      %v7134 = vunpack.c.l.b16 %v7102
      %v7135 = vunpack.c.l.b16 %v7103
      %v7136 = vunpack.c.l.b16 %v7104
      %v7137 = vunpack.c.l.b16 %v7105
      %v7138 = vunpack.c.l.b16 %v7106
      %v7139 = vunpack.c.l.b16 %v7107
      %v7140 = vunpack.c.l.b16 %v7108
      %v7141 = vunpack.c.l.b16 %v7109
      %v7142 = vunpack.c.l.b16 %v7110
      %v7143 = vunpack.c.l.b16 %v7111
      %v7144 = vunpack.c.l.b16 %v7112
      %v7145 = vunpack.c.l.b16 %v7113
      %v7146 = vunpack.c.l.b16 %v7114
      %v7147 = vunpack.c.l.b16 %v7115
      %v7148 = vunpack.c.l.b16 %v7116
      %v7149 = vunpack.c.l.b16 %v7117
      %v7150 = vpack.c.b16 %v7135, %v7134
      %v7151 = vpack.c.b16 %v7137, %v7136
      %v7152 = vpack.c.b16 %v7139, %v7138
      %v7153 = vpack.c.b16 %v7141, %v7140
      %v7154 = vpack.c.b16 %v7143, %v7142
      %v7155 = vpack.c.b16 %v7145, %v7144
      %v7156 = vpack.c.b16 %v7147, %v7146
      %v7157 = vpack.c.b16 %v7149, %v7148
      %7166 = vmatprep.subr.bf16.mxu0 0
      %7167 = vmatpush1.bf16.msra.mxu0 %v7157
      %7168 = vmatprep.subr.bf16.mxu0 0
      %7169 = vmatpush1.bf16.msra.mxu0 %v7156
      %7170 = vmatprep.subr.bf16.mxu0 0
      %7171 = vmatpush1.bf16.msra.mxu0 %v7155
      %7172 = vmatprep.subr.bf16.mxu0 0
      %7173 = vmatpush1.bf16.msra.mxu0 %v7154
      %7174 = vmatprep.subr.bf16.mxu0 0
      %7175 = vmatpush1.bf16.msra.mxu0 %v7153
      %7176 = vmatprep.subr.bf16.mxu0 0
      %7177 = vmatpush1.bf16.msra.mxu0 %v7152
      %7178 = vmatprep.subr.bf16.mxu0 0
      %7179 = vmatpush1.bf16.msra.mxu0 %v7151
      %7180 = vmatprep.subr.bf16.mxu0 0
      %7181 = vmatpush1.bf16.msra.mxu0 %v7150
      %7182 = vmatprep.subr.bf16.mxu0 0
      %7183 = vmatpush2.bf16.msra.mxu0 0
      %7184 = vmatprep.subr.bf16.mxu0 0
      %7185 = vmatpush2.bf16.msra.mxu0 0
      %7186 = vmatprep.subr.bf16.mxu0 0
      %7187 = vmatpush2.bf16.msra.mxu0 0
      %7188 = vmatprep.subr.bf16.mxu0 0
      %7189 = vmatpush2.bf16.msra.mxu0 0
      %7190 = vmatprep.subr.bf16.mxu0 0
      %7191 = vmatpush2.bf16.msra.mxu0 0
      %7192 = vmatprep.subr.bf16.mxu0 0
      %7193 = vmatpush2.bf16.msra.mxu0 0
      %7194 = vmatprep.subr.bf16.mxu0 0
      %7195 = vmatpush2.bf16.msra.mxu0 0
      %7196 = vmatprep.subr.bf16.mxu0 0
      %7197 = vmatpush2.bf16.msra.mxu0 0
      %7198 = vmatprep.mubr.bf16.mxu0 0
      %7199 = vmatmul.mubr.bf16.gmra.mxu0 %v4489
      %v7200 = vpop.f32.mrf.mxu0
      %v7201 = vadd.f32 0.0, %v7200
      %v7202 = vpop.f32.mrf.mxu0
      %v7203 = vpop.f32.mrf.mxu0
      %v7204 = vadd.f32 0.0, %v7203
      %v7205 = vpop.f32.mrf.mxu0
      %7206 = vdwg.mxu0
      %v7207 = vadd.f32 %v7099, %v7201
      %v7208 = vadd.f32 %v7100, %v7204
      %s7209 = scalar_lea.vmem %s3, 1600
      %v7210 = vld [vmem:[%s7209] sm:$0xf]
      %v7211 = vld [vmem:[%s7209 + $0x4] sm:$0xf]
      %v7212 = vld [vmem:[%s7209 + $0x8] sm:$0xf]
      %v7213 = vld [vmem:[%s7209 + $0xc] sm:$0xf]
      %v7214 = vld [vmem:[%s7209 + $0x10] sm:$0xf]
      %v7215 = vld [vmem:[%s7209 + $0x14] sm:$0xf]
      %v7216 = vld [vmem:[%s7209 + $0x18] sm:$0xf]
      %v7217 = vld [vmem:[%s7209 + $0x1c] sm:$0xf]
      %v7218 = vld [vmem:[%s7209 + $0x20] sm:$0xf]
      %v7219 = vld [vmem:[%s7209 + $0x24] sm:$0xf]
      %v7220 = vld [vmem:[%s7209 + $0x28] sm:$0xf]
      %v7221 = vld [vmem:[%s7209 + $0x2c] sm:$0xf]
      %v7222 = vld [vmem:[%s7209 + $0x30] sm:$0xf]
      %v7223 = vld [vmem:[%s7209 + $0x34] sm:$0xf]
      %v7224 = vld [vmem:[%s7209 + $0x38] sm:$0xf]
      %v7225 = vld [vmem:[%s7209 + $0x3c] sm:$0xf]
      %v7242 = vunpack.c.l.b16 %v7210
      %v7243 = vunpack.c.l.b16 %v7211
      %v7244 = vunpack.c.l.b16 %v7212
      %v7245 = vunpack.c.l.b16 %v7213
      %v7246 = vunpack.c.l.b16 %v7214
      %v7247 = vunpack.c.l.b16 %v7215
      %v7248 = vunpack.c.l.b16 %v7216
      %v7249 = vunpack.c.l.b16 %v7217
      %v7250 = vunpack.c.l.b16 %v7218
      %v7251 = vunpack.c.l.b16 %v7219
      %v7252 = vunpack.c.l.b16 %v7220
      %v7253 = vunpack.c.l.b16 %v7221
      %v7254 = vunpack.c.l.b16 %v7222
      %v7255 = vunpack.c.l.b16 %v7223
      %v7256 = vunpack.c.l.b16 %v7224
      %v7257 = vunpack.c.l.b16 %v7225
      %v7258 = vpack.c.b16 %v7243, %v7242
      %v7259 = vpack.c.b16 %v7245, %v7244
      %v7260 = vpack.c.b16 %v7247, %v7246
      %v7261 = vpack.c.b16 %v7249, %v7248
      %v7262 = vpack.c.b16 %v7251, %v7250
      %v7263 = vpack.c.b16 %v7253, %v7252
      %v7264 = vpack.c.b16 %v7255, %v7254
      %v7265 = vpack.c.b16 %v7257, %v7256
      %7274 = vmatprep.subr.bf16.mxu0 0
      %7275 = vmatpush1.bf16.msra.mxu0 %v7265
      %7276 = vmatprep.subr.bf16.mxu0 0
      %7277 = vmatpush1.bf16.msra.mxu0 %v7264
      %7278 = vmatprep.subr.bf16.mxu0 0
      %7279 = vmatpush1.bf16.msra.mxu0 %v7263
      %7280 = vmatprep.subr.bf16.mxu0 0
      %7281 = vmatpush1.bf16.msra.mxu0 %v7262
      %7282 = vmatprep.subr.bf16.mxu0 0
      %7283 = vmatpush1.bf16.msra.mxu0 %v7261
      %7284 = vmatprep.subr.bf16.mxu0 0
      %7285 = vmatpush1.bf16.msra.mxu0 %v7260
      %7286 = vmatprep.subr.bf16.mxu0 0
      %7287 = vmatpush1.bf16.msra.mxu0 %v7259
      %7288 = vmatprep.subr.bf16.mxu0 0
      %7289 = vmatpush1.bf16.msra.mxu0 %v7258
      %7290 = vmatprep.subr.bf16.mxu0 0
      %7291 = vmatpush2.bf16.msra.mxu0 0
      %7292 = vmatprep.subr.bf16.mxu0 0
      %7293 = vmatpush2.bf16.msra.mxu0 0
      %7294 = vmatprep.subr.bf16.mxu0 0
      %7295 = vmatpush2.bf16.msra.mxu0 0
      %7296 = vmatprep.subr.bf16.mxu0 0
      %7297 = vmatpush2.bf16.msra.mxu0 0
      %7298 = vmatprep.subr.bf16.mxu0 0
      %7299 = vmatpush2.bf16.msra.mxu0 0
      %7300 = vmatprep.subr.bf16.mxu0 0
      %7301 = vmatpush2.bf16.msra.mxu0 0
      %7302 = vmatprep.subr.bf16.mxu0 0
      %7303 = vmatpush2.bf16.msra.mxu0 0
      %7304 = vmatprep.subr.bf16.mxu0 0
      %7305 = vmatpush2.bf16.msra.mxu0 0
      %7306 = vmatprep.mubr.bf16.mxu0 0
      %7307 = vmatmul.mubr.bf16.gmra.mxu0 %v4490
      %v7308 = vpop.f32.mrf.mxu0
      %v7309 = vadd.f32 0.0, %v7308
      %v7310 = vpop.f32.mrf.mxu0
      %v7311 = vpop.f32.mrf.mxu0
      %v7312 = vadd.f32 0.0, %v7311
      %v7313 = vpop.f32.mrf.mxu0
      %7314 = vdwg.mxu0
      %v7315 = vadd.f32 %v7207, %v7309
      %v7316 = vadd.f32 %v7208, %v7312
      %s7317 = scalar_lea.vmem %s3, 1664
      %v7318 = vld [vmem:[%s7317] sm:$0xf]
      %v7319 = vld [vmem:[%s7317 + $0x4] sm:$0xf]
      %v7320 = vld [vmem:[%s7317 + $0x8] sm:$0xf]
      %v7321 = vld [vmem:[%s7317 + $0xc] sm:$0xf]
      %v7322 = vld [vmem:[%s7317 + $0x10] sm:$0xf]
      %v7323 = vld [vmem:[%s7317 + $0x14] sm:$0xf]
      %v7324 = vld [vmem:[%s7317 + $0x18] sm:$0xf]
      %v7325 = vld [vmem:[%s7317 + $0x1c] sm:$0xf]
      %v7326 = vld [vmem:[%s7317 + $0x20] sm:$0xf]
      %v7327 = vld [vmem:[%s7317 + $0x24] sm:$0xf]
      %v7328 = vld [vmem:[%s7317 + $0x28] sm:$0xf]
      %v7329 = vld [vmem:[%s7317 + $0x2c] sm:$0xf]
      %v7330 = vld [vmem:[%s7317 + $0x30] sm:$0xf]
      %v7331 = vld [vmem:[%s7317 + $0x34] sm:$0xf]
      %v7332 = vld [vmem:[%s7317 + $0x38] sm:$0xf]
      %v7333 = vld [vmem:[%s7317 + $0x3c] sm:$0xf]
      %v7350 = vunpack.c.l.b16 %v7318
      %v7351 = vunpack.c.l.b16 %v7319
      %v7352 = vunpack.c.l.b16 %v7320
      %v7353 = vunpack.c.l.b16 %v7321
      %v7354 = vunpack.c.l.b16 %v7322
      %v7355 = vunpack.c.l.b16 %v7323
      %v7356 = vunpack.c.l.b16 %v7324
      %v7357 = vunpack.c.l.b16 %v7325
      %v7358 = vunpack.c.l.b16 %v7326
      %v7359 = vunpack.c.l.b16 %v7327
      %v7360 = vunpack.c.l.b16 %v7328
      %v7361 = vunpack.c.l.b16 %v7329
      %v7362 = vunpack.c.l.b16 %v7330
      %v7363 = vunpack.c.l.b16 %v7331
      %v7364 = vunpack.c.l.b16 %v7332
      %v7365 = vunpack.c.l.b16 %v7333
      %v7366 = vpack.c.b16 %v7351, %v7350
      %v7367 = vpack.c.b16 %v7353, %v7352
      %v7368 = vpack.c.b16 %v7355, %v7354
      %v7369 = vpack.c.b16 %v7357, %v7356
      %v7370 = vpack.c.b16 %v7359, %v7358
      %v7371 = vpack.c.b16 %v7361, %v7360
      %v7372 = vpack.c.b16 %v7363, %v7362
      %v7373 = vpack.c.b16 %v7365, %v7364
      %7382 = vmatprep.subr.bf16.mxu0 0
      %7383 = vmatpush1.bf16.msra.mxu0 %v7373
      %7384 = vmatprep.subr.bf16.mxu0 0
      %7385 = vmatpush1.bf16.msra.mxu0 %v7372
      %7386 = vmatprep.subr.bf16.mxu0 0
      %7387 = vmatpush1.bf16.msra.mxu0 %v7371
      %7388 = vmatprep.subr.bf16.mxu0 0
      %7389 = vmatpush1.bf16.msra.mxu0 %v7370
      %7390 = vmatprep.subr.bf16.mxu0 0
      %7391 = vmatpush1.bf16.msra.mxu0 %v7369
      %7392 = vmatprep.subr.bf16.mxu0 0
      %7393 = vmatpush1.bf16.msra.mxu0 %v7368
      %7394 = vmatprep.subr.bf16.mxu0 0
      %7395 = vmatpush1.bf16.msra.mxu0 %v7367
      %7396 = vmatprep.subr.bf16.mxu0 0
      %7397 = vmatpush1.bf16.msra.mxu0 %v7366
      %7398 = vmatprep.subr.bf16.mxu0 0
      %7399 = vmatpush2.bf16.msra.mxu0 0
      %7400 = vmatprep.subr.bf16.mxu0 0
      %7401 = vmatpush2.bf16.msra.mxu0 0
      %7402 = vmatprep.subr.bf16.mxu0 0
      %7403 = vmatpush2.bf16.msra.mxu0 0
      %7404 = vmatprep.subr.bf16.mxu0 0
      %7405 = vmatpush2.bf16.msra.mxu0 0
      %7406 = vmatprep.subr.bf16.mxu0 0
      %7407 = vmatpush2.bf16.msra.mxu0 0
      %7408 = vmatprep.subr.bf16.mxu0 0
      %7409 = vmatpush2.bf16.msra.mxu0 0
      %7410 = vmatprep.subr.bf16.mxu0 0
      %7411 = vmatpush2.bf16.msra.mxu0 0
      %7412 = vmatprep.subr.bf16.mxu0 0
      %7413 = vmatpush2.bf16.msra.mxu0 0
      %7414 = vmatprep.mubr.bf16.mxu0 0
      %7415 = vmatmul.mubr.bf16.gmra.mxu0 %v4491
      %v7416 = vpop.f32.mrf.mxu0
      %v7417 = vadd.f32 0.0, %v7416
      %v7418 = vpop.f32.mrf.mxu0
      %v7419 = vpop.f32.mrf.mxu0
      %v7420 = vadd.f32 0.0, %v7419
      %v7421 = vpop.f32.mrf.mxu0
      %7422 = vdwg.mxu0
      %v7423 = vadd.f32 %v7315, %v7417
      %v7424 = vadd.f32 %v7316, %v7420
      %s7425 = scalar_lea.vmem %s3, 1728
      %v7426 = vld [vmem:[%s7425] sm:$0xf]
      %v7427 = vld [vmem:[%s7425 + $0x4] sm:$0xf]
      %v7428 = vld [vmem:[%s7425 + $0x8] sm:$0xf]
      %v7429 = vld [vmem:[%s7425 + $0xc] sm:$0xf]
      %v7430 = vld [vmem:[%s7425 + $0x10] sm:$0xf]
      %v7431 = vld [vmem:[%s7425 + $0x14] sm:$0xf]
      %v7432 = vld [vmem:[%s7425 + $0x18] sm:$0xf]
      %v7433 = vld [vmem:[%s7425 + $0x1c] sm:$0xf]
      %v7434 = vld [vmem:[%s7425 + $0x20] sm:$0xf]
      %v7435 = vld [vmem:[%s7425 + $0x24] sm:$0xf]
      %v7436 = vld [vmem:[%s7425 + $0x28] sm:$0xf]
      %v7437 = vld [vmem:[%s7425 + $0x2c] sm:$0xf]
      %v7438 = vld [vmem:[%s7425 + $0x30] sm:$0xf]
      %v7439 = vld [vmem:[%s7425 + $0x34] sm:$0xf]
      %v7440 = vld [vmem:[%s7425 + $0x38] sm:$0xf]
      %v7441 = vld [vmem:[%s7425 + $0x3c] sm:$0xf]
      %v7458 = vunpack.c.l.b16 %v7426
      %v7459 = vunpack.c.l.b16 %v7427
      %v7460 = vunpack.c.l.b16 %v7428
      %v7461 = vunpack.c.l.b16 %v7429
      %v7462 = vunpack.c.l.b16 %v7430
      %v7463 = vunpack.c.l.b16 %v7431
      %v7464 = vunpack.c.l.b16 %v7432
      %v7465 = vunpack.c.l.b16 %v7433
      %v7466 = vunpack.c.l.b16 %v7434
      %v7467 = vunpack.c.l.b16 %v7435
      %v7468 = vunpack.c.l.b16 %v7436
      %v7469 = vunpack.c.l.b16 %v7437
      %v7470 = vunpack.c.l.b16 %v7438
      %v7471 = vunpack.c.l.b16 %v7439
      %v7472 = vunpack.c.l.b16 %v7440
      %v7473 = vunpack.c.l.b16 %v7441
      %v7474 = vpack.c.b16 %v7459, %v7458
      %v7475 = vpack.c.b16 %v7461, %v7460
      %v7476 = vpack.c.b16 %v7463, %v7462
      %v7477 = vpack.c.b16 %v7465, %v7464
      %v7478 = vpack.c.b16 %v7467, %v7466
      %v7479 = vpack.c.b16 %v7469, %v7468
      %v7480 = vpack.c.b16 %v7471, %v7470
      %v7481 = vpack.c.b16 %v7473, %v7472
      %7490 = vmatprep.subr.bf16.mxu0 0
      %7491 = vmatpush1.bf16.msra.mxu0 %v7481
      %7492 = vmatprep.subr.bf16.mxu0 0
      %7493 = vmatpush1.bf16.msra.mxu0 %v7480
      %7494 = vmatprep.subr.bf16.mxu0 0
      %7495 = vmatpush1.bf16.msra.mxu0 %v7479
      %7496 = vmatprep.subr.bf16.mxu0 0
      %7497 = vmatpush1.bf16.msra.mxu0 %v7478
      %7498 = vmatprep.subr.bf16.mxu0 0
      %7499 = vmatpush1.bf16.msra.mxu0 %v7477
      %7500 = vmatprep.subr.bf16.mxu0 0
      %7501 = vmatpush1.bf16.msra.mxu0 %v7476
      %7502 = vmatprep.subr.bf16.mxu0 0
      %7503 = vmatpush1.bf16.msra.mxu0 %v7475
      %7504 = vmatprep.subr.bf16.mxu0 0
      %7505 = vmatpush1.bf16.msra.mxu0 %v7474
      %7506 = vmatprep.subr.bf16.mxu0 0
      %7507 = vmatpush2.bf16.msra.mxu0 0
      %7508 = vmatprep.subr.bf16.mxu0 0
      %7509 = vmatpush2.bf16.msra.mxu0 0
      %7510 = vmatprep.subr.bf16.mxu0 0
      %7511 = vmatpush2.bf16.msra.mxu0 0
      %7512 = vmatprep.subr.bf16.mxu0 0
      %7513 = vmatpush2.bf16.msra.mxu0 0
      %7514 = vmatprep.subr.bf16.mxu0 0
      %7515 = vmatpush2.bf16.msra.mxu0 0
      %7516 = vmatprep.subr.bf16.mxu0 0
      %7517 = vmatpush2.bf16.msra.mxu0 0
      %7518 = vmatprep.subr.bf16.mxu0 0
      %7519 = vmatpush2.bf16.msra.mxu0 0
      %7520 = vmatprep.subr.bf16.mxu0 0
      %7521 = vmatpush2.bf16.msra.mxu0 0
      %7522 = vmatprep.mubr.bf16.mxu0 0
      %7523 = vmatmul.mubr.bf16.gmra.mxu0 %v4492
      %v7524 = vpop.f32.mrf.mxu0
      %v7525 = vadd.f32 0.0, %v7524
      %v7526 = vpop.f32.mrf.mxu0
      %v7527 = vpop.f32.mrf.mxu0
      %v7528 = vadd.f32 0.0, %v7527
      %v7529 = vpop.f32.mrf.mxu0
      %7530 = vdwg.mxu0
      %v7531 = vadd.f32 %v7423, %v7525
      %v7532 = vadd.f32 %v7424, %v7528
      %s7533 = scalar_lea.vmem %s3, 1792
      %v7534 = vld [vmem:[%s7533] sm:$0xf]
      %v7535 = vld [vmem:[%s7533 + $0x4] sm:$0xf]
      %v7536 = vld [vmem:[%s7533 + $0x8] sm:$0xf]
      %v7537 = vld [vmem:[%s7533 + $0xc] sm:$0xf]
      %v7538 = vld [vmem:[%s7533 + $0x10] sm:$0xf]
      %v7539 = vld [vmem:[%s7533 + $0x14] sm:$0xf]
      %v7540 = vld [vmem:[%s7533 + $0x18] sm:$0xf]
      %v7541 = vld [vmem:[%s7533 + $0x1c] sm:$0xf]
      %v7542 = vld [vmem:[%s7533 + $0x20] sm:$0xf]
      %v7543 = vld [vmem:[%s7533 + $0x24] sm:$0xf]
      %v7544 = vld [vmem:[%s7533 + $0x28] sm:$0xf]
      %v7545 = vld [vmem:[%s7533 + $0x2c] sm:$0xf]
      %v7546 = vld [vmem:[%s7533 + $0x30] sm:$0xf]
      %v7547 = vld [vmem:[%s7533 + $0x34] sm:$0xf]
      %v7548 = vld [vmem:[%s7533 + $0x38] sm:$0xf]
      %v7549 = vld [vmem:[%s7533 + $0x3c] sm:$0xf]
      %v7566 = vunpack.c.l.b16 %v7534
      %v7567 = vunpack.c.l.b16 %v7535
      %v7568 = vunpack.c.l.b16 %v7536
      %v7569 = vunpack.c.l.b16 %v7537
      %v7570 = vunpack.c.l.b16 %v7538
      %v7571 = vunpack.c.l.b16 %v7539
      %v7572 = vunpack.c.l.b16 %v7540
      %v7573 = vunpack.c.l.b16 %v7541
      %v7574 = vunpack.c.l.b16 %v7542
      %v7575 = vunpack.c.l.b16 %v7543
      %v7576 = vunpack.c.l.b16 %v7544
      %v7577 = vunpack.c.l.b16 %v7545
      %v7578 = vunpack.c.l.b16 %v7546
      %v7579 = vunpack.c.l.b16 %v7547
      %v7580 = vunpack.c.l.b16 %v7548
      %v7581 = vunpack.c.l.b16 %v7549
      %v7582 = vpack.c.b16 %v7567, %v7566
      %v7583 = vpack.c.b16 %v7569, %v7568
      %v7584 = vpack.c.b16 %v7571, %v7570
      %v7585 = vpack.c.b16 %v7573, %v7572
      %v7586 = vpack.c.b16 %v7575, %v7574
      %v7587 = vpack.c.b16 %v7577, %v7576
      %v7588 = vpack.c.b16 %v7579, %v7578
      %v7589 = vpack.c.b16 %v7581, %v7580
      %7598 = vmatprep.subr.bf16.mxu0 0
      %7599 = vmatpush1.bf16.msra.mxu0 %v7589
      %7600 = vmatprep.subr.bf16.mxu0 0
      %7601 = vmatpush1.bf16.msra.mxu0 %v7588
      %7602 = vmatprep.subr.bf16.mxu0 0
      %7603 = vmatpush1.bf16.msra.mxu0 %v7587
      %7604 = vmatprep.subr.bf16.mxu0 0
      %7605 = vmatpush1.bf16.msra.mxu0 %v7586
      %7606 = vmatprep.subr.bf16.mxu0 0
      %7607 = vmatpush1.bf16.msra.mxu0 %v7585
      %7608 = vmatprep.subr.bf16.mxu0 0
      %7609 = vmatpush1.bf16.msra.mxu0 %v7584
      %7610 = vmatprep.subr.bf16.mxu0 0
      %7611 = vmatpush1.bf16.msra.mxu0 %v7583
      %7612 = vmatprep.subr.bf16.mxu0 0
      %7613 = vmatpush1.bf16.msra.mxu0 %v7582
      %7614 = vmatprep.subr.bf16.mxu0 0
      %7615 = vmatpush2.bf16.msra.mxu0 0
      %7616 = vmatprep.subr.bf16.mxu0 0
      %7617 = vmatpush2.bf16.msra.mxu0 0
      %7618 = vmatprep.subr.bf16.mxu0 0
      %7619 = vmatpush2.bf16.msra.mxu0 0
      %7620 = vmatprep.subr.bf16.mxu0 0
      %7621 = vmatpush2.bf16.msra.mxu0 0
      %7622 = vmatprep.subr.bf16.mxu0 0
      %7623 = vmatpush2.bf16.msra.mxu0 0
      %7624 = vmatprep.subr.bf16.mxu0 0
      %7625 = vmatpush2.bf16.msra.mxu0 0
      %7626 = vmatprep.subr.bf16.mxu0 0
      %7627 = vmatpush2.bf16.msra.mxu0 0
      %7628 = vmatprep.subr.bf16.mxu0 0
      %7629 = vmatpush2.bf16.msra.mxu0 0
      %7630 = vmatprep.mubr.bf16.mxu0 0
      %7631 = vmatmul.mubr.bf16.gmra.mxu0 %v4493
      %v7632 = vpop.f32.mrf.mxu0
      %v7633 = vadd.f32 0.0, %v7632
      %v7634 = vpop.f32.mrf.mxu0
      %v7635 = vpop.f32.mrf.mxu0
      %v7636 = vadd.f32 0.0, %v7635
      %v7637 = vpop.f32.mrf.mxu0
      %7638 = vdwg.mxu0
      %v7639 = vadd.f32 %v7531, %v7633
      %v7640 = vadd.f32 %v7532, %v7636
      %s7641 = scalar_lea.vmem %s3, 1856
      %v7642 = vld [vmem:[%s7641] sm:$0xf]
      %v7643 = vld [vmem:[%s7641 + $0x4] sm:$0xf]
      %v7644 = vld [vmem:[%s7641 + $0x8] sm:$0xf]
      %v7645 = vld [vmem:[%s7641 + $0xc] sm:$0xf]
      %v7646 = vld [vmem:[%s7641 + $0x10] sm:$0xf]
      %v7647 = vld [vmem:[%s7641 + $0x14] sm:$0xf]
      %v7648 = vld [vmem:[%s7641 + $0x18] sm:$0xf]
      %v7649 = vld [vmem:[%s7641 + $0x1c] sm:$0xf]
      %v7650 = vld [vmem:[%s7641 + $0x20] sm:$0xf]
      %v7651 = vld [vmem:[%s7641 + $0x24] sm:$0xf]
      %v7652 = vld [vmem:[%s7641 + $0x28] sm:$0xf]
      %v7653 = vld [vmem:[%s7641 + $0x2c] sm:$0xf]
      %v7654 = vld [vmem:[%s7641 + $0x30] sm:$0xf]
      %v7655 = vld [vmem:[%s7641 + $0x34] sm:$0xf]
      %v7656 = vld [vmem:[%s7641 + $0x38] sm:$0xf]
      %v7657 = vld [vmem:[%s7641 + $0x3c] sm:$0xf]
      %v7674 = vunpack.c.l.b16 %v7642
      %v7675 = vunpack.c.l.b16 %v7643
      %v7676 = vunpack.c.l.b16 %v7644
      %v7677 = vunpack.c.l.b16 %v7645
      %v7678 = vunpack.c.l.b16 %v7646
      %v7679 = vunpack.c.l.b16 %v7647
      %v7680 = vunpack.c.l.b16 %v7648
      %v7681 = vunpack.c.l.b16 %v7649
      %v7682 = vunpack.c.l.b16 %v7650
      %v7683 = vunpack.c.l.b16 %v7651
      %v7684 = vunpack.c.l.b16 %v7652
      %v7685 = vunpack.c.l.b16 %v7653
      %v7686 = vunpack.c.l.b16 %v7654
      %v7687 = vunpack.c.l.b16 %v7655
      %v7688 = vunpack.c.l.b16 %v7656
      %v7689 = vunpack.c.l.b16 %v7657
      %v7690 = vpack.c.b16 %v7675, %v7674
      %v7691 = vpack.c.b16 %v7677, %v7676
      %v7692 = vpack.c.b16 %v7679, %v7678
      %v7693 = vpack.c.b16 %v7681, %v7680
      %v7694 = vpack.c.b16 %v7683, %v7682
      %v7695 = vpack.c.b16 %v7685, %v7684
      %v7696 = vpack.c.b16 %v7687, %v7686
      %v7697 = vpack.c.b16 %v7689, %v7688
      %7706 = vmatprep.subr.bf16.mxu0 0
      %7707 = vmatpush1.bf16.msra.mxu0 %v7697
      %7708 = vmatprep.subr.bf16.mxu0 0
      %7709 = vmatpush1.bf16.msra.mxu0 %v7696
      %7710 = vmatprep.subr.bf16.mxu0 0
      %7711 = vmatpush1.bf16.msra.mxu0 %v7695
      %7712 = vmatprep.subr.bf16.mxu0 0
      %7713 = vmatpush1.bf16.msra.mxu0 %v7694
      %7714 = vmatprep.subr.bf16.mxu0 0
      %7715 = vmatpush1.bf16.msra.mxu0 %v7693
      %7716 = vmatprep.subr.bf16.mxu0 0
      %7717 = vmatpush1.bf16.msra.mxu0 %v7692
      %7718 = vmatprep.subr.bf16.mxu0 0
      %7719 = vmatpush1.bf16.msra.mxu0 %v7691
      %7720 = vmatprep.subr.bf16.mxu0 0
      %7721 = vmatpush1.bf16.msra.mxu0 %v7690
      %7722 = vmatprep.subr.bf16.mxu0 0
      %7723 = vmatpush2.bf16.msra.mxu0 0
      %7724 = vmatprep.subr.bf16.mxu0 0
      %7725 = vmatpush2.bf16.msra.mxu0 0
      %7726 = vmatprep.subr.bf16.mxu0 0
      %7727 = vmatpush2.bf16.msra.mxu0 0
      %7728 = vmatprep.subr.bf16.mxu0 0
      %7729 = vmatpush2.bf16.msra.mxu0 0
      %7730 = vmatprep.subr.bf16.mxu0 0
      %7731 = vmatpush2.bf16.msra.mxu0 0
      %7732 = vmatprep.subr.bf16.mxu0 0
      %7733 = vmatpush2.bf16.msra.mxu0 0
      %7734 = vmatprep.subr.bf16.mxu0 0
      %7735 = vmatpush2.bf16.msra.mxu0 0
      %7736 = vmatprep.subr.bf16.mxu0 0
      %7737 = vmatpush2.bf16.msra.mxu0 0
      %7738 = vmatprep.mubr.bf16.mxu0 0
      %7739 = vmatmul.mubr.bf16.gmra.mxu0 %v4494
      %v7740 = vpop.f32.mrf.mxu0
      %v7741 = vadd.f32 0.0, %v7740
      %v7742 = vpop.f32.mrf.mxu0
      %v7743 = vpop.f32.mrf.mxu0
      %v7744 = vadd.f32 0.0, %v7743
      %v7745 = vpop.f32.mrf.mxu0
      %7746 = vdwg.mxu0
      %v7747 = vadd.f32 %v7639, %v7741
      %v7748 = vadd.f32 %v7640, %v7744
      %s7749 = scalar_lea.vmem %s3, 1920
      %v7750 = vld [vmem:[%s7749] sm:$0xf]
      %v7751 = vld [vmem:[%s7749 + $0x4] sm:$0xf]
      %v7752 = vld [vmem:[%s7749 + $0x8] sm:$0xf]
      %v7753 = vld [vmem:[%s7749 + $0xc] sm:$0xf]
      %v7754 = vld [vmem:[%s7749 + $0x10] sm:$0xf]
      %v7755 = vld [vmem:[%s7749 + $0x14] sm:$0xf]
      %v7756 = vld [vmem:[%s7749 + $0x18] sm:$0xf]
      %v7757 = vld [vmem:[%s7749 + $0x1c] sm:$0xf]
      %v7758 = vld [vmem:[%s7749 + $0x20] sm:$0xf]
      %v7759 = vld [vmem:[%s7749 + $0x24] sm:$0xf]
      %v7760 = vld [vmem:[%s7749 + $0x28] sm:$0xf]
      %v7761 = vld [vmem:[%s7749 + $0x2c] sm:$0xf]
      %v7762 = vld [vmem:[%s7749 + $0x30] sm:$0xf]
      %v7763 = vld [vmem:[%s7749 + $0x34] sm:$0xf]
      %v7764 = vld [vmem:[%s7749 + $0x38] sm:$0xf]
      %v7765 = vld [vmem:[%s7749 + $0x3c] sm:$0xf]
      %v7782 = vunpack.c.l.b16 %v7750
      %v7783 = vunpack.c.l.b16 %v7751
      %v7784 = vunpack.c.l.b16 %v7752
      %v7785 = vunpack.c.l.b16 %v7753
      %v7786 = vunpack.c.l.b16 %v7754
      %v7787 = vunpack.c.l.b16 %v7755
      %v7788 = vunpack.c.l.b16 %v7756
      %v7789 = vunpack.c.l.b16 %v7757
      %v7790 = vunpack.c.l.b16 %v7758
      %v7791 = vunpack.c.l.b16 %v7759
      %v7792 = vunpack.c.l.b16 %v7760
      %v7793 = vunpack.c.l.b16 %v7761
      %v7794 = vunpack.c.l.b16 %v7762
      %v7795 = vunpack.c.l.b16 %v7763
      %v7796 = vunpack.c.l.b16 %v7764
      %v7797 = vunpack.c.l.b16 %v7765
      %v7798 = vpack.c.b16 %v7783, %v7782
      %v7799 = vpack.c.b16 %v7785, %v7784
      %v7800 = vpack.c.b16 %v7787, %v7786
      %v7801 = vpack.c.b16 %v7789, %v7788
      %v7802 = vpack.c.b16 %v7791, %v7790
      %v7803 = vpack.c.b16 %v7793, %v7792
      %v7804 = vpack.c.b16 %v7795, %v7794
      %v7805 = vpack.c.b16 %v7797, %v7796
      %7814 = vmatprep.subr.bf16.mxu0 0
      %7815 = vmatpush1.bf16.msra.mxu0 %v7805
      %7816 = vmatprep.subr.bf16.mxu0 0
      %7817 = vmatpush1.bf16.msra.mxu0 %v7804
      %7818 = vmatprep.subr.bf16.mxu0 0
      %7819 = vmatpush1.bf16.msra.mxu0 %v7803
      %7820 = vmatprep.subr.bf16.mxu0 0
      %7821 = vmatpush1.bf16.msra.mxu0 %v7802
      %7822 = vmatprep.subr.bf16.mxu0 0
      %7823 = vmatpush1.bf16.msra.mxu0 %v7801
      %7824 = vmatprep.subr.bf16.mxu0 0
      %7825 = vmatpush1.bf16.msra.mxu0 %v7800
      %7826 = vmatprep.subr.bf16.mxu0 0
      %7827 = vmatpush1.bf16.msra.mxu0 %v7799
      %7828 = vmatprep.subr.bf16.mxu0 0
      %7829 = vmatpush1.bf16.msra.mxu0 %v7798
      %7830 = vmatprep.subr.bf16.mxu0 0
      %7831 = vmatpush2.bf16.msra.mxu0 0
      %7832 = vmatprep.subr.bf16.mxu0 0
      %7833 = vmatpush2.bf16.msra.mxu0 0
      %7834 = vmatprep.subr.bf16.mxu0 0
      %7835 = vmatpush2.bf16.msra.mxu0 0
      %7836 = vmatprep.subr.bf16.mxu0 0
      %7837 = vmatpush2.bf16.msra.mxu0 0
      %7838 = vmatprep.subr.bf16.mxu0 0
      %7839 = vmatpush2.bf16.msra.mxu0 0
      %7840 = vmatprep.subr.bf16.mxu0 0
      %7841 = vmatpush2.bf16.msra.mxu0 0
      %7842 = vmatprep.subr.bf16.mxu0 0
      %7843 = vmatpush2.bf16.msra.mxu0 0
      %7844 = vmatprep.subr.bf16.mxu0 0
      %7845 = vmatpush2.bf16.msra.mxu0 0
      %7846 = vmatprep.mubr.bf16.mxu0 0
      %7847 = vmatmul.mubr.bf16.gmra.mxu0 %v4495
      %v7848 = vpop.f32.mrf.mxu0
      %v7849 = vadd.f32 0.0, %v7848
      %v7850 = vpop.f32.mrf.mxu0
      %v7851 = vpop.f32.mrf.mxu0
      %v7852 = vadd.f32 0.0, %v7851
      %v7853 = vpop.f32.mrf.mxu0
      %7854 = vdwg.mxu0
      %v7855 = vadd.f32 %v7747, %v7849
      %v7856 = vadd.f32 %v7748, %v7852
      %s7857 = scalar_lea.vmem %s3, 1984
      %v7858 = vld [vmem:[%s7857] sm:$0xf]
      %v7859 = vld [vmem:[%s7857 + $0x4] sm:$0xf]
      %v7860 = vld [vmem:[%s7857 + $0x8] sm:$0xf]
      %v7861 = vld [vmem:[%s7857 + $0xc] sm:$0xf]
      %v7862 = vld [vmem:[%s7857 + $0x10] sm:$0xf]
      %v7863 = vld [vmem:[%s7857 + $0x14] sm:$0xf]
      %v7864 = vld [vmem:[%s7857 + $0x18] sm:$0xf]
      %v7865 = vld [vmem:[%s7857 + $0x1c] sm:$0xf]
      %v7866 = vld [vmem:[%s7857 + $0x20] sm:$0xf]
      %v7867 = vld [vmem:[%s7857 + $0x24] sm:$0xf]
      %v7868 = vld [vmem:[%s7857 + $0x28] sm:$0xf]
      %v7869 = vld [vmem:[%s7857 + $0x2c] sm:$0xf]
      %v7870 = vld [vmem:[%s7857 + $0x30] sm:$0xf]
      %v7871 = vld [vmem:[%s7857 + $0x34] sm:$0xf]
      %v7872 = vld [vmem:[%s7857 + $0x38] sm:$0xf]
      %v7873 = vld [vmem:[%s7857 + $0x3c] sm:$0xf]
      %v7890 = vunpack.c.l.b16 %v7858
      %v7891 = vunpack.c.l.b16 %v7859
      %v7892 = vunpack.c.l.b16 %v7860
      %v7893 = vunpack.c.l.b16 %v7861
      %v7894 = vunpack.c.l.b16 %v7862
      %v7895 = vunpack.c.l.b16 %v7863
      %v7896 = vunpack.c.l.b16 %v7864
      %v7897 = vunpack.c.l.b16 %v7865
      %v7898 = vunpack.c.l.b16 %v7866
      %v7899 = vunpack.c.l.b16 %v7867
      %v7900 = vunpack.c.l.b16 %v7868
      %v7901 = vunpack.c.l.b16 %v7869
      %v7902 = vunpack.c.l.b16 %v7870
      %v7903 = vunpack.c.l.b16 %v7871
      %v7904 = vunpack.c.l.b16 %v7872
      %v7905 = vunpack.c.l.b16 %v7873
      %v7906 = vpack.c.b16 %v7891, %v7890
      %v7907 = vpack.c.b16 %v7893, %v7892
      %v7908 = vpack.c.b16 %v7895, %v7894
      %v7909 = vpack.c.b16 %v7897, %v7896
      %v7910 = vpack.c.b16 %v7899, %v7898
      %v7911 = vpack.c.b16 %v7901, %v7900
      %v7912 = vpack.c.b16 %v7903, %v7902
      %v7913 = vpack.c.b16 %v7905, %v7904
      %7922 = vmatprep.subr.bf16.mxu0 0
      %7923 = vmatpush1.bf16.msra.mxu0 %v7913
      %7924 = vmatprep.subr.bf16.mxu0 0
      %7925 = vmatpush1.bf16.msra.mxu0 %v7912
      %7926 = vmatprep.subr.bf16.mxu0 0
      %7927 = vmatpush1.bf16.msra.mxu0 %v7911
      %7928 = vmatprep.subr.bf16.mxu0 0
      %7929 = vmatpush1.bf16.msra.mxu0 %v7910
      %7930 = vmatprep.subr.bf16.mxu0 0
      %7931 = vmatpush1.bf16.msra.mxu0 %v7909
      %7932 = vmatprep.subr.bf16.mxu0 0
      %7933 = vmatpush1.bf16.msra.mxu0 %v7908
      %7934 = vmatprep.subr.bf16.mxu0 0
      %7935 = vmatpush1.bf16.msra.mxu0 %v7907
      %7936 = vmatprep.subr.bf16.mxu0 0
      %7937 = vmatpush1.bf16.msra.mxu0 %v7906
      %7938 = vmatprep.subr.bf16.mxu0 0
      %7939 = vmatpush2.bf16.msra.mxu0 0
      %7940 = vmatprep.subr.bf16.mxu0 0
      %7941 = vmatpush2.bf16.msra.mxu0 0
      %7942 = vmatprep.subr.bf16.mxu0 0
      %7943 = vmatpush2.bf16.msra.mxu0 0
      %7944 = vmatprep.subr.bf16.mxu0 0
      %7945 = vmatpush2.bf16.msra.mxu0 0
      %7946 = vmatprep.subr.bf16.mxu0 0
      %7947 = vmatpush2.bf16.msra.mxu0 0
      %7948 = vmatprep.subr.bf16.mxu0 0
      %7949 = vmatpush2.bf16.msra.mxu0 0
      %7950 = vmatprep.subr.bf16.mxu0 0
      %7951 = vmatpush2.bf16.msra.mxu0 0
      %7952 = vmatprep.subr.bf16.mxu0 0
      %7953 = vmatpush2.bf16.msra.mxu0 0
      %7954 = vmatprep.mubr.bf16.mxu0 0
      %7955 = vmatmul.mubr.bf16.gmra.mxu0 %v4496
      %v7956 = vpop.f32.mrf.mxu0
      %v7957 = vadd.f32 0.0, %v7956
      %v7958 = vpop.f32.mrf.mxu0
      %v7959 = vpop.f32.mrf.mxu0
      %v7960 = vadd.f32 0.0, %v7959
      %v7961 = vpop.f32.mrf.mxu0
      %7962 = vdwg.mxu0
      %v7963 = vadd.f32 %v7855, %v7957
      %v7964 = vadd.f32 %v7856, %v7960
      %s7965 = scalar_lea.vmem %s3, 2048
      %v7966 = vld [vmem:[%s7965] sm:$0xf]
      %v7967 = vld [vmem:[%s7965 + $0x4] sm:$0xf]
      %v7968 = vld [vmem:[%s7965 + $0x8] sm:$0xf]
      %v7969 = vld [vmem:[%s7965 + $0xc] sm:$0xf]
      %v7970 = vld [vmem:[%s7965 + $0x10] sm:$0xf]
      %v7971 = vld [vmem:[%s7965 + $0x14] sm:$0xf]
      %v7972 = vld [vmem:[%s7965 + $0x18] sm:$0xf]
      %v7973 = vld [vmem:[%s7965 + $0x1c] sm:$0xf]
      %v7974 = vld [vmem:[%s7965 + $0x20] sm:$0xf]
      %v7975 = vld [vmem:[%s7965 + $0x24] sm:$0xf]
      %v7976 = vld [vmem:[%s7965 + $0x28] sm:$0xf]
      %v7977 = vld [vmem:[%s7965 + $0x2c] sm:$0xf]
      %v7978 = vld [vmem:[%s7965 + $0x30] sm:$0xf]
      %v7979 = vld [vmem:[%s7965 + $0x34] sm:$0xf]
      %v7980 = vld [vmem:[%s7965 + $0x38] sm:$0xf]
      %v7981 = vld [vmem:[%s7965 + $0x3c] sm:$0xf]
      %v7998 = vunpack.c.l.b16 %v7966
      %v7999 = vunpack.c.l.b16 %v7967
      %v8000 = vunpack.c.l.b16 %v7968
      %v8001 = vunpack.c.l.b16 %v7969
      %v8002 = vunpack.c.l.b16 %v7970
      %v8003 = vunpack.c.l.b16 %v7971
      %v8004 = vunpack.c.l.b16 %v7972
      %v8005 = vunpack.c.l.b16 %v7973
      %v8006 = vunpack.c.l.b16 %v7974
      %v8007 = vunpack.c.l.b16 %v7975
      %v8008 = vunpack.c.l.b16 %v7976
      %v8009 = vunpack.c.l.b16 %v7977
      %v8010 = vunpack.c.l.b16 %v7978
      %v8011 = vunpack.c.l.b16 %v7979
      %v8012 = vunpack.c.l.b16 %v7980
      %v8013 = vunpack.c.l.b16 %v7981
      %v8014 = vpack.c.b16 %v7999, %v7998
      %v8015 = vpack.c.b16 %v8001, %v8000
      %v8016 = vpack.c.b16 %v8003, %v8002
      %v8017 = vpack.c.b16 %v8005, %v8004
      %v8018 = vpack.c.b16 %v8007, %v8006
      %v8019 = vpack.c.b16 %v8009, %v8008
      %v8020 = vpack.c.b16 %v8011, %v8010
      %v8021 = vpack.c.b16 %v8013, %v8012
      %8030 = vmatprep.subr.bf16.mxu0 0
      %8031 = vmatpush1.bf16.msra.mxu0 %v8021
      %8032 = vmatprep.subr.bf16.mxu0 0
      %8033 = vmatpush1.bf16.msra.mxu0 %v8020
      %8034 = vmatprep.subr.bf16.mxu0 0
      %8035 = vmatpush1.bf16.msra.mxu0 %v8019
      %8036 = vmatprep.subr.bf16.mxu0 0
      %8037 = vmatpush1.bf16.msra.mxu0 %v8018
      %8038 = vmatprep.subr.bf16.mxu0 0
      %8039 = vmatpush1.bf16.msra.mxu0 %v8017
      %8040 = vmatprep.subr.bf16.mxu0 0
      %8041 = vmatpush1.bf16.msra.mxu0 %v8016
      %8042 = vmatprep.subr.bf16.mxu0 0
      %8043 = vmatpush1.bf16.msra.mxu0 %v8015
      %8044 = vmatprep.subr.bf16.mxu0 0
      %8045 = vmatpush1.bf16.msra.mxu0 %v8014
      %8046 = vmatprep.subr.bf16.mxu0 0
      %8047 = vmatpush2.bf16.msra.mxu0 0
      %8048 = vmatprep.subr.bf16.mxu0 0
      %8049 = vmatpush2.bf16.msra.mxu0 0
      %8050 = vmatprep.subr.bf16.mxu0 0
      %8051 = vmatpush2.bf16.msra.mxu0 0
      %8052 = vmatprep.subr.bf16.mxu0 0
      %8053 = vmatpush2.bf16.msra.mxu0 0
      %8054 = vmatprep.subr.bf16.mxu0 0
      %8055 = vmatpush2.bf16.msra.mxu0 0
      %8056 = vmatprep.subr.bf16.mxu0 0
      %8057 = vmatpush2.bf16.msra.mxu0 0
      %8058 = vmatprep.subr.bf16.mxu0 0
      %8059 = vmatpush2.bf16.msra.mxu0 0
      %8060 = vmatprep.subr.bf16.mxu0 0
      %8061 = vmatpush2.bf16.msra.mxu0 0
      %8062 = vmatprep.mubr.bf16.mxu0 0
      %8063 = vmatmul.mubr.bf16.gmra.mxu0 %v4497
      %v8064 = vpop.f32.mrf.mxu0
      %v8065 = vadd.f32 0.0, %v8064
      %v8066 = vpop.f32.mrf.mxu0
      %v8067 = vpop.f32.mrf.mxu0
      %v8068 = vadd.f32 0.0, %v8067
      %v8069 = vpop.f32.mrf.mxu0
      %8070 = vdwg.mxu0
      %v8071 = vadd.f32 %v7963, %v8065
      %v8072 = vadd.f32 %v7964, %v8068
      %s8073 = scalar_lea.vmem %s3, 2112
      %v8074 = vld [vmem:[%s8073] sm:$0xf]
      %v8075 = vld [vmem:[%s8073 + $0x4] sm:$0xf]
      %v8076 = vld [vmem:[%s8073 + $0x8] sm:$0xf]
      %v8077 = vld [vmem:[%s8073 + $0xc] sm:$0xf]
      %v8078 = vld [vmem:[%s8073 + $0x10] sm:$0xf]
      %v8079 = vld [vmem:[%s8073 + $0x14] sm:$0xf]
      %v8080 = vld [vmem:[%s8073 + $0x18] sm:$0xf]
      %v8081 = vld [vmem:[%s8073 + $0x1c] sm:$0xf]
      %v8082 = vld [vmem:[%s8073 + $0x20] sm:$0xf]
      %v8083 = vld [vmem:[%s8073 + $0x24] sm:$0xf]
      %v8084 = vld [vmem:[%s8073 + $0x28] sm:$0xf]
      %v8085 = vld [vmem:[%s8073 + $0x2c] sm:$0xf]
      %v8086 = vld [vmem:[%s8073 + $0x30] sm:$0xf]
      %v8087 = vld [vmem:[%s8073 + $0x34] sm:$0xf]
      %v8088 = vld [vmem:[%s8073 + $0x38] sm:$0xf]
      %v8089 = vld [vmem:[%s8073 + $0x3c] sm:$0xf]
      %v8106 = vunpack.c.l.b16 %v8074
      %v8107 = vunpack.c.l.b16 %v8075
      %v8108 = vunpack.c.l.b16 %v8076
      %v8109 = vunpack.c.l.b16 %v8077
      %v8110 = vunpack.c.l.b16 %v8078
      %v8111 = vunpack.c.l.b16 %v8079
      %v8112 = vunpack.c.l.b16 %v8080
      %v8113 = vunpack.c.l.b16 %v8081
      %v8114 = vunpack.c.l.b16 %v8082
      %v8115 = vunpack.c.l.b16 %v8083
      %v8116 = vunpack.c.l.b16 %v8084
      %v8117 = vunpack.c.l.b16 %v8085
      %v8118 = vunpack.c.l.b16 %v8086
      %v8119 = vunpack.c.l.b16 %v8087
      %v8120 = vunpack.c.l.b16 %v8088
      %v8121 = vunpack.c.l.b16 %v8089
      %v8122 = vpack.c.b16 %v8107, %v8106
      %v8123 = vpack.c.b16 %v8109, %v8108
      %v8124 = vpack.c.b16 %v8111, %v8110
      %v8125 = vpack.c.b16 %v8113, %v8112
      %v8126 = vpack.c.b16 %v8115, %v8114
      %v8127 = vpack.c.b16 %v8117, %v8116
      %v8128 = vpack.c.b16 %v8119, %v8118
      %v8129 = vpack.c.b16 %v8121, %v8120
      %8138 = vmatprep.subr.bf16.mxu0 0
      %8139 = vmatpush1.bf16.msra.mxu0 %v8129
      %8140 = vmatprep.subr.bf16.mxu0 0
      %8141 = vmatpush1.bf16.msra.mxu0 %v8128
      %8142 = vmatprep.subr.bf16.mxu0 0
      %8143 = vmatpush1.bf16.msra.mxu0 %v8127
      %8144 = vmatprep.subr.bf16.mxu0 0
      %8145 = vmatpush1.bf16.msra.mxu0 %v8126
      %8146 = vmatprep.subr.bf16.mxu0 0
      %8147 = vmatpush1.bf16.msra.mxu0 %v8125
      %8148 = vmatprep.subr.bf16.mxu0 0
      %8149 = vmatpush1.bf16.msra.mxu0 %v8124
      %8150 = vmatprep.subr.bf16.mxu0 0
      %8151 = vmatpush1.bf16.msra.mxu0 %v8123
      %8152 = vmatprep.subr.bf16.mxu0 0
      %8153 = vmatpush1.bf16.msra.mxu0 %v8122
      %8154 = vmatprep.subr.bf16.mxu0 0
      %8155 = vmatpush2.bf16.msra.mxu0 0
      %8156 = vmatprep.subr.bf16.mxu0 0
      %8157 = vmatpush2.bf16.msra.mxu0 0
      %8158 = vmatprep.subr.bf16.mxu0 0
      %8159 = vmatpush2.bf16.msra.mxu0 0
      %8160 = vmatprep.subr.bf16.mxu0 0
      %8161 = vmatpush2.bf16.msra.mxu0 0
      %8162 = vmatprep.subr.bf16.mxu0 0
      %8163 = vmatpush2.bf16.msra.mxu0 0
      %8164 = vmatprep.subr.bf16.mxu0 0
      %8165 = vmatpush2.bf16.msra.mxu0 0
      %8166 = vmatprep.subr.bf16.mxu0 0
      %8167 = vmatpush2.bf16.msra.mxu0 0
      %8168 = vmatprep.subr.bf16.mxu0 0
      %8169 = vmatpush2.bf16.msra.mxu0 0
      %8170 = vmatprep.mubr.bf16.mxu0 0
      %8171 = vmatmul.mubr.bf16.gmra.mxu0 %v4498
      %v8172 = vpop.f32.mrf.mxu0
      %v8173 = vadd.f32 0.0, %v8172
      %v8174 = vpop.f32.mrf.mxu0
      %v8175 = vpop.f32.mrf.mxu0
      %v8176 = vadd.f32 0.0, %v8175
      %v8177 = vpop.f32.mrf.mxu0
      %8178 = vdwg.mxu0
      %v8179 = vadd.f32 %v8071, %v8173
      %v8180 = vadd.f32 %v8072, %v8176
      %s8181 = scalar_lea.vmem %s3, 2176
      %v8182 = vld [vmem:[%s8181] sm:$0xf]
      %v8183 = vld [vmem:[%s8181 + $0x4] sm:$0xf]
      %v8184 = vld [vmem:[%s8181 + $0x8] sm:$0xf]
      %v8185 = vld [vmem:[%s8181 + $0xc] sm:$0xf]
      %v8186 = vld [vmem:[%s8181 + $0x10] sm:$0xf]
      %v8187 = vld [vmem:[%s8181 + $0x14] sm:$0xf]
      %v8188 = vld [vmem:[%s8181 + $0x18] sm:$0xf]
      %v8189 = vld [vmem:[%s8181 + $0x1c] sm:$0xf]
      %v8190 = vld [vmem:[%s8181 + $0x20] sm:$0xf]
      %v8191 = vld [vmem:[%s8181 + $0x24] sm:$0xf]
      %v8192 = vld [vmem:[%s8181 + $0x28] sm:$0xf]
      %v8193 = vld [vmem:[%s8181 + $0x2c] sm:$0xf]
      %v8194 = vld [vmem:[%s8181 + $0x30] sm:$0xf]
      %v8195 = vld [vmem:[%s8181 + $0x34] sm:$0xf]
      %v8196 = vld [vmem:[%s8181 + $0x38] sm:$0xf]
      %v8197 = vld [vmem:[%s8181 + $0x3c] sm:$0xf]
      %v8214 = vunpack.c.l.b16 %v8182
      %v8215 = vunpack.c.l.b16 %v8183
      %v8216 = vunpack.c.l.b16 %v8184
      %v8217 = vunpack.c.l.b16 %v8185
      %v8218 = vunpack.c.l.b16 %v8186
      %v8219 = vunpack.c.l.b16 %v8187
      %v8220 = vunpack.c.l.b16 %v8188
      %v8221 = vunpack.c.l.b16 %v8189
      %v8222 = vunpack.c.l.b16 %v8190
      %v8223 = vunpack.c.l.b16 %v8191
      %v8224 = vunpack.c.l.b16 %v8192
      %v8225 = vunpack.c.l.b16 %v8193
      %v8226 = vunpack.c.l.b16 %v8194
      %v8227 = vunpack.c.l.b16 %v8195
      %v8228 = vunpack.c.l.b16 %v8196
      %v8229 = vunpack.c.l.b16 %v8197
      %v8230 = vpack.c.b16 %v8215, %v8214
      %v8231 = vpack.c.b16 %v8217, %v8216
      %v8232 = vpack.c.b16 %v8219, %v8218
      %v8233 = vpack.c.b16 %v8221, %v8220
      %v8234 = vpack.c.b16 %v8223, %v8222
      %v8235 = vpack.c.b16 %v8225, %v8224
      %v8236 = vpack.c.b16 %v8227, %v8226
      %v8237 = vpack.c.b16 %v8229, %v8228
      %8246 = vmatprep.subr.bf16.mxu0 0
      %8247 = vmatpush1.bf16.msra.mxu0 %v8237
      %8248 = vmatprep.subr.bf16.mxu0 0
      %8249 = vmatpush1.bf16.msra.mxu0 %v8236
      %8250 = vmatprep.subr.bf16.mxu0 0
      %8251 = vmatpush1.bf16.msra.mxu0 %v8235
      %8252 = vmatprep.subr.bf16.mxu0 0
      %8253 = vmatpush1.bf16.msra.mxu0 %v8234
      %8254 = vmatprep.subr.bf16.mxu0 0
      %8255 = vmatpush1.bf16.msra.mxu0 %v8233
      %8256 = vmatprep.subr.bf16.mxu0 0
      %8257 = vmatpush1.bf16.msra.mxu0 %v8232
      %8258 = vmatprep.subr.bf16.mxu0 0
      %8259 = vmatpush1.bf16.msra.mxu0 %v8231
      %8260 = vmatprep.subr.bf16.mxu0 0
      %8261 = vmatpush1.bf16.msra.mxu0 %v8230
      %8262 = vmatprep.subr.bf16.mxu0 0
      %8263 = vmatpush2.bf16.msra.mxu0 0
      %8264 = vmatprep.subr.bf16.mxu0 0
      %8265 = vmatpush2.bf16.msra.mxu0 0
      %8266 = vmatprep.subr.bf16.mxu0 0
      %8267 = vmatpush2.bf16.msra.mxu0 0
      %8268 = vmatprep.subr.bf16.mxu0 0
      %8269 = vmatpush2.bf16.msra.mxu0 0
      %8270 = vmatprep.subr.bf16.mxu0 0
      %8271 = vmatpush2.bf16.msra.mxu0 0
      %8272 = vmatprep.subr.bf16.mxu0 0
      %8273 = vmatpush2.bf16.msra.mxu0 0
      %8274 = vmatprep.subr.bf16.mxu0 0
      %8275 = vmatpush2.bf16.msra.mxu0 0
      %8276 = vmatprep.subr.bf16.mxu0 0
      %8277 = vmatpush2.bf16.msra.mxu0 0
      %8278 = vmatprep.mubr.bf16.mxu0 0
      %8279 = vmatmul.mubr.bf16.gmra.mxu0 %v4499
      %v8280 = vpop.f32.mrf.mxu0
      %v8281 = vadd.f32 0.0, %v8280
      %v8282 = vpop.f32.mrf.mxu0
      %v8283 = vpop.f32.mrf.mxu0
      %v8284 = vadd.f32 0.0, %v8283
      %v8285 = vpop.f32.mrf.mxu0
      %8286 = vdwg.mxu0
      %v8287 = vadd.f32 %v8179, %v8281
      %v8288 = vadd.f32 %v8180, %v8284
      %s8289 = scalar_lea.vmem %s3, 2240
      %v8290 = vld [vmem:[%s8289] sm:$0xf]
      %v8291 = vld [vmem:[%s8289 + $0x4] sm:$0xf]
      %v8292 = vld [vmem:[%s8289 + $0x8] sm:$0xf]
      %v8293 = vld [vmem:[%s8289 + $0xc] sm:$0xf]
      %v8294 = vld [vmem:[%s8289 + $0x10] sm:$0xf]
      %v8295 = vld [vmem:[%s8289 + $0x14] sm:$0xf]
      %v8296 = vld [vmem:[%s8289 + $0x18] sm:$0xf]
      %v8297 = vld [vmem:[%s8289 + $0x1c] sm:$0xf]
      %v8298 = vld [vmem:[%s8289 + $0x20] sm:$0xf]
      %v8299 = vld [vmem:[%s8289 + $0x24] sm:$0xf]
      %v8300 = vld [vmem:[%s8289 + $0x28] sm:$0xf]
      %v8301 = vld [vmem:[%s8289 + $0x2c] sm:$0xf]
      %v8302 = vld [vmem:[%s8289 + $0x30] sm:$0xf]
      %v8303 = vld [vmem:[%s8289 + $0x34] sm:$0xf]
      %v8304 = vld [vmem:[%s8289 + $0x38] sm:$0xf]
      %v8305 = vld [vmem:[%s8289 + $0x3c] sm:$0xf]
      %v8322 = vunpack.c.l.b16 %v8290
      %v8323 = vunpack.c.l.b16 %v8291
      %v8324 = vunpack.c.l.b16 %v8292
      %v8325 = vunpack.c.l.b16 %v8293
      %v8326 = vunpack.c.l.b16 %v8294
      %v8327 = vunpack.c.l.b16 %v8295
      %v8328 = vunpack.c.l.b16 %v8296
      %v8329 = vunpack.c.l.b16 %v8297
      %v8330 = vunpack.c.l.b16 %v8298
      %v8331 = vunpack.c.l.b16 %v8299
      %v8332 = vunpack.c.l.b16 %v8300
      %v8333 = vunpack.c.l.b16 %v8301
      %v8334 = vunpack.c.l.b16 %v8302
      %v8335 = vunpack.c.l.b16 %v8303
      %v8336 = vunpack.c.l.b16 %v8304
      %v8337 = vunpack.c.l.b16 %v8305
      %v8338 = vpack.c.b16 %v8323, %v8322
      %v8339 = vpack.c.b16 %v8325, %v8324
      %v8340 = vpack.c.b16 %v8327, %v8326
      %v8341 = vpack.c.b16 %v8329, %v8328
      %v8342 = vpack.c.b16 %v8331, %v8330
      %v8343 = vpack.c.b16 %v8333, %v8332
      %v8344 = vpack.c.b16 %v8335, %v8334
      %v8345 = vpack.c.b16 %v8337, %v8336
      %8354 = vmatprep.subr.bf16.mxu0 0
      %8355 = vmatpush1.bf16.msra.mxu0 %v8345
      %8356 = vmatprep.subr.bf16.mxu0 0
      %8357 = vmatpush1.bf16.msra.mxu0 %v8344
      %8358 = vmatprep.subr.bf16.mxu0 0
      %8359 = vmatpush1.bf16.msra.mxu0 %v8343
      %8360 = vmatprep.subr.bf16.mxu0 0
      %8361 = vmatpush1.bf16.msra.mxu0 %v8342
      %8362 = vmatprep.subr.bf16.mxu0 0
      %8363 = vmatpush1.bf16.msra.mxu0 %v8341
      %8364 = vmatprep.subr.bf16.mxu0 0
      %8365 = vmatpush1.bf16.msra.mxu0 %v8340
      %8366 = vmatprep.subr.bf16.mxu0 0
      %8367 = vmatpush1.bf16.msra.mxu0 %v8339
      %8368 = vmatprep.subr.bf16.mxu0 0
      %8369 = vmatpush1.bf16.msra.mxu0 %v8338
      %8370 = vmatprep.subr.bf16.mxu0 0
      %8371 = vmatpush2.bf16.msra.mxu0 0
      %8372 = vmatprep.subr.bf16.mxu0 0
      %8373 = vmatpush2.bf16.msra.mxu0 0
      %8374 = vmatprep.subr.bf16.mxu0 0
      %8375 = vmatpush2.bf16.msra.mxu0 0
      %8376 = vmatprep.subr.bf16.mxu0 0
      %8377 = vmatpush2.bf16.msra.mxu0 0
      %8378 = vmatprep.subr.bf16.mxu0 0
      %8379 = vmatpush2.bf16.msra.mxu0 0
      %8380 = vmatprep.subr.bf16.mxu0 0
      %8381 = vmatpush2.bf16.msra.mxu0 0
      %8382 = vmatprep.subr.bf16.mxu0 0
      %8383 = vmatpush2.bf16.msra.mxu0 0
      %8384 = vmatprep.subr.bf16.mxu0 0
      %8385 = vmatpush2.bf16.msra.mxu0 0
      %8386 = vmatprep.mubr.bf16.mxu0 0
      %8387 = vmatmul.mubr.bf16.gmra.mxu0 %v4500
      %v8388 = vpop.f32.mrf.mxu0
      %v8389 = vadd.f32 0.0, %v8388
      %v8390 = vpop.f32.mrf.mxu0
      %v8391 = vpop.f32.mrf.mxu0
      %v8392 = vadd.f32 0.0, %v8391
      %v8393 = vpop.f32.mrf.mxu0
      %8394 = vdwg.mxu0
      %v8395 = vadd.f32 %v8287, %v8389
      %v8396 = vadd.f32 %v8288, %v8392
      %s8397 = scalar_lea.vmem %s3, 2304
      %v8398 = vld [vmem:[%s8397] sm:$0xf]
      %v8399 = vld [vmem:[%s8397 + $0x4] sm:$0xf]
      %v8400 = vld [vmem:[%s8397 + $0x8] sm:$0xf]
      %v8401 = vld [vmem:[%s8397 + $0xc] sm:$0xf]
      %v8402 = vld [vmem:[%s8397 + $0x10] sm:$0xf]
      %v8403 = vld [vmem:[%s8397 + $0x14] sm:$0xf]
      %v8404 = vld [vmem:[%s8397 + $0x18] sm:$0xf]
      %v8405 = vld [vmem:[%s8397 + $0x1c] sm:$0xf]
      %v8406 = vld [vmem:[%s8397 + $0x20] sm:$0xf]
      %v8407 = vld [vmem:[%s8397 + $0x24] sm:$0xf]
      %v8408 = vld [vmem:[%s8397 + $0x28] sm:$0xf]
      %v8409 = vld [vmem:[%s8397 + $0x2c] sm:$0xf]
      %v8410 = vld [vmem:[%s8397 + $0x30] sm:$0xf]
      %v8411 = vld [vmem:[%s8397 + $0x34] sm:$0xf]
      %v8412 = vld [vmem:[%s8397 + $0x38] sm:$0xf]
      %v8413 = vld [vmem:[%s8397 + $0x3c] sm:$0xf]
      %v8430 = vunpack.c.l.b16 %v8398
      %v8431 = vunpack.c.l.b16 %v8399
      %v8432 = vunpack.c.l.b16 %v8400
      %v8433 = vunpack.c.l.b16 %v8401
      %v8434 = vunpack.c.l.b16 %v8402
      %v8435 = vunpack.c.l.b16 %v8403
      %v8436 = vunpack.c.l.b16 %v8404
      %v8437 = vunpack.c.l.b16 %v8405
      %v8438 = vunpack.c.l.b16 %v8406
      %v8439 = vunpack.c.l.b16 %v8407
      %v8440 = vunpack.c.l.b16 %v8408
      %v8441 = vunpack.c.l.b16 %v8409
      %v8442 = vunpack.c.l.b16 %v8410
      %v8443 = vunpack.c.l.b16 %v8411
      %v8444 = vunpack.c.l.b16 %v8412
      %v8445 = vunpack.c.l.b16 %v8413
      %v8446 = vpack.c.b16 %v8431, %v8430
      %v8447 = vpack.c.b16 %v8433, %v8432
      %v8448 = vpack.c.b16 %v8435, %v8434
      %v8449 = vpack.c.b16 %v8437, %v8436
      %v8450 = vpack.c.b16 %v8439, %v8438
      %v8451 = vpack.c.b16 %v8441, %v8440
      %v8452 = vpack.c.b16 %v8443, %v8442
      %v8453 = vpack.c.b16 %v8445, %v8444
      %8462 = vmatprep.subr.bf16.mxu0 0
      %8463 = vmatpush1.bf16.msra.mxu0 %v8453
      %8464 = vmatprep.subr.bf16.mxu0 0
      %8465 = vmatpush1.bf16.msra.mxu0 %v8452
      %8466 = vmatprep.subr.bf16.mxu0 0
      %8467 = vmatpush1.bf16.msra.mxu0 %v8451
      %8468 = vmatprep.subr.bf16.mxu0 0
      %8469 = vmatpush1.bf16.msra.mxu0 %v8450
      %8470 = vmatprep.subr.bf16.mxu0 0
      %8471 = vmatpush1.bf16.msra.mxu0 %v8449
      %8472 = vmatprep.subr.bf16.mxu0 0
      %8473 = vmatpush1.bf16.msra.mxu0 %v8448
      %8474 = vmatprep.subr.bf16.mxu0 0
      %8475 = vmatpush1.bf16.msra.mxu0 %v8447
      %8476 = vmatprep.subr.bf16.mxu0 0
      %8477 = vmatpush1.bf16.msra.mxu0 %v8446
      %8478 = vmatprep.subr.bf16.mxu0 0
      %8479 = vmatpush2.bf16.msra.mxu0 0
      %8480 = vmatprep.subr.bf16.mxu0 0
      %8481 = vmatpush2.bf16.msra.mxu0 0
      %8482 = vmatprep.subr.bf16.mxu0 0
      %8483 = vmatpush2.bf16.msra.mxu0 0
      %8484 = vmatprep.subr.bf16.mxu0 0
      %8485 = vmatpush2.bf16.msra.mxu0 0
      %8486 = vmatprep.subr.bf16.mxu0 0
      %8487 = vmatpush2.bf16.msra.mxu0 0
      %8488 = vmatprep.subr.bf16.mxu0 0
      %8489 = vmatpush2.bf16.msra.mxu0 0
      %8490 = vmatprep.subr.bf16.mxu0 0
      %8491 = vmatpush2.bf16.msra.mxu0 0
      %8492 = vmatprep.subr.bf16.mxu0 0
      %8493 = vmatpush2.bf16.msra.mxu0 0
      %8494 = vmatprep.mubr.bf16.mxu0 0
      %8495 = vmatmul.mubr.bf16.gmra.mxu0 %v4501
      %v8496 = vpop.f32.mrf.mxu0
      %v8497 = vadd.f32 0.0, %v8496
      %v8498 = vpop.f32.mrf.mxu0
      %v8499 = vpop.f32.mrf.mxu0
      %v8500 = vadd.f32 0.0, %v8499
      %v8501 = vpop.f32.mrf.mxu0
      %8502 = vdwg.mxu0
      %v8503 = vadd.f32 %v8395, %v8497
      %v8504 = vadd.f32 %v8396, %v8500
      %s8505 = scalar_lea.vmem %s3, 2368
      %v8506 = vld [vmem:[%s8505] sm:$0xf]
      %v8507 = vld [vmem:[%s8505 + $0x4] sm:$0xf]
      %v8508 = vld [vmem:[%s8505 + $0x8] sm:$0xf]
      %v8509 = vld [vmem:[%s8505 + $0xc] sm:$0xf]
      %v8510 = vld [vmem:[%s8505 + $0x10] sm:$0xf]
      %v8511 = vld [vmem:[%s8505 + $0x14] sm:$0xf]
      %v8512 = vld [vmem:[%s8505 + $0x18] sm:$0xf]
      %v8513 = vld [vmem:[%s8505 + $0x1c] sm:$0xf]
      %v8514 = vld [vmem:[%s8505 + $0x20] sm:$0xf]
      %v8515 = vld [vmem:[%s8505 + $0x24] sm:$0xf]
      %v8516 = vld [vmem:[%s8505 + $0x28] sm:$0xf]
      %v8517 = vld [vmem:[%s8505 + $0x2c] sm:$0xf]
      %v8518 = vld [vmem:[%s8505 + $0x30] sm:$0xf]
      %v8519 = vld [vmem:[%s8505 + $0x34] sm:$0xf]
      %v8520 = vld [vmem:[%s8505 + $0x38] sm:$0xf]
      %v8521 = vld [vmem:[%s8505 + $0x3c] sm:$0xf]
      %v8538 = vunpack.c.l.b16 %v8506
      %v8539 = vunpack.c.l.b16 %v8507
      %v8540 = vunpack.c.l.b16 %v8508
      %v8541 = vunpack.c.l.b16 %v8509
      %v8542 = vunpack.c.l.b16 %v8510
      %v8543 = vunpack.c.l.b16 %v8511
      %v8544 = vunpack.c.l.b16 %v8512
      %v8545 = vunpack.c.l.b16 %v8513
      %v8546 = vunpack.c.l.b16 %v8514
      %v8547 = vunpack.c.l.b16 %v8515
      %v8548 = vunpack.c.l.b16 %v8516
      %v8549 = vunpack.c.l.b16 %v8517
      %v8550 = vunpack.c.l.b16 %v8518
      %v8551 = vunpack.c.l.b16 %v8519
      %v8552 = vunpack.c.l.b16 %v8520
      %v8553 = vunpack.c.l.b16 %v8521
      %v8554 = vpack.c.b16 %v8539, %v8538
      %v8555 = vpack.c.b16 %v8541, %v8540
      %v8556 = vpack.c.b16 %v8543, %v8542
      %v8557 = vpack.c.b16 %v8545, %v8544
      %v8558 = vpack.c.b16 %v8547, %v8546
      %v8559 = vpack.c.b16 %v8549, %v8548
      %v8560 = vpack.c.b16 %v8551, %v8550
      %v8561 = vpack.c.b16 %v8553, %v8552
      %8570 = vmatprep.subr.bf16.mxu0 0
      %8571 = vmatpush1.bf16.msra.mxu0 %v8561
      %8572 = vmatprep.subr.bf16.mxu0 0
      %8573 = vmatpush1.bf16.msra.mxu0 %v8560
      %8574 = vmatprep.subr.bf16.mxu0 0
      %8575 = vmatpush1.bf16.msra.mxu0 %v8559
      %8576 = vmatprep.subr.bf16.mxu0 0
      %8577 = vmatpush1.bf16.msra.mxu0 %v8558
      %8578 = vmatprep.subr.bf16.mxu0 0
      %8579 = vmatpush1.bf16.msra.mxu0 %v8557
      %8580 = vmatprep.subr.bf16.mxu0 0
      %8581 = vmatpush1.bf16.msra.mxu0 %v8556
      %8582 = vmatprep.subr.bf16.mxu0 0
      %8583 = vmatpush1.bf16.msra.mxu0 %v8555
      %8584 = vmatprep.subr.bf16.mxu0 0
      %8585 = vmatpush1.bf16.msra.mxu0 %v8554
      %8586 = vmatprep.subr.bf16.mxu0 0
      %8587 = vmatpush2.bf16.msra.mxu0 0
      %8588 = vmatprep.subr.bf16.mxu0 0
      %8589 = vmatpush2.bf16.msra.mxu0 0
      %8590 = vmatprep.subr.bf16.mxu0 0
      %8591 = vmatpush2.bf16.msra.mxu0 0
      %8592 = vmatprep.subr.bf16.mxu0 0
      %8593 = vmatpush2.bf16.msra.mxu0 0
      %8594 = vmatprep.subr.bf16.mxu0 0
      %8595 = vmatpush2.bf16.msra.mxu0 0
      %8596 = vmatprep.subr.bf16.mxu0 0
      %8597 = vmatpush2.bf16.msra.mxu0 0
      %8598 = vmatprep.subr.bf16.mxu0 0
      %8599 = vmatpush2.bf16.msra.mxu0 0
      %8600 = vmatprep.subr.bf16.mxu0 0
      %8601 = vmatpush2.bf16.msra.mxu0 0
      %8602 = vmatprep.mubr.bf16.mxu0 0
      %8603 = vmatmul.mubr.bf16.gmra.mxu0 %v4502
      %v8604 = vpop.f32.mrf.mxu0
      %v8605 = vadd.f32 0.0, %v8604
      %v8606 = vpop.f32.mrf.mxu0
      %v8607 = vpop.f32.mrf.mxu0
      %v8608 = vadd.f32 0.0, %v8607
      %v8609 = vpop.f32.mrf.mxu0
      %8610 = vdwg.mxu0
      %v8611 = vadd.f32 %v8503, %v8605
      %v8612 = vadd.f32 %v8504, %v8608
      %s8613 = scalar_lea.vmem %s3, 2432
      %v8614 = vld [vmem:[%s8613] sm:$0xf]
      %v8615 = vld [vmem:[%s8613 + $0x4] sm:$0xf]
      %v8616 = vld [vmem:[%s8613 + $0x8] sm:$0xf]
      %v8617 = vld [vmem:[%s8613 + $0xc] sm:$0xf]
      %v8618 = vld [vmem:[%s8613 + $0x10] sm:$0xf]
      %v8619 = vld [vmem:[%s8613 + $0x14] sm:$0xf]
      %v8620 = vld [vmem:[%s8613 + $0x18] sm:$0xf]
      %v8621 = vld [vmem:[%s8613 + $0x1c] sm:$0xf]
      %v8622 = vld [vmem:[%s8613 + $0x20] sm:$0xf]
      %v8623 = vld [vmem:[%s8613 + $0x24] sm:$0xf]
      %v8624 = vld [vmem:[%s8613 + $0x28] sm:$0xf]
      %v8625 = vld [vmem:[%s8613 + $0x2c] sm:$0xf]
      %v8626 = vld [vmem:[%s8613 + $0x30] sm:$0xf]
      %v8627 = vld [vmem:[%s8613 + $0x34] sm:$0xf]
      %v8628 = vld [vmem:[%s8613 + $0x38] sm:$0xf]
      %v8629 = vld [vmem:[%s8613 + $0x3c] sm:$0xf]
      %v8646 = vunpack.c.l.b16 %v8614
      %v8647 = vunpack.c.l.b16 %v8615
      %v8648 = vunpack.c.l.b16 %v8616
      %v8649 = vunpack.c.l.b16 %v8617
      %v8650 = vunpack.c.l.b16 %v8618
      %v8651 = vunpack.c.l.b16 %v8619
      %v8652 = vunpack.c.l.b16 %v8620
      %v8653 = vunpack.c.l.b16 %v8621
      %v8654 = vunpack.c.l.b16 %v8622
      %v8655 = vunpack.c.l.b16 %v8623
      %v8656 = vunpack.c.l.b16 %v8624
      %v8657 = vunpack.c.l.b16 %v8625
      %v8658 = vunpack.c.l.b16 %v8626
      %v8659 = vunpack.c.l.b16 %v8627
      %v8660 = vunpack.c.l.b16 %v8628
      %v8661 = vunpack.c.l.b16 %v8629
      %v8662 = vpack.c.b16 %v8647, %v8646
      %v8663 = vpack.c.b16 %v8649, %v8648
      %v8664 = vpack.c.b16 %v8651, %v8650
      %v8665 = vpack.c.b16 %v8653, %v8652
      %v8666 = vpack.c.b16 %v8655, %v8654
      %v8667 = vpack.c.b16 %v8657, %v8656
      %v8668 = vpack.c.b16 %v8659, %v8658
      %v8669 = vpack.c.b16 %v8661, %v8660
      %8678 = vmatprep.subr.bf16.mxu0 0
      %8679 = vmatpush1.bf16.msra.mxu0 %v8669
      %8680 = vmatprep.subr.bf16.mxu0 0
      %8681 = vmatpush1.bf16.msra.mxu0 %v8668
      %8682 = vmatprep.subr.bf16.mxu0 0
      %8683 = vmatpush1.bf16.msra.mxu0 %v8667
      %8684 = vmatprep.subr.bf16.mxu0 0
      %8685 = vmatpush1.bf16.msra.mxu0 %v8666
      %8686 = vmatprep.subr.bf16.mxu0 0
      %8687 = vmatpush1.bf16.msra.mxu0 %v8665
      %8688 = vmatprep.subr.bf16.mxu0 0
      %8689 = vmatpush1.bf16.msra.mxu0 %v8664
      %8690 = vmatprep.subr.bf16.mxu0 0
      %8691 = vmatpush1.bf16.msra.mxu0 %v8663
      %8692 = vmatprep.subr.bf16.mxu0 0
      %8693 = vmatpush1.bf16.msra.mxu0 %v8662
      %8694 = vmatprep.subr.bf16.mxu0 0
      %8695 = vmatpush2.bf16.msra.mxu0 0
      %8696 = vmatprep.subr.bf16.mxu0 0
      %8697 = vmatpush2.bf16.msra.mxu0 0
      %8698 = vmatprep.subr.bf16.mxu0 0
      %8699 = vmatpush2.bf16.msra.mxu0 0
      %8700 = vmatprep.subr.bf16.mxu0 0
      %8701 = vmatpush2.bf16.msra.mxu0 0
      %8702 = vmatprep.subr.bf16.mxu0 0
      %8703 = vmatpush2.bf16.msra.mxu0 0
      %8704 = vmatprep.subr.bf16.mxu0 0
      %8705 = vmatpush2.bf16.msra.mxu0 0
      %8706 = vmatprep.subr.bf16.mxu0 0
      %8707 = vmatpush2.bf16.msra.mxu0 0
      %8708 = vmatprep.subr.bf16.mxu0 0
      %8709 = vmatpush2.bf16.msra.mxu0 0
      %8710 = vmatprep.mubr.bf16.mxu0 0
      %8711 = vmatmul.mubr.bf16.gmra.mxu0 %v4503
      %v8712 = vpop.f32.mrf.mxu0
      %v8713 = vadd.f32 0.0, %v8712
      %v8714 = vpop.f32.mrf.mxu0
      %v8715 = vpop.f32.mrf.mxu0
      %v8716 = vadd.f32 0.0, %v8715
      %v8717 = vpop.f32.mrf.mxu0
      %8718 = vdwg.mxu0
      %v8719 = vadd.f32 %v8611, %v8713
      %v8720 = vadd.f32 %v8612, %v8716
      %s8721 = scalar_lea.vmem %s3, 2496
      %v8722 = vld [vmem:[%s8721] sm:$0xf]
      %v8723 = vld [vmem:[%s8721 + $0x4] sm:$0xf]
      %v8724 = vld [vmem:[%s8721 + $0x8] sm:$0xf]
      %v8725 = vld [vmem:[%s8721 + $0xc] sm:$0xf]
      %v8726 = vld [vmem:[%s8721 + $0x10] sm:$0xf]
      %v8727 = vld [vmem:[%s8721 + $0x14] sm:$0xf]
      %v8728 = vld [vmem:[%s8721 + $0x18] sm:$0xf]
      %v8729 = vld [vmem:[%s8721 + $0x1c] sm:$0xf]
      %v8730 = vld [vmem:[%s8721 + $0x20] sm:$0xf]
      %v8731 = vld [vmem:[%s8721 + $0x24] sm:$0xf]
      %v8732 = vld [vmem:[%s8721 + $0x28] sm:$0xf]
      %v8733 = vld [vmem:[%s8721 + $0x2c] sm:$0xf]
      %v8734 = vld [vmem:[%s8721 + $0x30] sm:$0xf]
      %v8735 = vld [vmem:[%s8721 + $0x34] sm:$0xf]
      %v8736 = vld [vmem:[%s8721 + $0x38] sm:$0xf]
      %v8737 = vld [vmem:[%s8721 + $0x3c] sm:$0xf]
      %v8754 = vunpack.c.l.b16 %v8722
      %v8755 = vunpack.c.l.b16 %v8723
      %v8756 = vunpack.c.l.b16 %v8724
      %v8757 = vunpack.c.l.b16 %v8725
      %v8758 = vunpack.c.l.b16 %v8726
      %v8759 = vunpack.c.l.b16 %v8727
      %v8760 = vunpack.c.l.b16 %v8728
      %v8761 = vunpack.c.l.b16 %v8729
      %v8762 = vunpack.c.l.b16 %v8730
      %v8763 = vunpack.c.l.b16 %v8731
      %v8764 = vunpack.c.l.b16 %v8732
      %v8765 = vunpack.c.l.b16 %v8733
      %v8766 = vunpack.c.l.b16 %v8734
      %v8767 = vunpack.c.l.b16 %v8735
      %v8768 = vunpack.c.l.b16 %v8736
      %v8769 = vunpack.c.l.b16 %v8737
      %v8770 = vpack.c.b16 %v8755, %v8754
      %v8771 = vpack.c.b16 %v8757, %v8756
      %v8772 = vpack.c.b16 %v8759, %v8758
      %v8773 = vpack.c.b16 %v8761, %v8760
      %v8774 = vpack.c.b16 %v8763, %v8762
      %v8775 = vpack.c.b16 %v8765, %v8764
      %v8776 = vpack.c.b16 %v8767, %v8766
      %v8777 = vpack.c.b16 %v8769, %v8768
      %8786 = vmatprep.subr.bf16.mxu0 0
      %8787 = vmatpush1.bf16.msra.mxu0 %v8777
      %8788 = vmatprep.subr.bf16.mxu0 0
      %8789 = vmatpush1.bf16.msra.mxu0 %v8776
      %8790 = vmatprep.subr.bf16.mxu0 0
      %8791 = vmatpush1.bf16.msra.mxu0 %v8775
      %8792 = vmatprep.subr.bf16.mxu0 0
      %8793 = vmatpush1.bf16.msra.mxu0 %v8774
      %8794 = vmatprep.subr.bf16.mxu0 0
      %8795 = vmatpush1.bf16.msra.mxu0 %v8773
      %8796 = vmatprep.subr.bf16.mxu0 0
      %8797 = vmatpush1.bf16.msra.mxu0 %v8772
      %8798 = vmatprep.subr.bf16.mxu0 0
      %8799 = vmatpush1.bf16.msra.mxu0 %v8771
      %8800 = vmatprep.subr.bf16.mxu0 0
      %8801 = vmatpush1.bf16.msra.mxu0 %v8770
      %8802 = vmatprep.subr.bf16.mxu0 0
      %8803 = vmatpush2.bf16.msra.mxu0 0
      %8804 = vmatprep.subr.bf16.mxu0 0
      %8805 = vmatpush2.bf16.msra.mxu0 0
      %8806 = vmatprep.subr.bf16.mxu0 0
      %8807 = vmatpush2.bf16.msra.mxu0 0
      %8808 = vmatprep.subr.bf16.mxu0 0
      %8809 = vmatpush2.bf16.msra.mxu0 0
      %8810 = vmatprep.subr.bf16.mxu0 0
      %8811 = vmatpush2.bf16.msra.mxu0 0
      %8812 = vmatprep.subr.bf16.mxu0 0
      %8813 = vmatpush2.bf16.msra.mxu0 0
      %8814 = vmatprep.subr.bf16.mxu0 0
      %8815 = vmatpush2.bf16.msra.mxu0 0
      %8816 = vmatprep.subr.bf16.mxu0 0
      %8817 = vmatpush2.bf16.msra.mxu0 0
      %8818 = vmatprep.mubr.bf16.mxu0 0
      %8819 = vmatmul.mubr.bf16.gmra.mxu0 %v4504
      %v8820 = vpop.f32.mrf.mxu0
      %v8821 = vadd.f32 0.0, %v8820
      %v8822 = vpop.f32.mrf.mxu0
      %v8823 = vpop.f32.mrf.mxu0
      %v8824 = vadd.f32 0.0, %v8823
      %v8825 = vpop.f32.mrf.mxu0
      %8826 = vdwg.mxu0
      %v8827 = vadd.f32 %v8719, %v8821
      %v8828 = vadd.f32 %v8720, %v8824
      %s8829 = scalar_lea.vmem %s3, 2560
      %v8830 = vld [vmem:[%s8829] sm:$0xf]
      %v8831 = vld [vmem:[%s8829 + $0x4] sm:$0xf]
      %v8832 = vld [vmem:[%s8829 + $0x8] sm:$0xf]
      %v8833 = vld [vmem:[%s8829 + $0xc] sm:$0xf]
      %v8834 = vld [vmem:[%s8829 + $0x10] sm:$0xf]
      %v8835 = vld [vmem:[%s8829 + $0x14] sm:$0xf]
      %v8836 = vld [vmem:[%s8829 + $0x18] sm:$0xf]
      %v8837 = vld [vmem:[%s8829 + $0x1c] sm:$0xf]
      %v8838 = vld [vmem:[%s8829 + $0x20] sm:$0xf]
      %v8839 = vld [vmem:[%s8829 + $0x24] sm:$0xf]
      %v8840 = vld [vmem:[%s8829 + $0x28] sm:$0xf]
      %v8841 = vld [vmem:[%s8829 + $0x2c] sm:$0xf]
      %v8842 = vld [vmem:[%s8829 + $0x30] sm:$0xf]
      %v8843 = vld [vmem:[%s8829 + $0x34] sm:$0xf]
      %v8844 = vld [vmem:[%s8829 + $0x38] sm:$0xf]
      %v8845 = vld [vmem:[%s8829 + $0x3c] sm:$0xf]
      %v8862 = vunpack.c.l.b16 %v8830
      %v8863 = vunpack.c.l.b16 %v8831
      %v8864 = vunpack.c.l.b16 %v8832
      %v8865 = vunpack.c.l.b16 %v8833
      %v8866 = vunpack.c.l.b16 %v8834
      %v8867 = vunpack.c.l.b16 %v8835
      %v8868 = vunpack.c.l.b16 %v8836
      %v8869 = vunpack.c.l.b16 %v8837
      %v8870 = vunpack.c.l.b16 %v8838
      %v8871 = vunpack.c.l.b16 %v8839
      %v8872 = vunpack.c.l.b16 %v8840
      %v8873 = vunpack.c.l.b16 %v8841
      %v8874 = vunpack.c.l.b16 %v8842
      %v8875 = vunpack.c.l.b16 %v8843
      %v8876 = vunpack.c.l.b16 %v8844
      %v8877 = vunpack.c.l.b16 %v8845
      %v8878 = vpack.c.b16 %v8863, %v8862
      %v8879 = vpack.c.b16 %v8865, %v8864
      %v8880 = vpack.c.b16 %v8867, %v8866
      %v8881 = vpack.c.b16 %v8869, %v8868
      %v8882 = vpack.c.b16 %v8871, %v8870
      %v8883 = vpack.c.b16 %v8873, %v8872
      %v8884 = vpack.c.b16 %v8875, %v8874
      %v8885 = vpack.c.b16 %v8877, %v8876
      %8894 = vmatprep.subr.bf16.mxu0 0
      %8895 = vmatpush1.bf16.msra.mxu0 %v8885
      %8896 = vmatprep.subr.bf16.mxu0 0
      %8897 = vmatpush1.bf16.msra.mxu0 %v8884
      %8898 = vmatprep.subr.bf16.mxu0 0
      %8899 = vmatpush1.bf16.msra.mxu0 %v8883
      %8900 = vmatprep.subr.bf16.mxu0 0
      %8901 = vmatpush1.bf16.msra.mxu0 %v8882
      %8902 = vmatprep.subr.bf16.mxu0 0
      %8903 = vmatpush1.bf16.msra.mxu0 %v8881
      %8904 = vmatprep.subr.bf16.mxu0 0
      %8905 = vmatpush1.bf16.msra.mxu0 %v8880
      %8906 = vmatprep.subr.bf16.mxu0 0
      %8907 = vmatpush1.bf16.msra.mxu0 %v8879
      %8908 = vmatprep.subr.bf16.mxu0 0
      %8909 = vmatpush1.bf16.msra.mxu0 %v8878
      %8910 = vmatprep.subr.bf16.mxu0 0
      %8911 = vmatpush2.bf16.msra.mxu0 0
      %8912 = vmatprep.subr.bf16.mxu0 0
      %8913 = vmatpush2.bf16.msra.mxu0 0
      %8914 = vmatprep.subr.bf16.mxu0 0
      %8915 = vmatpush2.bf16.msra.mxu0 0
      %8916 = vmatprep.subr.bf16.mxu0 0
      %8917 = vmatpush2.bf16.msra.mxu0 0
      %8918 = vmatprep.subr.bf16.mxu0 0
      %8919 = vmatpush2.bf16.msra.mxu0 0
      %8920 = vmatprep.subr.bf16.mxu0 0
      %8921 = vmatpush2.bf16.msra.mxu0 0
      %8922 = vmatprep.subr.bf16.mxu0 0
      %8923 = vmatpush2.bf16.msra.mxu0 0
      %8924 = vmatprep.subr.bf16.mxu0 0
      %8925 = vmatpush2.bf16.msra.mxu0 0
      %8926 = vmatprep.mubr.bf16.mxu0 0
      %8927 = vmatmul.mubr.bf16.gmra.mxu0 %v4505
      %v8928 = vpop.f32.mrf.mxu0
      %v8929 = vadd.f32 0.0, %v8928
      %v8930 = vpop.f32.mrf.mxu0
      %v8931 = vpop.f32.mrf.mxu0
      %v8932 = vadd.f32 0.0, %v8931
      %v8933 = vpop.f32.mrf.mxu0
      %8934 = vdwg.mxu0
      %v8935 = vadd.f32 %v8827, %v8929
      %v8936 = vadd.f32 %v8828, %v8932
      %s8937 = scalar_lea.vmem %s3, 2624
      %v8938 = vld [vmem:[%s8937] sm:$0xf]
      %v8939 = vld [vmem:[%s8937 + $0x4] sm:$0xf]
      %v8940 = vld [vmem:[%s8937 + $0x8] sm:$0xf]
      %v8941 = vld [vmem:[%s8937 + $0xc] sm:$0xf]
      %v8942 = vld [vmem:[%s8937 + $0x10] sm:$0xf]
      %v8943 = vld [vmem:[%s8937 + $0x14] sm:$0xf]
      %v8944 = vld [vmem:[%s8937 + $0x18] sm:$0xf]
      %v8945 = vld [vmem:[%s8937 + $0x1c] sm:$0xf]
      %v8946 = vld [vmem:[%s8937 + $0x20] sm:$0xf]
      %v8947 = vld [vmem:[%s8937 + $0x24] sm:$0xf]
      %v8948 = vld [vmem:[%s8937 + $0x28] sm:$0xf]
      %v8949 = vld [vmem:[%s8937 + $0x2c] sm:$0xf]
      %v8950 = vld [vmem:[%s8937 + $0x30] sm:$0xf]
      %v8951 = vld [vmem:[%s8937 + $0x34] sm:$0xf]
      %v8952 = vld [vmem:[%s8937 + $0x38] sm:$0xf]
      %v8953 = vld [vmem:[%s8937 + $0x3c] sm:$0xf]
      %v8970 = vunpack.c.l.b16 %v8938
      %v8971 = vunpack.c.l.b16 %v8939
      %v8972 = vunpack.c.l.b16 %v8940
      %v8973 = vunpack.c.l.b16 %v8941
      %v8974 = vunpack.c.l.b16 %v8942
      %v8975 = vunpack.c.l.b16 %v8943
      %v8976 = vunpack.c.l.b16 %v8944
      %v8977 = vunpack.c.l.b16 %v8945
      %v8978 = vunpack.c.l.b16 %v8946
      %v8979 = vunpack.c.l.b16 %v8947
      %v8980 = vunpack.c.l.b16 %v8948
      %v8981 = vunpack.c.l.b16 %v8949
      %v8982 = vunpack.c.l.b16 %v8950
      %v8983 = vunpack.c.l.b16 %v8951
      %v8984 = vunpack.c.l.b16 %v8952
      %v8985 = vunpack.c.l.b16 %v8953
      %v8986 = vpack.c.b16 %v8971, %v8970
      %v8987 = vpack.c.b16 %v8973, %v8972
      %v8988 = vpack.c.b16 %v8975, %v8974
      %v8989 = vpack.c.b16 %v8977, %v8976
      %v8990 = vpack.c.b16 %v8979, %v8978
      %v8991 = vpack.c.b16 %v8981, %v8980
      %v8992 = vpack.c.b16 %v8983, %v8982
      %v8993 = vpack.c.b16 %v8985, %v8984
      %9002 = vmatprep.subr.bf16.mxu0 0
      %9003 = vmatpush1.bf16.msra.mxu0 %v8993
      %9004 = vmatprep.subr.bf16.mxu0 0
      %9005 = vmatpush1.bf16.msra.mxu0 %v8992
      %9006 = vmatprep.subr.bf16.mxu0 0
      %9007 = vmatpush1.bf16.msra.mxu0 %v8991
      %9008 = vmatprep.subr.bf16.mxu0 0
      %9009 = vmatpush1.bf16.msra.mxu0 %v8990
      %9010 = vmatprep.subr.bf16.mxu0 0
      %9011 = vmatpush1.bf16.msra.mxu0 %v8989
      %9012 = vmatprep.subr.bf16.mxu0 0
      %9013 = vmatpush1.bf16.msra.mxu0 %v8988
      %9014 = vmatprep.subr.bf16.mxu0 0
      %9015 = vmatpush1.bf16.msra.mxu0 %v8987
      %9016 = vmatprep.subr.bf16.mxu0 0
      %9017 = vmatpush1.bf16.msra.mxu0 %v8986
      %9018 = vmatprep.subr.bf16.mxu0 0
      %9019 = vmatpush2.bf16.msra.mxu0 0
      %9020 = vmatprep.subr.bf16.mxu0 0
      %9021 = vmatpush2.bf16.msra.mxu0 0
      %9022 = vmatprep.subr.bf16.mxu0 0
      %9023 = vmatpush2.bf16.msra.mxu0 0
      %9024 = vmatprep.subr.bf16.mxu0 0
      %9025 = vmatpush2.bf16.msra.mxu0 0
      %9026 = vmatprep.subr.bf16.mxu0 0
      %9027 = vmatpush2.bf16.msra.mxu0 0
      %9028 = vmatprep.subr.bf16.mxu0 0
      %9029 = vmatpush2.bf16.msra.mxu0 0
      %9030 = vmatprep.subr.bf16.mxu0 0
      %9031 = vmatpush2.bf16.msra.mxu0 0
      %9032 = vmatprep.subr.bf16.mxu0 0
      %9033 = vmatpush2.bf16.msra.mxu0 0
      %9034 = vmatprep.mubr.bf16.mxu0 0
      %9035 = vmatmul.mubr.bf16.gmra.mxu0 %v4506
      %v9036 = vpop.f32.mrf.mxu0
      %v9037 = vadd.f32 0.0, %v9036
      %v9038 = vpop.f32.mrf.mxu0
      %v9039 = vpop.f32.mrf.mxu0
      %v9040 = vadd.f32 0.0, %v9039
      %v9041 = vpop.f32.mrf.mxu0
      %9042 = vdwg.mxu0
      %v9043 = vadd.f32 %v8935, %v9037
      %v9044 = vadd.f32 %v8936, %v9040
      %s9045 = scalar_lea.vmem %s3, 2688
      %v9046 = vld [vmem:[%s9045] sm:$0xf]
      %v9047 = vld [vmem:[%s9045 + $0x4] sm:$0xf]
      %v9048 = vld [vmem:[%s9045 + $0x8] sm:$0xf]
      %v9049 = vld [vmem:[%s9045 + $0xc] sm:$0xf]
      %v9050 = vld [vmem:[%s9045 + $0x10] sm:$0xf]
      %v9051 = vld [vmem:[%s9045 + $0x14] sm:$0xf]
      %v9052 = vld [vmem:[%s9045 + $0x18] sm:$0xf]
      %v9053 = vld [vmem:[%s9045 + $0x1c] sm:$0xf]
      %v9054 = vld [vmem:[%s9045 + $0x20] sm:$0xf]
      %v9055 = vld [vmem:[%s9045 + $0x24] sm:$0xf]
      %v9056 = vld [vmem:[%s9045 + $0x28] sm:$0xf]
      %v9057 = vld [vmem:[%s9045 + $0x2c] sm:$0xf]
      %v9058 = vld [vmem:[%s9045 + $0x30] sm:$0xf]
      %v9059 = vld [vmem:[%s9045 + $0x34] sm:$0xf]
      %v9060 = vld [vmem:[%s9045 + $0x38] sm:$0xf]
      %v9061 = vld [vmem:[%s9045 + $0x3c] sm:$0xf]
      %v9078 = vunpack.c.l.b16 %v9046
      %v9079 = vunpack.c.l.b16 %v9047
      %v9080 = vunpack.c.l.b16 %v9048
      %v9081 = vunpack.c.l.b16 %v9049
      %v9082 = vunpack.c.l.b16 %v9050
      %v9083 = vunpack.c.l.b16 %v9051
      %v9084 = vunpack.c.l.b16 %v9052
      %v9085 = vunpack.c.l.b16 %v9053
      %v9086 = vunpack.c.l.b16 %v9054
      %v9087 = vunpack.c.l.b16 %v9055
      %v9088 = vunpack.c.l.b16 %v9056
      %v9089 = vunpack.c.l.b16 %v9057
      %v9090 = vunpack.c.l.b16 %v9058
      %v9091 = vunpack.c.l.b16 %v9059
      %v9092 = vunpack.c.l.b16 %v9060
      %v9093 = vunpack.c.l.b16 %v9061
      %v9094 = vpack.c.b16 %v9079, %v9078
      %v9095 = vpack.c.b16 %v9081, %v9080
      %v9096 = vpack.c.b16 %v9083, %v9082
      %v9097 = vpack.c.b16 %v9085, %v9084
      %v9098 = vpack.c.b16 %v9087, %v9086
      %v9099 = vpack.c.b16 %v9089, %v9088
      %v9100 = vpack.c.b16 %v9091, %v9090
      %v9101 = vpack.c.b16 %v9093, %v9092
      %9110 = vmatprep.subr.bf16.mxu0 0
      %9111 = vmatpush1.bf16.msra.mxu0 %v9101
      %9112 = vmatprep.subr.bf16.mxu0 0
      %9113 = vmatpush1.bf16.msra.mxu0 %v9100
      %9114 = vmatprep.subr.bf16.mxu0 0
      %9115 = vmatpush1.bf16.msra.mxu0 %v9099
      %9116 = vmatprep.subr.bf16.mxu0 0
      %9117 = vmatpush1.bf16.msra.mxu0 %v9098
      %9118 = vmatprep.subr.bf16.mxu0 0
      %9119 = vmatpush1.bf16.msra.mxu0 %v9097
      %9120 = vmatprep.subr.bf16.mxu0 0
      %9121 = vmatpush1.bf16.msra.mxu0 %v9096
      %9122 = vmatprep.subr.bf16.mxu0 0
      %9123 = vmatpush1.bf16.msra.mxu0 %v9095
      %9124 = vmatprep.subr.bf16.mxu0 0
      %9125 = vmatpush1.bf16.msra.mxu0 %v9094
      %9126 = vmatprep.subr.bf16.mxu0 0
      %9127 = vmatpush2.bf16.msra.mxu0 0
      %9128 = vmatprep.subr.bf16.mxu0 0
      %9129 = vmatpush2.bf16.msra.mxu0 0
      %9130 = vmatprep.subr.bf16.mxu0 0
      %9131 = vmatpush2.bf16.msra.mxu0 0
      %9132 = vmatprep.subr.bf16.mxu0 0
      %9133 = vmatpush2.bf16.msra.mxu0 0
      %9134 = vmatprep.subr.bf16.mxu0 0
      %9135 = vmatpush2.bf16.msra.mxu0 0
      %9136 = vmatprep.subr.bf16.mxu0 0
      %9137 = vmatpush2.bf16.msra.mxu0 0
      %9138 = vmatprep.subr.bf16.mxu0 0
      %9139 = vmatpush2.bf16.msra.mxu0 0
      %9140 = vmatprep.subr.bf16.mxu0 0
      %9141 = vmatpush2.bf16.msra.mxu0 0
      %9142 = vmatprep.mubr.bf16.mxu0 0
      %9143 = vmatmul.mubr.bf16.gmra.mxu0 %v4507
      %v9144 = vpop.f32.mrf.mxu0
      %v9145 = vadd.f32 0.0, %v9144
      %v9146 = vpop.f32.mrf.mxu0
      %v9147 = vpop.f32.mrf.mxu0
      %v9148 = vadd.f32 0.0, %v9147
      %v9149 = vpop.f32.mrf.mxu0
      %9150 = vdwg.mxu0
      %v9151 = vadd.f32 %v9043, %v9145
      %v9152 = vadd.f32 %v9044, %v9148
      %s9153 = scalar_lea.vmem %s3, 2752
      %v9154 = vld [vmem:[%s9153] sm:$0xf]
      %v9155 = vld [vmem:[%s9153 + $0x4] sm:$0xf]
      %v9156 = vld [vmem:[%s9153 + $0x8] sm:$0xf]
      %v9157 = vld [vmem:[%s9153 + $0xc] sm:$0xf]
      %v9158 = vld [vmem:[%s9153 + $0x10] sm:$0xf]
      %v9159 = vld [vmem:[%s9153 + $0x14] sm:$0xf]
      %v9160 = vld [vmem:[%s9153 + $0x18] sm:$0xf]
      %v9161 = vld [vmem:[%s9153 + $0x1c] sm:$0xf]
      %v9162 = vld [vmem:[%s9153 + $0x20] sm:$0xf]
      %v9163 = vld [vmem:[%s9153 + $0x24] sm:$0xf]
      %v9164 = vld [vmem:[%s9153 + $0x28] sm:$0xf]
      %v9165 = vld [vmem:[%s9153 + $0x2c] sm:$0xf]
      %v9166 = vld [vmem:[%s9153 + $0x30] sm:$0xf]
      %v9167 = vld [vmem:[%s9153 + $0x34] sm:$0xf]
      %v9168 = vld [vmem:[%s9153 + $0x38] sm:$0xf]
      %v9169 = vld [vmem:[%s9153 + $0x3c] sm:$0xf]
      %v9186 = vunpack.c.l.b16 %v9154
      %v9187 = vunpack.c.l.b16 %v9155
      %v9188 = vunpack.c.l.b16 %v9156
      %v9189 = vunpack.c.l.b16 %v9157
      %v9190 = vunpack.c.l.b16 %v9158
      %v9191 = vunpack.c.l.b16 %v9159
      %v9192 = vunpack.c.l.b16 %v9160
      %v9193 = vunpack.c.l.b16 %v9161
      %v9194 = vunpack.c.l.b16 %v9162
      %v9195 = vunpack.c.l.b16 %v9163
      %v9196 = vunpack.c.l.b16 %v9164
      %v9197 = vunpack.c.l.b16 %v9165
      %v9198 = vunpack.c.l.b16 %v9166
      %v9199 = vunpack.c.l.b16 %v9167
      %v9200 = vunpack.c.l.b16 %v9168
      %v9201 = vunpack.c.l.b16 %v9169
      %v9202 = vpack.c.b16 %v9187, %v9186
      %v9203 = vpack.c.b16 %v9189, %v9188
      %v9204 = vpack.c.b16 %v9191, %v9190
      %v9205 = vpack.c.b16 %v9193, %v9192
      %v9206 = vpack.c.b16 %v9195, %v9194
      %v9207 = vpack.c.b16 %v9197, %v9196
      %v9208 = vpack.c.b16 %v9199, %v9198
      %v9209 = vpack.c.b16 %v9201, %v9200
      %9218 = vmatprep.subr.bf16.mxu0 0
      %9219 = vmatpush1.bf16.msra.mxu0 %v9209
      %9220 = vmatprep.subr.bf16.mxu0 0
      %9221 = vmatpush1.bf16.msra.mxu0 %v9208
      %9222 = vmatprep.subr.bf16.mxu0 0
      %9223 = vmatpush1.bf16.msra.mxu0 %v9207
      %9224 = vmatprep.subr.bf16.mxu0 0
      %9225 = vmatpush1.bf16.msra.mxu0 %v9206
      %9226 = vmatprep.subr.bf16.mxu0 0
      %9227 = vmatpush1.bf16.msra.mxu0 %v9205
      %9228 = vmatprep.subr.bf16.mxu0 0
      %9229 = vmatpush1.bf16.msra.mxu0 %v9204
      %9230 = vmatprep.subr.bf16.mxu0 0
      %9231 = vmatpush1.bf16.msra.mxu0 %v9203
      %9232 = vmatprep.subr.bf16.mxu0 0
      %9233 = vmatpush1.bf16.msra.mxu0 %v9202
      %9234 = vmatprep.subr.bf16.mxu0 0
      %9235 = vmatpush2.bf16.msra.mxu0 0
      %9236 = vmatprep.subr.bf16.mxu0 0
      %9237 = vmatpush2.bf16.msra.mxu0 0
      %9238 = vmatprep.subr.bf16.mxu0 0
      %9239 = vmatpush2.bf16.msra.mxu0 0
      %9240 = vmatprep.subr.bf16.mxu0 0
      %9241 = vmatpush2.bf16.msra.mxu0 0
      %9242 = vmatprep.subr.bf16.mxu0 0
      %9243 = vmatpush2.bf16.msra.mxu0 0
      %9244 = vmatprep.subr.bf16.mxu0 0
      %9245 = vmatpush2.bf16.msra.mxu0 0
      %9246 = vmatprep.subr.bf16.mxu0 0
      %9247 = vmatpush2.bf16.msra.mxu0 0
      %9248 = vmatprep.subr.bf16.mxu0 0
      %9249 = vmatpush2.bf16.msra.mxu0 0
      %9250 = vmatprep.mubr.bf16.mxu0 0
      %9251 = vmatmul.mubr.bf16.gmra.mxu0 %v4508
      %v9252 = vpop.f32.mrf.mxu0
      %v9253 = vadd.f32 0.0, %v9252
      %v9254 = vpop.f32.mrf.mxu0
      %v9255 = vpop.f32.mrf.mxu0
      %v9256 = vadd.f32 0.0, %v9255
      %v9257 = vpop.f32.mrf.mxu0
      %9258 = vdwg.mxu0
      %v9259 = vadd.f32 %v9151, %v9253
      %v9260 = vadd.f32 %v9152, %v9256
      %s9261 = scalar_lea.vmem %s3, 2816
      %v9262 = vld [vmem:[%s9261] sm:$0xf]
      %v9263 = vld [vmem:[%s9261 + $0x4] sm:$0xf]
      %v9264 = vld [vmem:[%s9261 + $0x8] sm:$0xf]
      %v9265 = vld [vmem:[%s9261 + $0xc] sm:$0xf]
      %v9266 = vld [vmem:[%s9261 + $0x10] sm:$0xf]
      %v9267 = vld [vmem:[%s9261 + $0x14] sm:$0xf]
      %v9268 = vld [vmem:[%s9261 + $0x18] sm:$0xf]
      %v9269 = vld [vmem:[%s9261 + $0x1c] sm:$0xf]
      %v9270 = vld [vmem:[%s9261 + $0x20] sm:$0xf]
      %v9271 = vld [vmem:[%s9261 + $0x24] sm:$0xf]
      %v9272 = vld [vmem:[%s9261 + $0x28] sm:$0xf]
      %v9273 = vld [vmem:[%s9261 + $0x2c] sm:$0xf]
      %v9274 = vld [vmem:[%s9261 + $0x30] sm:$0xf]
      %v9275 = vld [vmem:[%s9261 + $0x34] sm:$0xf]
      %v9276 = vld [vmem:[%s9261 + $0x38] sm:$0xf]
      %v9277 = vld [vmem:[%s9261 + $0x3c] sm:$0xf]
      %v9294 = vunpack.c.l.b16 %v9262
      %v9295 = vunpack.c.l.b16 %v9263
      %v9296 = vunpack.c.l.b16 %v9264
      %v9297 = vunpack.c.l.b16 %v9265
      %v9298 = vunpack.c.l.b16 %v9266
      %v9299 = vunpack.c.l.b16 %v9267
      %v9300 = vunpack.c.l.b16 %v9268
      %v9301 = vunpack.c.l.b16 %v9269
      %v9302 = vunpack.c.l.b16 %v9270
      %v9303 = vunpack.c.l.b16 %v9271
      %v9304 = vunpack.c.l.b16 %v9272
      %v9305 = vunpack.c.l.b16 %v9273
      %v9306 = vunpack.c.l.b16 %v9274
      %v9307 = vunpack.c.l.b16 %v9275
      %v9308 = vunpack.c.l.b16 %v9276
      %v9309 = vunpack.c.l.b16 %v9277
      %v9310 = vpack.c.b16 %v9295, %v9294
      %v9311 = vpack.c.b16 %v9297, %v9296
      %v9312 = vpack.c.b16 %v9299, %v9298
      %v9313 = vpack.c.b16 %v9301, %v9300
      %v9314 = vpack.c.b16 %v9303, %v9302
      %v9315 = vpack.c.b16 %v9305, %v9304
      %v9316 = vpack.c.b16 %v9307, %v9306
      %v9317 = vpack.c.b16 %v9309, %v9308
      %9326 = vmatprep.subr.bf16.mxu0 0
      %9327 = vmatpush1.bf16.msra.mxu0 %v9317
      %9328 = vmatprep.subr.bf16.mxu0 0
      %9329 = vmatpush1.bf16.msra.mxu0 %v9316
      %9330 = vmatprep.subr.bf16.mxu0 0
      %9331 = vmatpush1.bf16.msra.mxu0 %v9315
      %9332 = vmatprep.subr.bf16.mxu0 0
      %9333 = vmatpush1.bf16.msra.mxu0 %v9314
      %9334 = vmatprep.subr.bf16.mxu0 0
      %9335 = vmatpush1.bf16.msra.mxu0 %v9313
      %9336 = vmatprep.subr.bf16.mxu0 0
      %9337 = vmatpush1.bf16.msra.mxu0 %v9312
      %9338 = vmatprep.subr.bf16.mxu0 0
      %9339 = vmatpush1.bf16.msra.mxu0 %v9311
      %9340 = vmatprep.subr.bf16.mxu0 0
      %9341 = vmatpush1.bf16.msra.mxu0 %v9310
      %9342 = vmatprep.subr.bf16.mxu0 0
      %9343 = vmatpush2.bf16.msra.mxu0 0
      %9344 = vmatprep.subr.bf16.mxu0 0
      %9345 = vmatpush2.bf16.msra.mxu0 0
      %9346 = vmatprep.subr.bf16.mxu0 0
      %9347 = vmatpush2.bf16.msra.mxu0 0
      %9348 = vmatprep.subr.bf16.mxu0 0
      %9349 = vmatpush2.bf16.msra.mxu0 0
      %9350 = vmatprep.subr.bf16.mxu0 0
      %9351 = vmatpush2.bf16.msra.mxu0 0
      %9352 = vmatprep.subr.bf16.mxu0 0
      %9353 = vmatpush2.bf16.msra.mxu0 0
      %9354 = vmatprep.subr.bf16.mxu0 0
      %9355 = vmatpush2.bf16.msra.mxu0 0
      %9356 = vmatprep.subr.bf16.mxu0 0
      %9357 = vmatpush2.bf16.msra.mxu0 0
      %9358 = vmatprep.mubr.bf16.mxu0 0
      %9359 = vmatmul.mubr.bf16.gmra.mxu0 %v4509
      %v9360 = vpop.f32.mrf.mxu0
      %v9361 = vadd.f32 0.0, %v9360
      %v9362 = vpop.f32.mrf.mxu0
      %v9363 = vpop.f32.mrf.mxu0
      %v9364 = vadd.f32 0.0, %v9363
      %v9365 = vpop.f32.mrf.mxu0
      %9366 = vdwg.mxu0
      %v9367 = vadd.f32 %v9259, %v9361
      %v9368 = vadd.f32 %v9260, %v9364
      %s9369 = scalar_lea.vmem %s3, 2880
      %v9370 = vld [vmem:[%s9369] sm:$0xf]
      %v9371 = vld [vmem:[%s9369 + $0x4] sm:$0xf]
      %v9372 = vld [vmem:[%s9369 + $0x8] sm:$0xf]
      %v9373 = vld [vmem:[%s9369 + $0xc] sm:$0xf]
      %v9374 = vld [vmem:[%s9369 + $0x10] sm:$0xf]
      %v9375 = vld [vmem:[%s9369 + $0x14] sm:$0xf]
      %v9376 = vld [vmem:[%s9369 + $0x18] sm:$0xf]
      %v9377 = vld [vmem:[%s9369 + $0x1c] sm:$0xf]
      %v9378 = vld [vmem:[%s9369 + $0x20] sm:$0xf]
      %v9379 = vld [vmem:[%s9369 + $0x24] sm:$0xf]
      %v9380 = vld [vmem:[%s9369 + $0x28] sm:$0xf]
      %v9381 = vld [vmem:[%s9369 + $0x2c] sm:$0xf]
      %v9382 = vld [vmem:[%s9369 + $0x30] sm:$0xf]
      %v9383 = vld [vmem:[%s9369 + $0x34] sm:$0xf]
      %v9384 = vld [vmem:[%s9369 + $0x38] sm:$0xf]
      %v9385 = vld [vmem:[%s9369 + $0x3c] sm:$0xf]
      %v9402 = vunpack.c.l.b16 %v9370
      %v9403 = vunpack.c.l.b16 %v9371
      %v9404 = vunpack.c.l.b16 %v9372
      %v9405 = vunpack.c.l.b16 %v9373
      %v9406 = vunpack.c.l.b16 %v9374
      %v9407 = vunpack.c.l.b16 %v9375
      %v9408 = vunpack.c.l.b16 %v9376
      %v9409 = vunpack.c.l.b16 %v9377
      %v9410 = vunpack.c.l.b16 %v9378
      %v9411 = vunpack.c.l.b16 %v9379
      %v9412 = vunpack.c.l.b16 %v9380
      %v9413 = vunpack.c.l.b16 %v9381
      %v9414 = vunpack.c.l.b16 %v9382
      %v9415 = vunpack.c.l.b16 %v9383
      %v9416 = vunpack.c.l.b16 %v9384
      %v9417 = vunpack.c.l.b16 %v9385
      %v9418 = vpack.c.b16 %v9403, %v9402
      %v9419 = vpack.c.b16 %v9405, %v9404
      %v9420 = vpack.c.b16 %v9407, %v9406
      %v9421 = vpack.c.b16 %v9409, %v9408
      %v9422 = vpack.c.b16 %v9411, %v9410
      %v9423 = vpack.c.b16 %v9413, %v9412
      %v9424 = vpack.c.b16 %v9415, %v9414
      %v9425 = vpack.c.b16 %v9417, %v9416
      %9434 = vmatprep.subr.bf16.mxu0 0
      %9435 = vmatpush1.bf16.msra.mxu0 %v9425
      %9436 = vmatprep.subr.bf16.mxu0 0
      %9437 = vmatpush1.bf16.msra.mxu0 %v9424
      %9438 = vmatprep.subr.bf16.mxu0 0
      %9439 = vmatpush1.bf16.msra.mxu0 %v9423
      %9440 = vmatprep.subr.bf16.mxu0 0
      %9441 = vmatpush1.bf16.msra.mxu0 %v9422
      %9442 = vmatprep.subr.bf16.mxu0 0
      %9443 = vmatpush1.bf16.msra.mxu0 %v9421
      %9444 = vmatprep.subr.bf16.mxu0 0
      %9445 = vmatpush1.bf16.msra.mxu0 %v9420
      %9446 = vmatprep.subr.bf16.mxu0 0
      %9447 = vmatpush1.bf16.msra.mxu0 %v9419
      %9448 = vmatprep.subr.bf16.mxu0 0
      %9449 = vmatpush1.bf16.msra.mxu0 %v9418
      %9450 = vmatprep.subr.bf16.mxu0 0
      %9451 = vmatpush2.bf16.msra.mxu0 0
      %9452 = vmatprep.subr.bf16.mxu0 0
      %9453 = vmatpush2.bf16.msra.mxu0 0
      %9454 = vmatprep.subr.bf16.mxu0 0
      %9455 = vmatpush2.bf16.msra.mxu0 0
      %9456 = vmatprep.subr.bf16.mxu0 0
      %9457 = vmatpush2.bf16.msra.mxu0 0
      %9458 = vmatprep.subr.bf16.mxu0 0
      %9459 = vmatpush2.bf16.msra.mxu0 0
      %9460 = vmatprep.subr.bf16.mxu0 0
      %9461 = vmatpush2.bf16.msra.mxu0 0
      %9462 = vmatprep.subr.bf16.mxu0 0
      %9463 = vmatpush2.bf16.msra.mxu0 0
      %9464 = vmatprep.subr.bf16.mxu0 0
      %9465 = vmatpush2.bf16.msra.mxu0 0
      %9466 = vmatprep.mubr.bf16.mxu0 0
      %9467 = vmatmul.mubr.bf16.gmra.mxu0 %v4510
      %v9468 = vpop.f32.mrf.mxu0
      %v9469 = vadd.f32 0.0, %v9468
      %v9470 = vpop.f32.mrf.mxu0
      %v9471 = vpop.f32.mrf.mxu0
      %v9472 = vadd.f32 0.0, %v9471
      %v9473 = vpop.f32.mrf.mxu0
      %9474 = vdwg.mxu0
      %v9475 = vadd.f32 %v9367, %v9469
      %v9476 = vadd.f32 %v9368, %v9472
      %s9477 = scalar_lea.vmem %s3, 2944
      %v9478 = vld [vmem:[%s9477] sm:$0xf]
      %v9479 = vld [vmem:[%s9477 + $0x4] sm:$0xf]
      %v9480 = vld [vmem:[%s9477 + $0x8] sm:$0xf]
      %v9481 = vld [vmem:[%s9477 + $0xc] sm:$0xf]
      %v9482 = vld [vmem:[%s9477 + $0x10] sm:$0xf]
      %v9483 = vld [vmem:[%s9477 + $0x14] sm:$0xf]
      %v9484 = vld [vmem:[%s9477 + $0x18] sm:$0xf]
      %v9485 = vld [vmem:[%s9477 + $0x1c] sm:$0xf]
      %v9486 = vld [vmem:[%s9477 + $0x20] sm:$0xf]
      %v9487 = vld [vmem:[%s9477 + $0x24] sm:$0xf]
      %v9488 = vld [vmem:[%s9477 + $0x28] sm:$0xf]
      %v9489 = vld [vmem:[%s9477 + $0x2c] sm:$0xf]
      %v9490 = vld [vmem:[%s9477 + $0x30] sm:$0xf]
      %v9491 = vld [vmem:[%s9477 + $0x34] sm:$0xf]
      %v9492 = vld [vmem:[%s9477 + $0x38] sm:$0xf]
      %v9493 = vld [vmem:[%s9477 + $0x3c] sm:$0xf]
      %v9510 = vunpack.c.l.b16 %v9478
      %v9511 = vunpack.c.l.b16 %v9479
      %v9512 = vunpack.c.l.b16 %v9480
      %v9513 = vunpack.c.l.b16 %v9481
      %v9514 = vunpack.c.l.b16 %v9482
      %v9515 = vunpack.c.l.b16 %v9483
      %v9516 = vunpack.c.l.b16 %v9484
      %v9517 = vunpack.c.l.b16 %v9485
      %v9518 = vunpack.c.l.b16 %v9486
      %v9519 = vunpack.c.l.b16 %v9487
      %v9520 = vunpack.c.l.b16 %v9488
      %v9521 = vunpack.c.l.b16 %v9489
      %v9522 = vunpack.c.l.b16 %v9490
      %v9523 = vunpack.c.l.b16 %v9491
      %v9524 = vunpack.c.l.b16 %v9492
      %v9525 = vunpack.c.l.b16 %v9493
      %v9526 = vpack.c.b16 %v9511, %v9510
      %v9527 = vpack.c.b16 %v9513, %v9512
      %v9528 = vpack.c.b16 %v9515, %v9514
      %v9529 = vpack.c.b16 %v9517, %v9516
      %v9530 = vpack.c.b16 %v9519, %v9518
      %v9531 = vpack.c.b16 %v9521, %v9520
      %v9532 = vpack.c.b16 %v9523, %v9522
      %v9533 = vpack.c.b16 %v9525, %v9524
      %9542 = vmatprep.subr.bf16.mxu0 0
      %9543 = vmatpush1.bf16.msra.mxu0 %v9533
      %9544 = vmatprep.subr.bf16.mxu0 0
      %9545 = vmatpush1.bf16.msra.mxu0 %v9532
      %9546 = vmatprep.subr.bf16.mxu0 0
      %9547 = vmatpush1.bf16.msra.mxu0 %v9531
      %9548 = vmatprep.subr.bf16.mxu0 0
      %9549 = vmatpush1.bf16.msra.mxu0 %v9530
      %9550 = vmatprep.subr.bf16.mxu0 0
      %9551 = vmatpush1.bf16.msra.mxu0 %v9529
      %9552 = vmatprep.subr.bf16.mxu0 0
      %9553 = vmatpush1.bf16.msra.mxu0 %v9528
      %9554 = vmatprep.subr.bf16.mxu0 0
      %9555 = vmatpush1.bf16.msra.mxu0 %v9527
      %9556 = vmatprep.subr.bf16.mxu0 0
      %9557 = vmatpush1.bf16.msra.mxu0 %v9526
      %9558 = vmatprep.subr.bf16.mxu0 0
      %9559 = vmatpush2.bf16.msra.mxu0 0
      %9560 = vmatprep.subr.bf16.mxu0 0
      %9561 = vmatpush2.bf16.msra.mxu0 0
      %9562 = vmatprep.subr.bf16.mxu0 0
      %9563 = vmatpush2.bf16.msra.mxu0 0
      %9564 = vmatprep.subr.bf16.mxu0 0
      %9565 = vmatpush2.bf16.msra.mxu0 0
      %9566 = vmatprep.subr.bf16.mxu0 0
      %9567 = vmatpush2.bf16.msra.mxu0 0
      %9568 = vmatprep.subr.bf16.mxu0 0
      %9569 = vmatpush2.bf16.msra.mxu0 0
      %9570 = vmatprep.subr.bf16.mxu0 0
      %9571 = vmatpush2.bf16.msra.mxu0 0
      %9572 = vmatprep.subr.bf16.mxu0 0
      %9573 = vmatpush2.bf16.msra.mxu0 0
      %9574 = vmatprep.mubr.bf16.mxu0 0
      %9575 = vmatmul.mubr.bf16.gmra.mxu0 %v4511
      %v9576 = vpop.f32.mrf.mxu0
      %v9577 = vadd.f32 0.0, %v9576
      %v9578 = vpop.f32.mrf.mxu0
      %v9579 = vpop.f32.mrf.mxu0
      %v9580 = vadd.f32 0.0, %v9579
      %v9581 = vpop.f32.mrf.mxu0
      %9582 = vdwg.mxu0
      %v9583 = vadd.f32 %v9475, %v9577
      %v9584 = vadd.f32 %v9476, %v9580
      %s9585 = scalar_lea.vmem %s3, 3008
      %v9586 = vld [vmem:[%s9585] sm:$0xf]
      %v9587 = vld [vmem:[%s9585 + $0x4] sm:$0xf]
      %v9588 = vld [vmem:[%s9585 + $0x8] sm:$0xf]
      %v9589 = vld [vmem:[%s9585 + $0xc] sm:$0xf]
      %v9590 = vld [vmem:[%s9585 + $0x10] sm:$0xf]
      %v9591 = vld [vmem:[%s9585 + $0x14] sm:$0xf]
      %v9592 = vld [vmem:[%s9585 + $0x18] sm:$0xf]
      %v9593 = vld [vmem:[%s9585 + $0x1c] sm:$0xf]
      %v9594 = vld [vmem:[%s9585 + $0x20] sm:$0xf]
      %v9595 = vld [vmem:[%s9585 + $0x24] sm:$0xf]
      %v9596 = vld [vmem:[%s9585 + $0x28] sm:$0xf]
      %v9597 = vld [vmem:[%s9585 + $0x2c] sm:$0xf]
      %v9598 = vld [vmem:[%s9585 + $0x30] sm:$0xf]
      %v9599 = vld [vmem:[%s9585 + $0x34] sm:$0xf]
      %v9600 = vld [vmem:[%s9585 + $0x38] sm:$0xf]
      %v9601 = vld [vmem:[%s9585 + $0x3c] sm:$0xf]
      %v9618 = vunpack.c.l.b16 %v9586
      %v9619 = vunpack.c.l.b16 %v9587
      %v9620 = vunpack.c.l.b16 %v9588
      %v9621 = vunpack.c.l.b16 %v9589
      %v9622 = vunpack.c.l.b16 %v9590
      %v9623 = vunpack.c.l.b16 %v9591
      %v9624 = vunpack.c.l.b16 %v9592
      %v9625 = vunpack.c.l.b16 %v9593
      %v9626 = vunpack.c.l.b16 %v9594
      %v9627 = vunpack.c.l.b16 %v9595
      %v9628 = vunpack.c.l.b16 %v9596
      %v9629 = vunpack.c.l.b16 %v9597
      %v9630 = vunpack.c.l.b16 %v9598
      %v9631 = vunpack.c.l.b16 %v9599
      %v9632 = vunpack.c.l.b16 %v9600
      %v9633 = vunpack.c.l.b16 %v9601
      %v9634 = vpack.c.b16 %v9619, %v9618
      %v9635 = vpack.c.b16 %v9621, %v9620
      %v9636 = vpack.c.b16 %v9623, %v9622
      %v9637 = vpack.c.b16 %v9625, %v9624
      %v9638 = vpack.c.b16 %v9627, %v9626
      %v9639 = vpack.c.b16 %v9629, %v9628
      %v9640 = vpack.c.b16 %v9631, %v9630
      %v9641 = vpack.c.b16 %v9633, %v9632
      %9650 = vmatprep.subr.bf16.mxu0 0
      %9651 = vmatpush1.bf16.msra.mxu0 %v9641
      %9652 = vmatprep.subr.bf16.mxu0 0
      %9653 = vmatpush1.bf16.msra.mxu0 %v9640
      %9654 = vmatprep.subr.bf16.mxu0 0
      %9655 = vmatpush1.bf16.msra.mxu0 %v9639
      %9656 = vmatprep.subr.bf16.mxu0 0
      %9657 = vmatpush1.bf16.msra.mxu0 %v9638
      %9658 = vmatprep.subr.bf16.mxu0 0
      %9659 = vmatpush1.bf16.msra.mxu0 %v9637
      %9660 = vmatprep.subr.bf16.mxu0 0
      %9661 = vmatpush1.bf16.msra.mxu0 %v9636
      %9662 = vmatprep.subr.bf16.mxu0 0
      %9663 = vmatpush1.bf16.msra.mxu0 %v9635
      %9664 = vmatprep.subr.bf16.mxu0 0
      %9665 = vmatpush1.bf16.msra.mxu0 %v9634
      %9666 = vmatprep.subr.bf16.mxu0 0
      %9667 = vmatpush2.bf16.msra.mxu0 0
      %9668 = vmatprep.subr.bf16.mxu0 0
      %9669 = vmatpush2.bf16.msra.mxu0 0
      %9670 = vmatprep.subr.bf16.mxu0 0
      %9671 = vmatpush2.bf16.msra.mxu0 0
      %9672 = vmatprep.subr.bf16.mxu0 0
      %9673 = vmatpush2.bf16.msra.mxu0 0
      %9674 = vmatprep.subr.bf16.mxu0 0
      %9675 = vmatpush2.bf16.msra.mxu0 0
      %9676 = vmatprep.subr.bf16.mxu0 0
      %9677 = vmatpush2.bf16.msra.mxu0 0
      %9678 = vmatprep.subr.bf16.mxu0 0
      %9679 = vmatpush2.bf16.msra.mxu0 0
      %9680 = vmatprep.subr.bf16.mxu0 0
      %9681 = vmatpush2.bf16.msra.mxu0 0
      %9682 = vmatprep.mubr.bf16.mxu0 0
      %9683 = vmatmul.mubr.bf16.gmra.mxu0 %v4512
      %v9684 = vpop.f32.mrf.mxu0
      %v9685 = vadd.f32 0.0, %v9684
      %v9686 = vpop.f32.mrf.mxu0
      %v9687 = vpop.f32.mrf.mxu0
      %v9688 = vadd.f32 0.0, %v9687
      %v9689 = vpop.f32.mrf.mxu0
      %9690 = vdwg.mxu0
      %v9691 = vadd.f32 %v9583, %v9685
      %v9692 = vadd.f32 %v9584, %v9688
      %s9693 = scalar_lea.vmem %s3, 3072
      %v9694 = vld [vmem:[%s9693] sm:$0xf]
      %v9695 = vld [vmem:[%s9693 + $0x4] sm:$0xf]
      %v9696 = vld [vmem:[%s9693 + $0x8] sm:$0xf]
      %v9697 = vld [vmem:[%s9693 + $0xc] sm:$0xf]
      %v9698 = vld [vmem:[%s9693 + $0x10] sm:$0xf]
      %v9699 = vld [vmem:[%s9693 + $0x14] sm:$0xf]
      %v9700 = vld [vmem:[%s9693 + $0x18] sm:$0xf]
      %v9701 = vld [vmem:[%s9693 + $0x1c] sm:$0xf]
      %v9702 = vld [vmem:[%s9693 + $0x20] sm:$0xf]
      %v9703 = vld [vmem:[%s9693 + $0x24] sm:$0xf]
      %v9704 = vld [vmem:[%s9693 + $0x28] sm:$0xf]
      %v9705 = vld [vmem:[%s9693 + $0x2c] sm:$0xf]
      %v9706 = vld [vmem:[%s9693 + $0x30] sm:$0xf]
      %v9707 = vld [vmem:[%s9693 + $0x34] sm:$0xf]
      %v9708 = vld [vmem:[%s9693 + $0x38] sm:$0xf]
      %v9709 = vld [vmem:[%s9693 + $0x3c] sm:$0xf]
      %v9726 = vunpack.c.l.b16 %v9694
      %v9727 = vunpack.c.l.b16 %v9695
      %v9728 = vunpack.c.l.b16 %v9696
      %v9729 = vunpack.c.l.b16 %v9697
      %v9730 = vunpack.c.l.b16 %v9698
      %v9731 = vunpack.c.l.b16 %v9699
      %v9732 = vunpack.c.l.b16 %v9700
      %v9733 = vunpack.c.l.b16 %v9701
      %v9734 = vunpack.c.l.b16 %v9702
      %v9735 = vunpack.c.l.b16 %v9703
      %v9736 = vunpack.c.l.b16 %v9704
      %v9737 = vunpack.c.l.b16 %v9705
      %v9738 = vunpack.c.l.b16 %v9706
      %v9739 = vunpack.c.l.b16 %v9707
      %v9740 = vunpack.c.l.b16 %v9708
      %v9741 = vunpack.c.l.b16 %v9709
      %v9742 = vpack.c.b16 %v9727, %v9726
      %v9743 = vpack.c.b16 %v9729, %v9728
      %v9744 = vpack.c.b16 %v9731, %v9730
      %v9745 = vpack.c.b16 %v9733, %v9732
      %v9746 = vpack.c.b16 %v9735, %v9734
      %v9747 = vpack.c.b16 %v9737, %v9736
      %v9748 = vpack.c.b16 %v9739, %v9738
      %v9749 = vpack.c.b16 %v9741, %v9740
      %9758 = vmatprep.subr.bf16.mxu0 0
      %9759 = vmatpush1.bf16.msra.mxu0 %v9749
      %9760 = vmatprep.subr.bf16.mxu0 0
      %9761 = vmatpush1.bf16.msra.mxu0 %v9748
      %9762 = vmatprep.subr.bf16.mxu0 0
      %9763 = vmatpush1.bf16.msra.mxu0 %v9747
      %9764 = vmatprep.subr.bf16.mxu0 0
      %9765 = vmatpush1.bf16.msra.mxu0 %v9746
      %9766 = vmatprep.subr.bf16.mxu0 0
      %9767 = vmatpush1.bf16.msra.mxu0 %v9745
      %9768 = vmatprep.subr.bf16.mxu0 0
      %9769 = vmatpush1.bf16.msra.mxu0 %v9744
      %9770 = vmatprep.subr.bf16.mxu0 0
      %9771 = vmatpush1.bf16.msra.mxu0 %v9743
      %9772 = vmatprep.subr.bf16.mxu0 0
      %9773 = vmatpush1.bf16.msra.mxu0 %v9742
      %9774 = vmatprep.subr.bf16.mxu0 0
      %9775 = vmatpush2.bf16.msra.mxu0 0
      %9776 = vmatprep.subr.bf16.mxu0 0
      %9777 = vmatpush2.bf16.msra.mxu0 0
      %9778 = vmatprep.subr.bf16.mxu0 0
      %9779 = vmatpush2.bf16.msra.mxu0 0
      %9780 = vmatprep.subr.bf16.mxu0 0
      %9781 = vmatpush2.bf16.msra.mxu0 0
      %9782 = vmatprep.subr.bf16.mxu0 0
      %9783 = vmatpush2.bf16.msra.mxu0 0
      %9784 = vmatprep.subr.bf16.mxu0 0
      %9785 = vmatpush2.bf16.msra.mxu0 0
      %9786 = vmatprep.subr.bf16.mxu0 0
      %9787 = vmatpush2.bf16.msra.mxu0 0
      %9788 = vmatprep.subr.bf16.mxu0 0
      %9789 = vmatpush2.bf16.msra.mxu0 0
      %9790 = vmatprep.mubr.bf16.mxu0 0
      %9791 = vmatmul.mubr.bf16.gmra.mxu0 %v4513
      %v9792 = vpop.f32.mrf.mxu0
      %v9793 = vadd.f32 0.0, %v9792
      %v9794 = vpop.f32.mrf.mxu0
      %v9795 = vpop.f32.mrf.mxu0
      %v9796 = vadd.f32 0.0, %v9795
      %v9797 = vpop.f32.mrf.mxu0
      %9798 = vdwg.mxu0
      %v9799 = vadd.f32 %v9691, %v9793
      %v9800 = vadd.f32 %v9692, %v9796
      %v9801 = vld [vmem:[%s4] sm:$0x1]
      %v9803 = vlaneseq
      %v9804 = vshrl.u32 %v9803, 7
      %v9805 = vsub.s32 0, %v9804
      %v9806 = vrot.slane %v9801, %v9805
      %v9808 = vadd.f32 %v9799, %v9806
      %v9809 = vadd.f32 %v9800, %v9806
      %v9810 = vmax.f32 %v9808, 0.0
      %v9811 = vmax.f32 %v9809, 0.0
      %v9812 = vpack.c.bf16 %v9811, %v9810
      %v9813 = vld [vmem:[%s5] sm:$0xf]
      %v9814 = vld [vmem:[%s5 + $0x4] sm:$0xf]
      %v9815 = vld [vmem:[%s5 + $0x8] sm:$0xf]
      %v9816 = vld [vmem:[%s5 + $0xc] sm:$0xf]
      %v9817 = vld [vmem:[%s5 + $0x10] sm:$0xf]
      %v9818 = vld [vmem:[%s5 + $0x14] sm:$0xf]
      %v9819 = vld [vmem:[%s5 + $0x18] sm:$0xf]
      %v9820 = vld [vmem:[%s5 + $0x1c] sm:$0xf]
      %v9821 = vld [vmem:[%s5 + $0x20] sm:$0xf]
      %v9822 = vld [vmem:[%s5 + $0x24] sm:$0xf]
      %v9823 = vld [vmem:[%s5 + $0x28] sm:$0xf]
      %v9824 = vld [vmem:[%s5 + $0x2c] sm:$0xf]
      %v9825 = vld [vmem:[%s5 + $0x30] sm:$0xf]
      %v9826 = vld [vmem:[%s5 + $0x34] sm:$0xf]
      %v9827 = vld [vmem:[%s5 + $0x38] sm:$0xf]
      %v9828 = vld [vmem:[%s5 + $0x3c] sm:$0xf]
      %v9829 = vld [vmem:[%s6] sm:$0x1]
      %v9831 = vlaneseq
      %v9832 = vshrl.u32 %v9831, 7
      %v9833 = vsub.s32 0, %v9832
      %v9834 = vrot.slane %v9829, %v9833
      %v9852 = vunpack.c.l.b16 %v9813
      %v9853 = vunpack.c.l.b16 %v9814
      %v9854 = vunpack.c.l.b16 %v9815
      %v9855 = vunpack.c.l.b16 %v9816
      %v9856 = vunpack.c.l.b16 %v9817
      %v9857 = vunpack.c.l.b16 %v9818
      %v9858 = vunpack.c.l.b16 %v9819
      %v9859 = vunpack.c.l.b16 %v9820
      %v9860 = vunpack.c.l.b16 %v9821
      %v9861 = vunpack.c.l.b16 %v9822
      %v9862 = vunpack.c.l.b16 %v9823
      %v9863 = vunpack.c.l.b16 %v9824
      %v9864 = vunpack.c.l.b16 %v9825
      %v9865 = vunpack.c.l.b16 %v9826
      %v9866 = vunpack.c.l.b16 %v9827
      %v9867 = vunpack.c.l.b16 %v9828
      %v9868 = vpack.c.b16 %v9853, %v9852
      %v9869 = vpack.c.b16 %v9855, %v9854
      %v9870 = vpack.c.b16 %v9857, %v9856
      %v9871 = vpack.c.b16 %v9859, %v9858
      %v9872 = vpack.c.b16 %v9861, %v9860
      %v9873 = vpack.c.b16 %v9863, %v9862
      %v9874 = vpack.c.b16 %v9865, %v9864
      %v9875 = vpack.c.b16 %v9867, %v9866
      %9884 = vmatprep.subr.bf16.mxu0 0
      %9885 = vmatpush1.bf16.msra.mxu0 %v9875
      %9886 = vmatprep.subr.bf16.mxu0 0
      %9887 = vmatpush1.bf16.msra.mxu0 %v9874
      %9888 = vmatprep.subr.bf16.mxu0 0
      %9889 = vmatpush1.bf16.msra.mxu0 %v9873
      %9890 = vmatprep.subr.bf16.mxu0 0
      %9891 = vmatpush1.bf16.msra.mxu0 %v9872
      %9892 = vmatprep.subr.bf16.mxu0 0
      %9893 = vmatpush1.bf16.msra.mxu0 %v9871
      %9894 = vmatprep.subr.bf16.mxu0 0
      %9895 = vmatpush1.bf16.msra.mxu0 %v9870
      %9896 = vmatprep.subr.bf16.mxu0 0
      %9897 = vmatpush1.bf16.msra.mxu0 %v9869
      %9898 = vmatprep.subr.bf16.mxu0 0
      %9899 = vmatpush1.bf16.msra.mxu0 %v9868
      %9900 = vmatprep.subr.bf16.mxu0 0
      %9901 = vmatpush2.bf16.msra.mxu0 0
      %9902 = vmatprep.subr.bf16.mxu0 0
      %9903 = vmatpush2.bf16.msra.mxu0 0
      %9904 = vmatprep.subr.bf16.mxu0 0
      %9905 = vmatpush2.bf16.msra.mxu0 0
      %9906 = vmatprep.subr.bf16.mxu0 0
      %9907 = vmatpush2.bf16.msra.mxu0 0
      %9908 = vmatprep.subr.bf16.mxu0 0
      %9909 = vmatpush2.bf16.msra.mxu0 0
      %9910 = vmatprep.subr.bf16.mxu0 0
      %9911 = vmatpush2.bf16.msra.mxu0 0
      %9912 = vmatprep.subr.bf16.mxu0 0
      %9913 = vmatpush2.bf16.msra.mxu0 0
      %9914 = vmatprep.subr.bf16.mxu0 0
      %9915 = vmatpush2.bf16.msra.mxu0 0
      %9916 = vmatprep.mubr.bf16.mxu0 0
      %9917 = vmatmul.mubr.bf16.gmra.mxu0 %v9812
      %v9918 = vpop.f32.mrf.mxu0
      %v9919 = vadd.f32 %v9834, %v9918
      %v9920 = vpop.f32.mrf.mxu0
      %v9921 = vpop.f32.mrf.mxu0
      %v9922 = vadd.f32 %v9834, %v9921
      %v9923 = vpop.f32.mrf.mxu0
      %9924 = vdwg.mxu0
      %9925 = vst [vmem:[%s280] sm:$0xff] %v9919
      %9926 = vst [vmem:[%s280 + $0x8] sm:$0xff] %v9922
      %s9927 = smul.u32 2, %s18
      %p9928 = scmp.lt.s32.totalorder %s9927, 3
      %s9929 = scalar_select %p9928, %s9927, 3
      %s9930 = smul.addr %s9929, 8
      %s9931 = scalar_lea.vmem %s7, %s9930
      // Predicated region
      $region49: #{fashion_cnn_forward.1} parent=47 // pred_check
        %p9932 = pneg %p188
      $region50: #{fashion_cnn_forward.1} parent=47 // pred_check_branch
        %9934 = sbr.rel (%p9932) target = $region52
      $region51: #{fashion_cnn_forward.1} parent=47 // pred_region
        %s9935 = smul.u32 2, %s18
      $region52: #{fashion_cnn_forward.1} parent=47 // pred_fallthru
        _
    $region48: #{fashion_cnn_forward.1} parent=5 // pred_fallthru
      _
    %p9936 = scmp.le.s32.totalorder 2, %s13
    // Predicated region
    $region53: #{fashion_cnn_forward.1} parent=5 // pred_check
      %p9937 = pneg %p9936
    $region54: #{fashion_cnn_forward.1} parent=5 // pred_check_branch
      %9939 = sbr.rel (%p9937) target = $region56
    $region55: #{fashion_cnn_forward.1} parent=5 // pred_region
      %s9940 = ssub.s32 %s13, 2
      // Predicated region
      $region57: #{fashion_cnn_forward.1} parent=55 // pred_check
        %p9941 = pneg %p194
      $region58: #{fashion_cnn_forward.1} parent=55 // pred_check_branch
        %9943 = sbr.rel (%p9941) target = $region60
      $region59: #{fashion_cnn_forward.1} parent=55 // pred_region
        %s9944 = smul.u32 2, %s19
        %p9945 = scmp.lt.s32.totalorder %s9944, 3
        %s9946 = scalar_select %p9945, %s9944, 3
        %s9947 = smul.addr %s9946, 8
        %s9948 = scalar_lea.vmem %s7, %s9947
      $region60: #{fashion_cnn_forward.1} parent=55 // pred_fallthru
        _
    $region56: #{fashion_cnn_forward.1} parent=5 // pred_fallthru
      _
  $region6: #{fashion_cnn_forward.1} parent=0 // loop_footer
    %s17 = sadd.s32 1, %s13
  $region7: #{fashion_cnn_forward.1} parent=0 // loop_footer_branch
    %12 = sbr.rel target = $region3
  $region8: #{fashion_cnn_forward.1} parent=0 // loop_exit
    _

</llo_original>
